<compile_context>
chip_gen: v7x
topology: tpu7x:2x2x1
jax: 0.10.0
libtpu: 0.0.40
codegen_flags: <defaults>
</compile_context>

<pallas_src>
import functools

import jax
import jax.numpy as jnp
from jax import lax
from jax.experimental import pallas as pl
from jax.experimental.pallas import tpu as pltpu


def _leaky_relu(x):
    return jnp.where(x > 0, x, 0.01 * x)   # F.leaky_relu default slope


def _cnn_fused_kernel(H, W, SPAD,
                      x_ref, w1_ref, b1_ref, w2_ref, b2_ref,
                      w3_ref, b3_ref, w4_ref, b4_ref,
                      o_ref, z_ref):
    """One image per grid step. Activations are (H*W, C) f32 VMEM values."""
    HW = H * W

    # ---- conv1: 1x1, Cin -> 12, LeakyReLU (single MXU matmul) -----------------
    h = jnp.dot(x_ref[0], w1_ref[...], preferred_element_type=jnp.float32)  # (HW, 12)
    h = _leaky_relu(h + b1_ref[...])

    # Horizontal-border masks shared by all 3x3 layers.  Vertical borders are
    # handled by the zero padding of the flat scratch below.
    col = lax.broadcasted_iota(jnp.int32, (HW, 1), 0) % W       # w-coordinate
    col_masks = {
        -1: (col >= 1).astype(jnp.float32),        # tap samples (., w-1)
        0: None,
        1: (col <= W - 2).astype(jnp.float32),     # tap samples (., w+1)
    }

    # Zero the padded flat scratch once; only its interior is rewritten per
    # layer, so the zero borders persist for conv2/conv3/conv4.
    z_ref[...] = jnp.zeros_like(z_ref)

    def conv3x3(h_in, contract):
        """Accumulate contract(kh, kw, shifted_masked_tap) over the 3x3 window."""
        z_ref[SPAD:SPAD + HW, :] = h_in            # sublane-aligned interior store
        acc = None
        for kh in range(3):
            for kw in range(3):
                dh, dw = kh - 1, kw - 1
                start = SPAD + dh * W + dw
                tap = z_ref[start:start + HW, :]   # (HW, 12) shifted window
                m = col_masks[dw]
                if m is not None:
                    tap = tap * m
                c = contract(kh, kw, tap)
                acc = c if acc is None else acc + c
        return acc

    # ---- conv2 / conv3: 3x3 pad=1, 12 -> 12, LeakyReLU (9 MXU matmuls each) ---
    h = _leaky_relu(
        conv3x3(h, lambda kh, kw, t: jnp.dot(t, w2_ref[kh, kw],
                                             preferred_element_type=jnp.float32))
        + b2_ref[...])
    h = _leaky_relu(
        conv3x3(h, lambda kh, kw, t: jnp.dot(t, w3_ref[kh, kw],
                                             preferred_element_type=jnp.float32))
        + b3_ref[...])

    # ---- conv4: 3x3 pad=1, 12 -> 1, ReLU (VPU FMAs + lane reduction) ----------
    acc4 = conv3x3(h, lambda kh, kw, t: t * w4_ref[kh, kw])     # (HW, 12) partials
    y = jnp.sum(acc4, axis=1, keepdims=True) + b4_ref[...]      # (HW, 1)
    # Only HBM write of the whole forward: the 2 KiB final map.
    o_ref[0] = jnp.maximum(y, 0.0)


def cnn_forward(params, x_nchw):
    """Forward of the PyTorch `CNN` module on an NCHW float32 input."""
    B, Cin, H, W = x_nchw.shape
    HW = H * W
    SPAD = 24                              # sublane-aligned zero pad, >= W + 1
    assert SPAD % 8 == 0 and SPAD >= W + 1

    # Channel-last with flattened spatial (one cheap transpose of the tiny input).
    x = jnp.transpose(x_nchw, (0, 2, 3, 1)).reshape(B, HW, Cin)

    # One-time weight re-layout: (Kh, Kw, Ci, Co) for the MXU convs,
    # (Kh, Kw, 1, Ci) for conv4; biases as (1, C) rows.
    w1 = params["conv1_w"].reshape(12, Cin).T                   # (Cin, 12)
    b1 = params["conv1_b"].reshape(1, 12)
    w2 = jnp.transpose(params["conv2_w"], (2, 3, 1, 0))         # (3,3,12,12)
    b2 = params["conv2_b"].reshape(1, 12)
    w3 = jnp.transpose(params["conv3_w"], (2, 3, 1, 0))         # (3,3,12,12)
    b3 = params["conv3_b"].reshape(1, 12)
    w4 = jnp.transpose(params["conv4_w"], (2, 3, 0, 1))         # (3,3,1,12)
    b4 = params["conv4_b"].reshape(1, 1)

    out = pl.pallas_call(
        functools.partial(_cnn_fused_kernel, H, W, SPAD),
        out_shape=jax.ShapeDtypeStruct((B, HW, 1), jnp.float32),
        grid=(B,),
        in_specs=[
            pl.BlockSpec((1, HW, Cin), lambda b: (b, 0, 0)),
            pl.BlockSpec((Cin, 12), lambda b: (0, 0)),
            pl.BlockSpec((1, 12), lambda b: (0, 0)),
            pl.BlockSpec((3, 3, 12, 12), lambda b: (0, 0, 0, 0)),
            pl.BlockSpec((1, 12), lambda b: (0, 0)),
            pl.BlockSpec((3, 3, 12, 12), lambda b: (0, 0, 0, 0)),
            pl.BlockSpec((1, 12), lambda b: (0, 0)),
            pl.BlockSpec((3, 3, 1, 12), lambda b: (0, 0, 0, 0)),
            pl.BlockSpec((1, 1), lambda b: (0, 0)),
        ],
        out_specs=pl.BlockSpec((1, HW, 1), lambda b: (b, 0, 0)),
        scratch_shapes=[pltpu.VMEM((HW + 2 * SPAD, 12), jnp.float32)],
        compiler_params=pltpu.CompilerParams(
            dimension_semantics=("parallel",)),   # both TCs used on v7x
    )(x, w1, b1, w2, b2, w3, b3, w4, b4)

    return jnp.transpose(out.reshape(B, H, W, 1), (0, 3, 1, 2))  # NCHW (B,1,H,W)


def cnn_reference(params, x):
    """Pure-JAX reference (lax.conv) for numerical validation."""
    def conv(x, w, b, pad):
        y = lax.conv_general_dilated(
            x, w, window_strides=(1, 1), padding=pad,
            dimension_numbers=("NCHW", "OIHW", "NCHW"))
        return y + b.reshape(1, -1, 1, 1)

    y = jax.nn.leaky_relu(conv(x, params["conv1_w"], params["conv1_b"],
                               [(0, 0), (0, 0)]), 0.01)
    y = jax.nn.leaky_relu(conv(y, params["conv2_w"], params["conv2_b"],
                               [(1, 1), (1, 1)]), 0.01)
    y = jax.nn.leaky_relu(conv(y, params["conv3_w"], params["conv3_b"],
                               [(1, 1), (1, 1)]), 0.01)
    y = jax.nn.relu(conv(y, params["conv4_w"], params["conv4_b"],
                         [(1, 1), (1, 1)]))
    return y


if __name__ == "__main__":
    # GraphSim feeds this CNN head (B, 3, cnn_reshape, cnn_reshape) similarity maps.
    B, Cin, H, W = 2, 3, 16, 16

    key = jax.random.PRNGKey(0)
    kx, *kp = jax.random.split(key, 9)

    def u(k, shape, fan_in):
        bound = 1.0 / float(fan_in) ** 0.5
        return jax.random.uniform(k, shape, jnp.float32, -bound, bound)

    params = {
        "conv1_w": u(kp[0], (12, Cin, 1, 1), Cin),
        "conv1_b": u(kp[1], (12,), Cin),
        "conv2_w": u(kp[2], (12, 12, 3, 3), 12 * 9),
        "conv2_b": u(kp[3], (12,), 12 * 9),
        "conv3_w": u(kp[4], (12, 12, 3, 3), 12 * 9),
        "conv3_b": u(kp[5], (12,), 12 * 9),
        "conv4_w": u(kp[6], (1, 12, 3, 3), 12 * 9),
        "conv4_b": u(kp[7], (1,), 12 * 9),
    }
    x = jax.random.normal(kx, (B, Cin, H, W), jnp.float32)

    out = jax.block_until_ready(jax.jit(cnn_forward)(params, x))

    assert out.shape == (B, 1, H, W), out.shape
    assert bool(jnp.all(jnp.isfinite(out)))
    assert bool(jnp.all(out >= 0.0))          # final ReLU

    # Numerical check against the pure-JAX conv reference (loose tolerance to
    # allow for MXU f32 matmul precision differences; structural bugs would be
    # orders of magnitude larger).
    ref = cnn_reference(params, x)
    err = float(jnp.max(jnp.abs(out - ref)))
    assert err < 5e-2, f"max abs err vs lax.conv reference: {err}"
    print("KERNEL_OK")
</pallas_src>

<mosaic_0001>
module attributes {stable_mosaic.version = 11 : i64} {
  func.func @_cnn_fused_kernel(%arg0: i32, %arg1: memref<1x256x3xf32, #tpu.memory_space<vmem>>, %arg2: memref<3x12xf32, #tpu.memory_space<vmem>>, %arg3: memref<1x12xf32, #tpu.memory_space<vmem>>, %arg4: memref<3x3x12x12xf32, #tpu.memory_space<vmem>>, %arg5: memref<1x12xf32, #tpu.memory_space<vmem>>, %arg6: memref<3x3x12x12xf32, #tpu.memory_space<vmem>>, %arg7: memref<1x12xf32, #tpu.memory_space<vmem>>, %arg8: memref<3x3x1x12xf32, #tpu.memory_space<vmem>>, %arg9: memref<1x1xf32, #tpu.memory_space<vmem>>, %arg10: memref<1x256x1xf32, #tpu.memory_space<vmem>>, %arg11: memref<304x12xf32, #tpu.memory_space<vmem>>) attributes {dimension_semantics = [#tpu.dimension_semantics<parallel>], iteration_bounds = array<i64: 2>, scalar_prefetch = 0 : i64, scratch_operands = 1 : i64, tpu.core_type = #tpu.core_type<tc>, window_params = [{transform_indices = @transform_0, window_bounds = array<i64: 1, 256, 3>}, {pipeline_mode = #tpu.pipeline_mode<synchronous>, transform_indices = @transform_1, window_bounds = array<i64: 3, 12>}, {pipeline_mode = #tpu.pipeline_mode<synchronous>, transform_indices = @transform_2, window_bounds = array<i64: 1, 12>}, {pipeline_mode = #tpu.pipeline_mode<synchronous>, transform_indices = @transform_3, window_bounds = array<i64: 3, 3, 12, 12>}, {pipeline_mode = #tpu.pipeline_mode<synchronous>, transform_indices = @transform_4, window_bounds = array<i64: 1, 12>}, {pipeline_mode = #tpu.pipeline_mode<synchronous>, transform_indices = @transform_5, window_bounds = array<i64: 3, 3, 12, 12>}, {pipeline_mode = #tpu.pipeline_mode<synchronous>, transform_indices = @transform_6, window_bounds = array<i64: 1, 12>}, {pipeline_mode = #tpu.pipeline_mode<synchronous>, transform_indices = @transform_7, window_bounds = array<i64: 3, 3, 1, 12>}, {pipeline_mode = #tpu.pipeline_mode<synchronous>, transform_indices = @transform_8, window_bounds = array<i64: 1, 1>}, {transform_indices = @transform_9, window_bounds = array<i64: 1, 256, 1>}]} {
    %c0 = arith.constant 0 : index
    %c0_0 = arith.constant 0 : index
    %c0_1 = arith.constant 0 : index
    %0 = vector.load %arg1[%c0, %c0_0, %c0_1] : memref<1x256x3xf32, #tpu.memory_space<vmem>>, vector<1x256x3xf32>
    %1 = vector.shape_cast %0 : vector<1x256x3xf32> to vector<256x3xf32>
    %c0_2 = arith.constant 0 : index
    %c0_3 = arith.constant 0 : index
    %2 = vector.load %arg2[%c0_2, %c0_3] : memref<3x12xf32, #tpu.memory_space<vmem>>, vector<3x12xf32>
    %cst = arith.constant dense<0.000000e+00> : vector<256x12xf32>
    %3 = tpu.matmul %1, %2, %cst {dimension_numbers = #tpu.dot_dimension_numbers<[1], [0], [0], [1], [0, 0, 1, 1], [], []>} : vector<256x3xf32>, vector<3x12xf32>, vector<256x12xf32> -> vector<256x12xf32>
    %c0_4 = arith.constant 0 : index
    %c0_5 = arith.constant 0 : index
    %4 = vector.load %arg3[%c0_4, %c0_5] : memref<1x12xf32, #tpu.memory_space<vmem>>, vector<1x12xf32>
    %5 = vector.broadcast %4 : vector<1x12xf32> to vector<256x12xf32>
    %6 = arith.addf %3, %5 : vector<256x12xf32>
    %cst_6 = arith.constant 0.000000e+00 : f32
    %7 = vector.broadcast %cst_6 : f32 to vector<256x12xf32>
    %8 = arith.cmpf ogt, %6, %7 : vector<256x12xf32>
    %cst_7 = arith.constant 0.00999999977 : f32
    %9 = vector.broadcast %cst_7 : f32 to vector<256x12xf32>
    %10 = arith.mulf %9, %6 : vector<256x12xf32>
    %11 = arith.select %8, %6, %10 : vector<256x12xi1>, vector<256x12xf32>
    %12 = tpu.iota {dimensions = array<i32: 0>} : vector<256x1xi32>
    %c16_i32 = arith.constant 16 : i32
    %c0_i32 = arith.constant 0 : i32
    %13 = arith.cmpi eq, %c16_i32, %c0_i32 : i32
    %c1_i32 = arith.constant 1 : i32
    %14 = arith.select %13, %c1_i32, %c16_i32 : i32
    %15 = vector.broadcast %14 : i32 to vector<256x1xi32>
    %16 = arith.remsi %12, %15 : vector<256x1xi32>
    %c0_i32_8 = arith.constant 0 : i32
    %17 = vector.broadcast %c0_i32_8 : i32 to vector<256x1xi32>
    %18 = arith.cmpi ne, %16, %17 : vector<256x1xi32>
    %c0_i32_9 = arith.constant 0 : i32
    %19 = vector.broadcast %c0_i32_9 : i32 to vector<256x1xi32>
    %20 = arith.cmpi slt, %16, %19 : vector<256x1xi32>
    %c0_i32_10 = arith.constant 0 : i32
    %21 = arith.cmpi slt, %14, %c0_i32_10 : i32
    %22 = vector.broadcast %21 : i1 to vector<256x1xi1>
    %23 = vector.broadcast %22 : vector<256x1xi1> to vector<256x1xi1>
    %24 = arith.xori %20, %23 : vector<256x1xi1>
    %25 = arith.andi %24, %18 : vector<256x1xi1>
    %26 = vector.broadcast %14 : i32 to vector<256x1xi32>
    %27 = arith.addi %16, %26 : vector<256x1xi32>
    %28 = arith.select %25, %27, %16 : vector<256x1xi1>, vector<256x1xi32>
    %c1_i32_11 = arith.constant 1 : i32
    %29 = vector.broadcast %c1_i32_11 : i32 to vector<256x1xi32>
    %30 = arith.cmpi sge, %28, %29 : vector<256x1xi32>
    %31 = arith.extui %30 : vector<256x1xi1> to vector<256x1xi32>
    %32 = arith.sitofp %31 : vector<256x1xi32> to vector<256x1xf32>
    %c14_i32 = arith.constant 14 : i32
    %33 = vector.broadcast %c14_i32 : i32 to vector<256x1xi32>
    %34 = arith.cmpi sle, %28, %33 : vector<256x1xi32>
    %35 = arith.extui %34 : vector<256x1xi1> to vector<256x1xi32>
    %36 = arith.sitofp %35 : vector<256x1xi32> to vector<256x1xf32>
    %cst_12 = arith.constant 0.000000e+00 : f32
    %37 = vector.broadcast %cst_12 : f32 to vector<304x12xf32>
    %c0_13 = arith.constant 0 : index
    %c0_14 = arith.constant 0 : index
    %38 = vector.load %arg11[%c0_13, %c0_14] : memref<304x12xf32, #tpu.memory_space<vmem>>, vector<304x12xf32>
    tpu.vector_store %arg11[%c0_13, %c0_14], %37 {strides = array<i32>} : memref<304x12xf32, #tpu.memory_space<vmem>>, vector<304x12xf32>,
    %c24 = arith.constant 24 : index
    %c0_15 = arith.constant 0 : index
    %39 = vector.load %arg11[%c24, %c0_15] : memref<304x12xf32, #tpu.memory_space<vmem>>, vector<256x12xf32>
    tpu.vector_store %arg11[%c24, %c0_15], %11 {strides = array<i32>} : memref<304x12xf32, #tpu.memory_space<vmem>>, vector<256x12xf32>,
    %c7 = arith.constant 7 : index
    %c0_16 = arith.constant 0 : index
    %40 = vector.load %arg11[%c7, %c0_16] : memref<304x12xf32, #tpu.memory_space<vmem>>, vector<256x12xf32>
    %41 = vector.broadcast %32 : vector<256x1xf32> to vector<256x12xf32>
    %42 = arith.mulf %40, %41 : vector<256x12xf32>
    %c0_17 = arith.constant 0 : index
    %c0_18 = arith.constant 0 : index
    %c0_19 = arith.constant 0 : index
    %c0_20 = arith.constant 0 : index
    %43 = vector.load %arg4[%c0_17, %c0_18, %c0_19, %c0_20] : memref<3x3x12x12xf32, #tpu.memory_space<vmem>>, vector<1x1x12x12xf32>
    %44 = vector.shape_cast %43 : vector<1x1x12x12xf32> to vector<12x12xf32>
    %cst_21 = arith.constant dense<0.000000e+00> : vector<256x12xf32>
    %45 = tpu.matmul %42, %44, %cst_21 {dimension_numbers = #tpu.dot_dimension_numbers<[1], [0], [0], [1], [0, 0, 1, 1], [], []>} : vector<256x12xf32>, vector<12x12xf32>, vector<256x12xf32> -> vector<256x12xf32>
    %c8 = arith.constant 8 : index
    %c0_22 = arith.constant 0 : index
    %46 = vector.load %arg11[%c8, %c0_22] : memref<304x12xf32, #tpu.memory_space<vmem>>, vector<256x12xf32>
    %c0_23 = arith.constant 0 : index
    %c1 = arith.constant 1 : index
    %c0_24 = arith.constant 0 : index
    %c0_25 = arith.constant 0 : index
    %47 = vector.load %arg4[%c0_23, %c1, %c0_24, %c0_25] : memref<3x3x12x12xf32, #tpu.memory_space<vmem>>, vector<1x1x12x12xf32>
    %48 = vector.shape_cast %47 : vector<1x1x12x12xf32> to vector<12x12xf32>
    %cst_26 = arith.constant dense<0.000000e+00> : vector<256x12xf32>
    %49 = tpu.matmul %46, %48, %cst_26 {dimension_numbers = #tpu.dot_dimension_numbers<[1], [0], [0], [1], [0, 0, 1, 1], [], []>} : vector<256x12xf32>, vector<12x12xf32>, vector<256x12xf32> -> vector<256x12xf32>
    %50 = arith.addf %45, %49 : vector<256x12xf32>
    %c9 = arith.constant 9 : index
    %c0_27 = arith.constant 0 : index
    %51 = vector.load %arg11[%c9, %c0_27] : memref<304x12xf32, #tpu.memory_space<vmem>>, vector<256x12xf32>
    %52 = vector.broadcast %36 : vector<256x1xf32> to vector<256x12xf32>
    %53 = arith.mulf %51, %52 : vector<256x12xf32>
    %c0_28 = arith.constant 0 : index
    %c2 = arith.constant 2 : index
    %c0_29 = arith.constant 0 : index
    %c0_30 = arith.constant 0 : index
    %54 = vector.load %arg4[%c0_28, %c2, %c0_29, %c0_30] : memref<3x3x12x12xf32, #tpu.memory_space<vmem>>, vector<1x1x12x12xf32>
    %55 = vector.shape_cast %54 : vector<1x1x12x12xf32> to vector<12x12xf32>
    %cst_31 = arith.constant dense<0.000000e+00> : vector<256x12xf32>
    %56 = tpu.matmul %53, %55, %cst_31 {dimension_numbers = #tpu.dot_dimension_numbers<[1], [0], [0], [1], [0, 0, 1, 1], [], []>} : vector<256x12xf32>, vector<12x12xf32>, vector<256x12xf32> -> vector<256x12xf32>
    %57 = arith.addf %50, %56 : vector<256x12xf32>
    %c23 = arith.constant 23 : index
    %c0_32 = arith.constant 0 : index
    %58 = vector.load %arg11[%c23, %c0_32] : memref<304x12xf32, #tpu.memory_space<vmem>>, vector<256x12xf32>
    %59 = vector.broadcast %32 : vector<256x1xf32> to vector<256x12xf32>
    %60 = arith.mulf %58, %59 : vector<256x12xf32>
    %c1_33 = arith.constant 1 : index
    %c0_34 = arith.constant 0 : index
    %c0_35 = arith.constant 0 : index
    %c0_36 = arith.constant 0 : index
    %61 = vector.load %arg4[%c1_33, %c0_34, %c0_35, %c0_36] : memref<3x3x12x12xf32, #tpu.memory_space<vmem>>, vector<1x1x12x12xf32>
    %62 = vector.shape_cast %61 : vector<1x1x12x12xf32> to vector<12x12xf32>
    %cst_37 = arith.constant dense<0.000000e+00> : vector<256x12xf32>
    %63 = tpu.matmul %60, %62, %cst_37 {dimension_numbers = #tpu.dot_dimension_numbers<[1], [0], [0], [1], [0, 0, 1, 1], [], []>} : vector<256x12xf32>, vector<12x12xf32>, vector<256x12xf32> -> vector<256x12xf32>
    %64 = arith.addf %57, %63 : vector<256x12xf32>
    %c24_38 = arith.constant 24 : index
    %c0_39 = arith.constant 0 : index
    %65 = vector.load %arg11[%c24_38, %c0_39] : memref<304x12xf32, #tpu.memory_space<vmem>>, vector<256x12xf32>
    %c1_40 = arith.constant 1 : index
    %c1_41 = arith.constant 1 : index
    %c0_42 = arith.constant 0 : index
    %c0_43 = arith.constant 0 : index
    %66 = vector.load %arg4[%c1_40, %c1_41, %c0_42, %c0_43] : memref<3x3x12x12xf32, #tpu.memory_space<vmem>>, vector<1x1x12x12xf32>
    %67 = vector.shape_cast %66 : vector<1x1x12x12xf32> to vector<12x12xf32>
    %cst_44 = arith.constant dense<0.000000e+00> : vector<256x12xf32>
    %68 = tpu.matmul %65, %67, %cst_44 {dimension_numbers = #tpu.dot_dimension_numbers<[1], [0], [0], [1], [0, 0, 1, 1], [], []>} : vector<256x12xf32>, vector<12x12xf32>, vector<256x12xf32> -> vector<256x12xf32>
    %69 = arith.addf %64, %68 : vector<256x12xf32>
    %c25 = arith.constant 25 : index
    %c0_45 = arith.constant 0 : index
    %70 = vector.load %arg11[%c25, %c0_45] : memref<304x12xf32, #tpu.memory_space<vmem>>, vector<256x12xf32>
    %71 = vector.broadcast %36 : vector<256x1xf32> to vector<256x12xf32>
    %72 = arith.mulf %70, %71 : vector<256x12xf32>
    %c1_46 = arith.constant 1 : index
    %c2_47 = arith.constant 2 : index
    %c0_48 = arith.constant 0 : index
    %c0_49 = arith.constant 0 : index
    %73 = vector.load %arg4[%c1_46, %c2_47, %c0_48, %c0_49] : memref<3x3x12x12xf32, #tpu.memory_space<vmem>>, vector<1x1x12x12xf32>
    %74 = vector.shape_cast %73 : vector<1x1x12x12xf32> to vector<12x12xf32>
    %cst_50 = arith.constant dense<0.000000e+00> : vector<256x12xf32>
    %75 = tpu.matmul %72, %74, %cst_50 {dimension_numbers = #tpu.dot_dimension_numbers<[1], [0], [0], [1], [0, 0, 1, 1], [], []>} : vector<256x12xf32>, vector<12x12xf32>, vector<256x12xf32> -> vector<256x12xf32>
    %76 = arith.addf %69, %75 : vector<256x12xf32>
    %c39 = arith.constant 39 : index
    %c0_51 = arith.constant 0 : index
    %77 = vector.load %arg11[%c39, %c0_51] : memref<304x12xf32, #tpu.memory_space<vmem>>, vector<256x12xf32>
    %78 = vector.broadcast %32 : vector<256x1xf32> to vector<256x12xf32>
    %79 = arith.mulf %77, %78 : vector<256x12xf32>
    %c2_52 = arith.constant 2 : index
    %c0_53 = arith.constant 0 : index
    %c0_54 = arith.constant 0 : index
    %c0_55 = arith.constant 0 : index
    %80 = vector.load %arg4[%c2_52, %c0_53, %c0_54, %c0_55] : memref<3x3x12x12xf32, #tpu.memory_space<vmem>>, vector<1x1x12x12xf32>
    %81 = vector.shape_cast %80 : vector<1x1x12x12xf32> to vector<12x12xf32>
    %cst_56 = arith.constant dense<0.000000e+00> : vector<256x12xf32>
    %82 = tpu.matmul %79, %81, %cst_56 {dimension_numbers = #tpu.dot_dimension_numbers<[1], [0], [0], [1], [0, 0, 1, 1], [], []>} : vector<256x12xf32>, vector<12x12xf32>, vector<256x12xf32> -> vector<256x12xf32>
    %83 = arith.addf %76, %82 : vector<256x12xf32>
    %c40 = arith.constant 40 : index
    %c0_57 = arith.constant 0 : index
    %84 = vector.load %arg11[%c40, %c0_57] : memref<304x12xf32, #tpu.memory_space<vmem>>, vector<256x12xf32>
    %c2_58 = arith.constant 2 : index
    %c1_59 = arith.constant 1 : index
    %c0_60 = arith.constant 0 : index
    %c0_61 = arith.constant 0 : index
    %85 = vector.load %arg4[%c2_58, %c1_59, %c0_60, %c0_61] : memref<3x3x12x12xf32, #tpu.memory_space<vmem>>, vector<1x1x12x12xf32>
    %86 = vector.shape_cast %85 : vector<1x1x12x12xf32> to vector<12x12xf32>
    %cst_62 = arith.constant dense<0.000000e+00> : vector<256x12xf32>
    %87 = tpu.matmul %84, %86, %cst_62 {dimension_numbers = #tpu.dot_dimension_numbers<[1], [0], [0], [1], [0, 0, 1, 1], [], []>} : vector<256x12xf32>, vector<12x12xf32>, vector<256x12xf32> -> vector<256x12xf32>
    %88 = arith.addf %83, %87 : vector<256x12xf32>
    %c41 = arith.constant 41 : index
    %c0_63 = arith.constant 0 : index
    %89 = vector.load %arg11[%c41, %c0_63] : memref<304x12xf32, #tpu.memory_space<vmem>>, vector<256x12xf32>
    %90 = vector.broadcast %36 : vector<256x1xf32> to vector<256x12xf32>
    %91 = arith.mulf %89, %90 : vector<256x12xf32>
    %c2_64 = arith.constant 2 : index
    %c2_65 = arith.constant 2 : index
    %c0_66 = arith.constant 0 : index
    %c0_67 = arith.constant 0 : index
    %92 = vector.load %arg4[%c2_64, %c2_65, %c0_66, %c0_67] : memref<3x3x12x12xf32, #tpu.memory_space<vmem>>, vector<1x1x12x12xf32>
    %93 = vector.shape_cast %92 : vector<1x1x12x12xf32> to vector<12x12xf32>
    %cst_68 = arith.constant dense<0.000000e+00> : vector<256x12xf32>
    %94 = tpu.matmul %91, %93, %cst_68 {dimension_numbers = #tpu.dot_dimension_numbers<[1], [0], [0], [1], [0, 0, 1, 1], [], []>} : vector<256x12xf32>, vector<12x12xf32>, vector<256x12xf32> -> vector<256x12xf32>
    %95 = arith.addf %88, %94 : vector<256x12xf32>
    %c0_69 = arith.constant 0 : index
    %c0_70 = arith.constant 0 : index
    %96 = vector.load %arg5[%c0_69, %c0_70] : memref<1x12xf32, #tpu.memory_space<vmem>>, vector<1x12xf32>
    %97 = vector.broadcast %96 : vector<1x12xf32> to vector<256x12xf32>
    %98 = arith.addf %95, %97 : vector<256x12xf32>
    %cst_71 = arith.constant 0.000000e+00 : f32
    %99 = vector.broadcast %cst_71 : f32 to vector<256x12xf32>
    %100 = arith.cmpf ogt, %98, %99 : vector<256x12xf32>
    %cst_72 = arith.constant 0.00999999977 : f32
    %101 = vector.broadcast %cst_72 : f32 to vector<256x12xf32>
    %102 = arith.mulf %101, %98 : vector<256x12xf32>
    %103 = arith.select %100, %98, %102 : vector<256x12xi1>, vector<256x12xf32>
    %c24_73 = arith.constant 24 : index
    %c0_74 = arith.constant 0 : index
    %104 = vector.load %arg11[%c24_73, %c0_74] : memref<304x12xf32, #tpu.memory_space<vmem>>, vector<256x12xf32>
    tpu.vector_store %arg11[%c24_73, %c0_74], %103 {strides = array<i32>} : memref<304x12xf32, #tpu.memory_space<vmem>>, vector<256x12xf32>,
    %c7_75 = arith.constant 7 : index
    %c0_76 = arith.constant 0 : index
    %105 = vector.load %arg11[%c7_75, %c0_76] : memref<304x12xf32, #tpu.memory_space<vmem>>, vector<256x12xf32>
    %106 = vector.broadcast %32 : vector<256x1xf32> to vector<256x12xf32>
    %107 = arith.mulf %105, %106 : vector<256x12xf32>
    %c0_77 = arith.constant 0 : index
    %c0_78 = arith.constant 0 : index
    %c0_79 = arith.constant 0 : index
    %c0_80 = arith.constant 0 : index
    %108 = vector.load %arg6[%c0_77, %c0_78, %c0_79, %c0_80] : memref<3x3x12x12xf32, #tpu.memory_space<vmem>>, vector<1x1x12x12xf32>
    %109 = vector.shape_cast %108 : vector<1x1x12x12xf32> to vector<12x12xf32>
    %cst_81 = arith.constant dense<0.000000e+00> : vector<256x12xf32>
    %110 = tpu.matmul %107, %109, %cst_81 {dimension_numbers = #tpu.dot_dimension_numbers<[1], [0], [0], [1], [0, 0, 1, 1], [], []>} : vector<256x12xf32>, vector<12x12xf32>, vector<256x12xf32> -> vector<256x12xf32>
    %c8_82 = arith.constant 8 : index
    %c0_83 = arith.constant 0 : index
    %111 = vector.load %arg11[%c8_82, %c0_83] : memref<304x12xf32, #tpu.memory_space<vmem>>, vector<256x12xf32>
    %c0_84 = arith.constant 0 : index
    %c1_85 = arith.constant 1 : index
    %c0_86 = arith.constant 0 : index
    %c0_87 = arith.constant 0 : index
    %112 = vector.load %arg6[%c0_84, %c1_85, %c0_86, %c0_87] : memref<3x3x12x12xf32, #tpu.memory_space<vmem>>, vector<1x1x12x12xf32>
    %113 = vector.shape_cast %112 : vector<1x1x12x12xf32> to vector<12x12xf32>
    %cst_88 = arith.constant dense<0.000000e+00> : vector<256x12xf32>
    %114 = tpu.matmul %111, %113, %cst_88 {dimension_numbers = #tpu.dot_dimension_numbers<[1], [0], [0], [1], [0, 0, 1, 1], [], []>} : vector<256x12xf32>, vector<12x12xf32>, vector<256x12xf32> -> vector<256x12xf32>
    %115 = arith.addf %110, %114 : vector<256x12xf32>
    %c9_89 = arith.constant 9 : index
    %c0_90 = arith.constant 0 : index
    %116 = vector.load %arg11[%c9_89, %c0_90] : memref<304x12xf32, #tpu.memory_space<vmem>>, vector<256x12xf32>
    %117 = vector.broadcast %36 : vector<256x1xf32> to vector<256x12xf32>
    %118 = arith.mulf %116, %117 : vector<256x12xf32>
    %c0_91 = arith.constant 0 : index
    %c2_92 = arith.constant 2 : index
    %c0_93 = arith.constant 0 : index
    %c0_94 = arith.constant 0 : index
    %119 = vector.load %arg6[%c0_91, %c2_92, %c0_93, %c0_94] : memref<3x3x12x12xf32, #tpu.memory_space<vmem>>, vector<1x1x12x12xf32>
    %120 = vector.shape_cast %119 : vector<1x1x12x12xf32> to vector<12x12xf32>
    %cst_95 = arith.constant dense<0.000000e+00> : vector<256x12xf32>
    %121 = tpu.matmul %118, %120, %cst_95 {dimension_numbers = #tpu.dot_dimension_numbers<[1], [0], [0], [1], [0, 0, 1, 1], [], []>} : vector<256x12xf32>, vector<12x12xf32>, vector<256x12xf32> -> vector<256x12xf32>
    %122 = arith.addf %115, %121 : vector<256x12xf32>
    %c23_96 = arith.constant 23 : index
    %c0_97 = arith.constant 0 : index
    %123 = vector.load %arg11[%c23_96, %c0_97] : memref<304x12xf32, #tpu.memory_space<vmem>>, vector<256x12xf32>
    %124 = vector.broadcast %32 : vector<256x1xf32> to vector<256x12xf32>
    %125 = arith.mulf %123, %124 : vector<256x12xf32>
    %c1_98 = arith.constant 1 : index
    %c0_99 = arith.constant 0 : index
    %c0_100 = arith.constant 0 : index
    %c0_101 = arith.constant 0 : index
    %126 = vector.load %arg6[%c1_98, %c0_99, %c0_100, %c0_101] : memref<3x3x12x12xf32, #tpu.memory_space<vmem>>, vector<1x1x12x12xf32>
    %127 = vector.shape_cast %126 : vector<1x1x12x12xf32> to vector<12x12xf32>
    %cst_102 = arith.constant dense<0.000000e+00> : vector<256x12xf32>
    %128 = tpu.matmul %125, %127, %cst_102 {dimension_numbers = #tpu.dot_dimension_numbers<[1], [0], [0], [1], [0, 0, 1, 1], [], []>} : vector<256x12xf32>, vector<12x12xf32>, vector<256x12xf32> -> vector<256x12xf32>
    %129 = arith.addf %122, %128 : vector<256x12xf32>
    %c24_103 = arith.constant 24 : index
    %c0_104 = arith.constant 0 : index
    %130 = vector.load %arg11[%c24_103, %c0_104] : memref<304x12xf32, #tpu.memory_space<vmem>>, vector<256x12xf32>
    %c1_105 = arith.constant 1 : index
    %c1_106 = arith.constant 1 : index
    %c0_107 = arith.constant 0 : index
    %c0_108 = arith.constant 0 : index
    %131 = vector.load %arg6[%c1_105, %c1_106, %c0_107, %c0_108] : memref<3x3x12x12xf32, #tpu.memory_space<vmem>>, vector<1x1x12x12xf32>
    %132 = vector.shape_cast %131 : vector<1x1x12x12xf32> to vector<12x12xf32>
    %cst_109 = arith.constant dense<0.000000e+00> : vector<256x12xf32>
    %133 = tpu.matmul %130, %132, %cst_109 {dimension_numbers = #tpu.dot_dimension_numbers<[1], [0], [0], [1], [0, 0, 1, 1], [], []>} : vector<256x12xf32>, vector<12x12xf32>, vector<256x12xf32> -> vector<256x12xf32>
    %134 = arith.addf %129, %133 : vector<256x12xf32>
    %c25_110 = arith.constant 25 : index
    %c0_111 = arith.constant 0 : index
    %135 = vector.load %arg11[%c25_110, %c0_111] : memref<304x12xf32, #tpu.memory_space<vmem>>, vector<256x12xf32>
    %136 = vector.broadcast %36 : vector<256x1xf32> to vector<256x12xf32>
    %137 = arith.mulf %135, %136 : vector<256x12xf32>
    %c1_112 = arith.constant 1 : index
    %c2_113 = arith.constant 2 : index
    %c0_114 = arith.constant 0 : index
    %c0_115 = arith.constant 0 : index
    %138 = vector.load %arg6[%c1_112, %c2_113, %c0_114, %c0_115] : memref<3x3x12x12xf32, #tpu.memory_space<vmem>>, vector<1x1x12x12xf32>
    %139 = vector.shape_cast %138 : vector<1x1x12x12xf32> to vector<12x12xf32>
    %cst_116 = arith.constant dense<0.000000e+00> : vector<256x12xf32>
    %140 = tpu.matmul %137, %139, %cst_116 {dimension_numbers = #tpu.dot_dimension_numbers<[1], [0], [0], [1], [0, 0, 1, 1], [], []>} : vector<256x12xf32>, vector<12x12xf32>, vector<256x12xf32> -> vector<256x12xf32>
    %141 = arith.addf %134, %140 : vector<256x12xf32>
    %c39_117 = arith.constant 39 : index
    %c0_118 = arith.constant 0 : index
    %142 = vector.load %arg11[%c39_117, %c0_118] : memref<304x12xf32, #tpu.memory_space<vmem>>, vector<256x12xf32>
    %143 = vector.broadcast %32 : vector<256x1xf32> to vector<256x12xf32>
    %144 = arith.mulf %142, %143 : vector<256x12xf32>
    %c2_119 = arith.constant 2 : index
    %c0_120 = arith.constant 0 : index
    %c0_121 = arith.constant 0 : index
    %c0_122 = arith.constant 0 : index
    %145 = vector.load %arg6[%c2_119, %c0_120, %c0_121, %c0_122] : memref<3x3x12x12xf32, #tpu.memory_space<vmem>>, vector<1x1x12x12xf32>
    %146 = vector.shape_cast %145 : vector<1x1x12x12xf32> to vector<12x12xf32>
    %cst_123 = arith.constant dense<0.000000e+00> : vector<256x12xf32>
    %147 = tpu.matmul %144, %146, %cst_123 {dimension_numbers = #tpu.dot_dimension_numbers<[1], [0], [0], [1], [0, 0, 1, 1], [], []>} : vector<256x12xf32>, vector<12x12xf32>, vector<256x12xf32> -> vector<256x12xf32>
    %148 = arith.addf %141, %147 : vector<256x12xf32>
    %c40_124 = arith.constant 40 : index
    %c0_125 = arith.constant 0 : index
    %149 = vector.load %arg11[%c40_124, %c0_125] : memref<304x12xf32, #tpu.memory_space<vmem>>, vector<256x12xf32>
    %c2_126 = arith.constant 2 : index
    %c1_127 = arith.constant 1 : index
    %c0_128 = arith.constant 0 : index
    %c0_129 = arith.constant 0 : index
    %150 = vector.load %arg6[%c2_126, %c1_127, %c0_128, %c0_129] : memref<3x3x12x12xf32, #tpu.memory_space<vmem>>, vector<1x1x12x12xf32>
    %151 = vector.shape_cast %150 : vector<1x1x12x12xf32> to vector<12x12xf32>
    %cst_130 = arith.constant dense<0.000000e+00> : vector<256x12xf32>
    %152 = tpu.matmul %149, %151, %cst_130 {dimension_numbers = #tpu.dot_dimension_numbers<[1], [0], [0], [1], [0, 0, 1, 1], [], []>} : vector<256x12xf32>, vector<12x12xf32>, vector<256x12xf32> -> vector<256x12xf32>
    %153 = arith.addf %148, %152 : vector<256x12xf32>
    %c41_131 = arith.constant 41 : index
    %c0_132 = arith.constant 0 : index
    %154 = vector.load %arg11[%c41_131, %c0_132] : memref<304x12xf32, #tpu.memory_space<vmem>>, vector<256x12xf32>
    %155 = vector.broadcast %36 : vector<256x1xf32> to vector<256x12xf32>
    %156 = arith.mulf %154, %155 : vector<256x12xf32>
    %c2_133 = arith.constant 2 : index
    %c2_134 = arith.constant 2 : index
    %c0_135 = arith.constant 0 : index
    %c0_136 = arith.constant 0 : index
    %157 = vector.load %arg6[%c2_133, %c2_134, %c0_135, %c0_136] : memref<3x3x12x12xf32, #tpu.memory_space<vmem>>, vector<1x1x12x12xf32>
    %158 = vector.shape_cast %157 : vector<1x1x12x12xf32> to vector<12x12xf32>
    %cst_137 = arith.constant dense<0.000000e+00> : vector<256x12xf32>
    %159 = tpu.matmul %156, %158, %cst_137 {dimension_numbers = #tpu.dot_dimension_numbers<[1], [0], [0], [1], [0, 0, 1, 1], [], []>} : vector<256x12xf32>, vector<12x12xf32>, vector<256x12xf32> -> vector<256x12xf32>
    %160 = arith.addf %153, %159 : vector<256x12xf32>
    %c0_138 = arith.constant 0 : index
    %c0_139 = arith.constant 0 : index
    %161 = vector.load %arg7[%c0_138, %c0_139] : memref<1x12xf32, #tpu.memory_space<vmem>>, vector<1x12xf32>
    %162 = vector.broadcast %161 : vector<1x12xf32> to vector<256x12xf32>
    %163 = arith.addf %160, %162 : vector<256x12xf32>
    %cst_140 = arith.constant 0.000000e+00 : f32
    %164 = vector.broadcast %cst_140 : f32 to vector<256x12xf32>
    %165 = arith.cmpf ogt, %163, %164 : vector<256x12xf32>
    %cst_141 = arith.constant 0.00999999977 : f32
    %166 = vector.broadcast %cst_141 : f32 to vector<256x12xf32>
    %167 = arith.mulf %166, %163 : vector<256x12xf32>
    %168 = arith.select %165, %163, %167 : vector<256x12xi1>, vector<256x12xf32>
    %c24_142 = arith.constant 24 : index
    %c0_143 = arith.constant 0 : index
    %169 = vector.load %arg11[%c24_142, %c0_143] : memref<304x12xf32, #tpu.memory_space<vmem>>, vector<256x12xf32>
    tpu.vector_store %arg11[%c24_142, %c0_143], %168 {strides = array<i32>} : memref<304x12xf32, #tpu.memory_space<vmem>>, vector<256x12xf32>,
    %c7_144 = arith.constant 7 : index
    %c0_145 = arith.constant 0 : index
    %170 = vector.load %arg11[%c7_144, %c0_145] : memref<304x12xf32, #tpu.memory_space<vmem>>, vector<256x12xf32>
    %171 = vector.broadcast %32 : vector<256x1xf32> to vector<256x12xf32>
    %172 = arith.mulf %170, %171 : vector<256x12xf32>
    %c0_146 = arith.constant 0 : index
    %c0_147 = arith.constant 0 : index
    %c0_148 = arith.constant 0 : index
    %c0_149 = arith.constant 0 : index
    %173 = vector.load %arg8[%c0_146, %c0_147, %c0_148, %c0_149] : memref<3x3x1x12xf32, #tpu.memory_space<vmem>>, vector<1x1x1x12xf32>
    %174 = vector.shape_cast %173 : vector<1x1x1x12xf32> to vector<1x12xf32>
    %175 = vector.broadcast %174 : vector<1x12xf32> to vector<256x12xf32>
    %176 = arith.mulf %172, %175 : vector<256x12xf32>
    %c8_150 = arith.constant 8 : index
    %c0_151 = arith.constant 0 : index
    %177 = vector.load %arg11[%c8_150, %c0_151] : memref<304x12xf32, #tpu.memory_space<vmem>>, vector<256x12xf32>
    %c0_152 = arith.constant 0 : index
    %c1_153 = arith.constant 1 : index
    %c0_154 = arith.constant 0 : index
    %c0_155 = arith.constant 0 : index
    %178 = vector.load %arg8[%c0_152, %c1_153, %c0_154, %c0_155] : memref<3x3x1x12xf32, #tpu.memory_space<vmem>>, vector<1x1x1x12xf32>
    %179 = vector.shape_cast %178 : vector<1x1x1x12xf32> to vector<1x12xf32>
    %180 = vector.broadcast %179 : vector<1x12xf32> to vector<256x12xf32>
    %181 = arith.mulf %177, %180 : vector<256x12xf32>
    %182 = arith.addf %176, %181 : vector<256x12xf32>
    %c9_156 = arith.constant 9 : index
    %c0_157 = arith.constant 0 : index
    %183 = vector.load %arg11[%c9_156, %c0_157] : memref<304x12xf32, #tpu.memory_space<vmem>>, vector<256x12xf32>
    %184 = vector.broadcast %36 : vector<256x1xf32> to vector<256x12xf32>
    %185 = arith.mulf %183, %184 : vector<256x12xf32>
    %c0_158 = arith.constant 0 : index
    %c2_159 = arith.constant 2 : index
    %c0_160 = arith.constant 0 : index
    %c0_161 = arith.constant 0 : index
    %186 = vector.load %arg8[%c0_158, %c2_159, %c0_160, %c0_161] : memref<3x3x1x12xf32, #tpu.memory_space<vmem>>, vector<1x1x1x12xf32>
    %187 = vector.shape_cast %186 : vector<1x1x1x12xf32> to vector<1x12xf32>
    %188 = vector.broadcast %187 : vector<1x12xf32> to vector<256x12xf32>
    %189 = arith.mulf %185, %188 : vector<256x12xf32>
    %190 = arith.addf %182, %189 : vector<256x12xf32>
    %c23_162 = arith.constant 23 : index
    %c0_163 = arith.constant 0 : index
    %191 = vector.load %arg11[%c23_162, %c0_163] : memref<304x12xf32, #tpu.memory_space<vmem>>, vector<256x12xf32>
    %192 = vector.broadcast %32 : vector<256x1xf32> to vector<256x12xf32>
    %193 = arith.mulf %191, %192 : vector<256x12xf32>
    %c1_164 = arith.constant 1 : index
    %c0_165 = arith.constant 0 : index
    %c0_166 = arith.constant 0 : index
    %c0_167 = arith.constant 0 : index
    %194 = vector.load %arg8[%c1_164, %c0_165, %c0_166, %c0_167] : memref<3x3x1x12xf32, #tpu.memory_space<vmem>>, vector<1x1x1x12xf32>
    %195 = vector.shape_cast %194 : vector<1x1x1x12xf32> to vector<1x12xf32>
    %196 = vector.broadcast %195 : vector<1x12xf32> to vector<256x12xf32>
    %197 = arith.mulf %193, %196 : vector<256x12xf32>
    %198 = arith.addf %190, %197 : vector<256x12xf32>
    %c24_168 = arith.constant 24 : index
    %c0_169 = arith.constant 0 : index
    %199 = vector.load %arg11[%c24_168, %c0_169] : memref<304x12xf32, #tpu.memory_space<vmem>>, vector<256x12xf32>
    %c1_170 = arith.constant 1 : index
    %c1_171 = arith.constant 1 : index
    %c0_172 = arith.constant 0 : index
    %c0_173 = arith.constant 0 : index
    %200 = vector.load %arg8[%c1_170, %c1_171, %c0_172, %c0_173] : memref<3x3x1x12xf32, #tpu.memory_space<vmem>>, vector<1x1x1x12xf32>
    %201 = vector.shape_cast %200 : vector<1x1x1x12xf32> to vector<1x12xf32>
    %202 = vector.broadcast %201 : vector<1x12xf32> to vector<256x12xf32>
    %203 = arith.mulf %199, %202 : vector<256x12xf32>
    %204 = arith.addf %198, %203 : vector<256x12xf32>
    %c25_174 = arith.constant 25 : index
    %c0_175 = arith.constant 0 : index
    %205 = vector.load %arg11[%c25_174, %c0_175] : memref<304x12xf32, #tpu.memory_space<vmem>>, vector<256x12xf32>
    %206 = vector.broadcast %36 : vector<256x1xf32> to vector<256x12xf32>
    %207 = arith.mulf %205, %206 : vector<256x12xf32>
    %c1_176 = arith.constant 1 : index
    %c2_177 = arith.constant 2 : index
    %c0_178 = arith.constant 0 : index
    %c0_179 = arith.constant 0 : index
    %208 = vector.load %arg8[%c1_176, %c2_177, %c0_178, %c0_179] : memref<3x3x1x12xf32, #tpu.memory_space<vmem>>, vector<1x1x1x12xf32>
    %209 = vector.shape_cast %208 : vector<1x1x1x12xf32> to vector<1x12xf32>
    %210 = vector.broadcast %209 : vector<1x12xf32> to vector<256x12xf32>
    %211 = arith.mulf %207, %210 : vector<256x12xf32>
    %212 = arith.addf %204, %211 : vector<256x12xf32>
    %c39_180 = arith.constant 39 : index
    %c0_181 = arith.constant 0 : index
    %213 = vector.load %arg11[%c39_180, %c0_181] : memref<304x12xf32, #tpu.memory_space<vmem>>, vector<256x12xf32>
    %214 = vector.broadcast %32 : vector<256x1xf32> to vector<256x12xf32>
    %215 = arith.mulf %213, %214 : vector<256x12xf32>
    %c2_182 = arith.constant 2 : index
    %c0_183 = arith.constant 0 : index
    %c0_184 = arith.constant 0 : index
    %c0_185 = arith.constant 0 : index
    %216 = vector.load %arg8[%c2_182, %c0_183, %c0_184, %c0_185] : memref<3x3x1x12xf32, #tpu.memory_space<vmem>>, vector<1x1x1x12xf32>
    %217 = vector.shape_cast %216 : vector<1x1x1x12xf32> to vector<1x12xf32>
    %218 = vector.broadcast %217 : vector<1x12xf32> to vector<256x12xf32>
    %219 = arith.mulf %215, %218 : vector<256x12xf32>
    %220 = arith.addf %212, %219 : vector<256x12xf32>
    %c40_186 = arith.constant 40 : index
    %c0_187 = arith.constant 0 : index
    %221 = vector.load %arg11[%c40_186, %c0_187] : memref<304x12xf32, #tpu.memory_space<vmem>>, vector<256x12xf32>
    %c2_188 = arith.constant 2 : index
    %c1_189 = arith.constant 1 : index
    %c0_190 = arith.constant 0 : index
    %c0_191 = arith.constant 0 : index
    %222 = vector.load %arg8[%c2_188, %c1_189, %c0_190, %c0_191] : memref<3x3x1x12xf32, #tpu.memory_space<vmem>>, vector<1x1x1x12xf32>
    %223 = vector.shape_cast %222 : vector<1x1x1x12xf32> to vector<1x12xf32>
    %224 = vector.broadcast %223 : vector<1x12xf32> to vector<256x12xf32>
    %225 = arith.mulf %221, %224 : vector<256x12xf32>
    %226 = arith.addf %220, %225 : vector<256x12xf32>
    %c41_192 = arith.constant 41 : index
    %c0_193 = arith.constant 0 : index
    %227 = vector.load %arg11[%c41_192, %c0_193] : memref<304x12xf32, #tpu.memory_space<vmem>>, vector<256x12xf32>
    %228 = vector.broadcast %36 : vector<256x1xf32> to vector<256x12xf32>
    %229 = arith.mulf %227, %228 : vector<256x12xf32>
    %c2_194 = arith.constant 2 : index
    %c2_195 = arith.constant 2 : index
    %c0_196 = arith.constant 0 : index
    %c0_197 = arith.constant 0 : index
    %230 = vector.load %arg8[%c2_194, %c2_195, %c0_196, %c0_197] : memref<3x3x1x12xf32, #tpu.memory_space<vmem>>, vector<1x1x1x12xf32>
    %231 = vector.shape_cast %230 : vector<1x1x1x12xf32> to vector<1x12xf32>
    %232 = vector.broadcast %231 : vector<1x12xf32> to vector<256x12xf32>
    %233 = arith.mulf %229, %232 : vector<256x12xf32>
    %234 = arith.addf %226, %233 : vector<256x12xf32>
    %cst_198 = arith.constant dense<0.000000e+00> : vector<256xf32>
    %235 = vector.multi_reduction <add>, %234, %cst_198 [1] : vector<256x12xf32> to vector<256xf32>
    %236 = vector.shape_cast %235 : vector<256xf32> to vector<256x1xf32>
    %c0_199 = arith.constant 0 : index
    %c0_200 = arith.constant 0 : index
    %237 = vector.load %arg9[%c0_199, %c0_200] : memref<1x1xf32, #tpu.memory_space<vmem>>, vector<1x1xf32>
    %238 = vector.broadcast %237 : vector<1x1xf32> to vector<256x1xf32>
    %239 = arith.addf %236, %238 : vector<256x1xf32>
    %cst_201 = arith.constant 0.000000e+00 : f32
    %240 = vector.broadcast %cst_201 : f32 to vector<256x1xf32>
    %241 = arith.maximumf %239, %240 : vector<256x1xf32>
    %c0_202 = arith.constant 0 : index
    %c0_203 = arith.constant 0 : index
    %c0_204 = arith.constant 0 : index
    %242 = vector.load %arg10[%c0_202, %c0_203, %c0_204] : memref<1x256x1xf32, #tpu.memory_space<vmem>>, vector<1x256x1xf32>
    %243 = vector.shape_cast %242 : vector<1x256x1xf32> to vector<256x1xf32>
    %244 = vector.shape_cast %241 : vector<256x1xf32> to vector<1x256x1xf32>
    tpu.vector_store %arg10[%c0_202, %c0_203, %c0_204], %244 {strides = array<i32>} : memref<1x256x1xf32, #tpu.memory_space<vmem>>, vector<1x256x1xf32>,
    return
  }
  func.func @transform_0(%arg0: i32) -> (i32, i32, i32) {
    %c0_i32 = arith.constant 0 : i32
    %c0_i32_0 = arith.constant 0 : i32
    %c0_i32_1 = arith.constant 0 : i32
    return %arg0, %c0_i32, %c0_i32_0 : i32, i32, i32
  }
  func.func @transform_1(%arg0: i32) -> (i32, i32) {
    %c0_i32 = arith.constant 0 : i32
    %c0_i32_0 = arith.constant 0 : i32
    %c0_i32_1 = arith.constant 0 : i32
    return %c0_i32, %c0_i32_0 : i32, i32
  }
  func.func @transform_2(%arg0: i32) -> (i32, i32) {
    %c0_i32 = arith.constant 0 : i32
    %c0_i32_0 = arith.constant 0 : i32
    %c0_i32_1 = arith.constant 0 : i32
    return %c0_i32, %c0_i32_0 : i32, i32
  }
  func.func @transform_3(%arg0: i32) -> (i32, i32, i32, i32) {
    %c0_i32 = arith.constant 0 : i32
    %c0_i32_0 = arith.constant 0 : i32
    %c0_i32_1 = arith.constant 0 : i32
    %c0_i32_2 = arith.constant 0 : i32
    %c0_i32_3 = arith.constant 0 : i32
    return %c0_i32, %c0_i32_0, %c0_i32_1, %c0_i32_2 : i32, i32, i32, i32
  }
  func.func @transform_4(%arg0: i32) -> (i32, i32) {
    %c0_i32 = arith.constant 0 : i32
    %c0_i32_0 = arith.constant 0 : i32
    %c0_i32_1 = arith.constant 0 : i32
    return %c0_i32, %c0_i32_0 : i32, i32
  }
  func.func @transform_5(%arg0: i32) -> (i32, i32, i32, i32) {
    %c0_i32 = arith.constant 0 : i32
    %c0_i32_0 = arith.constant 0 : i32
    %c0_i32_1 = arith.constant 0 : i32
    %c0_i32_2 = arith.constant 0 : i32
    %c0_i32_3 = arith.constant 0 : i32
    return %c0_i32, %c0_i32_0, %c0_i32_1, %c0_i32_2 : i32, i32, i32, i32
  }
  func.func @transform_6(%arg0: i32) -> (i32, i32) {
    %c0_i32 = arith.constant 0 : i32
    %c0_i32_0 = arith.constant 0 : i32
    %c0_i32_1 = arith.constant 0 : i32
    return %c0_i32, %c0_i32_0 : i32, i32
  }
  func.func @transform_7(%arg0: i32) -> (i32, i32, i32, i32) {
    %c0_i32 = arith.constant 0 : i32
    %c0_i32_0 = arith.constant 0 : i32
    %c0_i32_1 = arith.constant 0 : i32
    %c0_i32_2 = arith.constant 0 : i32
    %c0_i32_3 = arith.constant 0 : i32
    return %c0_i32, %c0_i32_0, %c0_i32_1, %c0_i32_2 : i32, i32, i32, i32
  }
  func.func @transform_8(%arg0: i32) -> (i32, i32) {
    %c0_i32 = arith.constant 0 : i32
    %c0_i32_0 = arith.constant 0 : i32
    %c0_i32_1 = arith.constant 0 : i32
    return %c0_i32, %c0_i32_0 : i32, i32
  }
  func.func @transform_9(%arg0: i32) -> (i32, i32, i32) {
    %c0_i32 = arith.constant 0 : i32
    %c0_i32_0 = arith.constant 0 : i32
    %c0_i32_1 = arith.constant 0 : i32
    return %arg0, %c0_i32, %c0_i32_0 : i32, i32, i32
  }
}

</mosaic_0001>

<llo_original>
// kernel: cnn_forward.1
$region0: #{cnn_forward.1}
  #allocation0 [shape = 'u32[]', space=smem, size = 0x4, offset = 0x4, fixed_abs, tag = 'smem constant byte address 0x4 - core index']
  #allocation1 [shape = 'u32[144,128]{1,0:T(1,128)}', space=vmem, size = 0x12000, scoped, tag = 'internal scratch']
  #allocation2 [shape = 'f32[304,12]{1,0:T(8,128)}', space=vmem, size = 0x26000, scoped, tag = 'scratch operand']
  #allocation3 [shape = 'f32[1,1]{1,0:T(1,128)S(1)}', space=vmem, size = 0x200, scoped, tag = 'scoped memory for cnn_forward.1']
  %s0 = inlined_call_operand.vmem [shape: f32[2,256,3], index: 0, kind: input, shape index: {}]
  %s1 = inlined_call_operand.vmem [shape: f32[3,12], index: 1, kind: input, shape index: {}]
  %s2 = inlined_call_operand.vmem [shape: f32[1,12], index: 2, kind: input, shape index: {}]
  %s3 = inlined_call_operand.vmem [shape: f32[3,3,12,12], index: 3, kind: input, shape index: {}]
  %s4 = inlined_call_operand.vmem [shape: f32[1,12], index: 4, kind: input, shape index: {}]
  %s5 = inlined_call_operand.vmem [shape: f32[3,3,12,12], index: 5, kind: input, shape index: {}]
  %s6 = inlined_call_operand.vmem [shape: f32[1,12], index: 6, kind: input, shape index: {}]
  %s7 = inlined_call_operand.vmem [shape: f32[3,3,1,12], index: 7, kind: input, shape index: {}]
  %s8 = inlined_call_operand.<no memory space> [shape: f32[1,1], index: 8, kind: input, shape index: {}]
  %s9 = inlined_call_operand.vmem [shape: f32[2,256,1], index: 9, kind: output, shape index: {}]
  %s10 = sld [smem:[#allocation0]]
  $region69: #{cnn_forward.1} parent=0
    _
  %s12 = ssub.s32 1, %s10
  %s13 = scalar_select 0, %s12, %s10
  %v14 = vstv %s8
  %15 = vst [vmem:[#allocation3] sm:$0x1] %v14
  loop: start=0, step=1, limit=4
  $region2: #{cnn_forward.1} parent=0 // loop_pre_header
    _
  $region3: #{cnn_forward.1} parent=0 // loop_header
    %s17 = sphi 0, %s21
    %p18 = scmp.ge.s32.totalorder %s17, 4
    %s27 = sphi 0, %s29
    %s30 = sphi 0, %s27
    %s31 = sphi 0, %s30
    %s47 = sphi 0, %s31
    %s51 = sphi 0, %s51
    %s53 = sphi 0, %s51
    %s54 = sphi 0, %s53
    %s68 = sphi 0, %s54
    %s72 = sphi 0, %s72
    %s74 = sphi 0, %s72
    %s75 = sphi 0, %s74
    %s89 = sphi 0, %s75
    %s93 = sphi 0, %s93
    %s95 = sphi 0, %s93
    %s96 = sphi 0, %s95
    %s110 = sphi 0, %s96
    %s114 = sphi 0, %s114
    %s116 = sphi 0, %s114
    %s117 = sphi 0, %s116
    %s131 = sphi 0, %s117
    %s135 = sphi 0, %s135
    %s137 = sphi 0, %s135
    %s138 = sphi 0, %s137
    %s152 = sphi 0, %s138
    %s156 = sphi 0, %s156
    %s158 = sphi 0, %s156
    %s159 = sphi 0, %s158
    %s173 = sphi 0, %s159
    %s177 = sphi 0, %s177
    %s179 = sphi 0, %s177
    %s180 = sphi 0, %s179
    %s194 = sphi 0, %s180
    %s198 = sphi 0, %s198
    %s200 = sphi 0, %s198
    %s201 = sphi 0, %s200
    %s215 = sphi 0, %s201
    %s221 = sphi 0, %s223
    %s224 = sphi 0, %s221
    %s225 = sphi 0, %s224
    %s241 = sphi 0, %s225
  $region4: #{cnn_forward.1} parent=0 // loop_header_branch
    %20 = sbr.rel (%p18) target = $region8
  $region5: #{cnn_forward.1} parent=0 // loop_body
    %s22 = ssub.s32 %s17, 1
    %s23 = ssub.s32 %s17, 2
    %s24 = sadd.s32 %s17, 1
    %s25 = ssub.s32 %s17, %s24
    %p26 = scmp.eq.s32.totalorder %s25, 0
    %s28 = sadd.s32 %s27, 1
    %s29 = scalar_select %p26, %s27, %s28
    %p32 = pneg %p26
    %p33 = scmp.eq.s32.totalorder %s17, 1
    %p34 = por %p32, %p33
    %p35 = scmp.ne.s32.totalorder %s27, %s30
    %p36 = scmp.eq.s32.totalorder %s17, 0
    %p37 = por %p35, %p36
    %p38 = scmp.ne.s32.totalorder %s27, %s30
    %p39 = scmp.eq.s32.totalorder %s22, 1
    %p40 = por %p38, %p39
    %p41 = scmp.ne.s32.totalorder %s30, %s31
    %p42 = scmp.eq.s32.totalorder %s22, 0
    %p43 = por %p41, %p42
    %p44 = scmp.ne.s32.totalorder %s30, %s31
    %p45 = scmp.eq.s32.totalorder %s23, 1
    %p46 = por %p44, %p45
    %p48 = scmp.ne.s32.totalorder %s31, %s47
    %p49 = scmp.eq.s32.totalorder %s23, 0
    %p50 = por %p48, %p49
    %s52 = sadd.s32 %s51, 1
    %p55 = scmp.eq.s32.totalorder %s17, 1
    %p56 = scmp.ne.s32.totalorder %s51, %s53
    %p57 = scmp.eq.s32.totalorder %s17, 0
    %p58 = por %p56, %p57
    %p59 = scmp.ne.s32.totalorder %s51, %s53
    %p60 = scmp.eq.s32.totalorder %s22, 1
    %p61 = por %p59, %p60
    %p62 = scmp.ne.s32.totalorder %s53, %s54
    %p63 = scmp.eq.s32.totalorder %s22, 0
    %p64 = por %p62, %p63
    %p65 = scmp.ne.s32.totalorder %s53, %s54
    %p66 = scmp.eq.s32.totalorder %s23, 1
    %p67 = por %p65, %p66
    %p69 = scmp.ne.s32.totalorder %s54, %s68
    %p70 = scmp.eq.s32.totalorder %s23, 0
    %p71 = por %p69, %p70
    %s73 = sadd.s32 %s72, 1
    %p76 = scmp.eq.s32.totalorder %s17, 1
    %p77 = scmp.ne.s32.totalorder %s72, %s74
    %p78 = scmp.eq.s32.totalorder %s17, 0
    %p79 = por %p77, %p78
    %p80 = scmp.ne.s32.totalorder %s72, %s74
    %p81 = scmp.eq.s32.totalorder %s22, 1
    %p82 = por %p80, %p81
    %p83 = scmp.ne.s32.totalorder %s74, %s75
    %p84 = scmp.eq.s32.totalorder %s22, 0
    %p85 = por %p83, %p84
    %p86 = scmp.ne.s32.totalorder %s74, %s75
    %p87 = scmp.eq.s32.totalorder %s23, 1
    %p88 = por %p86, %p87
    %p90 = scmp.ne.s32.totalorder %s75, %s89
    %p91 = scmp.eq.s32.totalorder %s23, 0
    %p92 = por %p90, %p91
    %s94 = sadd.s32 %s93, 1
    %p97 = scmp.eq.s32.totalorder %s17, 1
    %p98 = scmp.ne.s32.totalorder %s93, %s95
    %p99 = scmp.eq.s32.totalorder %s17, 0
    %p100 = por %p98, %p99
    %p101 = scmp.ne.s32.totalorder %s93, %s95
    %p102 = scmp.eq.s32.totalorder %s22, 1
    %p103 = por %p101, %p102
    %p104 = scmp.ne.s32.totalorder %s95, %s96
    %p105 = scmp.eq.s32.totalorder %s22, 0
    %p106 = por %p104, %p105
    %p107 = scmp.ne.s32.totalorder %s95, %s96
    %p108 = scmp.eq.s32.totalorder %s23, 1
    %p109 = por %p107, %p108
    %p111 = scmp.ne.s32.totalorder %s96, %s110
    %p112 = scmp.eq.s32.totalorder %s23, 0
    %p113 = por %p111, %p112
    %s115 = sadd.s32 %s114, 1
    %p118 = scmp.eq.s32.totalorder %s17, 1
    %p119 = scmp.ne.s32.totalorder %s114, %s116
    %p120 = scmp.eq.s32.totalorder %s17, 0
    %p121 = por %p119, %p120
    %p122 = scmp.ne.s32.totalorder %s114, %s116
    %p123 = scmp.eq.s32.totalorder %s22, 1
    %p124 = por %p122, %p123
    %p125 = scmp.ne.s32.totalorder %s116, %s117
    %p126 = scmp.eq.s32.totalorder %s22, 0
    %p127 = por %p125, %p126
    %p128 = scmp.ne.s32.totalorder %s116, %s117
    %p129 = scmp.eq.s32.totalorder %s23, 1
    %p130 = por %p128, %p129
    %p132 = scmp.ne.s32.totalorder %s117, %s131
    %p133 = scmp.eq.s32.totalorder %s23, 0
    %p134 = por %p132, %p133
    %s136 = sadd.s32 %s135, 1
    %p139 = scmp.eq.s32.totalorder %s17, 1
    %p140 = scmp.ne.s32.totalorder %s135, %s137
    %p141 = scmp.eq.s32.totalorder %s17, 0
    %p142 = por %p140, %p141
    %p143 = scmp.ne.s32.totalorder %s135, %s137
    %p144 = scmp.eq.s32.totalorder %s22, 1
    %p145 = por %p143, %p144
    %p146 = scmp.ne.s32.totalorder %s137, %s138
    %p147 = scmp.eq.s32.totalorder %s22, 0
    %p148 = por %p146, %p147
    %p149 = scmp.ne.s32.totalorder %s137, %s138
    %p150 = scmp.eq.s32.totalorder %s23, 1
    %p151 = por %p149, %p150
    %p153 = scmp.ne.s32.totalorder %s138, %s152
    %p154 = scmp.eq.s32.totalorder %s23, 0
    %p155 = por %p153, %p154
    %s157 = sadd.s32 %s156, 1
    %p160 = scmp.eq.s32.totalorder %s17, 1
    %p161 = scmp.ne.s32.totalorder %s156, %s158
    %p162 = scmp.eq.s32.totalorder %s17, 0
    %p163 = por %p161, %p162
    %p164 = scmp.ne.s32.totalorder %s156, %s158
    %p165 = scmp.eq.s32.totalorder %s22, 1
    %p166 = por %p164, %p165
    %p167 = scmp.ne.s32.totalorder %s158, %s159
    %p168 = scmp.eq.s32.totalorder %s22, 0
    %p169 = por %p167, %p168
    %p170 = scmp.ne.s32.totalorder %s158, %s159
    %p171 = scmp.eq.s32.totalorder %s23, 1
    %p172 = por %p170, %p171
    %p174 = scmp.ne.s32.totalorder %s159, %s173
    %p175 = scmp.eq.s32.totalorder %s23, 0
    %p176 = por %p174, %p175
    %s178 = sadd.s32 %s177, 1
    %p181 = scmp.eq.s32.totalorder %s17, 1
    %p182 = scmp.ne.s32.totalorder %s177, %s179
    %p183 = scmp.eq.s32.totalorder %s17, 0
    %p184 = por %p182, %p183
    %p185 = scmp.ne.s32.totalorder %s177, %s179
    %p186 = scmp.eq.s32.totalorder %s22, 1
    %p187 = por %p185, %p186
    %p188 = scmp.ne.s32.totalorder %s179, %s180
    %p189 = scmp.eq.s32.totalorder %s22, 0
    %p190 = por %p188, %p189
    %p191 = scmp.ne.s32.totalorder %s179, %s180
    %p192 = scmp.eq.s32.totalorder %s23, 1
    %p193 = por %p191, %p192
    %p195 = scmp.ne.s32.totalorder %s180, %s194
    %p196 = scmp.eq.s32.totalorder %s23, 0
    %p197 = por %p195, %p196
    %s199 = sadd.s32 %s198, 1
    %p202 = scmp.eq.s32.totalorder %s17, 1
    %p203 = scmp.ne.s32.totalorder %s198, %s200
    %p204 = scmp.eq.s32.totalorder %s17, 0
    %p205 = por %p203, %p204
    %p206 = scmp.ne.s32.totalorder %s198, %s200
    %p207 = scmp.eq.s32.totalorder %s22, 1
    %p208 = por %p206, %p207
    %p209 = scmp.ne.s32.totalorder %s200, %s201
    %p210 = scmp.eq.s32.totalorder %s22, 0
    %p211 = por %p209, %p210
    %p212 = scmp.ne.s32.totalorder %s200, %s201
    %p213 = scmp.eq.s32.totalorder %s23, 1
    %p214 = por %p212, %p213
    %p216 = scmp.ne.s32.totalorder %s201, %s215
    %p217 = scmp.eq.s32.totalorder %s23, 0
    %p218 = por %p216, %p217
    %s219 = ssub.s32 %s17, %s24
    %p220 = scmp.eq.s32.totalorder %s219, 0
    %s222 = sadd.s32 %s221, 1
    %s223 = scalar_select %p220, %s221, %s222
    %p226 = pneg %p220
    %p227 = scmp.eq.s32.totalorder %s17, 1
    %p228 = por %p226, %p227
    %p229 = scmp.ne.s32.totalorder %s221, %s224
    %p230 = scmp.eq.s32.totalorder %s17, 0
    %p231 = por %p229, %p230
    %p232 = scmp.ne.s32.totalorder %s221, %s224
    %p233 = scmp.eq.s32.totalorder %s22, 1
    %p234 = por %p232, %p233
    %p235 = scmp.ne.s32.totalorder %s224, %s225
    %p236 = scmp.eq.s32.totalorder %s22, 0
    %p237 = por %p235, %p236
    %p238 = scmp.ne.s32.totalorder %s224, %s225
    %p239 = scmp.eq.s32.totalorder %s23, 1
    %p240 = por %p238, %p239
    %p242 = scmp.ne.s32.totalorder %s225, %s241
    %p243 = scmp.eq.s32.totalorder %s23, 0
    %p244 = por %p242, %p243
    %p245 = scmp.le.s32.totalorder 1, %s17
    %p246 = scmp.lt.s32.totalorder %s17, 3
    %p247 = pnand %p245, %p246
    %p248 = pneg %p247
    // Predicated region
    $region9: #{cnn_forward.1} parent=5 // pred_check
      _
    $region10: #{cnn_forward.1} parent=5 // pred_check_branch
      %250 = sbr.rel (%p247) target = $region12
    $region11: #{cnn_forward.1} parent=5 // pred_region
      %s251 = ssub.s32 %s17, 1
      // Predicated region
      $region13: #{cnn_forward.1} parent=11 // pred_check
        %p252 = pneg %p64
      $region14: #{cnn_forward.1} parent=11 // pred_check_branch
        %254 = sbr.rel (%p252) target = $region16
      $region15: #{cnn_forward.1} parent=11 // pred_region
        _
      $region16: #{cnn_forward.1} parent=11 // pred_fallthru
        _
      // Predicated region
      $region17: #{cnn_forward.1} parent=11 // pred_check
        %p255 = pneg %p85
      $region18: #{cnn_forward.1} parent=11 // pred_check_branch
        %257 = sbr.rel (%p255) target = $region20
      $region19: #{cnn_forward.1} parent=11 // pred_region
        _
      $region20: #{cnn_forward.1} parent=11 // pred_fallthru
        _
      // Predicated region
      $region21: #{cnn_forward.1} parent=11 // pred_check
        %p258 = pneg %p106
      $region22: #{cnn_forward.1} parent=11 // pred_check_branch
        %260 = sbr.rel (%p258) target = $region24
      $region23: #{cnn_forward.1} parent=11 // pred_region
        _
      $region24: #{cnn_forward.1} parent=11 // pred_fallthru
        _
      // Predicated region
      $region25: #{cnn_forward.1} parent=11 // pred_check
        %p261 = pneg %p127
      $region26: #{cnn_forward.1} parent=11 // pred_check_branch
        %263 = sbr.rel (%p261) target = $region28
      $region27: #{cnn_forward.1} parent=11 // pred_region
        _
      $region28: #{cnn_forward.1} parent=11 // pred_fallthru
        _
      // Predicated region
      $region29: #{cnn_forward.1} parent=11 // pred_check
        %p264 = pneg %p148
      $region30: #{cnn_forward.1} parent=11 // pred_check_branch
        %266 = sbr.rel (%p264) target = $region32
      $region31: #{cnn_forward.1} parent=11 // pred_region
        _
      $region32: #{cnn_forward.1} parent=11 // pred_fallthru
        _
      // Predicated region
      $region33: #{cnn_forward.1} parent=11 // pred_check
        %p267 = pneg %p169
      $region34: #{cnn_forward.1} parent=11 // pred_check_branch
        %269 = sbr.rel (%p267) target = $region36
      $region35: #{cnn_forward.1} parent=11 // pred_region
        _
      $region36: #{cnn_forward.1} parent=11 // pred_fallthru
        _
      // Predicated region
      $region37: #{cnn_forward.1} parent=11 // pred_check
        %p270 = pneg %p190
      $region38: #{cnn_forward.1} parent=11 // pred_check_branch
        %272 = sbr.rel (%p270) target = $region40
      $region39: #{cnn_forward.1} parent=11 // pred_region
        _
      $region40: #{cnn_forward.1} parent=11 // pred_fallthru
        _
      // Predicated region
      $region41: #{cnn_forward.1} parent=11 // pred_check
        %p273 = pneg %p211
      $region42: #{cnn_forward.1} parent=11 // pred_check_branch
        %275 = sbr.rel (%p273) target = $region44
      $region43: #{cnn_forward.1} parent=11 // pred_region
        _
      $region44: #{cnn_forward.1} parent=11 // pred_fallthru
        _
    $region12: #{cnn_forward.1} parent=5 // pred_fallthru
      _
    %p276 = scmp.lt.s32.totalorder %s17, 2
    // Predicated region
    $region45: #{cnn_forward.1} parent=5 // pred_check
      %p277 = pneg %p276
    $region46: #{cnn_forward.1} parent=5 // pred_check_branch
      %279 = sbr.rel (%p277) target = $region48
    $region47: #{cnn_forward.1} parent=5 // pred_region
      // Predicated region
      $region49: #{cnn_forward.1} parent=47 // pred_check
        %p280 = pneg %p37
      $region50: #{cnn_forward.1} parent=47 // pred_check_branch
        %282 = sbr.rel (%p280) target = $region52
      $region51: #{cnn_forward.1} parent=47 // pred_region
        %p283 = scmp.lt.s32.totalorder %s17, 1
        %s284 = scalar_select %p283, %s17, 1
        %s285 = smul.addr %s284, 32
        %s286 = smul.addr %s285, 8
        %s287 = scalar_lea.vmem %s0, %s286
      $region52: #{cnn_forward.1} parent=47 // pred_fallthru
        _
    $region48: #{cnn_forward.1} parent=5 // pred_fallthru
      _
    %p288 = scmp.le.s32.totalorder 1, %s17
    %p289 = scmp.lt.s32.totalorder %s17, 3
    %p290 = pnand %p288, %p289
    %p291 = pneg %p290
    // Predicated region
    $region53: #{cnn_forward.1} parent=5 // pred_check
      _
    $region54: #{cnn_forward.1} parent=5 // pred_check_branch
      %293 = sbr.rel (%p290) target = $region56
    $region55: #{cnn_forward.1} parent=5 // pred_region
      %s294 = ssub.s32 %s17, 1
      %p295 = scmp.lt.s32.totalorder %s22, 1
      %s296 = scalar_select %p295, %s22, 1
      %s297 = smul.addr %s296, 32
      %s298 = smul.addr %s297, 8
      %s299 = scalar_lea.vmem %s0, %s298
      %p300 = pneg %p43
      %p301 = pneg %p40
      %p302 = pneg %p64
      %p303 = pneg %p61
      %p304 = pneg %p85
      %p305 = pneg %p82
      %p306 = pneg %p106
      %p307 = pneg %p103
      %p308 = pneg %p127
      %p309 = pneg %p124
      %p310 = pneg %p148
      %p311 = pneg %p145
      %p312 = pneg %p169
      %p313 = pneg %p166
      %p314 = pneg %p190
      %p315 = pneg %p187
      %p316 = pneg %p211
      %p317 = pneg %p208
      %p318 = pneg %p237
      %p319 = pneg %p234
      %p320 = scmp.lt.s32.totalorder %s22, 1
      %s321 = scalar_select %p320, %s22, 1
      %s322 = smul.addr %s321, 32
      %s323 = smul.addr %s322, 8
      %s324 = scalar_lea.vmem %s9, %s323
      %p325 = scmp.lt.s32.totalorder %s22, 1
      %s326 = scalar_select %p325, %s22, 1
      %s327 = smul.addr %s326, 32
      %s328 = smul.addr %s327, 8
      %s329 = scalar_lea.vmem %s0, %s328
      %p330 = scmp.lt.s32.totalorder %s22, 1
      %s331 = scalar_select %p330, %s22, 1
      %s332 = smul.addr %s331, 32
      %s333 = smul.addr %s332, 8
      %s334 = scalar_lea.vmem %s9, %s333
      %v335 = vld [vmem:[%s329] sm:$0xff]
      %v336 = vld [vmem:[%s329 + $0x8] sm:$0xff]
      %v337 = vld [vmem:[%s329 + $0x10] sm:$0xff]
      %v338 = vld [vmem:[%s329 + $0x18] sm:$0xff]
      %v339 = vld [vmem:[%s329 + $0x20] sm:$0xff]
      %v340 = vld [vmem:[%s329 + $0x28] sm:$0xff]
      %v341 = vld [vmem:[%s329 + $0x30] sm:$0xff]
      %v342 = vld [vmem:[%s329 + $0x38] sm:$0xff]
      %v343 = vld [vmem:[%s329 + $0x40] sm:$0xff]
      %v344 = vld [vmem:[%s329 + $0x48] sm:$0xff]
      %v345 = vld [vmem:[%s329 + $0x50] sm:$0xff]
      %v346 = vld [vmem:[%s329 + $0x58] sm:$0xff]
      %v347 = vld [vmem:[%s329 + $0x60] sm:$0xff]
      %v348 = vld [vmem:[%s329 + $0x68] sm:$0xff]
      %v349 = vld [vmem:[%s329 + $0x70] sm:$0xff]
      %v350 = vld [vmem:[%s329 + $0x78] sm:$0xff]
      %v351 = vld [vmem:[%s329 + $0x80] sm:$0xff]
      %v352 = vld [vmem:[%s329 + $0x88] sm:$0xff]
      %v353 = vld [vmem:[%s329 + $0x90] sm:$0xff]
      %v354 = vld [vmem:[%s329 + $0x98] sm:$0xff]
      %v355 = vld [vmem:[%s329 + $0xa0] sm:$0xff]
      %v356 = vld [vmem:[%s329 + $0xa8] sm:$0xff]
      %v357 = vld [vmem:[%s329 + $0xb0] sm:$0xff]
      %v358 = vld [vmem:[%s329 + $0xb8] sm:$0xff]
      %v359 = vld [vmem:[%s329 + $0xc0] sm:$0xff]
      %v360 = vld [vmem:[%s329 + $0xc8] sm:$0xff]
      %v361 = vld [vmem:[%s329 + $0xd0] sm:$0xff]
      %v362 = vld [vmem:[%s329 + $0xd8] sm:$0xff]
      %v363 = vld [vmem:[%s329 + $0xe0] sm:$0xff]
      %v364 = vld [vmem:[%s329 + $0xe8] sm:$0xff]
      %v365 = vld [vmem:[%s329 + $0xf0] sm:$0xff]
      %v366 = vld [vmem:[%s329 + $0xf8] sm:$0xff]
      %v367 = vld [vmem:[%s1] sm:$0x7]
      %v368 = vld [vmem:[%s2] sm:$0x1]
      %v370 = vlaneseq
      %v371 = vshrl.u32 %v370, 7
      %v372 = vsub.s32 0, %v371
      %v373 = vrot.slane %v368, %v372
      %vm375 = vcmask 23552
      %v377 = vsel %vm375, %v335, 0
      %v380 = vsel %vm375, %v336, 0
      %v383 = vsel %vm375, %v337, 0
      %v386 = vsel %vm375, %v338, 0
      %v389 = vsel %vm375, %v339, 0
      %v392 = vsel %vm375, %v340, 0
      %v395 = vsel %vm375, %v341, 0
      %v398 = vsel %vm375, %v342, 0
      %v401 = vsel %vm375, %v343, 0
      %v404 = vsel %vm375, %v344, 0
      %v407 = vsel %vm375, %v345, 0
      %v410 = vsel %vm375, %v346, 0
      %v413 = vsel %vm375, %v347, 0
      %v416 = vsel %vm375, %v348, 0
      %v419 = vsel %vm375, %v349, 0
      %v422 = vsel %vm375, %v350, 0
      %v425 = vsel %vm375, %v351, 0
      %v428 = vsel %vm375, %v352, 0
      %v431 = vsel %vm375, %v353, 0
      %v434 = vsel %vm375, %v354, 0
      %v437 = vsel %vm375, %v355, 0
      %v440 = vsel %vm375, %v356, 0
      %v443 = vsel %vm375, %v357, 0
      %v446 = vsel %vm375, %v358, 0
      %v449 = vsel %vm375, %v359, 0
      %v452 = vsel %vm375, %v360, 0
      %v455 = vsel %vm375, %v361, 0
      %v458 = vsel %vm375, %v362, 0
      %v461 = vsel %vm375, %v363, 0
      %v464 = vsel %vm375, %v364, 0
      %v467 = vsel %vm375, %v365, 0
      %v470 = vsel %vm375, %v366, 0
      %vm472 = vcmask 1042432
      %v474 = vsel %vm472, %v367, 0
      %476 = vmatprep.subr.mxu0 0.0
      %477 = vmatpush1.msra.mxu0 %v474
      %478 = vmatprep.subr.mxu0 0.0
      %479 = vmatpush1.msra.mxu0 0.0
      %480 = vmatprep.subr.mxu0 0.0
      %481 = vmatpush1.msra.mxu0 0.0
      %482 = vmatprep.subr.mxu0 0.0
      %483 = vmatpush1.msra.mxu0 0.0
      %484 = vmatprep.subr.mxu0 0.0
      %485 = vmatpush1.msra.mxu0 0.0
      %486 = vmatprep.subr.mxu0 0.0
      %487 = vmatpush1.msra.mxu0 0.0
      %488 = vmatprep.subr.mxu0 0.0
      %489 = vmatpush1.msra.mxu0 0.0
      %490 = vmatprep.subr.mxu0 0.0
      %491 = vmatpush1.msra.mxu0 0.0
      %492 = vmatprep.subr.mxu0 0.0
      %493 = vmatpush1.msra.mxu0 0.0
      %494 = vmatprep.subr.mxu0 0.0
      %495 = vmatpush1.msra.mxu0 0.0
      %496 = vmatprep.subr.mxu0 0.0
      %497 = vmatpush1.msra.mxu0 0.0
      %498 = vmatprep.subr.mxu0 0.0
      %499 = vmatpush1.msra.mxu0 0.0
      %500 = vmatprep.subr.mxu0 0.0
      %501 = vmatpush1.msra.mxu0 0.0
      %502 = vmatprep.subr.mxu0 0.0
      %503 = vmatpush1.msra.mxu0 0.0
      %504 = vmatprep.subr.mxu0 0.0
      %505 = vmatpush1.msra.mxu0 0.0
      %506 = vmatprep.subr.mxu0 0.0
      %507 = vmatpush1.msra.mxu0 0.0
      %508 = vmatprep.subr.mxu0 0.0
      %509 = vmatpush1.msra.mxu0 0.0
      %510 = vmatprep.subr.mxu0 0.0
      %511 = vmatpush1.msra.mxu0 0.0
      %512 = vmatprep.subr.mxu0 0.0
      %513 = vmatpush1.msra.mxu0 0.0
      %514 = vmatprep.subr.mxu0 0.0
      %515 = vmatpush1.msra.mxu0 0.0
      %516 = vmatprep.subr.mxu0 0.0
      %517 = vmatpush1.msra.mxu0 0.0
      %518 = vmatprep.subr.mxu0 0.0
      %519 = vmatpush1.msra.mxu0 0.0
      %520 = vmatprep.subr.mxu0 0.0
      %521 = vmatpush1.msra.mxu0 0.0
      %522 = vmatprep.subr.mxu0 0.0
      %523 = vmatpush1.msra.mxu0 0.0
      %524 = vmatprep.subr.mxu0 0.0
      %525 = vmatpush1.msra.mxu0 0.0
      %526 = vmatprep.subr.mxu0 0.0
      %527 = vmatpush1.msra.mxu0 0.0
      %528 = vmatprep.subr.mxu0 0.0
      %529 = vmatpush1.msra.mxu0 0.0
      %530 = vmatprep.subr.mxu0 0.0
      %531 = vmatpush1.msra.mxu0 0.0
      %532 = vmatprep.subr.mxu0 0.0
      %533 = vmatpush1.msra.mxu0 0.0
      %534 = vmatprep.subr.mxu0 0.0
      %535 = vmatpush1.msra.mxu0 0.0
      %536 = vmatprep.subr.mxu0 0.0
      %537 = vmatpush1.msra.mxu0 0.0
      %538 = vmatprep.subr.mxu0 0.0
      %539 = vmatpush1.msra.mxu0 0.0
      %540 = vmatprep.mubr.f32.mxu0 0.0
      %541 = vmatmul.mubr.f32.gmra.mrb[0].mxu0 %v377
      %v542 = vpop.f32.mrb[0].mxu0
      %v543 = vadd.f32 %v373, %v542
      %v544 = vpop.f32.mrb[0].mxu0
      %545 = vmatprep.mubr.f32.mxu0 0.0
      %546 = vmatmul.mubr.f32.gmra.mrb[0].mxu0 %v380
      %v547 = vpop.f32.mrb[0].mxu0
      %v548 = vadd.f32 %v373, %v547
      %v549 = vpop.f32.mrb[0].mxu0
      %550 = vmatprep.mubr.f32.mxu0 0.0
      %551 = vmatmul.mubr.f32.gmra.mrb[0].mxu0 %v383
      %v552 = vpop.f32.mrb[0].mxu0
      %v553 = vadd.f32 %v373, %v552
      %v554 = vpop.f32.mrb[0].mxu0
      %555 = vmatprep.mubr.f32.mxu0 0.0
      %556 = vmatmul.mubr.f32.gmra.mrb[0].mxu0 %v386
      %v557 = vpop.f32.mrb[0].mxu0
      %v558 = vadd.f32 %v373, %v557
      %v559 = vpop.f32.mrb[0].mxu0
      %560 = vmatprep.mubr.f32.mxu0 0.0
      %561 = vmatmul.mubr.f32.gmra.mrb[0].mxu0 %v389
      %v562 = vpop.f32.mrb[0].mxu0
      %v563 = vadd.f32 %v373, %v562
      %v564 = vpop.f32.mrb[0].mxu0
      %565 = vmatprep.mubr.f32.mxu0 0.0
      %566 = vmatmul.mubr.f32.gmra.mrb[0].mxu0 %v392
      %v567 = vpop.f32.mrb[0].mxu0
      %v568 = vadd.f32 %v373, %v567
      %v569 = vpop.f32.mrb[0].mxu0
      %570 = vmatprep.mubr.f32.mxu0 0.0
      %571 = vmatmul.mubr.f32.gmra.mrb[0].mxu0 %v395
      %v572 = vpop.f32.mrb[0].mxu0
      %v573 = vadd.f32 %v373, %v572
      %v574 = vpop.f32.mrb[0].mxu0
      %575 = vmatprep.mubr.f32.mxu0 0.0
      %576 = vmatmul.mubr.f32.gmra.mrb[0].mxu0 %v398
      %v577 = vpop.f32.mrb[0].mxu0
      %v578 = vadd.f32 %v373, %v577
      %v579 = vpop.f32.mrb[0].mxu0
      %580 = vmatprep.mubr.f32.mxu0 0.0
      %581 = vmatmul.mubr.f32.gmra.mrb[0].mxu0 %v401
      %v582 = vpop.f32.mrb[0].mxu0
      %v583 = vadd.f32 %v373, %v582
      %v584 = vpop.f32.mrb[0].mxu0
      %585 = vmatprep.mubr.f32.mxu0 0.0
      %586 = vmatmul.mubr.f32.gmra.mrb[0].mxu0 %v404
      %v587 = vpop.f32.mrb[0].mxu0
      %v588 = vadd.f32 %v373, %v587
      %v589 = vpop.f32.mrb[0].mxu0
      %590 = vmatprep.mubr.f32.mxu0 0.0
      %591 = vmatmul.mubr.f32.gmra.mrb[0].mxu0 %v407
      %v592 = vpop.f32.mrb[0].mxu0
      %v593 = vadd.f32 %v373, %v592
      %v594 = vpop.f32.mrb[0].mxu0
      %595 = vmatprep.mubr.f32.mxu0 0.0
      %596 = vmatmul.mubr.f32.gmra.mrb[0].mxu0 %v410
      %v597 = vpop.f32.mrb[0].mxu0
      %v598 = vadd.f32 %v373, %v597
      %v599 = vpop.f32.mrb[0].mxu0
      %600 = vmatprep.mubr.f32.mxu0 0.0
      %601 = vmatmul.mubr.f32.gmra.mrb[0].mxu0 %v413
      %v602 = vpop.f32.mrb[0].mxu0
      %v603 = vadd.f32 %v373, %v602
      %v604 = vpop.f32.mrb[0].mxu0
      %605 = vmatprep.mubr.f32.mxu0 0.0
      %606 = vmatmul.mubr.f32.gmra.mrb[0].mxu0 %v416
      %v607 = vpop.f32.mrb[0].mxu0
      %v608 = vadd.f32 %v373, %v607
      %v609 = vpop.f32.mrb[0].mxu0
      %610 = vmatprep.mubr.f32.mxu0 0.0
      %611 = vmatmul.mubr.f32.gmra.mrb[0].mxu0 %v419
      %v612 = vpop.f32.mrb[0].mxu0
      %v613 = vadd.f32 %v373, %v612
      %v614 = vpop.f32.mrb[0].mxu0
      %615 = vmatprep.mubr.f32.mxu0 0.0
      %616 = vmatmul.mubr.f32.gmra.mrb[0].mxu0 %v422
      %v617 = vpop.f32.mrb[0].mxu0
      %v618 = vadd.f32 %v373, %v617
      %v619 = vpop.f32.mrb[0].mxu0
      %620 = vmatprep.mubr.f32.mxu0 0.0
      %621 = vmatmul.mubr.f32.gmra.mrb[0].mxu0 %v425
      %v622 = vpop.f32.mrb[0].mxu0
      %v623 = vadd.f32 %v373, %v622
      %v624 = vpop.f32.mrb[0].mxu0
      %625 = vmatprep.mubr.f32.mxu0 0.0
      %626 = vmatmul.mubr.f32.gmra.mrb[0].mxu0 %v428
      %v627 = vpop.f32.mrb[0].mxu0
      %v628 = vadd.f32 %v373, %v627
      %v629 = vpop.f32.mrb[0].mxu0
      %630 = vmatprep.mubr.f32.mxu0 0.0
      %631 = vmatmul.mubr.f32.gmra.mrb[0].mxu0 %v431
      %v632 = vpop.f32.mrb[0].mxu0
      %v633 = vadd.f32 %v373, %v632
      %v634 = vpop.f32.mrb[0].mxu0
      %635 = vmatprep.mubr.f32.mxu0 0.0
      %636 = vmatmul.mubr.f32.gmra.mrb[0].mxu0 %v434
      %v637 = vpop.f32.mrb[0].mxu0
      %v638 = vadd.f32 %v373, %v637
      %v639 = vpop.f32.mrb[0].mxu0
      %640 = vmatprep.mubr.f32.mxu0 0.0
      %641 = vmatmul.mubr.f32.gmra.mrb[0].mxu0 %v437
      %v642 = vpop.f32.mrb[0].mxu0
      %v643 = vadd.f32 %v373, %v642
      %v644 = vpop.f32.mrb[0].mxu0
      %645 = vmatprep.mubr.f32.mxu0 0.0
      %646 = vmatmul.mubr.f32.gmra.mrb[0].mxu0 %v440
      %v647 = vpop.f32.mrb[0].mxu0
      %v648 = vadd.f32 %v373, %v647
      %v649 = vpop.f32.mrb[0].mxu0
      %650 = vmatprep.mubr.f32.mxu0 0.0
      %651 = vmatmul.mubr.f32.gmra.mrb[0].mxu0 %v443
      %v652 = vpop.f32.mrb[0].mxu0
      %v653 = vadd.f32 %v373, %v652
      %v654 = vpop.f32.mrb[0].mxu0
      %655 = vmatprep.mubr.f32.mxu0 0.0
      %656 = vmatmul.mubr.f32.gmra.mrb[0].mxu0 %v446
      %v657 = vpop.f32.mrb[0].mxu0
      %v658 = vadd.f32 %v373, %v657
      %v659 = vpop.f32.mrb[0].mxu0
      %660 = vmatprep.mubr.f32.mxu0 0.0
      %661 = vmatmul.mubr.f32.gmra.mrb[0].mxu0 %v449
      %v662 = vpop.f32.mrb[0].mxu0
      %v663 = vadd.f32 %v373, %v662
      %v664 = vpop.f32.mrb[0].mxu0
      %665 = vmatprep.mubr.f32.mxu0 0.0
      %666 = vmatmul.mubr.f32.gmra.mrb[0].mxu0 %v452
      %v667 = vpop.f32.mrb[0].mxu0
      %v668 = vadd.f32 %v373, %v667
      %v669 = vpop.f32.mrb[0].mxu0
      %670 = vmatprep.mubr.f32.mxu0 0.0
      %671 = vmatmul.mubr.f32.gmra.mrb[0].mxu0 %v455
      %v672 = vpop.f32.mrb[0].mxu0
      %v673 = vadd.f32 %v373, %v672
      %v674 = vpop.f32.mrb[0].mxu0
      %675 = vmatprep.mubr.f32.mxu0 0.0
      %676 = vmatmul.mubr.f32.gmra.mrb[0].mxu0 %v458
      %v677 = vpop.f32.mrb[0].mxu0
      %v678 = vadd.f32 %v373, %v677
      %v679 = vpop.f32.mrb[0].mxu0
      %680 = vmatprep.mubr.f32.mxu0 0.0
      %681 = vmatmul.mubr.f32.gmra.mrb[0].mxu0 %v461
      %v682 = vpop.f32.mrb[0].mxu0
      %v683 = vadd.f32 %v373, %v682
      %v684 = vpop.f32.mrb[0].mxu0
      %685 = vmatprep.mubr.f32.mxu0 0.0
      %686 = vmatmul.mubr.f32.gmra.mrb[0].mxu0 %v464
      %v687 = vpop.f32.mrb[0].mxu0
      %v688 = vadd.f32 %v373, %v687
      %v689 = vpop.f32.mrb[0].mxu0
      %690 = vmatprep.mubr.f32.mxu0 0.0
      %691 = vmatmul.mubr.f32.gmra.mrb[0].mxu0 %v467
      %v692 = vpop.f32.mrb[0].mxu0
      %v693 = vadd.f32 %v373, %v692
      %v694 = vpop.f32.mrb[0].mxu0
      %695 = vmatprep.mubr.f32.mxu0 0.0
      %696 = vmatmul.mubr.f32.gmra.mrb[0].mxu0 %v470
      %v697 = vpop.f32.mrb[0].mxu0
      %v698 = vadd.f32 %v373, %v697
      %v699 = vpop.f32.mrb[0].mxu0
      %700 = vdwg.mxu0
      %vm701 = vcmp.gt.f32.partialorder %v543, 0.0
      %vm702 = vcmp.gt.f32.partialorder %v548, 0.0
      %vm703 = vcmp.gt.f32.partialorder %v553, 0.0
      %vm704 = vcmp.gt.f32.partialorder %v558, 0.0
      %vm705 = vcmp.gt.f32.partialorder %v563, 0.0
      %vm706 = vcmp.gt.f32.partialorder %v568, 0.0
      %vm707 = vcmp.gt.f32.partialorder %v573, 0.0
      %vm708 = vcmp.gt.f32.partialorder %v578, 0.0
      %vm709 = vcmp.gt.f32.partialorder %v583, 0.0
      %vm710 = vcmp.gt.f32.partialorder %v588, 0.0
      %vm711 = vcmp.gt.f32.partialorder %v593, 0.0
      %vm712 = vcmp.gt.f32.partialorder %v598, 0.0
      %vm713 = vcmp.gt.f32.partialorder %v603, 0.0
      %vm714 = vcmp.gt.f32.partialorder %v608, 0.0
      %vm715 = vcmp.gt.f32.partialorder %v613, 0.0
      %vm716 = vcmp.gt.f32.partialorder %v618, 0.0
      %vm717 = vcmp.gt.f32.partialorder %v623, 0.0
      %vm718 = vcmp.gt.f32.partialorder %v628, 0.0
      %vm719 = vcmp.gt.f32.partialorder %v633, 0.0
      %vm720 = vcmp.gt.f32.partialorder %v638, 0.0
      %vm721 = vcmp.gt.f32.partialorder %v643, 0.0
      %vm722 = vcmp.gt.f32.partialorder %v648, 0.0
      %vm723 = vcmp.gt.f32.partialorder %v653, 0.0
      %vm724 = vcmp.gt.f32.partialorder %v658, 0.0
      %vm725 = vcmp.gt.f32.partialorder %v663, 0.0
      %vm726 = vcmp.gt.f32.partialorder %v668, 0.0
      %vm727 = vcmp.gt.f32.partialorder %v673, 0.0
      %vm728 = vcmp.gt.f32.partialorder %v678, 0.0
      %vm729 = vcmp.gt.f32.partialorder %v683, 0.0
      %vm730 = vcmp.gt.f32.partialorder %v688, 0.0
      %vm731 = vcmp.gt.f32.partialorder %v693, 0.0
      %vm732 = vcmp.gt.f32.partialorder %v698, 0.0
      %v733 = vmul.f32 %v543, 0.01
      %v734 = vmul.f32 %v548, 0.01
      %v735 = vmul.f32 %v553, 0.01
      %v736 = vmul.f32 %v558, 0.01
      %v737 = vmul.f32 %v563, 0.01
      %v738 = vmul.f32 %v568, 0.01
      %v739 = vmul.f32 %v573, 0.01
      %v740 = vmul.f32 %v578, 0.01
      %v741 = vmul.f32 %v583, 0.01
      %v742 = vmul.f32 %v588, 0.01
      %v743 = vmul.f32 %v593, 0.01
      %v744 = vmul.f32 %v598, 0.01
      %v745 = vmul.f32 %v603, 0.01
      %v746 = vmul.f32 %v608, 0.01
      %v747 = vmul.f32 %v613, 0.01
      %v748 = vmul.f32 %v618, 0.01
      %v749 = vmul.f32 %v623, 0.01
      %v750 = vmul.f32 %v628, 0.01
      %v751 = vmul.f32 %v633, 0.01
      %v752 = vmul.f32 %v638, 0.01
      %v753 = vmul.f32 %v643, 0.01
      %v754 = vmul.f32 %v648, 0.01
      %v755 = vmul.f32 %v653, 0.01
      %v756 = vmul.f32 %v658, 0.01
      %v757 = vmul.f32 %v663, 0.01
      %v758 = vmul.f32 %v668, 0.01
      %v759 = vmul.f32 %v673, 0.01
      %v760 = vmul.f32 %v678, 0.01
      %v761 = vmul.f32 %v683, 0.01
      %v762 = vmul.f32 %v688, 0.01
      %v763 = vmul.f32 %v693, 0.01
      %v764 = vmul.f32 %v698, 0.01
      %v765 = vsel %vm701, %v543, %v733
      %v766 = vsel %vm702, %v548, %v734
      %v767 = vsel %vm703, %v553, %v735
      %v768 = vsel %vm704, %v558, %v736
      %v769 = vsel %vm705, %v563, %v737
      %v770 = vsel %vm706, %v568, %v738
      %v771 = vsel %vm707, %v573, %v739
      %v772 = vsel %vm708, %v578, %v740
      %v773 = vsel %vm709, %v583, %v741
      %v774 = vsel %vm710, %v588, %v742
      %v775 = vsel %vm711, %v593, %v743
      %v776 = vsel %vm712, %v598, %v744
      %v777 = vsel %vm713, %v603, %v745
      %v778 = vsel %vm714, %v608, %v746
      %v779 = vsel %vm715, %v613, %v747
      %v780 = vsel %vm716, %v618, %v748
      %v781 = vsel %vm717, %v623, %v749
      %v782 = vsel %vm718, %v628, %v750
      %v783 = vsel %vm719, %v633, %v751
      %v784 = vsel %vm720, %v638, %v752
      %v785 = vsel %vm721, %v643, %v753
      %v786 = vsel %vm722, %v648, %v754
      %v787 = vsel %vm723, %v653, %v755
      %v788 = vsel %vm724, %v658, %v756
      %v789 = vsel %vm725, %v663, %v757
      %v790 = vsel %vm726, %v668, %v758
      %v791 = vsel %vm727, %v673, %v759
      %v792 = vsel %vm728, %v678, %v760
      %v793 = vsel %vm729, %v683, %v761
      %v794 = vsel %vm730, %v688, %v762
      %v795 = vsel %vm731, %v693, %v763
      %v796 = vsel %vm732, %v698, %v764
      %v797 = vlaneseq
      %v798 = vshrl.u32 %v797, 7
      %v799 = vadd.s32 %v798, 8
      %v800 = vadd.s32 %v798, 16
      %v801 = vadd.s32 %v798, 24
      %v802 = vadd.s32 %v798, 32
      %v803 = vadd.s32 %v798, 40
      %v804 = vadd.s32 %v798, 48
      %v805 = vadd.s32 %v798, 56
      %v806 = vadd.s32 %v798, 64
      %v807 = vadd.s32 %v798, 72
      %v808 = vadd.s32 %v798, 80
      %v809 = vadd.s32 %v798, 88
      %v810 = vadd.s32 %v798, 96
      %v811 = vadd.s32 %v798, 104
      %v812 = vadd.s32 %v798, 112
      %v813 = vadd.s32 %v798, 120
      %v814 = vadd.s32 %v798, 128
      %v815 = vadd.s32 %v798, 136
      %v816 = vadd.s32 %v798, 144
      %v817 = vadd.s32 %v798, 152
      %v818 = vadd.s32 %v798, 160
      %v819 = vadd.s32 %v798, 168
      %v820 = vadd.s32 %v798, 176
      %v821 = vadd.s32 %v798, 184
      %v822 = vadd.s32 %v798, 192
      %v823 = vadd.s32 %v798, 200
      %v824 = vadd.s32 %v798, 208
      %v825 = vadd.s32 %v798, 216
      %v826 = vadd.s32 %v798, 224
      %v827 = vadd.s32 %v798, 232
      %v828 = vadd.s32 %v798, 240
      %v829 = vadd.s32 %v798, 248
      %vm830 = vcmp.lt.s32.totalorder %v798, 0
      %v831 = vsub.s32 0, %v798
      %v832 = vsel %vm830, %v831, %v798
      %v833 = vshrl.u32 %v832, 4
      %v834 = vand.u32 %v832, 15
      %v835 = vsub.s32 0, %v834
      %v836 = vsel %vm830, %v835, %v834
      %vm837 = vcmp.lt.s32.totalorder %v799, 0
      %v838 = vsub.s32 0, %v799
      %v839 = vsel %vm837, %v838, %v799
      %v840 = vshrl.u32 %v839, 4
      %v841 = vand.u32 %v839, 15
      %v842 = vsub.s32 0, %v841
      %v843 = vsel %vm837, %v842, %v841
      %vm844 = vcmp.lt.s32.totalorder %v800, 0
      %v845 = vsub.s32 0, %v800
      %v846 = vsel %vm844, %v845, %v800
      %v847 = vshrl.u32 %v846, 4
      %v848 = vand.u32 %v846, 15
      %v849 = vsub.s32 0, %v848
      %v850 = vsel %vm844, %v849, %v848
      %vm851 = vcmp.lt.s32.totalorder %v801, 0
      %v852 = vsub.s32 0, %v801
      %v853 = vsel %vm851, %v852, %v801
      %v854 = vshrl.u32 %v853, 4
      %v855 = vand.u32 %v853, 15
      %v856 = vsub.s32 0, %v855
      %v857 = vsel %vm851, %v856, %v855
      %vm858 = vcmp.lt.s32.totalorder %v802, 0
      %v859 = vsub.s32 0, %v802
      %v860 = vsel %vm858, %v859, %v802
      %v861 = vshrl.u32 %v860, 4
      %v862 = vand.u32 %v860, 15
      %v863 = vsub.s32 0, %v862
      %v864 = vsel %vm858, %v863, %v862
      %vm865 = vcmp.lt.s32.totalorder %v803, 0
      %v866 = vsub.s32 0, %v803
      %v867 = vsel %vm865, %v866, %v803
      %v868 = vshrl.u32 %v867, 4
      %v869 = vand.u32 %v867, 15
      %v870 = vsub.s32 0, %v869
      %v871 = vsel %vm865, %v870, %v869
      %vm872 = vcmp.lt.s32.totalorder %v804, 0
      %v873 = vsub.s32 0, %v804
      %v874 = vsel %vm872, %v873, %v804
      %v875 = vshrl.u32 %v874, 4
      %v876 = vand.u32 %v874, 15
      %v877 = vsub.s32 0, %v876
      %v878 = vsel %vm872, %v877, %v876
      %vm879 = vcmp.lt.s32.totalorder %v805, 0
      %v880 = vsub.s32 0, %v805
      %v881 = vsel %vm879, %v880, %v805
      %v882 = vshrl.u32 %v881, 4
      %v883 = vand.u32 %v881, 15
      %v884 = vsub.s32 0, %v883
      %v885 = vsel %vm879, %v884, %v883
      %vm886 = vcmp.lt.s32.totalorder %v806, 0
      %v887 = vsub.s32 0, %v806
      %v888 = vsel %vm886, %v887, %v806
      %v889 = vshrl.u32 %v888, 4
      %v890 = vand.u32 %v888, 15
      %v891 = vsub.s32 0, %v890
      %v892 = vsel %vm886, %v891, %v890
      %vm893 = vcmp.lt.s32.totalorder %v807, 0
      %v894 = vsub.s32 0, %v807
      %v895 = vsel %vm893, %v894, %v807
      %v896 = vshrl.u32 %v895, 4
      %v897 = vand.u32 %v895, 15
      %v898 = vsub.s32 0, %v897
      %v899 = vsel %vm893, %v898, %v897
      %vm900 = vcmp.lt.s32.totalorder %v808, 0
      %v901 = vsub.s32 0, %v808
      %v902 = vsel %vm900, %v901, %v808
      %v903 = vshrl.u32 %v902, 4
      %v904 = vand.u32 %v902, 15
      %v905 = vsub.s32 0, %v904
      %v906 = vsel %vm900, %v905, %v904
      %vm907 = vcmp.lt.s32.totalorder %v809, 0
      %v908 = vsub.s32 0, %v809
      %v909 = vsel %vm907, %v908, %v809
      %v910 = vshrl.u32 %v909, 4
      %v911 = vand.u32 %v909, 15
      %v912 = vsub.s32 0, %v911
      %v913 = vsel %vm907, %v912, %v911
      %vm914 = vcmp.lt.s32.totalorder %v810, 0
      %v915 = vsub.s32 0, %v810
      %v916 = vsel %vm914, %v915, %v810
      %v917 = vshrl.u32 %v916, 4
      %v918 = vand.u32 %v916, 15
      %v919 = vsub.s32 0, %v918
      %v920 = vsel %vm914, %v919, %v918
      %vm921 = vcmp.lt.s32.totalorder %v811, 0
      %v922 = vsub.s32 0, %v811
      %v923 = vsel %vm921, %v922, %v811
      %v924 = vshrl.u32 %v923, 4
      %v925 = vand.u32 %v923, 15
      %v926 = vsub.s32 0, %v925
      %v927 = vsel %vm921, %v926, %v925
      %vm928 = vcmp.lt.s32.totalorder %v812, 0
      %v929 = vsub.s32 0, %v812
      %v930 = vsel %vm928, %v929, %v812
      %v931 = vshrl.u32 %v930, 4
      %v932 = vand.u32 %v930, 15
      %v933 = vsub.s32 0, %v932
      %v934 = vsel %vm928, %v933, %v932
      %vm935 = vcmp.lt.s32.totalorder %v813, 0
      %v936 = vsub.s32 0, %v813
      %v937 = vsel %vm935, %v936, %v813
      %v938 = vshrl.u32 %v937, 4
      %v939 = vand.u32 %v937, 15
      %v940 = vsub.s32 0, %v939
      %v941 = vsel %vm935, %v940, %v939
      %vm942 = vcmp.lt.s32.totalorder %v814, 0
      %v943 = vsub.s32 0, %v814
      %v944 = vsel %vm942, %v943, %v814
      %v945 = vshrl.u32 %v944, 4
      %v946 = vand.u32 %v944, 15
      %v947 = vsub.s32 0, %v946
      %v948 = vsel %vm942, %v947, %v946
      %vm949 = vcmp.lt.s32.totalorder %v815, 0
      %v950 = vsub.s32 0, %v815
      %v951 = vsel %vm949, %v950, %v815
      %v952 = vshrl.u32 %v951, 4
      %v953 = vand.u32 %v951, 15
      %v954 = vsub.s32 0, %v953
      %v955 = vsel %vm949, %v954, %v953
      %vm956 = vcmp.lt.s32.totalorder %v816, 0
      %v957 = vsub.s32 0, %v816
      %v958 = vsel %vm956, %v957, %v816
      %v959 = vshrl.u32 %v958, 4
      %v960 = vand.u32 %v958, 15
      %v961 = vsub.s32 0, %v960
      %v962 = vsel %vm956, %v961, %v960
      %vm963 = vcmp.lt.s32.totalorder %v817, 0
      %v964 = vsub.s32 0, %v817
      %v965 = vsel %vm963, %v964, %v817
      %v966 = vshrl.u32 %v965, 4
      %v967 = vand.u32 %v965, 15
      %v968 = vsub.s32 0, %v967
      %v969 = vsel %vm963, %v968, %v967
      %vm970 = vcmp.lt.s32.totalorder %v818, 0
      %v971 = vsub.s32 0, %v818
      %v972 = vsel %vm970, %v971, %v818
      %v973 = vshrl.u32 %v972, 4
      %v974 = vand.u32 %v972, 15
      %v975 = vsub.s32 0, %v974
      %v976 = vsel %vm970, %v975, %v974
      %vm977 = vcmp.lt.s32.totalorder %v819, 0
      %v978 = vsub.s32 0, %v819
      %v979 = vsel %vm977, %v978, %v819
      %v980 = vshrl.u32 %v979, 4
      %v981 = vand.u32 %v979, 15
      %v982 = vsub.s32 0, %v981
      %v983 = vsel %vm977, %v982, %v981
      %vm984 = vcmp.lt.s32.totalorder %v820, 0
      %v985 = vsub.s32 0, %v820
      %v986 = vsel %vm984, %v985, %v820
      %v987 = vshrl.u32 %v986, 4
      %v988 = vand.u32 %v986, 15
      %v989 = vsub.s32 0, %v988
      %v990 = vsel %vm984, %v989, %v988
      %vm991 = vcmp.lt.s32.totalorder %v821, 0
      %v992 = vsub.s32 0, %v821
      %v993 = vsel %vm991, %v992, %v821
      %v994 = vshrl.u32 %v993, 4
      %v995 = vand.u32 %v993, 15
      %v996 = vsub.s32 0, %v995
      %v997 = vsel %vm991, %v996, %v995
      %vm998 = vcmp.lt.s32.totalorder %v822, 0
      %v999 = vsub.s32 0, %v822
      %v1000 = vsel %vm998, %v999, %v822
      %v1001 = vshrl.u32 %v1000, 4
      %v1002 = vand.u32 %v1000, 15
      %v1003 = vsub.s32 0, %v1002
      %v1004 = vsel %vm998, %v1003, %v1002
      %vm1005 = vcmp.lt.s32.totalorder %v823, 0
      %v1006 = vsub.s32 0, %v823
      %v1007 = vsel %vm1005, %v1006, %v823
      %v1008 = vshrl.u32 %v1007, 4
      %v1009 = vand.u32 %v1007, 15
      %v1010 = vsub.s32 0, %v1009
      %v1011 = vsel %vm1005, %v1010, %v1009
      %vm1012 = vcmp.lt.s32.totalorder %v824, 0
      %v1013 = vsub.s32 0, %v824
      %v1014 = vsel %vm1012, %v1013, %v824
      %v1015 = vshrl.u32 %v1014, 4
      %v1016 = vand.u32 %v1014, 15
      %v1017 = vsub.s32 0, %v1016
      %v1018 = vsel %vm1012, %v1017, %v1016
      %vm1019 = vcmp.lt.s32.totalorder %v825, 0
      %v1020 = vsub.s32 0, %v825
      %v1021 = vsel %vm1019, %v1020, %v825
      %v1022 = vshrl.u32 %v1021, 4
      %v1023 = vand.u32 %v1021, 15
      %v1024 = vsub.s32 0, %v1023
      %v1025 = vsel %vm1019, %v1024, %v1023
      %vm1026 = vcmp.lt.s32.totalorder %v826, 0
      %v1027 = vsub.s32 0, %v826
      %v1028 = vsel %vm1026, %v1027, %v826
      %v1029 = vshrl.u32 %v1028, 4
      %v1030 = vand.u32 %v1028, 15
      %v1031 = vsub.s32 0, %v1030
      %v1032 = vsel %vm1026, %v1031, %v1030
      %vm1033 = vcmp.lt.s32.totalorder %v827, 0
      %v1034 = vsub.s32 0, %v827
      %v1035 = vsel %vm1033, %v1034, %v827
      %v1036 = vshrl.u32 %v1035, 4
      %v1037 = vand.u32 %v1035, 15
      %v1038 = vsub.s32 0, %v1037
      %v1039 = vsel %vm1033, %v1038, %v1037
      %vm1040 = vcmp.lt.s32.totalorder %v828, 0
      %v1041 = vsub.s32 0, %v828
      %v1042 = vsel %vm1040, %v1041, %v828
      %v1043 = vshrl.u32 %v1042, 4
      %v1044 = vand.u32 %v1042, 15
      %v1045 = vsub.s32 0, %v1044
      %v1046 = vsel %vm1040, %v1045, %v1044
      %vm1047 = vcmp.lt.s32.totalorder %v829, 0
      %v1048 = vsub.s32 0, %v829
      %v1049 = vsel %vm1047, %v1048, %v829
      %v1050 = vshrl.u32 %v1049, 4
      %v1051 = vand.u32 %v1049, 15
      %v1052 = vsub.s32 0, %v1051
      %v1053 = vsel %vm1047, %v1052, %v1051
      %vm1054 = vcmp.ne.s32.totalorder %v836, 0
      %vm1055 = vcmp.ne.s32.totalorder %v843, 0
      %vm1056 = vcmp.ne.s32.totalorder %v850, 0
      %vm1057 = vcmp.ne.s32.totalorder %v857, 0
      %vm1058 = vcmp.ne.s32.totalorder %v864, 0
      %vm1059 = vcmp.ne.s32.totalorder %v871, 0
      %vm1060 = vcmp.ne.s32.totalorder %v878, 0
      %vm1061 = vcmp.ne.s32.totalorder %v885, 0
      %vm1062 = vcmp.ne.s32.totalorder %v892, 0
      %vm1063 = vcmp.ne.s32.totalorder %v899, 0
      %vm1064 = vcmp.ne.s32.totalorder %v906, 0
      %vm1065 = vcmp.ne.s32.totalorder %v913, 0
      %vm1066 = vcmp.ne.s32.totalorder %v920, 0
      %vm1067 = vcmp.ne.s32.totalorder %v927, 0
      %vm1068 = vcmp.ne.s32.totalorder %v934, 0
      %vm1069 = vcmp.ne.s32.totalorder %v941, 0
      %vm1070 = vcmp.ne.s32.totalorder %v948, 0
      %vm1071 = vcmp.ne.s32.totalorder %v955, 0
      %vm1072 = vcmp.ne.s32.totalorder %v962, 0
      %vm1073 = vcmp.ne.s32.totalorder %v969, 0
      %vm1074 = vcmp.ne.s32.totalorder %v976, 0
      %vm1075 = vcmp.ne.s32.totalorder %v983, 0
      %vm1076 = vcmp.ne.s32.totalorder %v990, 0
      %vm1077 = vcmp.ne.s32.totalorder %v997, 0
      %vm1078 = vcmp.ne.s32.totalorder %v1004, 0
      %vm1079 = vcmp.ne.s32.totalorder %v1011, 0
      %vm1080 = vcmp.ne.s32.totalorder %v1018, 0
      %vm1081 = vcmp.ne.s32.totalorder %v1025, 0
      %vm1082 = vcmp.ne.s32.totalorder %v1032, 0
      %vm1083 = vcmp.ne.s32.totalorder %v1039, 0
      %vm1084 = vcmp.ne.s32.totalorder %v1046, 0
      %vm1085 = vcmp.ne.s32.totalorder %v1053, 0
      %vm1086 = vcmp.lt.s32.totalorder %v836, 0
      %vm1087 = vcmp.lt.s32.totalorder %v843, 0
      %vm1088 = vcmp.lt.s32.totalorder %v850, 0
      %vm1089 = vcmp.lt.s32.totalorder %v857, 0
      %vm1090 = vcmp.lt.s32.totalorder %v864, 0
      %vm1091 = vcmp.lt.s32.totalorder %v871, 0
      %vm1092 = vcmp.lt.s32.totalorder %v878, 0
      %vm1093 = vcmp.lt.s32.totalorder %v885, 0
      %vm1094 = vcmp.lt.s32.totalorder %v892, 0
      %vm1095 = vcmp.lt.s32.totalorder %v899, 0
      %vm1096 = vcmp.lt.s32.totalorder %v906, 0
      %vm1097 = vcmp.lt.s32.totalorder %v913, 0
      %vm1098 = vcmp.lt.s32.totalorder %v920, 0
      %vm1099 = vcmp.lt.s32.totalorder %v927, 0
      %vm1100 = vcmp.lt.s32.totalorder %v934, 0
      %vm1101 = vcmp.lt.s32.totalorder %v941, 0
      %vm1102 = vcmp.lt.s32.totalorder %v948, 0
      %vm1103 = vcmp.lt.s32.totalorder %v955, 0
      %vm1104 = vcmp.lt.s32.totalorder %v962, 0
      %vm1105 = vcmp.lt.s32.totalorder %v969, 0
      %vm1106 = vcmp.lt.s32.totalorder %v976, 0
      %vm1107 = vcmp.lt.s32.totalorder %v983, 0
      %vm1108 = vcmp.lt.s32.totalorder %v990, 0
      %vm1109 = vcmp.lt.s32.totalorder %v997, 0
      %vm1110 = vcmp.lt.s32.totalorder %v1004, 0
      %vm1111 = vcmp.lt.s32.totalorder %v1011, 0
      %vm1112 = vcmp.lt.s32.totalorder %v1018, 0
      %vm1113 = vcmp.lt.s32.totalorder %v1025, 0
      %vm1114 = vcmp.lt.s32.totalorder %v1032, 0
      %vm1115 = vcmp.lt.s32.totalorder %v1039, 0
      %vm1116 = vcmp.lt.s32.totalorder %v1046, 0
      %vm1117 = vcmp.lt.s32.totalorder %v1053, 0
      %vm1118 = vmand %vm1086, %vm1054
      %vm1119 = vmand %vm1087, %vm1055
      %vm1120 = vmand %vm1088, %vm1056
      %vm1121 = vmand %vm1089, %vm1057
      %vm1122 = vmand %vm1090, %vm1058
      %vm1123 = vmand %vm1091, %vm1059
      %vm1124 = vmand %vm1092, %vm1060
      %vm1125 = vmand %vm1093, %vm1061
      %vm1126 = vmand %vm1094, %vm1062
      %vm1127 = vmand %vm1095, %vm1063
      %vm1128 = vmand %vm1096, %vm1064
      %vm1129 = vmand %vm1097, %vm1065
      %vm1130 = vmand %vm1098, %vm1066
      %vm1131 = vmand %vm1099, %vm1067
      %vm1132 = vmand %vm1100, %vm1068
      %vm1133 = vmand %vm1101, %vm1069
      %vm1134 = vmand %vm1102, %vm1070
      %vm1135 = vmand %vm1103, %vm1071
      %vm1136 = vmand %vm1104, %vm1072
      %vm1137 = vmand %vm1105, %vm1073
      %vm1138 = vmand %vm1106, %vm1074
      %vm1139 = vmand %vm1107, %vm1075
      %vm1140 = vmand %vm1108, %vm1076
      %vm1141 = vmand %vm1109, %vm1077
      %vm1142 = vmand %vm1110, %vm1078
      %vm1143 = vmand %vm1111, %vm1079
      %vm1144 = vmand %vm1112, %vm1080
      %vm1145 = vmand %vm1113, %vm1081
      %vm1146 = vmand %vm1114, %vm1082
      %vm1147 = vmand %vm1115, %vm1083
      %vm1148 = vmand %vm1116, %vm1084
      %vm1149 = vmand %vm1117, %vm1085
      %v1150 = vadd.s32 %v836, 16
      %v1151 = vadd.s32 %v843, 16
      %v1152 = vadd.s32 %v850, 16
      %v1153 = vadd.s32 %v857, 16
      %v1154 = vadd.s32 %v864, 16
      %v1155 = vadd.s32 %v871, 16
      %v1156 = vadd.s32 %v878, 16
      %v1157 = vadd.s32 %v885, 16
      %v1158 = vadd.s32 %v892, 16
      %v1159 = vadd.s32 %v899, 16
      %v1160 = vadd.s32 %v906, 16
      %v1161 = vadd.s32 %v913, 16
      %v1162 = vadd.s32 %v920, 16
      %v1163 = vadd.s32 %v927, 16
      %v1164 = vadd.s32 %v934, 16
      %v1165 = vadd.s32 %v941, 16
      %v1166 = vadd.s32 %v948, 16
      %v1167 = vadd.s32 %v955, 16
      %v1168 = vadd.s32 %v962, 16
      %v1169 = vadd.s32 %v969, 16
      %v1170 = vadd.s32 %v976, 16
      %v1171 = vadd.s32 %v983, 16
      %v1172 = vadd.s32 %v990, 16
      %v1173 = vadd.s32 %v997, 16
      %v1174 = vadd.s32 %v1004, 16
      %v1175 = vadd.s32 %v1011, 16
      %v1176 = vadd.s32 %v1018, 16
      %v1177 = vadd.s32 %v1025, 16
      %v1178 = vadd.s32 %v1032, 16
      %v1179 = vadd.s32 %v1039, 16
      %v1180 = vadd.s32 %v1046, 16
      %v1181 = vadd.s32 %v1053, 16
      %v1182 = vsel %vm1118, %v1150, %v836
      %v1183 = vsel %vm1119, %v1151, %v843
      %v1184 = vsel %vm1120, %v1152, %v850
      %v1185 = vsel %vm1121, %v1153, %v857
      %v1186 = vsel %vm1122, %v1154, %v864
      %v1187 = vsel %vm1123, %v1155, %v871
      %v1188 = vsel %vm1124, %v1156, %v878
      %v1189 = vsel %vm1125, %v1157, %v885
      %v1190 = vsel %vm1126, %v1158, %v892
      %v1191 = vsel %vm1127, %v1159, %v899
      %v1192 = vsel %vm1128, %v1160, %v906
      %v1193 = vsel %vm1129, %v1161, %v913
      %v1194 = vsel %vm1130, %v1162, %v920
      %v1195 = vsel %vm1131, %v1163, %v927
      %v1196 = vsel %vm1132, %v1164, %v934
      %v1197 = vsel %vm1133, %v1165, %v941
      %v1198 = vsel %vm1134, %v1166, %v948
      %v1199 = vsel %vm1135, %v1167, %v955
      %v1200 = vsel %vm1136, %v1168, %v962
      %v1201 = vsel %vm1137, %v1169, %v969
      %v1202 = vsel %vm1138, %v1170, %v976
      %v1203 = vsel %vm1139, %v1171, %v983
      %v1204 = vsel %vm1140, %v1172, %v990
      %v1205 = vsel %vm1141, %v1173, %v997
      %v1206 = vsel %vm1142, %v1174, %v1004
      %v1207 = vsel %vm1143, %v1175, %v1011
      %v1208 = vsel %vm1144, %v1176, %v1018
      %v1209 = vsel %vm1145, %v1177, %v1025
      %v1210 = vsel %vm1146, %v1178, %v1032
      %v1211 = vsel %vm1147, %v1179, %v1039
      %v1212 = vsel %vm1148, %v1180, %v1046
      %v1213 = vsel %vm1149, %v1181, %v1053
      %vm1214 = vcmp.ge.s32.totalorder %v1182, 1
      %vm1215 = vcmp.ge.s32.totalorder %v1183, 1
      %vm1216 = vcmp.ge.s32.totalorder %v1184, 1
      %vm1217 = vcmp.ge.s32.totalorder %v1185, 1
      %vm1218 = vcmp.ge.s32.totalorder %v1186, 1
      %vm1219 = vcmp.ge.s32.totalorder %v1187, 1
      %vm1220 = vcmp.ge.s32.totalorder %v1188, 1
      %vm1221 = vcmp.ge.s32.totalorder %v1189, 1
      %vm1222 = vcmp.ge.s32.totalorder %v1190, 1
      %vm1223 = vcmp.ge.s32.totalorder %v1191, 1
      %vm1224 = vcmp.ge.s32.totalorder %v1192, 1
      %vm1225 = vcmp.ge.s32.totalorder %v1193, 1
      %vm1226 = vcmp.ge.s32.totalorder %v1194, 1
      %vm1227 = vcmp.ge.s32.totalorder %v1195, 1
      %vm1228 = vcmp.ge.s32.totalorder %v1196, 1
      %vm1229 = vcmp.ge.s32.totalorder %v1197, 1
      %vm1230 = vcmp.ge.s32.totalorder %v1198, 1
      %vm1231 = vcmp.ge.s32.totalorder %v1199, 1
      %vm1232 = vcmp.ge.s32.totalorder %v1200, 1
      %vm1233 = vcmp.ge.s32.totalorder %v1201, 1
      %vm1234 = vcmp.ge.s32.totalorder %v1202, 1
      %vm1235 = vcmp.ge.s32.totalorder %v1203, 1
      %vm1236 = vcmp.ge.s32.totalorder %v1204, 1
      %vm1237 = vcmp.ge.s32.totalorder %v1205, 1
      %vm1238 = vcmp.ge.s32.totalorder %v1206, 1
      %vm1239 = vcmp.ge.s32.totalorder %v1207, 1
      %vm1240 = vcmp.ge.s32.totalorder %v1208, 1
      %vm1241 = vcmp.ge.s32.totalorder %v1209, 1
      %vm1242 = vcmp.ge.s32.totalorder %v1210, 1
      %vm1243 = vcmp.ge.s32.totalorder %v1211, 1
      %vm1244 = vcmp.ge.s32.totalorder %v1212, 1
      %vm1245 = vcmp.ge.s32.totalorder %v1213, 1
      %v1246 = vsel %vm1214, 1, 0
      %v1247 = vsel %vm1215, 1, 0
      %v1248 = vsel %vm1216, 1, 0
      %v1249 = vsel %vm1217, 1, 0
      %v1250 = vsel %vm1218, 1, 0
      %v1251 = vsel %vm1219, 1, 0
      %v1252 = vsel %vm1220, 1, 0
      %v1253 = vsel %vm1221, 1, 0
      %v1254 = vsel %vm1222, 1, 0
      %v1255 = vsel %vm1223, 1, 0
      %v1256 = vsel %vm1224, 1, 0
      %v1257 = vsel %vm1225, 1, 0
      %v1258 = vsel %vm1226, 1, 0
      %v1259 = vsel %vm1227, 1, 0
      %v1260 = vsel %vm1228, 1, 0
      %v1261 = vsel %vm1229, 1, 0
      %v1262 = vsel %vm1230, 1, 0
      %v1263 = vsel %vm1231, 1, 0
      %v1264 = vsel %vm1232, 1, 0
      %v1265 = vsel %vm1233, 1, 0
      %v1266 = vsel %vm1234, 1, 0
      %v1267 = vsel %vm1235, 1, 0
      %v1268 = vsel %vm1236, 1, 0
      %v1269 = vsel %vm1237, 1, 0
      %v1270 = vsel %vm1238, 1, 0
      %v1271 = vsel %vm1239, 1, 0
      %v1272 = vsel %vm1240, 1, 0
      %v1273 = vsel %vm1241, 1, 0
      %v1274 = vsel %vm1242, 1, 0
      %v1275 = vsel %vm1243, 1, 0
      %v1276 = vsel %vm1244, 1, 0
      %v1277 = vsel %vm1245, 1, 0
      %v1278 = vcvt.s32.f32 %v1246
      %v1279 = vcvt.s32.f32 %v1247
      %v1280 = vcvt.s32.f32 %v1248
      %v1281 = vcvt.s32.f32 %v1249
      %v1282 = vcvt.s32.f32 %v1250
      %v1283 = vcvt.s32.f32 %v1251
      %v1284 = vcvt.s32.f32 %v1252
      %v1285 = vcvt.s32.f32 %v1253
      %v1286 = vcvt.s32.f32 %v1254
      %v1287 = vcvt.s32.f32 %v1255
      %v1288 = vcvt.s32.f32 %v1256
      %v1289 = vcvt.s32.f32 %v1257
      %v1290 = vcvt.s32.f32 %v1258
      %v1291 = vcvt.s32.f32 %v1259
      %v1292 = vcvt.s32.f32 %v1260
      %v1293 = vcvt.s32.f32 %v1261
      %v1294 = vcvt.s32.f32 %v1262
      %v1295 = vcvt.s32.f32 %v1263
      %v1296 = vcvt.s32.f32 %v1264
      %v1297 = vcvt.s32.f32 %v1265
      %v1298 = vcvt.s32.f32 %v1266
      %v1299 = vcvt.s32.f32 %v1267
      %v1300 = vcvt.s32.f32 %v1268
      %v1301 = vcvt.s32.f32 %v1269
      %v1302 = vcvt.s32.f32 %v1270
      %v1303 = vcvt.s32.f32 %v1271
      %v1304 = vcvt.s32.f32 %v1272
      %v1305 = vcvt.s32.f32 %v1273
      %v1306 = vcvt.s32.f32 %v1274
      %v1307 = vcvt.s32.f32 %v1275
      %v1308 = vcvt.s32.f32 %v1276
      %v1309 = vcvt.s32.f32 %v1277
      %vm1310 = vcmp.le.s32.totalorder %v1182, 14
      %vm1311 = vcmp.le.s32.totalorder %v1183, 14
      %vm1312 = vcmp.le.s32.totalorder %v1184, 14
      %vm1313 = vcmp.le.s32.totalorder %v1185, 14
      %vm1314 = vcmp.le.s32.totalorder %v1186, 14
      %vm1315 = vcmp.le.s32.totalorder %v1187, 14
      %vm1316 = vcmp.le.s32.totalorder %v1188, 14
      %vm1317 = vcmp.le.s32.totalorder %v1189, 14
      %vm1318 = vcmp.le.s32.totalorder %v1190, 14
      %vm1319 = vcmp.le.s32.totalorder %v1191, 14
      %vm1320 = vcmp.le.s32.totalorder %v1192, 14
      %vm1321 = vcmp.le.s32.totalorder %v1193, 14
      %vm1322 = vcmp.le.s32.totalorder %v1194, 14
      %vm1323 = vcmp.le.s32.totalorder %v1195, 14
      %vm1324 = vcmp.le.s32.totalorder %v1196, 14
      %vm1325 = vcmp.le.s32.totalorder %v1197, 14
      %vm1326 = vcmp.le.s32.totalorder %v1198, 14
      %vm1327 = vcmp.le.s32.totalorder %v1199, 14
      %vm1328 = vcmp.le.s32.totalorder %v1200, 14
      %vm1329 = vcmp.le.s32.totalorder %v1201, 14
      %vm1330 = vcmp.le.s32.totalorder %v1202, 14
      %vm1331 = vcmp.le.s32.totalorder %v1203, 14
      %vm1332 = vcmp.le.s32.totalorder %v1204, 14
      %vm1333 = vcmp.le.s32.totalorder %v1205, 14
      %vm1334 = vcmp.le.s32.totalorder %v1206, 14
      %vm1335 = vcmp.le.s32.totalorder %v1207, 14
      %vm1336 = vcmp.le.s32.totalorder %v1208, 14
      %vm1337 = vcmp.le.s32.totalorder %v1209, 14
      %vm1338 = vcmp.le.s32.totalorder %v1210, 14
      %vm1339 = vcmp.le.s32.totalorder %v1211, 14
      %vm1340 = vcmp.le.s32.totalorder %v1212, 14
      %vm1341 = vcmp.le.s32.totalorder %v1213, 14
      %v1342 = vsel %vm1310, 1, 0
      %v1343 = vsel %vm1311, 1, 0
      %v1344 = vsel %vm1312, 1, 0
      %v1345 = vsel %vm1313, 1, 0
      %v1346 = vsel %vm1314, 1, 0
      %v1347 = vsel %vm1315, 1, 0
      %v1348 = vsel %vm1316, 1, 0
      %v1349 = vsel %vm1317, 1, 0
      %v1350 = vsel %vm1318, 1, 0
      %v1351 = vsel %vm1319, 1, 0
      %v1352 = vsel %vm1320, 1, 0
      %v1353 = vsel %vm1321, 1, 0
      %v1354 = vsel %vm1322, 1, 0
      %v1355 = vsel %vm1323, 1, 0
      %v1356 = vsel %vm1324, 1, 0
      %v1357 = vsel %vm1325, 1, 0
      %v1358 = vsel %vm1326, 1, 0
      %v1359 = vsel %vm1327, 1, 0
      %v1360 = vsel %vm1328, 1, 0
      %v1361 = vsel %vm1329, 1, 0
      %v1362 = vsel %vm1330, 1, 0
      %v1363 = vsel %vm1331, 1, 0
      %v1364 = vsel %vm1332, 1, 0
      %v1365 = vsel %vm1333, 1, 0
      %v1366 = vsel %vm1334, 1, 0
      %v1367 = vsel %vm1335, 1, 0
      %v1368 = vsel %vm1336, 1, 0
      %v1369 = vsel %vm1337, 1, 0
      %v1370 = vsel %vm1338, 1, 0
      %v1371 = vsel %vm1339, 1, 0
      %v1372 = vsel %vm1340, 1, 0
      %v1373 = vsel %vm1341, 1, 0
      %v1374 = vcvt.s32.f32 %v1342
      %v1375 = vcvt.s32.f32 %v1343
      %v1376 = vcvt.s32.f32 %v1344
      %v1377 = vcvt.s32.f32 %v1345
      %v1378 = vcvt.s32.f32 %v1346
      %v1379 = vcvt.s32.f32 %v1347
      %v1380 = vcvt.s32.f32 %v1348
      %v1381 = vcvt.s32.f32 %v1349
      %v1382 = vcvt.s32.f32 %v1350
      %v1383 = vcvt.s32.f32 %v1351
      %v1384 = vcvt.s32.f32 %v1352
      %v1385 = vcvt.s32.f32 %v1353
      %v1386 = vcvt.s32.f32 %v1354
      %v1387 = vcvt.s32.f32 %v1355
      %v1388 = vcvt.s32.f32 %v1356
      %v1389 = vcvt.s32.f32 %v1357
      %v1390 = vcvt.s32.f32 %v1358
      %v1391 = vcvt.s32.f32 %v1359
      %v1392 = vcvt.s32.f32 %v1360
      %v1393 = vcvt.s32.f32 %v1361
      %v1394 = vcvt.s32.f32 %v1362
      %v1395 = vcvt.s32.f32 %v1363
      %v1396 = vcvt.s32.f32 %v1364
      %v1397 = vcvt.s32.f32 %v1365
      %v1398 = vcvt.s32.f32 %v1366
      %v1399 = vcvt.s32.f32 %v1367
      %v1400 = vcvt.s32.f32 %v1368
      %v1401 = vcvt.s32.f32 %v1369
      %v1402 = vcvt.s32.f32 %v1370
      %v1403 = vcvt.s32.f32 %v1371
      %v1404 = vcvt.s32.f32 %v1372
      %v1405 = vcvt.s32.f32 %v1373
      %vm1406 = vcmask 97280
      %1407 = vst.msk [vmem:[#allocation2] sm:$0xff] %vm1406, 0.0
      %1408 = vst.msk [vmem:[#allocation2 + $0x8] sm:$0xff] %vm1406, 0.0
      %1409 = vst.msk [vmem:[#allocation2 + $0x10] sm:$0xff] %vm1406, 0.0
      %1410 = vst.msk [vmem:[#allocation2 + $0x18] sm:$0xff] %vm1406, 0.0
      %1411 = vst.msk [vmem:[#allocation2 + $0x20] sm:$0xff] %vm1406, 0.0
      %1412 = vst.msk [vmem:[#allocation2 + $0x28] sm:$0xff] %vm1406, 0.0
      %1413 = vst.msk [vmem:[#allocation2 + $0x30] sm:$0xff] %vm1406, 0.0
      %1414 = vst.msk [vmem:[#allocation2 + $0x38] sm:$0xff] %vm1406, 0.0
      %1415 = vst.msk [vmem:[#allocation2 + $0x40] sm:$0xff] %vm1406, 0.0
      %1416 = vst.msk [vmem:[#allocation2 + $0x48] sm:$0xff] %vm1406, 0.0
      %1417 = vst.msk [vmem:[#allocation2 + $0x50] sm:$0xff] %vm1406, 0.0
      %1418 = vst.msk [vmem:[#allocation2 + $0x58] sm:$0xff] %vm1406, 0.0
      %1419 = vst.msk [vmem:[#allocation2 + $0x60] sm:$0xff] %vm1406, 0.0
      %1420 = vst.msk [vmem:[#allocation2 + $0x68] sm:$0xff] %vm1406, 0.0
      %1421 = vst.msk [vmem:[#allocation2 + $0x70] sm:$0xff] %vm1406, 0.0
      %1422 = vst.msk [vmem:[#allocation2 + $0x78] sm:$0xff] %vm1406, 0.0
      %1423 = vst.msk [vmem:[#allocation2 + $0x80] sm:$0xff] %vm1406, 0.0
      %1424 = vst.msk [vmem:[#allocation2 + $0x88] sm:$0xff] %vm1406, 0.0
      %1425 = vst.msk [vmem:[#allocation2 + $0x90] sm:$0xff] %vm1406, 0.0
      %1426 = vst.msk [vmem:[#allocation2 + $0x98] sm:$0xff] %vm1406, 0.0
      %1427 = vst.msk [vmem:[#allocation2 + $0xa0] sm:$0xff] %vm1406, 0.0
      %1428 = vst.msk [vmem:[#allocation2 + $0xa8] sm:$0xff] %vm1406, 0.0
      %1429 = vst.msk [vmem:[#allocation2 + $0xb0] sm:$0xff] %vm1406, 0.0
      %1430 = vst.msk [vmem:[#allocation2 + $0xb8] sm:$0xff] %vm1406, 0.0
      %1431 = vst.msk [vmem:[#allocation2 + $0xc0] sm:$0xff] %vm1406, 0.0
      %1432 = vst.msk [vmem:[#allocation2 + $0xc8] sm:$0xff] %vm1406, 0.0
      %1433 = vst.msk [vmem:[#allocation2 + $0xd0] sm:$0xff] %vm1406, 0.0
      %1434 = vst.msk [vmem:[#allocation2 + $0xd8] sm:$0xff] %vm1406, 0.0
      %1435 = vst.msk [vmem:[#allocation2 + $0xe0] sm:$0xff] %vm1406, 0.0
      %1436 = vst.msk [vmem:[#allocation2 + $0xe8] sm:$0xff] %vm1406, 0.0
      %1437 = vst.msk [vmem:[#allocation2 + $0xf0] sm:$0xff] %vm1406, 0.0
      %1438 = vst.msk [vmem:[#allocation2 + $0xf8] sm:$0xff] %vm1406, 0.0
      %1439 = vst.msk [vmem:[#allocation2 + $0x100] sm:$0xff] %vm1406, 0.0
      %1440 = vst.msk [vmem:[#allocation2 + $0x108] sm:$0xff] %vm1406, 0.0
      %1441 = vst.msk [vmem:[#allocation2 + $0x110] sm:$0xff] %vm1406, 0.0
      %1442 = vst.msk [vmem:[#allocation2 + $0x118] sm:$0xff] %vm1406, 0.0
      %1443 = vst.msk [vmem:[#allocation2 + $0x120] sm:$0xff] %vm1406, 0.0
      %1444 = vst.msk [vmem:[#allocation2 + $0x128] sm:$0xff] %vm1406, 0.0
      %1445 = vst.msk [vmem:[#allocation2 + $0x18] sm:$0xff] %vm1406, %v765
      %1446 = vst.msk [vmem:[#allocation2 + $0x20] sm:$0xff] %vm1406, %v766
      %1447 = vst.msk [vmem:[#allocation2 + $0x28] sm:$0xff] %vm1406, %v767
      %1448 = vst.msk [vmem:[#allocation2 + $0x30] sm:$0xff] %vm1406, %v768
      %1449 = vst.msk [vmem:[#allocation2 + $0x38] sm:$0xff] %vm1406, %v769
      %1450 = vst.msk [vmem:[#allocation2 + $0x40] sm:$0xff] %vm1406, %v770
      %1451 = vst.msk [vmem:[#allocation2 + $0x48] sm:$0xff] %vm1406, %v771
      %1452 = vst.msk [vmem:[#allocation2 + $0x50] sm:$0xff] %vm1406, %v772
      %1453 = vst.msk [vmem:[#allocation2 + $0x58] sm:$0xff] %vm1406, %v773
      %1454 = vst.msk [vmem:[#allocation2 + $0x60] sm:$0xff] %vm1406, %v774
      %1455 = vst.msk [vmem:[#allocation2 + $0x68] sm:$0xff] %vm1406, %v775
      %1456 = vst.msk [vmem:[#allocation2 + $0x70] sm:$0xff] %vm1406, %v776
      %1457 = vst.msk [vmem:[#allocation2 + $0x78] sm:$0xff] %vm1406, %v777
      %1458 = vst.msk [vmem:[#allocation2 + $0x80] sm:$0xff] %vm1406, %v778
      %1459 = vst.msk [vmem:[#allocation2 + $0x88] sm:$0xff] %vm1406, %v779
      %1460 = vst.msk [vmem:[#allocation2 + $0x90] sm:$0xff] %vm1406, %v780
      %1461 = vst.msk [vmem:[#allocation2 + $0x98] sm:$0xff] %vm1406, %v781
      %1462 = vst.msk [vmem:[#allocation2 + $0xa0] sm:$0xff] %vm1406, %v782
      %1463 = vst.msk [vmem:[#allocation2 + $0xa8] sm:$0xff] %vm1406, %v783
      %1464 = vst.msk [vmem:[#allocation2 + $0xb0] sm:$0xff] %vm1406, %v784
      %1465 = vst.msk [vmem:[#allocation2 + $0xb8] sm:$0xff] %vm1406, %v785
      %1466 = vst.msk [vmem:[#allocation2 + $0xc0] sm:$0xff] %vm1406, %v786
      %1467 = vst.msk [vmem:[#allocation2 + $0xc8] sm:$0xff] %vm1406, %v787
      %1468 = vst.msk [vmem:[#allocation2 + $0xd0] sm:$0xff] %vm1406, %v788
      %1469 = vst.msk [vmem:[#allocation2 + $0xd8] sm:$0xff] %vm1406, %v789
      %1470 = vst.msk [vmem:[#allocation2 + $0xe0] sm:$0xff] %vm1406, %v790
      %1471 = vst.msk [vmem:[#allocation2 + $0xe8] sm:$0xff] %vm1406, %v791
      %1472 = vst.msk [vmem:[#allocation2 + $0xf0] sm:$0xff] %vm1406, %v792
      %1473 = vst.msk [vmem:[#allocation2 + $0xf8] sm:$0xff] %vm1406, %v793
      %1474 = vst.msk [vmem:[#allocation2 + $0x100] sm:$0xff] %vm1406, %v794
      %1475 = vst.msk [vmem:[#allocation2 + $0x108] sm:$0xff] %vm1406, %v795
      %1476 = vst.msk [vmem:[#allocation2 + $0x110] sm:$0xff] %vm1406, %v796
      %v1477 = vld [vmem:[#allocation2 + $0x7] sm:$0xff]
      %v1478 = vld [vmem:[#allocation2 + $0xf] sm:$0xff]
      %v1479 = vld [vmem:[#allocation2 + $0x17] sm:$0xff]
      %v1480 = vld [vmem:[#allocation2 + $0x1f] sm:$0xff]
      %v1481 = vld [vmem:[#allocation2 + $0x27] sm:$0xff]
      %v1482 = vld [vmem:[#allocation2 + $0x2f] sm:$0xff]
      %v1483 = vld [vmem:[#allocation2 + $0x37] sm:$0xff]
      %v1484 = vld [vmem:[#allocation2 + $0x3f] sm:$0xff]
      %v1485 = vld [vmem:[#allocation2 + $0x47] sm:$0xff]
      %v1486 = vld [vmem:[#allocation2 + $0x4f] sm:$0xff]
      %v1487 = vld [vmem:[#allocation2 + $0x57] sm:$0xff]
      %v1488 = vld [vmem:[#allocation2 + $0x5f] sm:$0xff]
      %v1489 = vld [vmem:[#allocation2 + $0x67] sm:$0xff]
      %v1490 = vld [vmem:[#allocation2 + $0x6f] sm:$0xff]
      %v1491 = vld [vmem:[#allocation2 + $0x77] sm:$0xff]
      %v1492 = vld [vmem:[#allocation2 + $0x7f] sm:$0xff]
      %v1493 = vld [vmem:[#allocation2 + $0x87] sm:$0xff]
      %v1494 = vld [vmem:[#allocation2 + $0x8f] sm:$0xff]
      %v1495 = vld [vmem:[#allocation2 + $0x97] sm:$0xff]
      %v1496 = vld [vmem:[#allocation2 + $0x9f] sm:$0xff]
      %v1497 = vld [vmem:[#allocation2 + $0xa7] sm:$0xff]
      %v1498 = vld [vmem:[#allocation2 + $0xaf] sm:$0xff]
      %v1499 = vld [vmem:[#allocation2 + $0xb7] sm:$0xff]
      %v1500 = vld [vmem:[#allocation2 + $0xbf] sm:$0xff]
      %v1501 = vld [vmem:[#allocation2 + $0xc7] sm:$0xff]
      %v1502 = vld [vmem:[#allocation2 + $0xcf] sm:$0xff]
      %v1503 = vld [vmem:[#allocation2 + $0xd7] sm:$0xff]
      %v1504 = vld [vmem:[#allocation2 + $0xdf] sm:$0xff]
      %v1505 = vld [vmem:[#allocation2 + $0xe7] sm:$0xff]
      %v1506 = vld [vmem:[#allocation2 + $0xef] sm:$0xff]
      %v1507 = vld [vmem:[#allocation2 + $0xf7] sm:$0xff]
      %v1508 = vld [vmem:[#allocation2 + $0xff] sm:$0xff]
      %v1509 = vmul.f32 %v1477, %v1278
      %v1510 = vmul.f32 %v1478, %v1279
      %v1511 = vmul.f32 %v1479, %v1280
      %v1512 = vmul.f32 %v1480, %v1281
      %v1513 = vmul.f32 %v1481, %v1282
      %v1514 = vmul.f32 %v1482, %v1283
      %v1515 = vmul.f32 %v1483, %v1284
      %v1516 = vmul.f32 %v1484, %v1285
      %v1517 = vmul.f32 %v1485, %v1286
      %v1518 = vmul.f32 %v1486, %v1287
      %v1519 = vmul.f32 %v1487, %v1288
      %v1520 = vmul.f32 %v1488, %v1289
      %v1521 = vmul.f32 %v1489, %v1290
      %v1522 = vmul.f32 %v1490, %v1291
      %v1523 = vmul.f32 %v1491, %v1292
      %v1524 = vmul.f32 %v1492, %v1293
      %v1525 = vmul.f32 %v1493, %v1294
      %v1526 = vmul.f32 %v1494, %v1295
      %v1527 = vmul.f32 %v1495, %v1296
      %v1528 = vmul.f32 %v1496, %v1297
      %v1529 = vmul.f32 %v1497, %v1298
      %v1530 = vmul.f32 %v1498, %v1299
      %v1531 = vmul.f32 %v1499, %v1300
      %v1532 = vmul.f32 %v1500, %v1301
      %v1533 = vmul.f32 %v1501, %v1302
      %v1534 = vmul.f32 %v1502, %v1303
      %v1535 = vmul.f32 %v1503, %v1304
      %v1536 = vmul.f32 %v1504, %v1305
      %v1537 = vmul.f32 %v1505, %v1306
      %v1538 = vmul.f32 %v1506, %v1307
      %v1539 = vmul.f32 %v1507, %v1308
      %v1540 = vmul.f32 %v1508, %v1309
      %v1541 = vld [vmem:[%s3] sm:$0xff]
      %v1542 = vld [vmem:[%s3 + $0x8] sm:$0xf]
      %v1543 = vld [vmem:[#allocation2 + $0x8] sm:$0xff]
      %v1544 = vld [vmem:[#allocation2 + $0x10] sm:$0xff]
      %v1545 = vld [vmem:[#allocation2 + $0x18] sm:$0xff]
      %v1546 = vld [vmem:[#allocation2 + $0x20] sm:$0xff]
      %v1547 = vld [vmem:[#allocation2 + $0x28] sm:$0xff]
      %v1548 = vld [vmem:[#allocation2 + $0x30] sm:$0xff]
      %v1549 = vld [vmem:[#allocation2 + $0x38] sm:$0xff]
      %v1550 = vld [vmem:[#allocation2 + $0x40] sm:$0xff]
      %v1551 = vld [vmem:[#allocation2 + $0x48] sm:$0xff]
      %v1552 = vld [vmem:[#allocation2 + $0x50] sm:$0xff]
      %v1553 = vld [vmem:[#allocation2 + $0x58] sm:$0xff]
      %v1554 = vld [vmem:[#allocation2 + $0x60] sm:$0xff]
      %v1555 = vld [vmem:[#allocation2 + $0x68] sm:$0xff]
      %v1556 = vld [vmem:[#allocation2 + $0x70] sm:$0xff]
      %v1557 = vld [vmem:[#allocation2 + $0x78] sm:$0xff]
      %v1558 = vld [vmem:[#allocation2 + $0x80] sm:$0xff]
      %v1559 = vld [vmem:[#allocation2 + $0x88] sm:$0xff]
      %v1560 = vld [vmem:[#allocation2 + $0x90] sm:$0xff]
      %v1561 = vld [vmem:[#allocation2 + $0x98] sm:$0xff]
      %v1562 = vld [vmem:[#allocation2 + $0xa0] sm:$0xff]
      %v1563 = vld [vmem:[#allocation2 + $0xa8] sm:$0xff]
      %v1564 = vld [vmem:[#allocation2 + $0xb0] sm:$0xff]
      %v1565 = vld [vmem:[#allocation2 + $0xb8] sm:$0xff]
      %v1566 = vld [vmem:[#allocation2 + $0xc0] sm:$0xff]
      %v1567 = vld [vmem:[#allocation2 + $0xc8] sm:$0xff]
      %v1568 = vld [vmem:[#allocation2 + $0xd0] sm:$0xff]
      %v1569 = vld [vmem:[#allocation2 + $0xd8] sm:$0xff]
      %v1570 = vld [vmem:[#allocation2 + $0xe0] sm:$0xff]
      %v1571 = vld [vmem:[#allocation2 + $0xe8] sm:$0xff]
      %v1572 = vld [vmem:[#allocation2 + $0xf0] sm:$0xff]
      %v1573 = vld [vmem:[#allocation2 + $0xf8] sm:$0xff]
      %v1574 = vld [vmem:[#allocation2 + $0x100] sm:$0xff]
      %s1575 = scalar_lea.vmem %s3, 16
      %v1576 = vld [vmem:[%s1575] sm:$0xff]
      %v1577 = vld [vmem:[%s1575 + $0x8] sm:$0xf]
      %v1579 = vsel %vm1406, %v1543, 0
      %v1582 = vsel %vm1406, %v1544, 0
      %v1585 = vsel %vm1406, %v1545, 0
      %v1588 = vsel %vm1406, %v1546, 0
      %v1591 = vsel %vm1406, %v1547, 0
      %v1594 = vsel %vm1406, %v1548, 0
      %v1597 = vsel %vm1406, %v1549, 0
      %v1600 = vsel %vm1406, %v1550, 0
      %v1603 = vsel %vm1406, %v1551, 0
      %v1606 = vsel %vm1406, %v1552, 0
      %v1609 = vsel %vm1406, %v1553, 0
      %v1612 = vsel %vm1406, %v1554, 0
      %v1615 = vsel %vm1406, %v1555, 0
      %v1618 = vsel %vm1406, %v1556, 0
      %v1621 = vsel %vm1406, %v1557, 0
      %v1624 = vsel %vm1406, %v1558, 0
      %v1627 = vsel %vm1406, %v1559, 0
      %v1630 = vsel %vm1406, %v1560, 0
      %v1633 = vsel %vm1406, %v1561, 0
      %v1636 = vsel %vm1406, %v1562, 0
      %v1639 = vsel %vm1406, %v1563, 0
      %v1642 = vsel %vm1406, %v1564, 0
      %v1645 = vsel %vm1406, %v1565, 0
      %v1648 = vsel %vm1406, %v1566, 0
      %v1651 = vsel %vm1406, %v1567, 0
      %v1654 = vsel %vm1406, %v1568, 0
      %v1657 = vsel %vm1406, %v1569, 0
      %v1660 = vsel %vm1406, %v1570, 0
      %v1663 = vsel %vm1406, %v1571, 0
      %v1666 = vsel %vm1406, %v1572, 0
      %v1669 = vsel %vm1406, %v1573, 0
      %v1672 = vsel %vm1406, %v1574, 0
      %vm1674 = vcmask 1043456
      %v1676 = vsel %vm1674, %v1577, 0
      %1678 = vmatprep.subr.mxu0 0.0
      %1679 = vmatpush1.msra.mxu0 %v1576
      %1680 = vmatprep.subr.mxu0 0.0
      %1681 = vmatpush1.msra.mxu0 %v1676
      %1682 = vmatprep.subr.mxu0 0.0
      %1683 = vmatpush1.msra.mxu0 0.0
      %1684 = vmatprep.subr.mxu0 0.0
      %1685 = vmatpush1.msra.mxu0 0.0
      %1686 = vmatprep.subr.mxu0 0.0
      %1687 = vmatpush1.msra.mxu0 0.0
      %1688 = vmatprep.subr.mxu0 0.0
      %1689 = vmatpush1.msra.mxu0 0.0
      %1690 = vmatprep.subr.mxu0 0.0
      %1691 = vmatpush1.msra.mxu0 0.0
      %1692 = vmatprep.subr.mxu0 0.0
      %1693 = vmatpush1.msra.mxu0 0.0
      %1694 = vmatprep.subr.mxu0 0.0
      %1695 = vmatpush1.msra.mxu0 0.0
      %1696 = vmatprep.subr.mxu0 0.0
      %1697 = vmatpush1.msra.mxu0 0.0
      %1698 = vmatprep.subr.mxu0 0.0
      %1699 = vmatpush1.msra.mxu0 0.0
      %1700 = vmatprep.subr.mxu0 0.0
      %1701 = vmatpush1.msra.mxu0 0.0
      %1702 = vmatprep.subr.mxu0 0.0
      %1703 = vmatpush1.msra.mxu0 0.0
      %1704 = vmatprep.subr.mxu0 0.0
      %1705 = vmatpush1.msra.mxu0 0.0
      %1706 = vmatprep.subr.mxu0 0.0
      %1707 = vmatpush1.msra.mxu0 0.0
      %1708 = vmatprep.subr.mxu0 0.0
      %1709 = vmatpush1.msra.mxu0 0.0
      %1710 = vmatprep.subr.mxu0 0.0
      %1711 = vmatpush1.msra.mxu0 0.0
      %1712 = vmatprep.subr.mxu0 0.0
      %1713 = vmatpush1.msra.mxu0 0.0
      %1714 = vmatprep.subr.mxu0 0.0
      %1715 = vmatpush1.msra.mxu0 0.0
      %1716 = vmatprep.subr.mxu0 0.0
      %1717 = vmatpush1.msra.mxu0 0.0
      %1718 = vmatprep.subr.mxu0 0.0
      %1719 = vmatpush1.msra.mxu0 0.0
      %1720 = vmatprep.subr.mxu0 0.0
      %1721 = vmatpush1.msra.mxu0 0.0
      %1722 = vmatprep.subr.mxu0 0.0
      %1723 = vmatpush1.msra.mxu0 0.0
      %1724 = vmatprep.subr.mxu0 0.0
      %1725 = vmatpush1.msra.mxu0 0.0
      %1726 = vmatprep.subr.mxu0 0.0
      %1727 = vmatpush1.msra.mxu0 0.0
      %1728 = vmatprep.subr.mxu0 0.0
      %1729 = vmatpush1.msra.mxu0 0.0
      %1730 = vmatprep.subr.mxu0 0.0
      %1731 = vmatpush1.msra.mxu0 0.0
      %1732 = vmatprep.subr.mxu0 0.0
      %1733 = vmatpush1.msra.mxu0 0.0
      %1734 = vmatprep.subr.mxu0 0.0
      %1735 = vmatpush1.msra.mxu0 0.0
      %1736 = vmatprep.subr.mxu0 0.0
      %1737 = vmatpush1.msra.mxu0 0.0
      %1738 = vmatprep.subr.mxu0 0.0
      %1739 = vmatpush1.msra.mxu0 0.0
      %1740 = vmatprep.subr.mxu0 0.0
      %1741 = vmatpush1.msra.mxu0 0.0
      %1742 = vmatprep.mubr.f32.mxu0 0.0
      %1743 = vmatmul.mubr.f32.gmra.mrb[0].mxu0 %v1579
      %v1744 = vpop.f32.mrb[0].mxu0
      %v1745 = vadd.f32 0.0, %v1744
      %v1746 = vpop.f32.mrb[0].mxu0
      %1747 = vmatprep.mubr.f32.mxu0 0.0
      %1748 = vmatmul.mubr.f32.gmra.mrb[0].mxu0 %v1582
      %v1749 = vpop.f32.mrb[0].mxu0
      %v1750 = vadd.f32 0.0, %v1749
      %v1751 = vpop.f32.mrb[0].mxu0
      %1752 = vmatprep.mubr.f32.mxu0 0.0
      %1753 = vmatmul.mubr.f32.gmra.mrb[0].mxu0 %v1585
      %v1754 = vpop.f32.mrb[0].mxu0
      %v1755 = vadd.f32 0.0, %v1754
      %v1756 = vpop.f32.mrb[0].mxu0
      %1757 = vmatprep.mubr.f32.mxu0 0.0
      %1758 = vmatmul.mubr.f32.gmra.mrb[0].mxu0 %v1588
      %v1759 = vpop.f32.mrb[0].mxu0
      %v1760 = vadd.f32 0.0, %v1759
      %v1761 = vpop.f32.mrb[0].mxu0
      %1762 = vmatprep.mubr.f32.mxu0 0.0
      %1763 = vmatmul.mubr.f32.gmra.mrb[0].mxu0 %v1591
      %v1764 = vpop.f32.mrb[0].mxu0
      %v1765 = vadd.f32 0.0, %v1764
      %v1766 = vpop.f32.mrb[0].mxu0
      %1767 = vmatprep.mubr.f32.mxu0 0.0
      %1768 = vmatmul.mubr.f32.gmra.mrb[0].mxu0 %v1594
      %v1769 = vpop.f32.mrb[0].mxu0
      %v1770 = vadd.f32 0.0, %v1769
      %v1771 = vpop.f32.mrb[0].mxu0
      %1772 = vmatprep.mubr.f32.mxu0 0.0
      %1773 = vmatmul.mubr.f32.gmra.mrb[0].mxu0 %v1597
      %v1774 = vpop.f32.mrb[0].mxu0
      %v1775 = vadd.f32 0.0, %v1774
      %v1776 = vpop.f32.mrb[0].mxu0
      %1777 = vmatprep.mubr.f32.mxu0 0.0
      %1778 = vmatmul.mubr.f32.gmra.mrb[0].mxu0 %v1600
      %v1779 = vpop.f32.mrb[0].mxu0
      %v1780 = vadd.f32 0.0, %v1779
      %v1781 = vpop.f32.mrb[0].mxu0
      %1782 = vmatprep.mubr.f32.mxu0 0.0
      %1783 = vmatmul.mubr.f32.gmra.mrb[0].mxu0 %v1603
      %v1784 = vpop.f32.mrb[0].mxu0
      %v1785 = vadd.f32 0.0, %v1784
      %v1786 = vpop.f32.mrb[0].mxu0
      %1787 = vmatprep.mubr.f32.mxu0 0.0
      %1788 = vmatmul.mubr.f32.gmra.mrb[0].mxu0 %v1606
      %v1789 = vpop.f32.mrb[0].mxu0
      %v1790 = vadd.f32 0.0, %v1789
      %v1791 = vpop.f32.mrb[0].mxu0
      %1792 = vmatprep.mubr.f32.mxu0 0.0
      %1793 = vmatmul.mubr.f32.gmra.mrb[0].mxu0 %v1609
      %v1794 = vpop.f32.mrb[0].mxu0
      %v1795 = vadd.f32 0.0, %v1794
      %v1796 = vpop.f32.mrb[0].mxu0
      %1797 = vmatprep.mubr.f32.mxu0 0.0
      %1798 = vmatmul.mubr.f32.gmra.mrb[0].mxu0 %v1612
      %v1799 = vpop.f32.mrb[0].mxu0
      %v1800 = vadd.f32 0.0, %v1799
      %v1801 = vpop.f32.mrb[0].mxu0
      %1802 = vmatprep.mubr.f32.mxu0 0.0
      %1803 = vmatmul.mubr.f32.gmra.mrb[0].mxu0 %v1615
      %v1804 = vpop.f32.mrb[0].mxu0
      %v1805 = vadd.f32 0.0, %v1804
      %v1806 = vpop.f32.mrb[0].mxu0
      %1807 = vmatprep.mubr.f32.mxu0 0.0
      %1808 = vmatmul.mubr.f32.gmra.mrb[0].mxu0 %v1618
      %v1809 = vpop.f32.mrb[0].mxu0
      %v1810 = vadd.f32 0.0, %v1809
      %v1811 = vpop.f32.mrb[0].mxu0
      %1812 = vmatprep.mubr.f32.mxu0 0.0
      %1813 = vmatmul.mubr.f32.gmra.mrb[0].mxu0 %v1621
      %v1814 = vpop.f32.mrb[0].mxu0
      %v1815 = vadd.f32 0.0, %v1814
      %v1816 = vpop.f32.mrb[0].mxu0
      %1817 = vmatprep.mubr.f32.mxu0 0.0
      %1818 = vmatmul.mubr.f32.gmra.mrb[0].mxu0 %v1624
      %v1819 = vpop.f32.mrb[0].mxu0
      %v1820 = vadd.f32 0.0, %v1819
      %v1821 = vpop.f32.mrb[0].mxu0
      %1822 = vmatprep.mubr.f32.mxu0 0.0
      %1823 = vmatmul.mubr.f32.gmra.mrb[0].mxu0 %v1627
      %v1824 = vpop.f32.mrb[0].mxu0
      %v1825 = vadd.f32 0.0, %v1824
      %v1826 = vpop.f32.mrb[0].mxu0
      %1827 = vmatprep.mubr.f32.mxu0 0.0
      %1828 = vmatmul.mubr.f32.gmra.mrb[0].mxu0 %v1630
      %v1829 = vpop.f32.mrb[0].mxu0
      %v1830 = vadd.f32 0.0, %v1829
      %v1831 = vpop.f32.mrb[0].mxu0
      %1832 = vmatprep.mubr.f32.mxu0 0.0
      %1833 = vmatmul.mubr.f32.gmra.mrb[0].mxu0 %v1633
      %v1834 = vpop.f32.mrb[0].mxu0
      %v1835 = vadd.f32 0.0, %v1834
      %v1836 = vpop.f32.mrb[0].mxu0
      %1837 = vmatprep.mubr.f32.mxu0 0.0
      %1838 = vmatmul.mubr.f32.gmra.mrb[0].mxu0 %v1636
      %v1839 = vpop.f32.mrb[0].mxu0
      %v1840 = vadd.f32 0.0, %v1839
      %v1841 = vpop.f32.mrb[0].mxu0
      %1842 = vmatprep.mubr.f32.mxu0 0.0
      %1843 = vmatmul.mubr.f32.gmra.mrb[0].mxu0 %v1639
      %v1844 = vpop.f32.mrb[0].mxu0
      %v1845 = vadd.f32 0.0, %v1844
      %v1846 = vpop.f32.mrb[0].mxu0
      %1847 = vmatprep.mubr.f32.mxu0 0.0
      %1848 = vmatmul.mubr.f32.gmra.mrb[0].mxu0 %v1642
      %v1849 = vpop.f32.mrb[0].mxu0
      %v1850 = vadd.f32 0.0, %v1849
      %v1851 = vpop.f32.mrb[0].mxu0
      %1852 = vmatprep.mubr.f32.mxu0 0.0
      %1853 = vmatmul.mubr.f32.gmra.mrb[0].mxu0 %v1645
      %v1854 = vpop.f32.mrb[0].mxu0
      %v1855 = vadd.f32 0.0, %v1854
      %v1856 = vpop.f32.mrb[0].mxu0
      %1857 = vmatprep.mubr.f32.mxu0 0.0
      %1858 = vmatmul.mubr.f32.gmra.mrb[0].mxu0 %v1648
      %v1859 = vpop.f32.mrb[0].mxu0
      %v1860 = vadd.f32 0.0, %v1859
      %v1861 = vpop.f32.mrb[0].mxu0
      %1862 = vmatprep.mubr.f32.mxu0 0.0
      %1863 = vmatmul.mubr.f32.gmra.mrb[0].mxu0 %v1651
      %v1864 = vpop.f32.mrb[0].mxu0
      %v1865 = vadd.f32 0.0, %v1864
      %v1866 = vpop.f32.mrb[0].mxu0
      %1867 = vmatprep.mubr.f32.mxu0 0.0
      %1868 = vmatmul.mubr.f32.gmra.mrb[0].mxu0 %v1654
      %v1869 = vpop.f32.mrb[0].mxu0
      %v1870 = vadd.f32 0.0, %v1869
      %v1871 = vpop.f32.mrb[0].mxu0
      %1872 = vmatprep.mubr.f32.mxu0 0.0
      %1873 = vmatmul.mubr.f32.gmra.mrb[0].mxu0 %v1657
      %v1874 = vpop.f32.mrb[0].mxu0
      %v1875 = vadd.f32 0.0, %v1874
      %v1876 = vpop.f32.mrb[0].mxu0
      %1877 = vmatprep.mubr.f32.mxu0 0.0
      %1878 = vmatmul.mubr.f32.gmra.mrb[0].mxu0 %v1660
      %v1879 = vpop.f32.mrb[0].mxu0
      %v1880 = vadd.f32 0.0, %v1879
      %v1881 = vpop.f32.mrb[0].mxu0
      %1882 = vmatprep.mubr.f32.mxu0 0.0
      %1883 = vmatmul.mubr.f32.gmra.mrb[0].mxu0 %v1663
      %v1884 = vpop.f32.mrb[0].mxu0
      %v1885 = vadd.f32 0.0, %v1884
      %v1886 = vpop.f32.mrb[0].mxu0
      %1887 = vmatprep.mubr.f32.mxu0 0.0
      %1888 = vmatmul.mubr.f32.gmra.mrb[0].mxu0 %v1666
      %v1889 = vpop.f32.mrb[0].mxu0
      %v1890 = vadd.f32 0.0, %v1889
      %v1891 = vpop.f32.mrb[0].mxu0
      %1892 = vmatprep.mubr.f32.mxu0 0.0
      %1893 = vmatmul.mubr.f32.gmra.mrb[0].mxu0 %v1669
      %v1894 = vpop.f32.mrb[0].mxu0
      %v1895 = vadd.f32 0.0, %v1894
      %v1896 = vpop.f32.mrb[0].mxu0
      %1897 = vmatprep.mubr.f32.mxu0 0.0
      %1898 = vmatmul.mubr.f32.gmra.mrb[0].mxu0 %v1672
      %v1899 = vpop.f32.mrb[0].mxu0
      %v1900 = vadd.f32 0.0, %v1899
      %v1901 = vpop.f32.mrb[0].mxu0
      %1902 = vdwg.mxu0
      %v1904 = vsel %vm1406, %v1509, 0
      %v1907 = vsel %vm1406, %v1510, 0
      %v1910 = vsel %vm1406, %v1511, 0
      %v1913 = vsel %vm1406, %v1512, 0
      %v1916 = vsel %vm1406, %v1513, 0
      %v1919 = vsel %vm1406, %v1514, 0
      %v1922 = vsel %vm1406, %v1515, 0
      %v1925 = vsel %vm1406, %v1516, 0
      %v1928 = vsel %vm1406, %v1517, 0
      %v1931 = vsel %vm1406, %v1518, 0
      %v1934 = vsel %vm1406, %v1519, 0
      %v1937 = vsel %vm1406, %v1520, 0
      %v1940 = vsel %vm1406, %v1521, 0
      %v1943 = vsel %vm1406, %v1522, 0
      %v1946 = vsel %vm1406, %v1523, 0
      %v1949 = vsel %vm1406, %v1524, 0
      %v1952 = vsel %vm1406, %v1525, 0
      %v1955 = vsel %vm1406, %v1526, 0
      %v1958 = vsel %vm1406, %v1527, 0
      %v1961 = vsel %vm1406, %v1528, 0
      %v1964 = vsel %vm1406, %v1529, 0
      %v1967 = vsel %vm1406, %v1530, 0
      %v1970 = vsel %vm1406, %v1531, 0
      %v1973 = vsel %vm1406, %v1532, 0
      %v1976 = vsel %vm1406, %v1533, 0
      %v1979 = vsel %vm1406, %v1534, 0
      %v1982 = vsel %vm1406, %v1535, 0
      %v1985 = vsel %vm1406, %v1536, 0
      %v1988 = vsel %vm1406, %v1537, 0
      %v1991 = vsel %vm1406, %v1538, 0
      %v1994 = vsel %vm1406, %v1539, 0
      %v1997 = vsel %vm1406, %v1540, 0
      %v2000 = vsel %vm1674, %v1542, 0
      %2002 = vmatprep.subr.mxu0 0.0
      %2003 = vmatpush1.msra.mxu0 %v1541
      %2004 = vmatprep.subr.mxu0 0.0
      %2005 = vmatpush1.msra.mxu0 %v2000
      %2006 = vmatprep.subr.mxu0 0.0
      %2007 = vmatpush1.msra.mxu0 0.0
      %2008 = vmatprep.subr.mxu0 0.0
      %2009 = vmatpush1.msra.mxu0 0.0
      %2010 = vmatprep.subr.mxu0 0.0
      %2011 = vmatpush1.msra.mxu0 0.0
      %2012 = vmatprep.subr.mxu0 0.0
      %2013 = vmatpush1.msra.mxu0 0.0
      %2014 = vmatprep.subr.mxu0 0.0
      %2015 = vmatpush1.msra.mxu0 0.0
      %2016 = vmatprep.subr.mxu0 0.0
      %2017 = vmatpush1.msra.mxu0 0.0
      %2018 = vmatprep.subr.mxu0 0.0
      %2019 = vmatpush1.msra.mxu0 0.0
      %2020 = vmatprep.subr.mxu0 0.0
      %2021 = vmatpush1.msra.mxu0 0.0
      %2022 = vmatprep.subr.mxu0 0.0
      %2023 = vmatpush1.msra.mxu0 0.0
      %2024 = vmatprep.subr.mxu0 0.0
      %2025 = vmatpush1.msra.mxu0 0.0
      %2026 = vmatprep.subr.mxu0 0.0
      %2027 = vmatpush1.msra.mxu0 0.0
      %2028 = vmatprep.subr.mxu0 0.0
      %2029 = vmatpush1.msra.mxu0 0.0
      %2030 = vmatprep.subr.mxu0 0.0
      %2031 = vmatpush1.msra.mxu0 0.0
      %2032 = vmatprep.subr.mxu0 0.0
      %2033 = vmatpush1.msra.mxu0 0.0
      %2034 = vmatprep.subr.mxu0 0.0
      %2035 = vmatpush1.msra.mxu0 0.0
      %2036 = vmatprep.subr.mxu0 0.0
      %2037 = vmatpush1.msra.mxu0 0.0
      %2038 = vmatprep.subr.mxu0 0.0
      %2039 = vmatpush1.msra.mxu0 0.0
      %2040 = vmatprep.subr.mxu0 0.0
      %2041 = vmatpush1.msra.mxu0 0.0
      %2042 = vmatprep.subr.mxu0 0.0
      %2043 = vmatpush1.msra.mxu0 0.0
      %2044 = vmatprep.subr.mxu0 0.0
      %2045 = vmatpush1.msra.mxu0 0.0
      %2046 = vmatprep.subr.mxu0 0.0
      %2047 = vmatpush1.msra.mxu0 0.0
      %2048 = vmatprep.subr.mxu0 0.0
      %2049 = vmatpush1.msra.mxu0 0.0
      %2050 = vmatprep.subr.mxu0 0.0
      %2051 = vmatpush1.msra.mxu0 0.0
      %2052 = vmatprep.subr.mxu0 0.0
      %2053 = vmatpush1.msra.mxu0 0.0
      %2054 = vmatprep.subr.mxu0 0.0
      %2055 = vmatpush1.msra.mxu0 0.0
      %2056 = vmatprep.subr.mxu0 0.0
      %2057 = vmatpush1.msra.mxu0 0.0
      %2058 = vmatprep.subr.mxu0 0.0
      %2059 = vmatpush1.msra.mxu0 0.0
      %2060 = vmatprep.subr.mxu0 0.0
      %2061 = vmatpush1.msra.mxu0 0.0
      %2062 = vmatprep.subr.mxu0 0.0
      %2063 = vmatpush1.msra.mxu0 0.0
      %2064 = vmatprep.subr.mxu0 0.0
      %2065 = vmatpush1.msra.mxu0 0.0
      %2066 = vmatprep.mubr.f32.mxu0 0.0
      %2067 = vmatmul.mubr.f32.gmra.mrb[0].mxu0 %v1904
      %v2068 = vpop.f32.mrb[0].mxu0
      %v2069 = vadd.f32 %v1745, %v2068
      %v2070 = vpop.f32.mrb[0].mxu0
      %2071 = vmatprep.mubr.f32.mxu0 0.0
      %2072 = vmatmul.mubr.f32.gmra.mrb[0].mxu0 %v1907
      %v2073 = vpop.f32.mrb[0].mxu0
      %v2074 = vadd.f32 %v1750, %v2073
      %v2075 = vpop.f32.mrb[0].mxu0
      %2076 = vmatprep.mubr.f32.mxu0 0.0
      %2077 = vmatmul.mubr.f32.gmra.mrb[0].mxu0 %v1910
      %v2078 = vpop.f32.mrb[0].mxu0
      %v2079 = vadd.f32 %v1755, %v2078
      %v2080 = vpop.f32.mrb[0].mxu0
      %2081 = vmatprep.mubr.f32.mxu0 0.0
      %2082 = vmatmul.mubr.f32.gmra.mrb[0].mxu0 %v1913
      %v2083 = vpop.f32.mrb[0].mxu0
      %v2084 = vadd.f32 %v1760, %v2083
      %v2085 = vpop.f32.mrb[0].mxu0
      %2086 = vmatprep.mubr.f32.mxu0 0.0
      %2087 = vmatmul.mubr.f32.gmra.mrb[0].mxu0 %v1916
      %v2088 = vpop.f32.mrb[0].mxu0
      %v2089 = vadd.f32 %v1765, %v2088
      %v2090 = vpop.f32.mrb[0].mxu0
      %2091 = vmatprep.mubr.f32.mxu0 0.0
      %2092 = vmatmul.mubr.f32.gmra.mrb[0].mxu0 %v1919
      %v2093 = vpop.f32.mrb[0].mxu0
      %v2094 = vadd.f32 %v1770, %v2093
      %v2095 = vpop.f32.mrb[0].mxu0
      %2096 = vmatprep.mubr.f32.mxu0 0.0
      %2097 = vmatmul.mubr.f32.gmra.mrb[0].mxu0 %v1922
      %v2098 = vpop.f32.mrb[0].mxu0
      %v2099 = vadd.f32 %v1775, %v2098
      %v2100 = vpop.f32.mrb[0].mxu0
      %2101 = vmatprep.mubr.f32.mxu0 0.0
      %2102 = vmatmul.mubr.f32.gmra.mrb[0].mxu0 %v1925
      %v2103 = vpop.f32.mrb[0].mxu0
      %v2104 = vadd.f32 %v1780, %v2103
      %v2105 = vpop.f32.mrb[0].mxu0
      %2106 = vmatprep.mubr.f32.mxu0 0.0
      %2107 = vmatmul.mubr.f32.gmra.mrb[0].mxu0 %v1928
      %v2108 = vpop.f32.mrb[0].mxu0
      %v2109 = vadd.f32 %v1785, %v2108
      %v2110 = vpop.f32.mrb[0].mxu0
      %2111 = vmatprep.mubr.f32.mxu0 0.0
      %2112 = vmatmul.mubr.f32.gmra.mrb[0].mxu0 %v1931
      %v2113 = vpop.f32.mrb[0].mxu0
      %v2114 = vadd.f32 %v1790, %v2113
      %v2115 = vpop.f32.mrb[0].mxu0
      %2116 = vmatprep.mubr.f32.mxu0 0.0
      %2117 = vmatmul.mubr.f32.gmra.mrb[0].mxu0 %v1934
      %v2118 = vpop.f32.mrb[0].mxu0
      %v2119 = vadd.f32 %v1795, %v2118
      %v2120 = vpop.f32.mrb[0].mxu0
      %2121 = vmatprep.mubr.f32.mxu0 0.0
      %2122 = vmatmul.mubr.f32.gmra.mrb[0].mxu0 %v1937
      %v2123 = vpop.f32.mrb[0].mxu0
      %v2124 = vadd.f32 %v1800, %v2123
      %v2125 = vpop.f32.mrb[0].mxu0
      %2126 = vmatprep.mubr.f32.mxu0 0.0
      %2127 = vmatmul.mubr.f32.gmra.mrb[0].mxu0 %v1940
      %v2128 = vpop.f32.mrb[0].mxu0
      %v2129 = vadd.f32 %v1805, %v2128
      %v2130 = vpop.f32.mrb[0].mxu0
      %2131 = vmatprep.mubr.f32.mxu0 0.0
      %2132 = vmatmul.mubr.f32.gmra.mrb[0].mxu0 %v1943
      %v2133 = vpop.f32.mrb[0].mxu0
      %v2134 = vadd.f32 %v1810, %v2133
      %v2135 = vpop.f32.mrb[0].mxu0
      %2136 = vmatprep.mubr.f32.mxu0 0.0
      %2137 = vmatmul.mubr.f32.gmra.mrb[0].mxu0 %v1946
      %v2138 = vpop.f32.mrb[0].mxu0
      %v2139 = vadd.f32 %v1815, %v2138
      %v2140 = vpop.f32.mrb[0].mxu0
      %2141 = vmatprep.mubr.f32.mxu0 0.0
      %2142 = vmatmul.mubr.f32.gmra.mrb[0].mxu0 %v1949
      %v2143 = vpop.f32.mrb[0].mxu0
      %v2144 = vadd.f32 %v1820, %v2143
      %v2145 = vpop.f32.mrb[0].mxu0
      %2146 = vmatprep.mubr.f32.mxu0 0.0
      %2147 = vmatmul.mubr.f32.gmra.mrb[0].mxu0 %v1952
      %v2148 = vpop.f32.mrb[0].mxu0
      %v2149 = vadd.f32 %v1825, %v2148
      %v2150 = vpop.f32.mrb[0].mxu0
      %2151 = vmatprep.mubr.f32.mxu0 0.0
      %2152 = vmatmul.mubr.f32.gmra.mrb[0].mxu0 %v1955
      %v2153 = vpop.f32.mrb[0].mxu0
      %v2154 = vadd.f32 %v1830, %v2153
      %v2155 = vpop.f32.mrb[0].mxu0
      %2156 = vmatprep.mubr.f32.mxu0 0.0
      %2157 = vmatmul.mubr.f32.gmra.mrb[0].mxu0 %v1958
      %v2158 = vpop.f32.mrb[0].mxu0
      %v2159 = vadd.f32 %v1835, %v2158
      %v2160 = vpop.f32.mrb[0].mxu0
      %2161 = vmatprep.mubr.f32.mxu0 0.0
      %2162 = vmatmul.mubr.f32.gmra.mrb[0].mxu0 %v1961
      %v2163 = vpop.f32.mrb[0].mxu0
      %v2164 = vadd.f32 %v1840, %v2163
      %v2165 = vpop.f32.mrb[0].mxu0
      %2166 = vmatprep.mubr.f32.mxu0 0.0
      %2167 = vmatmul.mubr.f32.gmra.mrb[0].mxu0 %v1964
      %v2168 = vpop.f32.mrb[0].mxu0
      %v2169 = vadd.f32 %v1845, %v2168
      %v2170 = vpop.f32.mrb[0].mxu0
      %2171 = vmatprep.mubr.f32.mxu0 0.0
      %2172 = vmatmul.mubr.f32.gmra.mrb[0].mxu0 %v1967
      %v2173 = vpop.f32.mrb[0].mxu0
      %v2174 = vadd.f32 %v1850, %v2173
      %v2175 = vpop.f32.mrb[0].mxu0
      %2176 = vmatprep.mubr.f32.mxu0 0.0
      %2177 = vmatmul.mubr.f32.gmra.mrb[0].mxu0 %v1970
      %v2178 = vpop.f32.mrb[0].mxu0
      %v2179 = vadd.f32 %v1855, %v2178
      %v2180 = vpop.f32.mrb[0].mxu0
      %2181 = vmatprep.mubr.f32.mxu0 0.0
      %2182 = vmatmul.mubr.f32.gmra.mrb[0].mxu0 %v1973
      %v2183 = vpop.f32.mrb[0].mxu0
      %v2184 = vadd.f32 %v1860, %v2183
      %v2185 = vpop.f32.mrb[0].mxu0
      %2186 = vmatprep.mubr.f32.mxu0 0.0
      %2187 = vmatmul.mubr.f32.gmra.mrb[0].mxu0 %v1976
      %v2188 = vpop.f32.mrb[0].mxu0
      %v2189 = vadd.f32 %v1865, %v2188
      %v2190 = vpop.f32.mrb[0].mxu0
      %2191 = vmatprep.mubr.f32.mxu0 0.0
      %2192 = vmatmul.mubr.f32.gmra.mrb[0].mxu0 %v1979
      %v2193 = vpop.f32.mrb[0].mxu0
      %v2194 = vadd.f32 %v1870, %v2193
      %v2195 = vpop.f32.mrb[0].mxu0
      %2196 = vmatprep.mubr.f32.mxu0 0.0
      %2197 = vmatmul.mubr.f32.gmra.mrb[0].mxu0 %v1982
      %v2198 = vpop.f32.mrb[0].mxu0
      %v2199 = vadd.f32 %v1875, %v2198
      %v2200 = vpop.f32.mrb[0].mxu0
      %2201 = vmatprep.mubr.f32.mxu0 0.0
      %2202 = vmatmul.mubr.f32.gmra.mrb[0].mxu0 %v1985
      %v2203 = vpop.f32.mrb[0].mxu0
      %v2204 = vadd.f32 %v1880, %v2203
      %v2205 = vpop.f32.mrb[0].mxu0
      %2206 = vmatprep.mubr.f32.mxu0 0.0
      %2207 = vmatmul.mubr.f32.gmra.mrb[0].mxu0 %v1988
      %v2208 = vpop.f32.mrb[0].mxu0
      %v2209 = vadd.f32 %v1885, %v2208
      %v2210 = vpop.f32.mrb[0].mxu0
      %2211 = vmatprep.mubr.f32.mxu0 0.0
      %2212 = vmatmul.mubr.f32.gmra.mrb[0].mxu0 %v1991
      %v2213 = vpop.f32.mrb[0].mxu0
      %v2214 = vadd.f32 %v1890, %v2213
      %v2215 = vpop.f32.mrb[0].mxu0
      %2216 = vmatprep.mubr.f32.mxu0 0.0
      %2217 = vmatmul.mubr.f32.gmra.mrb[0].mxu0 %v1994
      %v2218 = vpop.f32.mrb[0].mxu0
      %v2219 = vadd.f32 %v1895, %v2218
      %v2220 = vpop.f32.mrb[0].mxu0
      %2221 = vmatprep.mubr.f32.mxu0 0.0
      %2222 = vmatmul.mubr.f32.gmra.mrb[0].mxu0 %v1997
      %v2223 = vpop.f32.mrb[0].mxu0
      %v2224 = vadd.f32 %v1900, %v2223
      %v2225 = vpop.f32.mrb[0].mxu0
      %2226 = vdwg.mxu0
      %v2227 = vld [vmem:[#allocation2 + $0x9] sm:$0xff]
      %v2228 = vld [vmem:[#allocation2 + $0x11] sm:$0xff]
      %v2229 = vld [vmem:[#allocation2 + $0x19] sm:$0xff]
      %v2230 = vld [vmem:[#allocation2 + $0x21] sm:$0xff]
      %v2231 = vld [vmem:[#allocation2 + $0x29] sm:$0xff]
      %v2232 = vld [vmem:[#allocation2 + $0x31] sm:$0xff]
      %v2233 = vld [vmem:[#allocation2 + $0x39] sm:$0xff]
      %v2234 = vld [vmem:[#allocation2 + $0x41] sm:$0xff]
      %v2235 = vld [vmem:[#allocation2 + $0x49] sm:$0xff]
      %v2236 = vld [vmem:[#allocation2 + $0x51] sm:$0xff]
      %v2237 = vld [vmem:[#allocation2 + $0x59] sm:$0xff]
      %v2238 = vld [vmem:[#allocation2 + $0x61] sm:$0xff]
      %v2239 = vld [vmem:[#allocation2 + $0x69] sm:$0xff]
      %v2240 = vld [vmem:[#allocation2 + $0x71] sm:$0xff]
      %v2241 = vld [vmem:[#allocation2 + $0x79] sm:$0xff]
      %v2242 = vld [vmem:[#allocation2 + $0x81] sm:$0xff]
      %v2243 = vld [vmem:[#allocation2 + $0x89] sm:$0xff]
      %v2244 = vld [vmem:[#allocation2 + $0x91] sm:$0xff]
      %v2245 = vld [vmem:[#allocation2 + $0x99] sm:$0xff]
      %v2246 = vld [vmem:[#allocation2 + $0xa1] sm:$0xff]
      %v2247 = vld [vmem:[#allocation2 + $0xa9] sm:$0xff]
      %v2248 = vld [vmem:[#allocation2 + $0xb1] sm:$0xff]
      %v2249 = vld [vmem:[#allocation2 + $0xb9] sm:$0xff]
      %v2250 = vld [vmem:[#allocation2 + $0xc1] sm:$0xff]
      %v2251 = vld [vmem:[#allocation2 + $0xc9] sm:$0xff]
      %v2252 = vld [vmem:[#allocation2 + $0xd1] sm:$0xff]
      %v2253 = vld [vmem:[#allocation2 + $0xd9] sm:$0xff]
      %v2254 = vld [vmem:[#allocation2 + $0xe1] sm:$0xff]
      %v2255 = vld [vmem:[#allocation2 + $0xe9] sm:$0xff]
      %v2256 = vld [vmem:[#allocation2 + $0xf1] sm:$0xff]
      %v2257 = vld [vmem:[#allocation2 + $0xf9] sm:$0xff]
      %v2258 = vld [vmem:[#allocation2 + $0x101] sm:$0xff]
      %v2259 = vmul.f32 %v2227, %v1374
      %v2260 = vmul.f32 %v2228, %v1375
      %v2261 = vmul.f32 %v2229, %v1376
      %v2262 = vmul.f32 %v2230, %v1377
      %v2263 = vmul.f32 %v2231, %v1378
      %v2264 = vmul.f32 %v2232, %v1379
      %v2265 = vmul.f32 %v2233, %v1380
      %v2266 = vmul.f32 %v2234, %v1381
      %v2267 = vmul.f32 %v2235, %v1382
      %v2268 = vmul.f32 %v2236, %v1383
      %v2269 = vmul.f32 %v2237, %v1384
      %v2270 = vmul.f32 %v2238, %v1385
      %v2271 = vmul.f32 %v2239, %v1386
      %v2272 = vmul.f32 %v2240, %v1387
      %v2273 = vmul.f32 %v2241, %v1388
      %v2274 = vmul.f32 %v2242, %v1389
      %v2275 = vmul.f32 %v2243, %v1390
      %v2276 = vmul.f32 %v2244, %v1391
      %v2277 = vmul.f32 %v2245, %v1392
      %v2278 = vmul.f32 %v2246, %v1393
      %v2279 = vmul.f32 %v2247, %v1394
      %v2280 = vmul.f32 %v2248, %v1395
      %v2281 = vmul.f32 %v2249, %v1396
      %v2282 = vmul.f32 %v2250, %v1397
      %v2283 = vmul.f32 %v2251, %v1398
      %v2284 = vmul.f32 %v2252, %v1399
      %v2285 = vmul.f32 %v2253, %v1400
      %v2286 = vmul.f32 %v2254, %v1401
      %v2287 = vmul.f32 %v2255, %v1402
      %v2288 = vmul.f32 %v2256, %v1403
      %v2289 = vmul.f32 %v2257, %v1404
      %v2290 = vmul.f32 %v2258, %v1405
      %s2291 = scalar_lea.vmem %s3, 32
      %v2292 = vld [vmem:[%s2291] sm:$0xff]
      %v2293 = vld [vmem:[%s2291 + $0x8] sm:$0xf]
      %v2295 = vsel %vm1406, %v2259, 0
      %v2298 = vsel %vm1406, %v2260, 0
      %v2301 = vsel %vm1406, %v2261, 0
      %v2304 = vsel %vm1406, %v2262, 0
      %v2307 = vsel %vm1406, %v2263, 0
      %v2310 = vsel %vm1406, %v2264, 0
      %v2313 = vsel %vm1406, %v2265, 0
      %v2316 = vsel %vm1406, %v2266, 0
      %v2319 = vsel %vm1406, %v2267, 0
      %v2322 = vsel %vm1406, %v2268, 0
      %v2325 = vsel %vm1406, %v2269, 0
      %v2328 = vsel %vm1406, %v2270, 0
      %v2331 = vsel %vm1406, %v2271, 0
      %v2334 = vsel %vm1406, %v2272, 0
      %v2337 = vsel %vm1406, %v2273, 0
      %v2340 = vsel %vm1406, %v2274, 0
      %v2343 = vsel %vm1406, %v2275, 0
      %v2346 = vsel %vm1406, %v2276, 0
      %v2349 = vsel %vm1406, %v2277, 0
      %v2352 = vsel %vm1406, %v2278, 0
      %v2355 = vsel %vm1406, %v2279, 0
      %v2358 = vsel %vm1406, %v2280, 0
      %v2361 = vsel %vm1406, %v2281, 0
      %v2364 = vsel %vm1406, %v2282, 0
      %v2367 = vsel %vm1406, %v2283, 0
      %v2370 = vsel %vm1406, %v2284, 0
      %v2373 = vsel %vm1406, %v2285, 0
      %v2376 = vsel %vm1406, %v2286, 0
      %v2379 = vsel %vm1406, %v2287, 0
      %v2382 = vsel %vm1406, %v2288, 0
      %v2385 = vsel %vm1406, %v2289, 0
      %v2388 = vsel %vm1406, %v2290, 0
      %v2391 = vsel %vm1674, %v2293, 0
      %2393 = vmatprep.subr.mxu0 0.0
      %2394 = vmatpush1.msra.mxu0 %v2292
      %2395 = vmatprep.subr.mxu0 0.0
      %2396 = vmatpush1.msra.mxu0 %v2391
      %2397 = vmatprep.subr.mxu0 0.0
      %2398 = vmatpush1.msra.mxu0 0.0
      %2399 = vmatprep.subr.mxu0 0.0
      %2400 = vmatpush1.msra.mxu0 0.0
      %2401 = vmatprep.subr.mxu0 0.0
      %2402 = vmatpush1.msra.mxu0 0.0
      %2403 = vmatprep.subr.mxu0 0.0
      %2404 = vmatpush1.msra.mxu0 0.0
      %2405 = vmatprep.subr.mxu0 0.0
      %2406 = vmatpush1.msra.mxu0 0.0
      %2407 = vmatprep.subr.mxu0 0.0
      %2408 = vmatpush1.msra.mxu0 0.0
      %2409 = vmatprep.subr.mxu0 0.0
      %2410 = vmatpush1.msra.mxu0 0.0
      %2411 = vmatprep.subr.mxu0 0.0
      %2412 = vmatpush1.msra.mxu0 0.0
      %2413 = vmatprep.subr.mxu0 0.0
      %2414 = vmatpush1.msra.mxu0 0.0
      %2415 = vmatprep.subr.mxu0 0.0
      %2416 = vmatpush1.msra.mxu0 0.0
      %2417 = vmatprep.subr.mxu0 0.0
      %2418 = vmatpush1.msra.mxu0 0.0
      %2419 = vmatprep.subr.mxu0 0.0
      %2420 = vmatpush1.msra.mxu0 0.0
      %2421 = vmatprep.subr.mxu0 0.0
      %2422 = vmatpush1.msra.mxu0 0.0
      %2423 = vmatprep.subr.mxu0 0.0
      %2424 = vmatpush1.msra.mxu0 0.0
      %2425 = vmatprep.subr.mxu0 0.0
      %2426 = vmatpush1.msra.mxu0 0.0
      %2427 = vmatprep.subr.mxu0 0.0
      %2428 = vmatpush1.msra.mxu0 0.0
      %2429 = vmatprep.subr.mxu0 0.0
      %2430 = vmatpush1.msra.mxu0 0.0
      %2431 = vmatprep.subr.mxu0 0.0
      %2432 = vmatpush1.msra.mxu0 0.0
      %2433 = vmatprep.subr.mxu0 0.0
      %2434 = vmatpush1.msra.mxu0 0.0
      %2435 = vmatprep.subr.mxu0 0.0
      %2436 = vmatpush1.msra.mxu0 0.0
      %2437 = vmatprep.subr.mxu0 0.0
      %2438 = vmatpush1.msra.mxu0 0.0
      %2439 = vmatprep.subr.mxu0 0.0
      %2440 = vmatpush1.msra.mxu0 0.0
      %2441 = vmatprep.subr.mxu0 0.0
      %2442 = vmatpush1.msra.mxu0 0.0
      %2443 = vmatprep.subr.mxu0 0.0
      %2444 = vmatpush1.msra.mxu0 0.0
      %2445 = vmatprep.subr.mxu0 0.0
      %2446 = vmatpush1.msra.mxu0 0.0
      %2447 = vmatprep.subr.mxu0 0.0
      %2448 = vmatpush1.msra.mxu0 0.0
      %2449 = vmatprep.subr.mxu0 0.0
      %2450 = vmatpush1.msra.mxu0 0.0
      %2451 = vmatprep.subr.mxu0 0.0
      %2452 = vmatpush1.msra.mxu0 0.0
      %2453 = vmatprep.subr.mxu0 0.0
      %2454 = vmatpush1.msra.mxu0 0.0
      %2455 = vmatprep.subr.mxu0 0.0
      %2456 = vmatpush1.msra.mxu0 0.0
      %2457 = vmatprep.mubr.f32.mxu0 0.0
      %2458 = vmatmul.mubr.f32.gmra.mrb[0].mxu0 %v2295
      %v2459 = vpop.f32.mrb[0].mxu0
      %v2460 = vadd.f32 0.0, %v2459
      %v2461 = vpop.f32.mrb[0].mxu0
      %2462 = vmatprep.mubr.f32.mxu0 0.0
      %2463 = vmatmul.mubr.f32.gmra.mrb[0].mxu0 %v2298
      %v2464 = vpop.f32.mrb[0].mxu0
      %v2465 = vadd.f32 0.0, %v2464
      %v2466 = vpop.f32.mrb[0].mxu0
      %2467 = vmatprep.mubr.f32.mxu0 0.0
      %2468 = vmatmul.mubr.f32.gmra.mrb[0].mxu0 %v2301
      %v2469 = vpop.f32.mrb[0].mxu0
      %v2470 = vadd.f32 0.0, %v2469
      %v2471 = vpop.f32.mrb[0].mxu0
      %2472 = vmatprep.mubr.f32.mxu0 0.0
      %2473 = vmatmul.mubr.f32.gmra.mrb[0].mxu0 %v2304
      %v2474 = vpop.f32.mrb[0].mxu0
      %v2475 = vadd.f32 0.0, %v2474
      %v2476 = vpop.f32.mrb[0].mxu0
      %2477 = vmatprep.mubr.f32.mxu0 0.0
      %2478 = vmatmul.mubr.f32.gmra.mrb[0].mxu0 %v2307
      %v2479 = vpop.f32.mrb[0].mxu0
      %v2480 = vadd.f32 0.0, %v2479
      %v2481 = vpop.f32.mrb[0].mxu0
      %2482 = vmatprep.mubr.f32.mxu0 0.0
      %2483 = vmatmul.mubr.f32.gmra.mrb[0].mxu0 %v2310
      %v2484 = vpop.f32.mrb[0].mxu0
      %v2485 = vadd.f32 0.0, %v2484
      %v2486 = vpop.f32.mrb[0].mxu0
      %2487 = vmatprep.mubr.f32.mxu0 0.0
      %2488 = vmatmul.mubr.f32.gmra.mrb[0].mxu0 %v2313
      %v2489 = vpop.f32.mrb[0].mxu0
      %v2490 = vadd.f32 0.0, %v2489
      %v2491 = vpop.f32.mrb[0].mxu0
      %2492 = vmatprep.mubr.f32.mxu0 0.0
      %2493 = vmatmul.mubr.f32.gmra.mrb[0].mxu0 %v2316
      %v2494 = vpop.f32.mrb[0].mxu0
      %v2495 = vadd.f32 0.0, %v2494
      %v2496 = vpop.f32.mrb[0].mxu0
      %2497 = vmatprep.mubr.f32.mxu0 0.0
      %2498 = vmatmul.mubr.f32.gmra.mrb[0].mxu0 %v2319
      %v2499 = vpop.f32.mrb[0].mxu0
      %v2500 = vadd.f32 0.0, %v2499
      %v2501 = vpop.f32.mrb[0].mxu0
      %2502 = vmatprep.mubr.f32.mxu0 0.0
      %2503 = vmatmul.mubr.f32.gmra.mrb[0].mxu0 %v2322
      %v2504 = vpop.f32.mrb[0].mxu0
      %v2505 = vadd.f32 0.0, %v2504
      %v2506 = vpop.f32.mrb[0].mxu0
      %2507 = vmatprep.mubr.f32.mxu0 0.0
      %2508 = vmatmul.mubr.f32.gmra.mrb[0].mxu0 %v2325
      %v2509 = vpop.f32.mrb[0].mxu0
      %v2510 = vadd.f32 0.0, %v2509
      %v2511 = vpop.f32.mrb[0].mxu0
      %2512 = vmatprep.mubr.f32.mxu0 0.0
      %2513 = vmatmul.mubr.f32.gmra.mrb[0].mxu0 %v2328
      %v2514 = vpop.f32.mrb[0].mxu0
      %v2515 = vadd.f32 0.0, %v2514
      %v2516 = vpop.f32.mrb[0].mxu0
      %2517 = vmatprep.mubr.f32.mxu0 0.0
      %2518 = vmatmul.mubr.f32.gmra.mrb[0].mxu0 %v2331
      %v2519 = vpop.f32.mrb[0].mxu0
      %v2520 = vadd.f32 0.0, %v2519
      %v2521 = vpop.f32.mrb[0].mxu0
      %2522 = vmatprep.mubr.f32.mxu0 0.0
      %2523 = vmatmul.mubr.f32.gmra.mrb[0].mxu0 %v2334
      %v2524 = vpop.f32.mrb[0].mxu0
      %v2525 = vadd.f32 0.0, %v2524
      %v2526 = vpop.f32.mrb[0].mxu0
      %2527 = vmatprep.mubr.f32.mxu0 0.0
      %2528 = vmatmul.mubr.f32.gmra.mrb[0].mxu0 %v2337
      %v2529 = vpop.f32.mrb[0].mxu0
      %v2530 = vadd.f32 0.0, %v2529
      %v2531 = vpop.f32.mrb[0].mxu0
      %2532 = vmatprep.mubr.f32.mxu0 0.0
      %2533 = vmatmul.mubr.f32.gmra.mrb[0].mxu0 %v2340
      %v2534 = vpop.f32.mrb[0].mxu0
      %v2535 = vadd.f32 0.0, %v2534
      %v2536 = vpop.f32.mrb[0].mxu0
      %2537 = vmatprep.mubr.f32.mxu0 0.0
      %2538 = vmatmul.mubr.f32.gmra.mrb[0].mxu0 %v2343
      %v2539 = vpop.f32.mrb[0].mxu0
      %v2540 = vadd.f32 0.0, %v2539
      %v2541 = vpop.f32.mrb[0].mxu0
      %2542 = vmatprep.mubr.f32.mxu0 0.0
      %2543 = vmatmul.mubr.f32.gmra.mrb[0].mxu0 %v2346
      %v2544 = vpop.f32.mrb[0].mxu0
      %v2545 = vadd.f32 0.0, %v2544
      %v2546 = vpop.f32.mrb[0].mxu0
      %2547 = vmatprep.mubr.f32.mxu0 0.0
      %2548 = vmatmul.mubr.f32.gmra.mrb[0].mxu0 %v2349
      %v2549 = vpop.f32.mrb[0].mxu0
      %v2550 = vadd.f32 0.0, %v2549
      %v2551 = vpop.f32.mrb[0].mxu0
      %2552 = vmatprep.mubr.f32.mxu0 0.0
      %2553 = vmatmul.mubr.f32.gmra.mrb[0].mxu0 %v2352
      %v2554 = vpop.f32.mrb[0].mxu0
      %v2555 = vadd.f32 0.0, %v2554
      %v2556 = vpop.f32.mrb[0].mxu0
      %2557 = vmatprep.mubr.f32.mxu0 0.0
      %2558 = vmatmul.mubr.f32.gmra.mrb[0].mxu0 %v2355
      %v2559 = vpop.f32.mrb[0].mxu0
      %v2560 = vadd.f32 0.0, %v2559
      %v2561 = vpop.f32.mrb[0].mxu0
      %2562 = vmatprep.mubr.f32.mxu0 0.0
      %2563 = vmatmul.mubr.f32.gmra.mrb[0].mxu0 %v2358
      %v2564 = vpop.f32.mrb[0].mxu0
      %v2565 = vadd.f32 0.0, %v2564
      %v2566 = vpop.f32.mrb[0].mxu0
      %2567 = vmatprep.mubr.f32.mxu0 0.0
      %2568 = vmatmul.mubr.f32.gmra.mrb[0].mxu0 %v2361
      %v2569 = vpop.f32.mrb[0].mxu0
      %v2570 = vadd.f32 0.0, %v2569
      %v2571 = vpop.f32.mrb[0].mxu0
      %2572 = vmatprep.mubr.f32.mxu0 0.0
      %2573 = vmatmul.mubr.f32.gmra.mrb[0].mxu0 %v2364
      %v2574 = vpop.f32.mrb[0].mxu0
      %v2575 = vadd.f32 0.0, %v2574
      %v2576 = vpop.f32.mrb[0].mxu0
      %2577 = vmatprep.mubr.f32.mxu0 0.0
      %2578 = vmatmul.mubr.f32.gmra.mrb[0].mxu0 %v2367
      %v2579 = vpop.f32.mrb[0].mxu0
      %v2580 = vadd.f32 0.0, %v2579
      %v2581 = vpop.f32.mrb[0].mxu0
      %2582 = vmatprep.mubr.f32.mxu0 0.0
      %2583 = vmatmul.mubr.f32.gmra.mrb[0].mxu0 %v2370
      %v2584 = vpop.f32.mrb[0].mxu0
      %v2585 = vadd.f32 0.0, %v2584
      %v2586 = vpop.f32.mrb[0].mxu0
      %2587 = vmatprep.mubr.f32.mxu0 0.0
      %2588 = vmatmul.mubr.f32.gmra.mrb[0].mxu0 %v2373
      %v2589 = vpop.f32.mrb[0].mxu0
      %v2590 = vadd.f32 0.0, %v2589
      %v2591 = vpop.f32.mrb[0].mxu0
      %2592 = vmatprep.mubr.f32.mxu0 0.0
      %2593 = vmatmul.mubr.f32.gmra.mrb[0].mxu0 %v2376
      %v2594 = vpop.f32.mrb[0].mxu0
      %v2595 = vadd.f32 0.0, %v2594
      %v2596 = vpop.f32.mrb[0].mxu0
      %2597 = vmatprep.mubr.f32.mxu0 0.0
      %2598 = vmatmul.mubr.f32.gmra.mrb[0].mxu0 %v2379
      %v2599 = vpop.f32.mrb[0].mxu0
      %v2600 = vadd.f32 0.0, %v2599
      %v2601 = vpop.f32.mrb[0].mxu0
      %2602 = vmatprep.mubr.f32.mxu0 0.0
      %2603 = vmatmul.mubr.f32.gmra.mrb[0].mxu0 %v2382
      %v2604 = vpop.f32.mrb[0].mxu0
      %v2605 = vadd.f32 0.0, %v2604
      %v2606 = vpop.f32.mrb[0].mxu0
      %2607 = vmatprep.mubr.f32.mxu0 0.0
      %2608 = vmatmul.mubr.f32.gmra.mrb[0].mxu0 %v2385
      %v2609 = vpop.f32.mrb[0].mxu0
      %v2610 = vadd.f32 0.0, %v2609
      %v2611 = vpop.f32.mrb[0].mxu0
      %2612 = vmatprep.mubr.f32.mxu0 0.0
      %2613 = vmatmul.mubr.f32.gmra.mrb[0].mxu0 %v2388
      %v2614 = vpop.f32.mrb[0].mxu0
      %v2615 = vadd.f32 0.0, %v2614
      %v2616 = vpop.f32.mrb[0].mxu0
      %2617 = vdwg.mxu0
      %v2618 = vadd.f32 %v2069, %v2460
      %v2619 = vadd.f32 %v2074, %v2465
      %v2620 = vadd.f32 %v2079, %v2470
      %v2621 = vadd.f32 %v2084, %v2475
      %v2622 = vadd.f32 %v2089, %v2480
      %v2623 = vadd.f32 %v2094, %v2485
      %v2624 = vadd.f32 %v2099, %v2490
      %v2625 = vadd.f32 %v2104, %v2495
      %v2626 = vadd.f32 %v2109, %v2500
      %v2627 = vadd.f32 %v2114, %v2505
      %v2628 = vadd.f32 %v2119, %v2510
      %v2629 = vadd.f32 %v2124, %v2515
      %v2630 = vadd.f32 %v2129, %v2520
      %v2631 = vadd.f32 %v2134, %v2525
      %v2632 = vadd.f32 %v2139, %v2530
      %v2633 = vadd.f32 %v2144, %v2535
      %v2634 = vadd.f32 %v2149, %v2540
      %v2635 = vadd.f32 %v2154, %v2545
      %v2636 = vadd.f32 %v2159, %v2550
      %v2637 = vadd.f32 %v2164, %v2555
      %v2638 = vadd.f32 %v2169, %v2560
      %v2639 = vadd.f32 %v2174, %v2565
      %v2640 = vadd.f32 %v2179, %v2570
      %v2641 = vadd.f32 %v2184, %v2575
      %v2642 = vadd.f32 %v2189, %v2580
      %v2643 = vadd.f32 %v2194, %v2585
      %v2644 = vadd.f32 %v2199, %v2590
      %v2645 = vadd.f32 %v2204, %v2595
      %v2646 = vadd.f32 %v2209, %v2600
      %v2647 = vadd.f32 %v2214, %v2605
      %v2648 = vadd.f32 %v2219, %v2610
      %v2649 = vadd.f32 %v2224, %v2615
      %v2650 = vld [vmem:[#allocation2 + $0x17] sm:$0xff]
      %v2651 = vld [vmem:[#allocation2 + $0x1f] sm:$0xff]
      %v2652 = vld [vmem:[#allocation2 + $0x27] sm:$0xff]
      %v2653 = vld [vmem:[#allocation2 + $0x2f] sm:$0xff]
      %v2654 = vld [vmem:[#allocation2 + $0x37] sm:$0xff]
      %v2655 = vld [vmem:[#allocation2 + $0x3f] sm:$0xff]
      %v2656 = vld [vmem:[#allocation2 + $0x47] sm:$0xff]
      %v2657 = vld [vmem:[#allocation2 + $0x4f] sm:$0xff]
      %v2658 = vld [vmem:[#allocation2 + $0x57] sm:$0xff]
      %v2659 = vld [vmem:[#allocation2 + $0x5f] sm:$0xff]
      %v2660 = vld [vmem:[#allocation2 + $0x67] sm:$0xff]
      %v2661 = vld [vmem:[#allocation2 + $0x6f] sm:$0xff]
      %v2662 = vld [vmem:[#allocation2 + $0x77] sm:$0xff]
      %v2663 = vld [vmem:[#allocation2 + $0x7f] sm:$0xff]
      %v2664 = vld [vmem:[#allocation2 + $0x87] sm:$0xff]
      %v2665 = vld [vmem:[#allocation2 + $0x8f] sm:$0xff]
      %v2666 = vld [vmem:[#allocation2 + $0x97] sm:$0xff]
      %v2667 = vld [vmem:[#allocation2 + $0x9f] sm:$0xff]
      %v2668 = vld [vmem:[#allocation2 + $0xa7] sm:$0xff]
      %v2669 = vld [vmem:[#allocation2 + $0xaf] sm:$0xff]
      %v2670 = vld [vmem:[#allocation2 + $0xb7] sm:$0xff]
      %v2671 = vld [vmem:[#allocation2 + $0xbf] sm:$0xff]
      %v2672 = vld [vmem:[#allocation2 + $0xc7] sm:$0xff]
      %v2673 = vld [vmem:[#allocation2 + $0xcf] sm:$0xff]
      %v2674 = vld [vmem:[#allocation2 + $0xd7] sm:$0xff]
      %v2675 = vld [vmem:[#allocation2 + $0xdf] sm:$0xff]
      %v2676 = vld [vmem:[#allocation2 + $0xe7] sm:$0xff]
      %v2677 = vld [vmem:[#allocation2 + $0xef] sm:$0xff]
      %v2678 = vld [vmem:[#allocation2 + $0xf7] sm:$0xff]
      %v2679 = vld [vmem:[#allocation2 + $0xff] sm:$0xff]
      %v2680 = vld [vmem:[#allocation2 + $0x107] sm:$0xff]
      %v2681 = vld [vmem:[#allocation2 + $0x10f] sm:$0xff]
      %v2682 = vmul.f32 %v2650, %v1278
      %v2683 = vmul.f32 %v2651, %v1279
      %v2684 = vmul.f32 %v2652, %v1280
      %v2685 = vmul.f32 %v2653, %v1281
      %v2686 = vmul.f32 %v2654, %v1282
      %v2687 = vmul.f32 %v2655, %v1283
      %v2688 = vmul.f32 %v2656, %v1284
      %v2689 = vmul.f32 %v2657, %v1285
      %v2690 = vmul.f32 %v2658, %v1286
      %v2691 = vmul.f32 %v2659, %v1287
      %v2692 = vmul.f32 %v2660, %v1288
      %v2693 = vmul.f32 %v2661, %v1289
      %v2694 = vmul.f32 %v2662, %v1290
      %v2695 = vmul.f32 %v2663, %v1291
      %v2696 = vmul.f32 %v2664, %v1292
      %v2697 = vmul.f32 %v2665, %v1293
      %v2698 = vmul.f32 %v2666, %v1294
      %v2699 = vmul.f32 %v2667, %v1295
      %v2700 = vmul.f32 %v2668, %v1296
      %v2701 = vmul.f32 %v2669, %v1297
      %v2702 = vmul.f32 %v2670, %v1298
      %v2703 = vmul.f32 %v2671, %v1299
      %v2704 = vmul.f32 %v2672, %v1300
      %v2705 = vmul.f32 %v2673, %v1301
      %v2706 = vmul.f32 %v2674, %v1302
      %v2707 = vmul.f32 %v2675, %v1303
      %v2708 = vmul.f32 %v2676, %v1304
      %v2709 = vmul.f32 %v2677, %v1305
      %v2710 = vmul.f32 %v2678, %v1306
      %v2711 = vmul.f32 %v2679, %v1307
      %v2712 = vmul.f32 %v2680, %v1308
      %v2713 = vmul.f32 %v2681, %v1309
      %s2714 = scalar_lea.vmem %s3, 48
      %v2715 = vld [vmem:[%s2714] sm:$0xff]
      %v2716 = vld [vmem:[%s2714 + $0x8] sm:$0xf]
      %v2718 = vsel %vm1406, %v2682, 0
      %v2721 = vsel %vm1406, %v2683, 0
      %v2724 = vsel %vm1406, %v2684, 0
      %v2727 = vsel %vm1406, %v2685, 0
      %v2730 = vsel %vm1406, %v2686, 0
      %v2733 = vsel %vm1406, %v2687, 0
      %v2736 = vsel %vm1406, %v2688, 0
      %v2739 = vsel %vm1406, %v2689, 0
      %v2742 = vsel %vm1406, %v2690, 0
      %v2745 = vsel %vm1406, %v2691, 0
      %v2748 = vsel %vm1406, %v2692, 0
      %v2751 = vsel %vm1406, %v2693, 0
      %v2754 = vsel %vm1406, %v2694, 0
      %v2757 = vsel %vm1406, %v2695, 0
      %v2760 = vsel %vm1406, %v2696, 0
      %v2763 = vsel %vm1406, %v2697, 0
      %v2766 = vsel %vm1406, %v2698, 0
      %v2769 = vsel %vm1406, %v2699, 0
      %v2772 = vsel %vm1406, %v2700, 0
      %v2775 = vsel %vm1406, %v2701, 0
      %v2778 = vsel %vm1406, %v2702, 0
      %v2781 = vsel %vm1406, %v2703, 0
      %v2784 = vsel %vm1406, %v2704, 0
      %v2787 = vsel %vm1406, %v2705, 0
      %v2790 = vsel %vm1406, %v2706, 0
      %v2793 = vsel %vm1406, %v2707, 0
      %v2796 = vsel %vm1406, %v2708, 0
      %v2799 = vsel %vm1406, %v2709, 0
      %v2802 = vsel %vm1406, %v2710, 0
      %v2805 = vsel %vm1406, %v2711, 0
      %v2808 = vsel %vm1406, %v2712, 0
      %v2811 = vsel %vm1406, %v2713, 0
      %v2814 = vsel %vm1674, %v2716, 0
      %2816 = vmatprep.subr.mxu0 0.0
      %2817 = vmatpush1.msra.mxu0 %v2715
      %2818 = vmatprep.subr.mxu0 0.0
      %2819 = vmatpush1.msra.mxu0 %v2814
      %2820 = vmatprep.subr.mxu0 0.0
      %2821 = vmatpush1.msra.mxu0 0.0
      %2822 = vmatprep.subr.mxu0 0.0
      %2823 = vmatpush1.msra.mxu0 0.0
      %2824 = vmatprep.subr.mxu0 0.0
      %2825 = vmatpush1.msra.mxu0 0.0
      %2826 = vmatprep.subr.mxu0 0.0
      %2827 = vmatpush1.msra.mxu0 0.0
      %2828 = vmatprep.subr.mxu0 0.0
      %2829 = vmatpush1.msra.mxu0 0.0
      %2830 = vmatprep.subr.mxu0 0.0
      %2831 = vmatpush1.msra.mxu0 0.0
      %2832 = vmatprep.subr.mxu0 0.0
      %2833 = vmatpush1.msra.mxu0 0.0
      %2834 = vmatprep.subr.mxu0 0.0
      %2835 = vmatpush1.msra.mxu0 0.0
      %2836 = vmatprep.subr.mxu0 0.0
      %2837 = vmatpush1.msra.mxu0 0.0
      %2838 = vmatprep.subr.mxu0 0.0
      %2839 = vmatpush1.msra.mxu0 0.0
      %2840 = vmatprep.subr.mxu0 0.0
      %2841 = vmatpush1.msra.mxu0 0.0
      %2842 = vmatprep.subr.mxu0 0.0
      %2843 = vmatpush1.msra.mxu0 0.0
      %2844 = vmatprep.subr.mxu0 0.0
      %2845 = vmatpush1.msra.mxu0 0.0
      %2846 = vmatprep.subr.mxu0 0.0
      %2847 = vmatpush1.msra.mxu0 0.0
      %2848 = vmatprep.subr.mxu0 0.0
      %2849 = vmatpush1.msra.mxu0 0.0
      %2850 = vmatprep.subr.mxu0 0.0
      %2851 = vmatpush1.msra.mxu0 0.0
      %2852 = vmatprep.subr.mxu0 0.0
      %2853 = vmatpush1.msra.mxu0 0.0
      %2854 = vmatprep.subr.mxu0 0.0
      %2855 = vmatpush1.msra.mxu0 0.0
      %2856 = vmatprep.subr.mxu0 0.0
      %2857 = vmatpush1.msra.mxu0 0.0
      %2858 = vmatprep.subr.mxu0 0.0
      %2859 = vmatpush1.msra.mxu0 0.0
      %2860 = vmatprep.subr.mxu0 0.0
      %2861 = vmatpush1.msra.mxu0 0.0
      %2862 = vmatprep.subr.mxu0 0.0
      %2863 = vmatpush1.msra.mxu0 0.0
      %2864 = vmatprep.subr.mxu0 0.0
      %2865 = vmatpush1.msra.mxu0 0.0
      %2866 = vmatprep.subr.mxu0 0.0
      %2867 = vmatpush1.msra.mxu0 0.0
      %2868 = vmatprep.subr.mxu0 0.0
      %2869 = vmatpush1.msra.mxu0 0.0
      %2870 = vmatprep.subr.mxu0 0.0
      %2871 = vmatpush1.msra.mxu0 0.0
      %2872 = vmatprep.subr.mxu0 0.0
      %2873 = vmatpush1.msra.mxu0 0.0
      %2874 = vmatprep.subr.mxu0 0.0
      %2875 = vmatpush1.msra.mxu0 0.0
      %2876 = vmatprep.subr.mxu0 0.0
      %2877 = vmatpush1.msra.mxu0 0.0
      %2878 = vmatprep.subr.mxu0 0.0
      %2879 = vmatpush1.msra.mxu0 0.0
      %2880 = vmatprep.mubr.f32.mxu0 0.0
      %2881 = vmatmul.mubr.f32.gmra.mrb[0].mxu0 %v2718
      %v2882 = vpop.f32.mrb[0].mxu0
      %v2883 = vadd.f32 0.0, %v2882
      %v2884 = vpop.f32.mrb[0].mxu0
      %2885 = vmatprep.mubr.f32.mxu0 0.0
      %2886 = vmatmul.mubr.f32.gmra.mrb[0].mxu0 %v2721
      %v2887 = vpop.f32.mrb[0].mxu0
      %v2888 = vadd.f32 0.0, %v2887
      %v2889 = vpop.f32.mrb[0].mxu0
      %2890 = vmatprep.mubr.f32.mxu0 0.0
      %2891 = vmatmul.mubr.f32.gmra.mrb[0].mxu0 %v2724
      %v2892 = vpop.f32.mrb[0].mxu0
      %v2893 = vadd.f32 0.0, %v2892
      %v2894 = vpop.f32.mrb[0].mxu0
      %2895 = vmatprep.mubr.f32.mxu0 0.0
      %2896 = vmatmul.mubr.f32.gmra.mrb[0].mxu0 %v2727
      %v2897 = vpop.f32.mrb[0].mxu0
      %v2898 = vadd.f32 0.0, %v2897
      %v2899 = vpop.f32.mrb[0].mxu0
      %2900 = vmatprep.mubr.f32.mxu0 0.0
      %2901 = vmatmul.mubr.f32.gmra.mrb[0].mxu0 %v2730
      %v2902 = vpop.f32.mrb[0].mxu0
      %v2903 = vadd.f32 0.0, %v2902
      %v2904 = vpop.f32.mrb[0].mxu0
      %2905 = vmatprep.mubr.f32.mxu0 0.0
      %2906 = vmatmul.mubr.f32.gmra.mrb[0].mxu0 %v2733
      %v2907 = vpop.f32.mrb[0].mxu0
      %v2908 = vadd.f32 0.0, %v2907
      %v2909 = vpop.f32.mrb[0].mxu0
      %2910 = vmatprep.mubr.f32.mxu0 0.0
      %2911 = vmatmul.mubr.f32.gmra.mrb[0].mxu0 %v2736
      %v2912 = vpop.f32.mrb[0].mxu0
      %v2913 = vadd.f32 0.0, %v2912
      %v2914 = vpop.f32.mrb[0].mxu0
      %2915 = vmatprep.mubr.f32.mxu0 0.0
      %2916 = vmatmul.mubr.f32.gmra.mrb[0].mxu0 %v2739
      %v2917 = vpop.f32.mrb[0].mxu0
      %v2918 = vadd.f32 0.0, %v2917
      %v2919 = vpop.f32.mrb[0].mxu0
      %2920 = vmatprep.mubr.f32.mxu0 0.0
      %2921 = vmatmul.mubr.f32.gmra.mrb[0].mxu0 %v2742
      %v2922 = vpop.f32.mrb[0].mxu0
      %v2923 = vadd.f32 0.0, %v2922
      %v2924 = vpop.f32.mrb[0].mxu0
      %2925 = vmatprep.mubr.f32.mxu0 0.0
      %2926 = vmatmul.mubr.f32.gmra.mrb[0].mxu0 %v2745
      %v2927 = vpop.f32.mrb[0].mxu0
      %v2928 = vadd.f32 0.0, %v2927
      %v2929 = vpop.f32.mrb[0].mxu0
      %2930 = vmatprep.mubr.f32.mxu0 0.0
      %2931 = vmatmul.mubr.f32.gmra.mrb[0].mxu0 %v2748
      %v2932 = vpop.f32.mrb[0].mxu0
      %v2933 = vadd.f32 0.0, %v2932
      %v2934 = vpop.f32.mrb[0].mxu0
      %2935 = vmatprep.mubr.f32.mxu0 0.0
      %2936 = vmatmul.mubr.f32.gmra.mrb[0].mxu0 %v2751
      %v2937 = vpop.f32.mrb[0].mxu0
      %v2938 = vadd.f32 0.0, %v2937
      %v2939 = vpop.f32.mrb[0].mxu0
      %2940 = vmatprep.mubr.f32.mxu0 0.0
      %2941 = vmatmul.mubr.f32.gmra.mrb[0].mxu0 %v2754
      %v2942 = vpop.f32.mrb[0].mxu0
      %v2943 = vadd.f32 0.0, %v2942
      %v2944 = vpop.f32.mrb[0].mxu0
      %2945 = vmatprep.mubr.f32.mxu0 0.0
      %2946 = vmatmul.mubr.f32.gmra.mrb[0].mxu0 %v2757
      %v2947 = vpop.f32.mrb[0].mxu0
      %v2948 = vadd.f32 0.0, %v2947
      %v2949 = vpop.f32.mrb[0].mxu0
      %2950 = vmatprep.mubr.f32.mxu0 0.0
      %2951 = vmatmul.mubr.f32.gmra.mrb[0].mxu0 %v2760
      %v2952 = vpop.f32.mrb[0].mxu0
      %v2953 = vadd.f32 0.0, %v2952
      %v2954 = vpop.f32.mrb[0].mxu0
      %2955 = vmatprep.mubr.f32.mxu0 0.0
      %2956 = vmatmul.mubr.f32.gmra.mrb[0].mxu0 %v2763
      %v2957 = vpop.f32.mrb[0].mxu0
      %v2958 = vadd.f32 0.0, %v2957
      %v2959 = vpop.f32.mrb[0].mxu0
      %2960 = vmatprep.mubr.f32.mxu0 0.0
      %2961 = vmatmul.mubr.f32.gmra.mrb[0].mxu0 %v2766
      %v2962 = vpop.f32.mrb[0].mxu0
      %v2963 = vadd.f32 0.0, %v2962
      %v2964 = vpop.f32.mrb[0].mxu0
      %2965 = vmatprep.mubr.f32.mxu0 0.0
      %2966 = vmatmul.mubr.f32.gmra.mrb[0].mxu0 %v2769
      %v2967 = vpop.f32.mrb[0].mxu0
      %v2968 = vadd.f32 0.0, %v2967
      %v2969 = vpop.f32.mrb[0].mxu0
      %2970 = vmatprep.mubr.f32.mxu0 0.0
      %2971 = vmatmul.mubr.f32.gmra.mrb[0].mxu0 %v2772
      %v2972 = vpop.f32.mrb[0].mxu0
      %v2973 = vadd.f32 0.0, %v2972
      %v2974 = vpop.f32.mrb[0].mxu0
      %2975 = vmatprep.mubr.f32.mxu0 0.0
      %2976 = vmatmul.mubr.f32.gmra.mrb[0].mxu0 %v2775
      %v2977 = vpop.f32.mrb[0].mxu0
      %v2978 = vadd.f32 0.0, %v2977
      %v2979 = vpop.f32.mrb[0].mxu0
      %2980 = vmatprep.mubr.f32.mxu0 0.0
      %2981 = vmatmul.mubr.f32.gmra.mrb[0].mxu0 %v2778
      %v2982 = vpop.f32.mrb[0].mxu0
      %v2983 = vadd.f32 0.0, %v2982
      %v2984 = vpop.f32.mrb[0].mxu0
      %2985 = vmatprep.mubr.f32.mxu0 0.0
      %2986 = vmatmul.mubr.f32.gmra.mrb[0].mxu0 %v2781
      %v2987 = vpop.f32.mrb[0].mxu0
      %v2988 = vadd.f32 0.0, %v2987
      %v2989 = vpop.f32.mrb[0].mxu0
      %2990 = vmatprep.mubr.f32.mxu0 0.0
      %2991 = vmatmul.mubr.f32.gmra.mrb[0].mxu0 %v2784
      %v2992 = vpop.f32.mrb[0].mxu0
      %v2993 = vadd.f32 0.0, %v2992
      %v2994 = vpop.f32.mrb[0].mxu0
      %2995 = vmatprep.mubr.f32.mxu0 0.0
      %2996 = vmatmul.mubr.f32.gmra.mrb[0].mxu0 %v2787
      %v2997 = vpop.f32.mrb[0].mxu0
      %v2998 = vadd.f32 0.0, %v2997
      %v2999 = vpop.f32.mrb[0].mxu0
      %3000 = vmatprep.mubr.f32.mxu0 0.0
      %3001 = vmatmul.mubr.f32.gmra.mrb[0].mxu0 %v2790
      %v3002 = vpop.f32.mrb[0].mxu0
      %v3003 = vadd.f32 0.0, %v3002
      %v3004 = vpop.f32.mrb[0].mxu0
      %3005 = vmatprep.mubr.f32.mxu0 0.0
      %3006 = vmatmul.mubr.f32.gmra.mrb[0].mxu0 %v2793
      %v3007 = vpop.f32.mrb[0].mxu0
      %v3008 = vadd.f32 0.0, %v3007
      %v3009 = vpop.f32.mrb[0].mxu0
      %3010 = vmatprep.mubr.f32.mxu0 0.0
      %3011 = vmatmul.mubr.f32.gmra.mrb[0].mxu0 %v2796
      %v3012 = vpop.f32.mrb[0].mxu0
      %v3013 = vadd.f32 0.0, %v3012
      %v3014 = vpop.f32.mrb[0].mxu0
      %3015 = vmatprep.mubr.f32.mxu0 0.0
      %3016 = vmatmul.mubr.f32.gmra.mrb[0].mxu0 %v2799
      %v3017 = vpop.f32.mrb[0].mxu0
      %v3018 = vadd.f32 0.0, %v3017
      %v3019 = vpop.f32.mrb[0].mxu0
      %3020 = vmatprep.mubr.f32.mxu0 0.0
      %3021 = vmatmul.mubr.f32.gmra.mrb[0].mxu0 %v2802
      %v3022 = vpop.f32.mrb[0].mxu0
      %v3023 = vadd.f32 0.0, %v3022
      %v3024 = vpop.f32.mrb[0].mxu0
      %3025 = vmatprep.mubr.f32.mxu0 0.0
      %3026 = vmatmul.mubr.f32.gmra.mrb[0].mxu0 %v2805
      %v3027 = vpop.f32.mrb[0].mxu0
      %v3028 = vadd.f32 0.0, %v3027
      %v3029 = vpop.f32.mrb[0].mxu0
      %3030 = vmatprep.mubr.f32.mxu0 0.0
      %3031 = vmatmul.mubr.f32.gmra.mrb[0].mxu0 %v2808
      %v3032 = vpop.f32.mrb[0].mxu0
      %v3033 = vadd.f32 0.0, %v3032
      %v3034 = vpop.f32.mrb[0].mxu0
      %3035 = vmatprep.mubr.f32.mxu0 0.0
      %3036 = vmatmul.mubr.f32.gmra.mrb[0].mxu0 %v2811
      %v3037 = vpop.f32.mrb[0].mxu0
      %v3038 = vadd.f32 0.0, %v3037
      %v3039 = vpop.f32.mrb[0].mxu0
      %3040 = vdwg.mxu0
      %v3041 = vadd.f32 %v2618, %v2883
      %v3042 = vadd.f32 %v2619, %v2888
      %v3043 = vadd.f32 %v2620, %v2893
      %v3044 = vadd.f32 %v2621, %v2898
      %v3045 = vadd.f32 %v2622, %v2903
      %v3046 = vadd.f32 %v2623, %v2908
      %v3047 = vadd.f32 %v2624, %v2913
      %v3048 = vadd.f32 %v2625, %v2918
      %v3049 = vadd.f32 %v2626, %v2923
      %v3050 = vadd.f32 %v2627, %v2928
      %v3051 = vadd.f32 %v2628, %v2933
      %v3052 = vadd.f32 %v2629, %v2938
      %v3053 = vadd.f32 %v2630, %v2943
      %v3054 = vadd.f32 %v2631, %v2948
      %v3055 = vadd.f32 %v2632, %v2953
      %v3056 = vadd.f32 %v2633, %v2958
      %v3057 = vadd.f32 %v2634, %v2963
      %v3058 = vadd.f32 %v2635, %v2968
      %v3059 = vadd.f32 %v2636, %v2973
      %v3060 = vadd.f32 %v2637, %v2978
      %v3061 = vadd.f32 %v2638, %v2983
      %v3062 = vadd.f32 %v2639, %v2988
      %v3063 = vadd.f32 %v2640, %v2993
      %v3064 = vadd.f32 %v2641, %v2998
      %v3065 = vadd.f32 %v2642, %v3003
      %v3066 = vadd.f32 %v2643, %v3008
      %v3067 = vadd.f32 %v2644, %v3013
      %v3068 = vadd.f32 %v2645, %v3018
      %v3069 = vadd.f32 %v2646, %v3023
      %v3070 = vadd.f32 %v2647, %v3028
      %v3071 = vadd.f32 %v2648, %v3033
      %v3072 = vadd.f32 %v2649, %v3038
      %v3073 = vld [vmem:[#allocation2 + $0x18] sm:$0xff]
      %v3074 = vld [vmem:[#allocation2 + $0x20] sm:$0xff]
      %v3075 = vld [vmem:[#allocation2 + $0x28] sm:$0xff]
      %v3076 = vld [vmem:[#allocation2 + $0x30] sm:$0xff]
      %v3077 = vld [vmem:[#allocation2 + $0x38] sm:$0xff]
      %v3078 = vld [vmem:[#allocation2 + $0x40] sm:$0xff]
      %v3079 = vld [vmem:[#allocation2 + $0x48] sm:$0xff]
      %v3080 = vld [vmem:[#allocation2 + $0x50] sm:$0xff]
      %v3081 = vld [vmem:[#allocation2 + $0x58] sm:$0xff]
      %v3082 = vld [vmem:[#allocation2 + $0x60] sm:$0xff]
      %v3083 = vld [vmem:[#allocation2 + $0x68] sm:$0xff]
      %v3084 = vld [vmem:[#allocation2 + $0x70] sm:$0xff]
      %v3085 = vld [vmem:[#allocation2 + $0x78] sm:$0xff]
      %v3086 = vld [vmem:[#allocation2 + $0x80] sm:$0xff]
      %v3087 = vld [vmem:[#allocation2 + $0x88] sm:$0xff]
      %v3088 = vld [vmem:[#allocation2 + $0x90] sm:$0xff]
      %v3089 = vld [vmem:[#allocation2 + $0x98] sm:$0xff]
      %v3090 = vld [vmem:[#allocation2 + $0xa0] sm:$0xff]
      %v3091 = vld [vmem:[#allocation2 + $0xa8] sm:$0xff]
      %v3092 = vld [vmem:[#allocation2 + $0xb0] sm:$0xff]
      %v3093 = vld [vmem:[#allocation2 + $0xb8] sm:$0xff]
      %v3094 = vld [vmem:[#allocation2 + $0xc0] sm:$0xff]
      %v3095 = vld [vmem:[#allocation2 + $0xc8] sm:$0xff]
      %v3096 = vld [vmem:[#allocation2 + $0xd0] sm:$0xff]
      %v3097 = vld [vmem:[#allocation2 + $0xd8] sm:$0xff]
      %v3098 = vld [vmem:[#allocation2 + $0xe0] sm:$0xff]
      %v3099 = vld [vmem:[#allocation2 + $0xe8] sm:$0xff]
      %v3100 = vld [vmem:[#allocation2 + $0xf0] sm:$0xff]
      %v3101 = vld [vmem:[#allocation2 + $0xf8] sm:$0xff]
      %v3102 = vld [vmem:[#allocation2 + $0x100] sm:$0xff]
      %v3103 = vld [vmem:[#allocation2 + $0x108] sm:$0xff]
      %v3104 = vld [vmem:[#allocation2 + $0x110] sm:$0xff]
      %s3105 = scalar_lea.vmem %s3, 64
      %v3106 = vld [vmem:[%s3105] sm:$0xff]
      %v3107 = vld [vmem:[%s3105 + $0x8] sm:$0xf]
      %v3109 = vsel %vm1406, %v3073, 0
      %v3112 = vsel %vm1406, %v3074, 0
      %v3115 = vsel %vm1406, %v3075, 0
      %v3118 = vsel %vm1406, %v3076, 0
      %v3121 = vsel %vm1406, %v3077, 0
      %v3124 = vsel %vm1406, %v3078, 0
      %v3127 = vsel %vm1406, %v3079, 0
      %v3130 = vsel %vm1406, %v3080, 0
      %v3133 = vsel %vm1406, %v3081, 0
      %v3136 = vsel %vm1406, %v3082, 0
      %v3139 = vsel %vm1406, %v3083, 0
      %v3142 = vsel %vm1406, %v3084, 0
      %v3145 = vsel %vm1406, %v3085, 0
      %v3148 = vsel %vm1406, %v3086, 0
      %v3151 = vsel %vm1406, %v3087, 0
      %v3154 = vsel %vm1406, %v3088, 0
      %v3157 = vsel %vm1406, %v3089, 0
      %v3160 = vsel %vm1406, %v3090, 0
      %v3163 = vsel %vm1406, %v3091, 0
      %v3166 = vsel %vm1406, %v3092, 0
      %v3169 = vsel %vm1406, %v3093, 0
      %v3172 = vsel %vm1406, %v3094, 0
      %v3175 = vsel %vm1406, %v3095, 0
      %v3178 = vsel %vm1406, %v3096, 0
      %v3181 = vsel %vm1406, %v3097, 0
      %v3184 = vsel %vm1406, %v3098, 0
      %v3187 = vsel %vm1406, %v3099, 0
      %v3190 = vsel %vm1406, %v3100, 0
      %v3193 = vsel %vm1406, %v3101, 0
      %v3196 = vsel %vm1406, %v3102, 0
      %v3199 = vsel %vm1406, %v3103, 0
      %v3202 = vsel %vm1406, %v3104, 0
      %v3205 = vsel %vm1674, %v3107, 0
      %3207 = vmatprep.subr.mxu0 0.0
      %3208 = vmatpush1.msra.mxu0 %v3106
      %3209 = vmatprep.subr.mxu0 0.0
      %3210 = vmatpush1.msra.mxu0 %v3205
      %3211 = vmatprep.subr.mxu0 0.0
      %3212 = vmatpush1.msra.mxu0 0.0
      %3213 = vmatprep.subr.mxu0 0.0
      %3214 = vmatpush1.msra.mxu0 0.0
      %3215 = vmatprep.subr.mxu0 0.0
      %3216 = vmatpush1.msra.mxu0 0.0
      %3217 = vmatprep.subr.mxu0 0.0
      %3218 = vmatpush1.msra.mxu0 0.0
      %3219 = vmatprep.subr.mxu0 0.0
      %3220 = vmatpush1.msra.mxu0 0.0
      %3221 = vmatprep.subr.mxu0 0.0
      %3222 = vmatpush1.msra.mxu0 0.0
      %3223 = vmatprep.subr.mxu0 0.0
      %3224 = vmatpush1.msra.mxu0 0.0
      %3225 = vmatprep.subr.mxu0 0.0
      %3226 = vmatpush1.msra.mxu0 0.0
      %3227 = vmatprep.subr.mxu0 0.0
      %3228 = vmatpush1.msra.mxu0 0.0
      %3229 = vmatprep.subr.mxu0 0.0
      %3230 = vmatpush1.msra.mxu0 0.0
      %3231 = vmatprep.subr.mxu0 0.0
      %3232 = vmatpush1.msra.mxu0 0.0
      %3233 = vmatprep.subr.mxu0 0.0
      %3234 = vmatpush1.msra.mxu0 0.0
      %3235 = vmatprep.subr.mxu0 0.0
      %3236 = vmatpush1.msra.mxu0 0.0
      %3237 = vmatprep.subr.mxu0 0.0
      %3238 = vmatpush1.msra.mxu0 0.0
      %3239 = vmatprep.subr.mxu0 0.0
      %3240 = vmatpush1.msra.mxu0 0.0
      %3241 = vmatprep.subr.mxu0 0.0
      %3242 = vmatpush1.msra.mxu0 0.0
      %3243 = vmatprep.subr.mxu0 0.0
      %3244 = vmatpush1.msra.mxu0 0.0
      %3245 = vmatprep.subr.mxu0 0.0
      %3246 = vmatpush1.msra.mxu0 0.0
      %3247 = vmatprep.subr.mxu0 0.0
      %3248 = vmatpush1.msra.mxu0 0.0
      %3249 = vmatprep.subr.mxu0 0.0
      %3250 = vmatpush1.msra.mxu0 0.0
      %3251 = vmatprep.subr.mxu0 0.0
      %3252 = vmatpush1.msra.mxu0 0.0
      %3253 = vmatprep.subr.mxu0 0.0
      %3254 = vmatpush1.msra.mxu0 0.0
      %3255 = vmatprep.subr.mxu0 0.0
      %3256 = vmatpush1.msra.mxu0 0.0
      %3257 = vmatprep.subr.mxu0 0.0
      %3258 = vmatpush1.msra.mxu0 0.0
      %3259 = vmatprep.subr.mxu0 0.0
      %3260 = vmatpush1.msra.mxu0 0.0
      %3261 = vmatprep.subr.mxu0 0.0
      %3262 = vmatpush1.msra.mxu0 0.0
      %3263 = vmatprep.subr.mxu0 0.0
      %3264 = vmatpush1.msra.mxu0 0.0
      %3265 = vmatprep.subr.mxu0 0.0
      %3266 = vmatpush1.msra.mxu0 0.0
      %3267 = vmatprep.subr.mxu0 0.0
      %3268 = vmatpush1.msra.mxu0 0.0
      %3269 = vmatprep.subr.mxu0 0.0
      %3270 = vmatpush1.msra.mxu0 0.0
      %3271 = vmatprep.mubr.f32.mxu0 0.0
      %3272 = vmatmul.mubr.f32.gmra.mrb[0].mxu0 %v3109
      %v3273 = vpop.f32.mrb[0].mxu0
      %v3274 = vadd.f32 0.0, %v3273
      %v3275 = vpop.f32.mrb[0].mxu0
      %3276 = vmatprep.mubr.f32.mxu0 0.0
      %3277 = vmatmul.mubr.f32.gmra.mrb[0].mxu0 %v3112
      %v3278 = vpop.f32.mrb[0].mxu0
      %v3279 = vadd.f32 0.0, %v3278
      %v3280 = vpop.f32.mrb[0].mxu0
      %3281 = vmatprep.mubr.f32.mxu0 0.0
      %3282 = vmatmul.mubr.f32.gmra.mrb[0].mxu0 %v3115
      %v3283 = vpop.f32.mrb[0].mxu0
      %v3284 = vadd.f32 0.0, %v3283
      %v3285 = vpop.f32.mrb[0].mxu0
      %3286 = vmatprep.mubr.f32.mxu0 0.0
      %3287 = vmatmul.mubr.f32.gmra.mrb[0].mxu0 %v3118
      %v3288 = vpop.f32.mrb[0].mxu0
      %v3289 = vadd.f32 0.0, %v3288
      %v3290 = vpop.f32.mrb[0].mxu0
      %3291 = vmatprep.mubr.f32.mxu0 0.0
      %3292 = vmatmul.mubr.f32.gmra.mrb[0].mxu0 %v3121
      %v3293 = vpop.f32.mrb[0].mxu0
      %v3294 = vadd.f32 0.0, %v3293
      %v3295 = vpop.f32.mrb[0].mxu0
      %3296 = vmatprep.mubr.f32.mxu0 0.0
      %3297 = vmatmul.mubr.f32.gmra.mrb[0].mxu0 %v3124
      %v3298 = vpop.f32.mrb[0].mxu0
      %v3299 = vadd.f32 0.0, %v3298
      %v3300 = vpop.f32.mrb[0].mxu0
      %3301 = vmatprep.mubr.f32.mxu0 0.0
      %3302 = vmatmul.mubr.f32.gmra.mrb[0].mxu0 %v3127
      %v3303 = vpop.f32.mrb[0].mxu0
      %v3304 = vadd.f32 0.0, %v3303
      %v3305 = vpop.f32.mrb[0].mxu0
      %3306 = vmatprep.mubr.f32.mxu0 0.0
      %3307 = vmatmul.mubr.f32.gmra.mrb[0].mxu0 %v3130
      %v3308 = vpop.f32.mrb[0].mxu0
      %v3309 = vadd.f32 0.0, %v3308
      %v3310 = vpop.f32.mrb[0].mxu0
      %3311 = vmatprep.mubr.f32.mxu0 0.0
      %3312 = vmatmul.mubr.f32.gmra.mrb[0].mxu0 %v3133
      %v3313 = vpop.f32.mrb[0].mxu0
      %v3314 = vadd.f32 0.0, %v3313
      %v3315 = vpop.f32.mrb[0].mxu0
      %3316 = vmatprep.mubr.f32.mxu0 0.0
      %3317 = vmatmul.mubr.f32.gmra.mrb[0].mxu0 %v3136
      %v3318 = vpop.f32.mrb[0].mxu0
      %v3319 = vadd.f32 0.0, %v3318
      %v3320 = vpop.f32.mrb[0].mxu0
      %3321 = vmatprep.mubr.f32.mxu0 0.0
      %3322 = vmatmul.mubr.f32.gmra.mrb[0].mxu0 %v3139
      %v3323 = vpop.f32.mrb[0].mxu0
      %v3324 = vadd.f32 0.0, %v3323
      %v3325 = vpop.f32.mrb[0].mxu0
      %3326 = vmatprep.mubr.f32.mxu0 0.0
      %3327 = vmatmul.mubr.f32.gmra.mrb[0].mxu0 %v3142
      %v3328 = vpop.f32.mrb[0].mxu0
      %v3329 = vadd.f32 0.0, %v3328
      %v3330 = vpop.f32.mrb[0].mxu0
      %3331 = vmatprep.mubr.f32.mxu0 0.0
      %3332 = vmatmul.mubr.f32.gmra.mrb[0].mxu0 %v3145
      %v3333 = vpop.f32.mrb[0].mxu0
      %v3334 = vadd.f32 0.0, %v3333
      %v3335 = vpop.f32.mrb[0].mxu0
      %3336 = vmatprep.mubr.f32.mxu0 0.0
      %3337 = vmatmul.mubr.f32.gmra.mrb[0].mxu0 %v3148
      %v3338 = vpop.f32.mrb[0].mxu0
      %v3339 = vadd.f32 0.0, %v3338
      %v3340 = vpop.f32.mrb[0].mxu0
      %3341 = vmatprep.mubr.f32.mxu0 0.0
      %3342 = vmatmul.mubr.f32.gmra.mrb[0].mxu0 %v3151
      %v3343 = vpop.f32.mrb[0].mxu0
      %v3344 = vadd.f32 0.0, %v3343
      %v3345 = vpop.f32.mrb[0].mxu0
      %3346 = vmatprep.mubr.f32.mxu0 0.0
      %3347 = vmatmul.mubr.f32.gmra.mrb[0].mxu0 %v3154
      %v3348 = vpop.f32.mrb[0].mxu0
      %v3349 = vadd.f32 0.0, %v3348
      %v3350 = vpop.f32.mrb[0].mxu0
      %3351 = vmatprep.mubr.f32.mxu0 0.0
      %3352 = vmatmul.mubr.f32.gmra.mrb[0].mxu0 %v3157
      %v3353 = vpop.f32.mrb[0].mxu0
      %v3354 = vadd.f32 0.0, %v3353
      %v3355 = vpop.f32.mrb[0].mxu0
      %3356 = vmatprep.mubr.f32.mxu0 0.0
      %3357 = vmatmul.mubr.f32.gmra.mrb[0].mxu0 %v3160
      %v3358 = vpop.f32.mrb[0].mxu0
      %v3359 = vadd.f32 0.0, %v3358
      %v3360 = vpop.f32.mrb[0].mxu0
      %3361 = vmatprep.mubr.f32.mxu0 0.0
      %3362 = vmatmul.mubr.f32.gmra.mrb[0].mxu0 %v3163
      %v3363 = vpop.f32.mrb[0].mxu0
      %v3364 = vadd.f32 0.0, %v3363
      %v3365 = vpop.f32.mrb[0].mxu0
      %3366 = vmatprep.mubr.f32.mxu0 0.0
      %3367 = vmatmul.mubr.f32.gmra.mrb[0].mxu0 %v3166
      %v3368 = vpop.f32.mrb[0].mxu0
      %v3369 = vadd.f32 0.0, %v3368
      %v3370 = vpop.f32.mrb[0].mxu0
      %3371 = vmatprep.mubr.f32.mxu0 0.0
      %3372 = vmatmul.mubr.f32.gmra.mrb[0].mxu0 %v3169
      %v3373 = vpop.f32.mrb[0].mxu0
      %v3374 = vadd.f32 0.0, %v3373
      %v3375 = vpop.f32.mrb[0].mxu0
      %3376 = vmatprep.mubr.f32.mxu0 0.0
      %3377 = vmatmul.mubr.f32.gmra.mrb[0].mxu0 %v3172
      %v3378 = vpop.f32.mrb[0].mxu0
      %v3379 = vadd.f32 0.0, %v3378
      %v3380 = vpop.f32.mrb[0].mxu0
      %3381 = vmatprep.mubr.f32.mxu0 0.0
      %3382 = vmatmul.mubr.f32.gmra.mrb[0].mxu0 %v3175
      %v3383 = vpop.f32.mrb[0].mxu0
      %v3384 = vadd.f32 0.0, %v3383
      %v3385 = vpop.f32.mrb[0].mxu0
      %3386 = vmatprep.mubr.f32.mxu0 0.0
      %3387 = vmatmul.mubr.f32.gmra.mrb[0].mxu0 %v3178
      %v3388 = vpop.f32.mrb[0].mxu0
      %v3389 = vadd.f32 0.0, %v3388
      %v3390 = vpop.f32.mrb[0].mxu0
      %3391 = vmatprep.mubr.f32.mxu0 0.0
      %3392 = vmatmul.mubr.f32.gmra.mrb[0].mxu0 %v3181
      %v3393 = vpop.f32.mrb[0].mxu0
      %v3394 = vadd.f32 0.0, %v3393
      %v3395 = vpop.f32.mrb[0].mxu0
      %3396 = vmatprep.mubr.f32.mxu0 0.0
      %3397 = vmatmul.mubr.f32.gmra.mrb[0].mxu0 %v3184
      %v3398 = vpop.f32.mrb[0].mxu0
      %v3399 = vadd.f32 0.0, %v3398
      %v3400 = vpop.f32.mrb[0].mxu0
      %3401 = vmatprep.mubr.f32.mxu0 0.0
      %3402 = vmatmul.mubr.f32.gmra.mrb[0].mxu0 %v3187
      %v3403 = vpop.f32.mrb[0].mxu0
      %v3404 = vadd.f32 0.0, %v3403
      %v3405 = vpop.f32.mrb[0].mxu0
      %3406 = vmatprep.mubr.f32.mxu0 0.0
      %3407 = vmatmul.mubr.f32.gmra.mrb[0].mxu0 %v3190
      %v3408 = vpop.f32.mrb[0].mxu0
      %v3409 = vadd.f32 0.0, %v3408
      %v3410 = vpop.f32.mrb[0].mxu0
      %3411 = vmatprep.mubr.f32.mxu0 0.0
      %3412 = vmatmul.mubr.f32.gmra.mrb[0].mxu0 %v3193
      %v3413 = vpop.f32.mrb[0].mxu0
      %v3414 = vadd.f32 0.0, %v3413
      %v3415 = vpop.f32.mrb[0].mxu0
      %3416 = vmatprep.mubr.f32.mxu0 0.0
      %3417 = vmatmul.mubr.f32.gmra.mrb[0].mxu0 %v3196
      %v3418 = vpop.f32.mrb[0].mxu0
      %v3419 = vadd.f32 0.0, %v3418
      %v3420 = vpop.f32.mrb[0].mxu0
      %3421 = vmatprep.mubr.f32.mxu0 0.0
      %3422 = vmatmul.mubr.f32.gmra.mrb[0].mxu0 %v3199
      %v3423 = vpop.f32.mrb[0].mxu0
      %v3424 = vadd.f32 0.0, %v3423
      %v3425 = vpop.f32.mrb[0].mxu0
      %3426 = vmatprep.mubr.f32.mxu0 0.0
      %3427 = vmatmul.mubr.f32.gmra.mrb[0].mxu0 %v3202
      %v3428 = vpop.f32.mrb[0].mxu0
      %v3429 = vadd.f32 0.0, %v3428
      %v3430 = vpop.f32.mrb[0].mxu0
      %3431 = vdwg.mxu0
      %v3432 = vadd.f32 %v3041, %v3274
      %v3433 = vadd.f32 %v3042, %v3279
      %v3434 = vadd.f32 %v3043, %v3284
      %v3435 = vadd.f32 %v3044, %v3289
      %v3436 = vadd.f32 %v3045, %v3294
      %v3437 = vadd.f32 %v3046, %v3299
      %v3438 = vadd.f32 %v3047, %v3304
      %v3439 = vadd.f32 %v3048, %v3309
      %v3440 = vadd.f32 %v3049, %v3314
      %v3441 = vadd.f32 %v3050, %v3319
      %v3442 = vadd.f32 %v3051, %v3324
      %v3443 = vadd.f32 %v3052, %v3329
      %v3444 = vadd.f32 %v3053, %v3334
      %v3445 = vadd.f32 %v3054, %v3339
      %v3446 = vadd.f32 %v3055, %v3344
      %v3447 = vadd.f32 %v3056, %v3349
      %v3448 = vadd.f32 %v3057, %v3354
      %v3449 = vadd.f32 %v3058, %v3359
      %v3450 = vadd.f32 %v3059, %v3364
      %v3451 = vadd.f32 %v3060, %v3369
      %v3452 = vadd.f32 %v3061, %v3374
      %v3453 = vadd.f32 %v3062, %v3379
      %v3454 = vadd.f32 %v3063, %v3384
      %v3455 = vadd.f32 %v3064, %v3389
      %v3456 = vadd.f32 %v3065, %v3394
      %v3457 = vadd.f32 %v3066, %v3399
      %v3458 = vadd.f32 %v3067, %v3404
      %v3459 = vadd.f32 %v3068, %v3409
      %v3460 = vadd.f32 %v3069, %v3414
      %v3461 = vadd.f32 %v3070, %v3419
      %v3462 = vadd.f32 %v3071, %v3424
      %v3463 = vadd.f32 %v3072, %v3429
      %v3464 = vld [vmem:[#allocation2 + $0x19] sm:$0xff]
      %v3465 = vld [vmem:[#allocation2 + $0x21] sm:$0xff]
      %v3466 = vld [vmem:[#allocation2 + $0x29] sm:$0xff]
      %v3467 = vld [vmem:[#allocation2 + $0x31] sm:$0xff]
      %v3468 = vld [vmem:[#allocation2 + $0x39] sm:$0xff]
      %v3469 = vld [vmem:[#allocation2 + $0x41] sm:$0xff]
      %v3470 = vld [vmem:[#allocation2 + $0x49] sm:$0xff]
      %v3471 = vld [vmem:[#allocation2 + $0x51] sm:$0xff]
      %v3472 = vld [vmem:[#allocation2 + $0x59] sm:$0xff]
      %v3473 = vld [vmem:[#allocation2 + $0x61] sm:$0xff]
      %v3474 = vld [vmem:[#allocation2 + $0x69] sm:$0xff]
      %v3475 = vld [vmem:[#allocation2 + $0x71] sm:$0xff]
      %v3476 = vld [vmem:[#allocation2 + $0x79] sm:$0xff]
      %v3477 = vld [vmem:[#allocation2 + $0x81] sm:$0xff]
      %v3478 = vld [vmem:[#allocation2 + $0x89] sm:$0xff]
      %v3479 = vld [vmem:[#allocation2 + $0x91] sm:$0xff]
      %v3480 = vld [vmem:[#allocation2 + $0x99] sm:$0xff]
      %v3481 = vld [vmem:[#allocation2 + $0xa1] sm:$0xff]
      %v3482 = vld [vmem:[#allocation2 + $0xa9] sm:$0xff]
      %v3483 = vld [vmem:[#allocation2 + $0xb1] sm:$0xff]
      %v3484 = vld [vmem:[#allocation2 + $0xb9] sm:$0xff]
      %v3485 = vld [vmem:[#allocation2 + $0xc1] sm:$0xff]
      %v3486 = vld [vmem:[#allocation2 + $0xc9] sm:$0xff]
      %v3487 = vld [vmem:[#allocation2 + $0xd1] sm:$0xff]
      %v3488 = vld [vmem:[#allocation2 + $0xd9] sm:$0xff]
      %v3489 = vld [vmem:[#allocation2 + $0xe1] sm:$0xff]
      %v3490 = vld [vmem:[#allocation2 + $0xe9] sm:$0xff]
      %v3491 = vld [vmem:[#allocation2 + $0xf1] sm:$0xff]
      %v3492 = vld [vmem:[#allocation2 + $0xf9] sm:$0xff]
      %v3493 = vld [vmem:[#allocation2 + $0x101] sm:$0xff]
      %v3494 = vld [vmem:[#allocation2 + $0x109] sm:$0xff]
      %v3495 = vld [vmem:[#allocation2 + $0x111] sm:$0xff]
      %v3496 = vmul.f32 %v3464, %v1374
      %v3497 = vmul.f32 %v3465, %v1375
      %v3498 = vmul.f32 %v3466, %v1376
      %v3499 = vmul.f32 %v3467, %v1377
      %v3500 = vmul.f32 %v3468, %v1378
      %v3501 = vmul.f32 %v3469, %v1379
      %v3502 = vmul.f32 %v3470, %v1380
      %v3503 = vmul.f32 %v3471, %v1381
      %v3504 = vmul.f32 %v3472, %v1382
      %v3505 = vmul.f32 %v3473, %v1383
      %v3506 = vmul.f32 %v3474, %v1384
      %v3507 = vmul.f32 %v3475, %v1385
      %v3508 = vmul.f32 %v3476, %v1386
      %v3509 = vmul.f32 %v3477, %v1387
      %v3510 = vmul.f32 %v3478, %v1388
      %v3511 = vmul.f32 %v3479, %v1389
      %v3512 = vmul.f32 %v3480, %v1390
      %v3513 = vmul.f32 %v3481, %v1391
      %v3514 = vmul.f32 %v3482, %v1392
      %v3515 = vmul.f32 %v3483, %v1393
      %v3516 = vmul.f32 %v3484, %v1394
      %v3517 = vmul.f32 %v3485, %v1395
      %v3518 = vmul.f32 %v3486, %v1396
      %v3519 = vmul.f32 %v3487, %v1397
      %v3520 = vmul.f32 %v3488, %v1398
      %v3521 = vmul.f32 %v3489, %v1399
      %v3522 = vmul.f32 %v3490, %v1400
      %v3523 = vmul.f32 %v3491, %v1401
      %v3524 = vmul.f32 %v3492, %v1402
      %v3525 = vmul.f32 %v3493, %v1403
      %v3526 = vmul.f32 %v3494, %v1404
      %v3527 = vmul.f32 %v3495, %v1405
      %s3528 = scalar_lea.vmem %s3, 80
      %v3529 = vld [vmem:[%s3528] sm:$0xff]
      %v3530 = vld [vmem:[%s3528 + $0x8] sm:$0xf]
      %v3532 = vsel %vm1406, %v3496, 0
      %v3535 = vsel %vm1406, %v3497, 0
      %v3538 = vsel %vm1406, %v3498, 0
      %v3541 = vsel %vm1406, %v3499, 0
      %v3544 = vsel %vm1406, %v3500, 0
      %v3547 = vsel %vm1406, %v3501, 0
      %v3550 = vsel %vm1406, %v3502, 0
      %v3553 = vsel %vm1406, %v3503, 0
      %v3556 = vsel %vm1406, %v3504, 0
      %v3559 = vsel %vm1406, %v3505, 0
      %v3562 = vsel %vm1406, %v3506, 0
      %v3565 = vsel %vm1406, %v3507, 0
      %v3568 = vsel %vm1406, %v3508, 0
      %v3571 = vsel %vm1406, %v3509, 0
      %v3574 = vsel %vm1406, %v3510, 0
      %v3577 = vsel %vm1406, %v3511, 0
      %v3580 = vsel %vm1406, %v3512, 0
      %v3583 = vsel %vm1406, %v3513, 0
      %v3586 = vsel %vm1406, %v3514, 0
      %v3589 = vsel %vm1406, %v3515, 0
      %v3592 = vsel %vm1406, %v3516, 0
      %v3595 = vsel %vm1406, %v3517, 0
      %v3598 = vsel %vm1406, %v3518, 0
      %v3601 = vsel %vm1406, %v3519, 0
      %v3604 = vsel %vm1406, %v3520, 0
      %v3607 = vsel %vm1406, %v3521, 0
      %v3610 = vsel %vm1406, %v3522, 0
      %v3613 = vsel %vm1406, %v3523, 0
      %v3616 = vsel %vm1406, %v3524, 0
      %v3619 = vsel %vm1406, %v3525, 0
      %v3622 = vsel %vm1406, %v3526, 0
      %v3625 = vsel %vm1406, %v3527, 0
      %v3628 = vsel %vm1674, %v3530, 0
      %3630 = vmatprep.subr.mxu0 0.0
      %3631 = vmatpush1.msra.mxu0 %v3529
      %3632 = vmatprep.subr.mxu0 0.0
      %3633 = vmatpush1.msra.mxu0 %v3628
      %3634 = vmatprep.subr.mxu0 0.0
      %3635 = vmatpush1.msra.mxu0 0.0
      %3636 = vmatprep.subr.mxu0 0.0
      %3637 = vmatpush1.msra.mxu0 0.0
      %3638 = vmatprep.subr.mxu0 0.0
      %3639 = vmatpush1.msra.mxu0 0.0
      %3640 = vmatprep.subr.mxu0 0.0
      %3641 = vmatpush1.msra.mxu0 0.0
      %3642 = vmatprep.subr.mxu0 0.0
      %3643 = vmatpush1.msra.mxu0 0.0
      %3644 = vmatprep.subr.mxu0 0.0
      %3645 = vmatpush1.msra.mxu0 0.0
      %3646 = vmatprep.subr.mxu0 0.0
      %3647 = vmatpush1.msra.mxu0 0.0
      %3648 = vmatprep.subr.mxu0 0.0
      %3649 = vmatpush1.msra.mxu0 0.0
      %3650 = vmatprep.subr.mxu0 0.0
      %3651 = vmatpush1.msra.mxu0 0.0
      %3652 = vmatprep.subr.mxu0 0.0
      %3653 = vmatpush1.msra.mxu0 0.0
      %3654 = vmatprep.subr.mxu0 0.0
      %3655 = vmatpush1.msra.mxu0 0.0
      %3656 = vmatprep.subr.mxu0 0.0
      %3657 = vmatpush1.msra.mxu0 0.0
      %3658 = vmatprep.subr.mxu0 0.0
      %3659 = vmatpush1.msra.mxu0 0.0
      %3660 = vmatprep.subr.mxu0 0.0
      %3661 = vmatpush1.msra.mxu0 0.0
      %3662 = vmatprep.subr.mxu0 0.0
      %3663 = vmatpush1.msra.mxu0 0.0
      %3664 = vmatprep.subr.mxu0 0.0
      %3665 = vmatpush1.msra.mxu0 0.0
      %3666 = vmatprep.subr.mxu0 0.0
      %3667 = vmatpush1.msra.mxu0 0.0
      %3668 = vmatprep.subr.mxu0 0.0
      %3669 = vmatpush1.msra.mxu0 0.0
      %3670 = vmatprep.subr.mxu0 0.0
      %3671 = vmatpush1.msra.mxu0 0.0
      %3672 = vmatprep.subr.mxu0 0.0
      %3673 = vmatpush1.msra.mxu0 0.0
      %3674 = vmatprep.subr.mxu0 0.0
      %3675 = vmatpush1.msra.mxu0 0.0
      %3676 = vmatprep.subr.mxu0 0.0
      %3677 = vmatpush1.msra.mxu0 0.0
      %3678 = vmatprep.subr.mxu0 0.0
      %3679 = vmatpush1.msra.mxu0 0.0
      %3680 = vmatprep.subr.mxu0 0.0
      %3681 = vmatpush1.msra.mxu0 0.0
      %3682 = vmatprep.subr.mxu0 0.0
      %3683 = vmatpush1.msra.mxu0 0.0
      %3684 = vmatprep.subr.mxu0 0.0
      %3685 = vmatpush1.msra.mxu0 0.0
      %3686 = vmatprep.subr.mxu0 0.0
      %3687 = vmatpush1.msra.mxu0 0.0
      %3688 = vmatprep.subr.mxu0 0.0
      %3689 = vmatpush1.msra.mxu0 0.0
      %3690 = vmatprep.subr.mxu0 0.0
      %3691 = vmatpush1.msra.mxu0 0.0
      %3692 = vmatprep.subr.mxu0 0.0
      %3693 = vmatpush1.msra.mxu0 0.0
      %3694 = vmatprep.mubr.f32.mxu0 0.0
      %3695 = vmatmul.mubr.f32.gmra.mrb[0].mxu0 %v3532
      %v3696 = vpop.f32.mrb[0].mxu0
      %v3697 = vadd.f32 0.0, %v3696
      %v3698 = vpop.f32.mrb[0].mxu0
      %3699 = vmatprep.mubr.f32.mxu0 0.0
      %3700 = vmatmul.mubr.f32.gmra.mrb[0].mxu0 %v3535
      %v3701 = vpop.f32.mrb[0].mxu0
      %v3702 = vadd.f32 0.0, %v3701
      %v3703 = vpop.f32.mrb[0].mxu0
      %3704 = vmatprep.mubr.f32.mxu0 0.0
      %3705 = vmatmul.mubr.f32.gmra.mrb[0].mxu0 %v3538
      %v3706 = vpop.f32.mrb[0].mxu0
      %v3707 = vadd.f32 0.0, %v3706
      %v3708 = vpop.f32.mrb[0].mxu0
      %3709 = vmatprep.mubr.f32.mxu0 0.0
      %3710 = vmatmul.mubr.f32.gmra.mrb[0].mxu0 %v3541
      %v3711 = vpop.f32.mrb[0].mxu0
      %v3712 = vadd.f32 0.0, %v3711
      %v3713 = vpop.f32.mrb[0].mxu0
      %3714 = vmatprep.mubr.f32.mxu0 0.0
      %3715 = vmatmul.mubr.f32.gmra.mrb[0].mxu0 %v3544
      %v3716 = vpop.f32.mrb[0].mxu0
      %v3717 = vadd.f32 0.0, %v3716
      %v3718 = vpop.f32.mrb[0].mxu0
      %3719 = vmatprep.mubr.f32.mxu0 0.0
      %3720 = vmatmul.mubr.f32.gmra.mrb[0].mxu0 %v3547
      %v3721 = vpop.f32.mrb[0].mxu0
      %v3722 = vadd.f32 0.0, %v3721
      %v3723 = vpop.f32.mrb[0].mxu0
      %3724 = vmatprep.mubr.f32.mxu0 0.0
      %3725 = vmatmul.mubr.f32.gmra.mrb[0].mxu0 %v3550
      %v3726 = vpop.f32.mrb[0].mxu0
      %v3727 = vadd.f32 0.0, %v3726
      %v3728 = vpop.f32.mrb[0].mxu0
      %3729 = vmatprep.mubr.f32.mxu0 0.0
      %3730 = vmatmul.mubr.f32.gmra.mrb[0].mxu0 %v3553
      %v3731 = vpop.f32.mrb[0].mxu0
      %v3732 = vadd.f32 0.0, %v3731
      %v3733 = vpop.f32.mrb[0].mxu0
      %3734 = vmatprep.mubr.f32.mxu0 0.0
      %3735 = vmatmul.mubr.f32.gmra.mrb[0].mxu0 %v3556
      %v3736 = vpop.f32.mrb[0].mxu0
      %v3737 = vadd.f32 0.0, %v3736
      %v3738 = vpop.f32.mrb[0].mxu0
      %3739 = vmatprep.mubr.f32.mxu0 0.0
      %3740 = vmatmul.mubr.f32.gmra.mrb[0].mxu0 %v3559
      %v3741 = vpop.f32.mrb[0].mxu0
      %v3742 = vadd.f32 0.0, %v3741
      %v3743 = vpop.f32.mrb[0].mxu0
      %3744 = vmatprep.mubr.f32.mxu0 0.0
      %3745 = vmatmul.mubr.f32.gmra.mrb[0].mxu0 %v3562
      %v3746 = vpop.f32.mrb[0].mxu0
      %v3747 = vadd.f32 0.0, %v3746
      %v3748 = vpop.f32.mrb[0].mxu0
      %3749 = vmatprep.mubr.f32.mxu0 0.0
      %3750 = vmatmul.mubr.f32.gmra.mrb[0].mxu0 %v3565
      %v3751 = vpop.f32.mrb[0].mxu0
      %v3752 = vadd.f32 0.0, %v3751
      %v3753 = vpop.f32.mrb[0].mxu0
      %3754 = vmatprep.mubr.f32.mxu0 0.0
      %3755 = vmatmul.mubr.f32.gmra.mrb[0].mxu0 %v3568
      %v3756 = vpop.f32.mrb[0].mxu0
      %v3757 = vadd.f32 0.0, %v3756
      %v3758 = vpop.f32.mrb[0].mxu0
      %3759 = vmatprep.mubr.f32.mxu0 0.0
      %3760 = vmatmul.mubr.f32.gmra.mrb[0].mxu0 %v3571
      %v3761 = vpop.f32.mrb[0].mxu0
      %v3762 = vadd.f32 0.0, %v3761
      %v3763 = vpop.f32.mrb[0].mxu0
      %3764 = vmatprep.mubr.f32.mxu0 0.0
      %3765 = vmatmul.mubr.f32.gmra.mrb[0].mxu0 %v3574
      %v3766 = vpop.f32.mrb[0].mxu0
      %v3767 = vadd.f32 0.0, %v3766
      %v3768 = vpop.f32.mrb[0].mxu0
      %3769 = vmatprep.mubr.f32.mxu0 0.0
      %3770 = vmatmul.mubr.f32.gmra.mrb[0].mxu0 %v3577
      %v3771 = vpop.f32.mrb[0].mxu0
      %v3772 = vadd.f32 0.0, %v3771
      %v3773 = vpop.f32.mrb[0].mxu0
      %3774 = vmatprep.mubr.f32.mxu0 0.0
      %3775 = vmatmul.mubr.f32.gmra.mrb[0].mxu0 %v3580
      %v3776 = vpop.f32.mrb[0].mxu0
      %v3777 = vadd.f32 0.0, %v3776
      %v3778 = vpop.f32.mrb[0].mxu0
      %3779 = vmatprep.mubr.f32.mxu0 0.0
      %3780 = vmatmul.mubr.f32.gmra.mrb[0].mxu0 %v3583
      %v3781 = vpop.f32.mrb[0].mxu0
      %v3782 = vadd.f32 0.0, %v3781
      %v3783 = vpop.f32.mrb[0].mxu0
      %3784 = vmatprep.mubr.f32.mxu0 0.0
      %3785 = vmatmul.mubr.f32.gmra.mrb[0].mxu0 %v3586
      %v3786 = vpop.f32.mrb[0].mxu0
      %v3787 = vadd.f32 0.0, %v3786
      %v3788 = vpop.f32.mrb[0].mxu0
      %3789 = vmatprep.mubr.f32.mxu0 0.0
      %3790 = vmatmul.mubr.f32.gmra.mrb[0].mxu0 %v3589
      %v3791 = vpop.f32.mrb[0].mxu0
      %v3792 = vadd.f32 0.0, %v3791
      %v3793 = vpop.f32.mrb[0].mxu0
      %3794 = vmatprep.mubr.f32.mxu0 0.0
      %3795 = vmatmul.mubr.f32.gmra.mrb[0].mxu0 %v3592
      %v3796 = vpop.f32.mrb[0].mxu0
      %v3797 = vadd.f32 0.0, %v3796
      %v3798 = vpop.f32.mrb[0].mxu0
      %3799 = vmatprep.mubr.f32.mxu0 0.0
      %3800 = vmatmul.mubr.f32.gmra.mrb[0].mxu0 %v3595
      %v3801 = vpop.f32.mrb[0].mxu0
      %v3802 = vadd.f32 0.0, %v3801
      %v3803 = vpop.f32.mrb[0].mxu0
      %3804 = vmatprep.mubr.f32.mxu0 0.0
      %3805 = vmatmul.mubr.f32.gmra.mrb[0].mxu0 %v3598
      %v3806 = vpop.f32.mrb[0].mxu0
      %v3807 = vadd.f32 0.0, %v3806
      %v3808 = vpop.f32.mrb[0].mxu0
      %3809 = vmatprep.mubr.f32.mxu0 0.0
      %3810 = vmatmul.mubr.f32.gmra.mrb[0].mxu0 %v3601
      %v3811 = vpop.f32.mrb[0].mxu0
      %v3812 = vadd.f32 0.0, %v3811
      %v3813 = vpop.f32.mrb[0].mxu0
      %3814 = vmatprep.mubr.f32.mxu0 0.0
      %3815 = vmatmul.mubr.f32.gmra.mrb[0].mxu0 %v3604
      %v3816 = vpop.f32.mrb[0].mxu0
      %v3817 = vadd.f32 0.0, %v3816
      %v3818 = vpop.f32.mrb[0].mxu0
      %3819 = vmatprep.mubr.f32.mxu0 0.0
      %3820 = vmatmul.mubr.f32.gmra.mrb[0].mxu0 %v3607
      %v3821 = vpop.f32.mrb[0].mxu0
      %v3822 = vadd.f32 0.0, %v3821
      %v3823 = vpop.f32.mrb[0].mxu0
      %3824 = vmatprep.mubr.f32.mxu0 0.0
      %3825 = vmatmul.mubr.f32.gmra.mrb[0].mxu0 %v3610
      %v3826 = vpop.f32.mrb[0].mxu0
      %v3827 = vadd.f32 0.0, %v3826
      %v3828 = vpop.f32.mrb[0].mxu0
      %3829 = vmatprep.mubr.f32.mxu0 0.0
      %3830 = vmatmul.mubr.f32.gmra.mrb[0].mxu0 %v3613
      %v3831 = vpop.f32.mrb[0].mxu0
      %v3832 = vadd.f32 0.0, %v3831
      %v3833 = vpop.f32.mrb[0].mxu0
      %3834 = vmatprep.mubr.f32.mxu0 0.0
      %3835 = vmatmul.mubr.f32.gmra.mrb[0].mxu0 %v3616
      %v3836 = vpop.f32.mrb[0].mxu0
      %v3837 = vadd.f32 0.0, %v3836
      %v3838 = vpop.f32.mrb[0].mxu0
      %3839 = vmatprep.mubr.f32.mxu0 0.0
      %3840 = vmatmul.mubr.f32.gmra.mrb[0].mxu0 %v3619
      %v3841 = vpop.f32.mrb[0].mxu0
      %v3842 = vadd.f32 0.0, %v3841
      %v3843 = vpop.f32.mrb[0].mxu0
      %3844 = vmatprep.mubr.f32.mxu0 0.0
      %3845 = vmatmul.mubr.f32.gmra.mrb[0].mxu0 %v3622
      %v3846 = vpop.f32.mrb[0].mxu0
      %v3847 = vadd.f32 0.0, %v3846
      %v3848 = vpop.f32.mrb[0].mxu0
      %3849 = vmatprep.mubr.f32.mxu0 0.0
      %3850 = vmatmul.mubr.f32.gmra.mrb[0].mxu0 %v3625
      %v3851 = vpop.f32.mrb[0].mxu0
      %v3852 = vadd.f32 0.0, %v3851
      %v3853 = vpop.f32.mrb[0].mxu0
      %3854 = vdwg.mxu0
      %v3855 = vadd.f32 %v3432, %v3697
      %v3856 = vadd.f32 %v3433, %v3702
      %v3857 = vadd.f32 %v3434, %v3707
      %v3858 = vadd.f32 %v3435, %v3712
      %v3859 = vadd.f32 %v3436, %v3717
      %v3860 = vadd.f32 %v3437, %v3722
      %v3861 = vadd.f32 %v3438, %v3727
      %v3862 = vadd.f32 %v3439, %v3732
      %v3863 = vadd.f32 %v3440, %v3737
      %v3864 = vadd.f32 %v3441, %v3742
      %v3865 = vadd.f32 %v3442, %v3747
      %v3866 = vadd.f32 %v3443, %v3752
      %v3867 = vadd.f32 %v3444, %v3757
      %v3868 = vadd.f32 %v3445, %v3762
      %v3869 = vadd.f32 %v3446, %v3767
      %v3870 = vadd.f32 %v3447, %v3772
      %v3871 = vadd.f32 %v3448, %v3777
      %v3872 = vadd.f32 %v3449, %v3782
      %v3873 = vadd.f32 %v3450, %v3787
      %v3874 = vadd.f32 %v3451, %v3792
      %v3875 = vadd.f32 %v3452, %v3797
      %v3876 = vadd.f32 %v3453, %v3802
      %v3877 = vadd.f32 %v3454, %v3807
      %v3878 = vadd.f32 %v3455, %v3812
      %v3879 = vadd.f32 %v3456, %v3817
      %v3880 = vadd.f32 %v3457, %v3822
      %v3881 = vadd.f32 %v3458, %v3827
      %v3882 = vadd.f32 %v3459, %v3832
      %v3883 = vadd.f32 %v3460, %v3837
      %v3884 = vadd.f32 %v3461, %v3842
      %v3885 = vadd.f32 %v3462, %v3847
      %v3886 = vadd.f32 %v3463, %v3852
      %v3887 = vld [vmem:[#allocation2 + $0x27] sm:$0xff]
      %v3888 = vld [vmem:[#allocation2 + $0x2f] sm:$0xff]
      %v3889 = vld [vmem:[#allocation2 + $0x37] sm:$0xff]
      %v3890 = vld [vmem:[#allocation2 + $0x3f] sm:$0xff]
      %v3891 = vld [vmem:[#allocation2 + $0x47] sm:$0xff]
      %v3892 = vld [vmem:[#allocation2 + $0x4f] sm:$0xff]
      %v3893 = vld [vmem:[#allocation2 + $0x57] sm:$0xff]
      %v3894 = vld [vmem:[#allocation2 + $0x5f] sm:$0xff]
      %v3895 = vld [vmem:[#allocation2 + $0x67] sm:$0xff]
      %v3896 = vld [vmem:[#allocation2 + $0x6f] sm:$0xff]
      %v3897 = vld [vmem:[#allocation2 + $0x77] sm:$0xff]
      %v3898 = vld [vmem:[#allocation2 + $0x7f] sm:$0xff]
      %v3899 = vld [vmem:[#allocation2 + $0x87] sm:$0xff]
      %v3900 = vld [vmem:[#allocation2 + $0x8f] sm:$0xff]
      %v3901 = vld [vmem:[#allocation2 + $0x97] sm:$0xff]
      %v3902 = vld [vmem:[#allocation2 + $0x9f] sm:$0xff]
      %v3903 = vld [vmem:[#allocation2 + $0xa7] sm:$0xff]
      %v3904 = vld [vmem:[#allocation2 + $0xaf] sm:$0xff]
      %v3905 = vld [vmem:[#allocation2 + $0xb7] sm:$0xff]
      %v3906 = vld [vmem:[#allocation2 + $0xbf] sm:$0xff]
      %v3907 = vld [vmem:[#allocation2 + $0xc7] sm:$0xff]
      %v3908 = vld [vmem:[#allocation2 + $0xcf] sm:$0xff]
      %v3909 = vld [vmem:[#allocation2 + $0xd7] sm:$0xff]
      %v3910 = vld [vmem:[#allocation2 + $0xdf] sm:$0xff]
      %v3911 = vld [vmem:[#allocation2 + $0xe7] sm:$0xff]
      %v3912 = vld [vmem:[#allocation2 + $0xef] sm:$0xff]
      %v3913 = vld [vmem:[#allocation2 + $0xf7] sm:$0xff]
      %v3914 = vld [vmem:[#allocation2 + $0xff] sm:$0xff]
      %v3915 = vld [vmem:[#allocation2 + $0x107] sm:$0xff]
      %v3916 = vld [vmem:[#allocation2 + $0x10f] sm:$0xff]
      %v3917 = vld [vmem:[#allocation2 + $0x117] sm:$0xff]
      %v3918 = vld [vmem:[#allocation2 + $0x11f] sm:$0xff]
      %v3919 = vmul.f32 %v3887, %v1278
      %v3920 = vmul.f32 %v3888, %v1279
      %v3921 = vmul.f32 %v3889, %v1280
      %v3922 = vmul.f32 %v3890, %v1281
      %v3923 = vmul.f32 %v3891, %v1282
      %v3924 = vmul.f32 %v3892, %v1283
      %v3925 = vmul.f32 %v3893, %v1284
      %v3926 = vmul.f32 %v3894, %v1285
      %v3927 = vmul.f32 %v3895, %v1286
      %v3928 = vmul.f32 %v3896, %v1287
      %v3929 = vmul.f32 %v3897, %v1288
      %v3930 = vmul.f32 %v3898, %v1289
      %v3931 = vmul.f32 %v3899, %v1290
      %v3932 = vmul.f32 %v3900, %v1291
      %v3933 = vmul.f32 %v3901, %v1292
      %v3934 = vmul.f32 %v3902, %v1293
      %v3935 = vmul.f32 %v3903, %v1294
      %v3936 = vmul.f32 %v3904, %v1295
      %v3937 = vmul.f32 %v3905, %v1296
      %v3938 = vmul.f32 %v3906, %v1297
      %v3939 = vmul.f32 %v3907, %v1298
      %v3940 = vmul.f32 %v3908, %v1299
      %v3941 = vmul.f32 %v3909, %v1300
      %v3942 = vmul.f32 %v3910, %v1301
      %v3943 = vmul.f32 %v3911, %v1302
      %v3944 = vmul.f32 %v3912, %v1303
      %v3945 = vmul.f32 %v3913, %v1304
      %v3946 = vmul.f32 %v3914, %v1305
      %v3947 = vmul.f32 %v3915, %v1306
      %v3948 = vmul.f32 %v3916, %v1307
      %v3949 = vmul.f32 %v3917, %v1308
      %v3950 = vmul.f32 %v3918, %v1309
      %s3951 = scalar_lea.vmem %s3, 96
      %v3952 = vld [vmem:[%s3951] sm:$0xff]
      %v3953 = vld [vmem:[%s3951 + $0x8] sm:$0xf]
      %v3955 = vsel %vm1406, %v3919, 0
      %v3958 = vsel %vm1406, %v3920, 0
      %v3961 = vsel %vm1406, %v3921, 0
      %v3964 = vsel %vm1406, %v3922, 0
      %v3967 = vsel %vm1406, %v3923, 0
      %v3970 = vsel %vm1406, %v3924, 0
      %v3973 = vsel %vm1406, %v3925, 0
      %v3976 = vsel %vm1406, %v3926, 0
      %v3979 = vsel %vm1406, %v3927, 0
      %v3982 = vsel %vm1406, %v3928, 0
      %v3985 = vsel %vm1406, %v3929, 0
      %v3988 = vsel %vm1406, %v3930, 0
      %v3991 = vsel %vm1406, %v3931, 0
      %v3994 = vsel %vm1406, %v3932, 0
      %v3997 = vsel %vm1406, %v3933, 0
      %v4000 = vsel %vm1406, %v3934, 0
      %v4003 = vsel %vm1406, %v3935, 0
      %v4006 = vsel %vm1406, %v3936, 0
      %v4009 = vsel %vm1406, %v3937, 0
      %v4012 = vsel %vm1406, %v3938, 0
      %v4015 = vsel %vm1406, %v3939, 0
      %v4018 = vsel %vm1406, %v3940, 0
      %v4021 = vsel %vm1406, %v3941, 0
      %v4024 = vsel %vm1406, %v3942, 0
      %v4027 = vsel %vm1406, %v3943, 0
      %v4030 = vsel %vm1406, %v3944, 0
      %v4033 = vsel %vm1406, %v3945, 0
      %v4036 = vsel %vm1406, %v3946, 0
      %v4039 = vsel %vm1406, %v3947, 0
      %v4042 = vsel %vm1406, %v3948, 0
      %v4045 = vsel %vm1406, %v3949, 0
      %v4048 = vsel %vm1406, %v3950, 0
      %v4051 = vsel %vm1674, %v3953, 0
      %4053 = vmatprep.subr.mxu0 0.0
      %4054 = vmatpush1.msra.mxu0 %v3952
      %4055 = vmatprep.subr.mxu0 0.0
      %4056 = vmatpush1.msra.mxu0 %v4051
      %4057 = vmatprep.subr.mxu0 0.0
      %4058 = vmatpush1.msra.mxu0 0.0
      %4059 = vmatprep.subr.mxu0 0.0
      %4060 = vmatpush1.msra.mxu0 0.0
      %4061 = vmatprep.subr.mxu0 0.0
      %4062 = vmatpush1.msra.mxu0 0.0
      %4063 = vmatprep.subr.mxu0 0.0
      %4064 = vmatpush1.msra.mxu0 0.0
      %4065 = vmatprep.subr.mxu0 0.0
      %4066 = vmatpush1.msra.mxu0 0.0
      %4067 = vmatprep.subr.mxu0 0.0
      %4068 = vmatpush1.msra.mxu0 0.0
      %4069 = vmatprep.subr.mxu0 0.0
      %4070 = vmatpush1.msra.mxu0 0.0
      %4071 = vmatprep.subr.mxu0 0.0
      %4072 = vmatpush1.msra.mxu0 0.0
      %4073 = vmatprep.subr.mxu0 0.0
      %4074 = vmatpush1.msra.mxu0 0.0
      %4075 = vmatprep.subr.mxu0 0.0
      %4076 = vmatpush1.msra.mxu0 0.0
      %4077 = vmatprep.subr.mxu0 0.0
      %4078 = vmatpush1.msra.mxu0 0.0
      %4079 = vmatprep.subr.mxu0 0.0
      %4080 = vmatpush1.msra.mxu0 0.0
      %4081 = vmatprep.subr.mxu0 0.0
      %4082 = vmatpush1.msra.mxu0 0.0
      %4083 = vmatprep.subr.mxu0 0.0
      %4084 = vmatpush1.msra.mxu0 0.0
      %4085 = vmatprep.subr.mxu0 0.0
      %4086 = vmatpush1.msra.mxu0 0.0
      %4087 = vmatprep.subr.mxu0 0.0
      %4088 = vmatpush1.msra.mxu0 0.0
      %4089 = vmatprep.subr.mxu0 0.0
      %4090 = vmatpush1.msra.mxu0 0.0
      %4091 = vmatprep.subr.mxu0 0.0
      %4092 = vmatpush1.msra.mxu0 0.0
      %4093 = vmatprep.subr.mxu0 0.0
      %4094 = vmatpush1.msra.mxu0 0.0
      %4095 = vmatprep.subr.mxu0 0.0
      %4096 = vmatpush1.msra.mxu0 0.0
      %4097 = vmatprep.subr.mxu0 0.0
      %4098 = vmatpush1.msra.mxu0 0.0
      %4099 = vmatprep.subr.mxu0 0.0
      %4100 = vmatpush1.msra.mxu0 0.0
      %4101 = vmatprep.subr.mxu0 0.0
      %4102 = vmatpush1.msra.mxu0 0.0
      %4103 = vmatprep.subr.mxu0 0.0
      %4104 = vmatpush1.msra.mxu0 0.0
      %4105 = vmatprep.subr.mxu0 0.0
      %4106 = vmatpush1.msra.mxu0 0.0
      %4107 = vmatprep.subr.mxu0 0.0
      %4108 = vmatpush1.msra.mxu0 0.0
      %4109 = vmatprep.subr.mxu0 0.0
      %4110 = vmatpush1.msra.mxu0 0.0
      %4111 = vmatprep.subr.mxu0 0.0
      %4112 = vmatpush1.msra.mxu0 0.0
      %4113 = vmatprep.subr.mxu0 0.0
      %4114 = vmatpush1.msra.mxu0 0.0
      %4115 = vmatprep.subr.mxu0 0.0
      %4116 = vmatpush1.msra.mxu0 0.0
      %4117 = vmatprep.mubr.f32.mxu0 0.0
      %4118 = vmatmul.mubr.f32.gmra.mrb[0].mxu0 %v3955
      %v4119 = vpop.f32.mrb[0].mxu0
      %v4120 = vadd.f32 0.0, %v4119
      %v4121 = vpop.f32.mrb[0].mxu0
      %4122 = vmatprep.mubr.f32.mxu0 0.0
      %4123 = vmatmul.mubr.f32.gmra.mrb[0].mxu0 %v3958
      %v4124 = vpop.f32.mrb[0].mxu0
      %v4125 = vadd.f32 0.0, %v4124
      %v4126 = vpop.f32.mrb[0].mxu0
      %4127 = vmatprep.mubr.f32.mxu0 0.0
      %4128 = vmatmul.mubr.f32.gmra.mrb[0].mxu0 %v3961
      %v4129 = vpop.f32.mrb[0].mxu0
      %v4130 = vadd.f32 0.0, %v4129
      %v4131 = vpop.f32.mrb[0].mxu0
      %4132 = vmatprep.mubr.f32.mxu0 0.0
      %4133 = vmatmul.mubr.f32.gmra.mrb[0].mxu0 %v3964
      %v4134 = vpop.f32.mrb[0].mxu0
      %v4135 = vadd.f32 0.0, %v4134
      %v4136 = vpop.f32.mrb[0].mxu0
      %4137 = vmatprep.mubr.f32.mxu0 0.0
      %4138 = vmatmul.mubr.f32.gmra.mrb[0].mxu0 %v3967
      %v4139 = vpop.f32.mrb[0].mxu0
      %v4140 = vadd.f32 0.0, %v4139
      %v4141 = vpop.f32.mrb[0].mxu0
      %4142 = vmatprep.mubr.f32.mxu0 0.0
      %4143 = vmatmul.mubr.f32.gmra.mrb[0].mxu0 %v3970
      %v4144 = vpop.f32.mrb[0].mxu0
      %v4145 = vadd.f32 0.0, %v4144
      %v4146 = vpop.f32.mrb[0].mxu0
      %4147 = vmatprep.mubr.f32.mxu0 0.0
      %4148 = vmatmul.mubr.f32.gmra.mrb[0].mxu0 %v3973
      %v4149 = vpop.f32.mrb[0].mxu0
      %v4150 = vadd.f32 0.0, %v4149
      %v4151 = vpop.f32.mrb[0].mxu0
      %4152 = vmatprep.mubr.f32.mxu0 0.0
      %4153 = vmatmul.mubr.f32.gmra.mrb[0].mxu0 %v3976
      %v4154 = vpop.f32.mrb[0].mxu0
      %v4155 = vadd.f32 0.0, %v4154
      %v4156 = vpop.f32.mrb[0].mxu0
      %4157 = vmatprep.mubr.f32.mxu0 0.0
      %4158 = vmatmul.mubr.f32.gmra.mrb[0].mxu0 %v3979
      %v4159 = vpop.f32.mrb[0].mxu0
      %v4160 = vadd.f32 0.0, %v4159
      %v4161 = vpop.f32.mrb[0].mxu0
      %4162 = vmatprep.mubr.f32.mxu0 0.0
      %4163 = vmatmul.mubr.f32.gmra.mrb[0].mxu0 %v3982
      %v4164 = vpop.f32.mrb[0].mxu0
      %v4165 = vadd.f32 0.0, %v4164
      %v4166 = vpop.f32.mrb[0].mxu0
      %4167 = vmatprep.mubr.f32.mxu0 0.0
      %4168 = vmatmul.mubr.f32.gmra.mrb[0].mxu0 %v3985
      %v4169 = vpop.f32.mrb[0].mxu0
      %v4170 = vadd.f32 0.0, %v4169
      %v4171 = vpop.f32.mrb[0].mxu0
      %4172 = vmatprep.mubr.f32.mxu0 0.0
      %4173 = vmatmul.mubr.f32.gmra.mrb[0].mxu0 %v3988
      %v4174 = vpop.f32.mrb[0].mxu0
      %v4175 = vadd.f32 0.0, %v4174
      %v4176 = vpop.f32.mrb[0].mxu0
      %4177 = vmatprep.mubr.f32.mxu0 0.0
      %4178 = vmatmul.mubr.f32.gmra.mrb[0].mxu0 %v3991
      %v4179 = vpop.f32.mrb[0].mxu0
      %v4180 = vadd.f32 0.0, %v4179
      %v4181 = vpop.f32.mrb[0].mxu0
      %4182 = vmatprep.mubr.f32.mxu0 0.0
      %4183 = vmatmul.mubr.f32.gmra.mrb[0].mxu0 %v3994
      %v4184 = vpop.f32.mrb[0].mxu0
      %v4185 = vadd.f32 0.0, %v4184
      %v4186 = vpop.f32.mrb[0].mxu0
      %4187 = vmatprep.mubr.f32.mxu0 0.0
      %4188 = vmatmul.mubr.f32.gmra.mrb[0].mxu0 %v3997
      %v4189 = vpop.f32.mrb[0].mxu0
      %v4190 = vadd.f32 0.0, %v4189
      %v4191 = vpop.f32.mrb[0].mxu0
      %4192 = vmatprep.mubr.f32.mxu0 0.0
      %4193 = vmatmul.mubr.f32.gmra.mrb[0].mxu0 %v4000
      %v4194 = vpop.f32.mrb[0].mxu0
      %v4195 = vadd.f32 0.0, %v4194
      %v4196 = vpop.f32.mrb[0].mxu0
      %4197 = vmatprep.mubr.f32.mxu0 0.0
      %4198 = vmatmul.mubr.f32.gmra.mrb[0].mxu0 %v4003
      %v4199 = vpop.f32.mrb[0].mxu0
      %v4200 = vadd.f32 0.0, %v4199
      %v4201 = vpop.f32.mrb[0].mxu0
      %4202 = vmatprep.mubr.f32.mxu0 0.0
      %4203 = vmatmul.mubr.f32.gmra.mrb[0].mxu0 %v4006
      %v4204 = vpop.f32.mrb[0].mxu0
      %v4205 = vadd.f32 0.0, %v4204
      %v4206 = vpop.f32.mrb[0].mxu0
      %4207 = vmatprep.mubr.f32.mxu0 0.0
      %4208 = vmatmul.mubr.f32.gmra.mrb[0].mxu0 %v4009
      %v4209 = vpop.f32.mrb[0].mxu0
      %v4210 = vadd.f32 0.0, %v4209
      %v4211 = vpop.f32.mrb[0].mxu0
      %4212 = vmatprep.mubr.f32.mxu0 0.0
      %4213 = vmatmul.mubr.f32.gmra.mrb[0].mxu0 %v4012
      %v4214 = vpop.f32.mrb[0].mxu0
      %v4215 = vadd.f32 0.0, %v4214
      %v4216 = vpop.f32.mrb[0].mxu0
      %4217 = vmatprep.mubr.f32.mxu0 0.0
      %4218 = vmatmul.mubr.f32.gmra.mrb[0].mxu0 %v4015
      %v4219 = vpop.f32.mrb[0].mxu0
      %v4220 = vadd.f32 0.0, %v4219
      %v4221 = vpop.f32.mrb[0].mxu0
      %4222 = vmatprep.mubr.f32.mxu0 0.0
      %4223 = vmatmul.mubr.f32.gmra.mrb[0].mxu0 %v4018
      %v4224 = vpop.f32.mrb[0].mxu0
      %v4225 = vadd.f32 0.0, %v4224
      %v4226 = vpop.f32.mrb[0].mxu0
      %4227 = vmatprep.mubr.f32.mxu0 0.0
      %4228 = vmatmul.mubr.f32.gmra.mrb[0].mxu0 %v4021
      %v4229 = vpop.f32.mrb[0].mxu0
      %v4230 = vadd.f32 0.0, %v4229
      %v4231 = vpop.f32.mrb[0].mxu0
      %4232 = vmatprep.mubr.f32.mxu0 0.0
      %4233 = vmatmul.mubr.f32.gmra.mrb[0].mxu0 %v4024
      %v4234 = vpop.f32.mrb[0].mxu0
      %v4235 = vadd.f32 0.0, %v4234
      %v4236 = vpop.f32.mrb[0].mxu0
      %4237 = vmatprep.mubr.f32.mxu0 0.0
      %4238 = vmatmul.mubr.f32.gmra.mrb[0].mxu0 %v4027
      %v4239 = vpop.f32.mrb[0].mxu0
      %v4240 = vadd.f32 0.0, %v4239
      %v4241 = vpop.f32.mrb[0].mxu0
      %4242 = vmatprep.mubr.f32.mxu0 0.0
      %4243 = vmatmul.mubr.f32.gmra.mrb[0].mxu0 %v4030
      %v4244 = vpop.f32.mrb[0].mxu0
      %v4245 = vadd.f32 0.0, %v4244
      %v4246 = vpop.f32.mrb[0].mxu0
      %4247 = vmatprep.mubr.f32.mxu0 0.0
      %4248 = vmatmul.mubr.f32.gmra.mrb[0].mxu0 %v4033
      %v4249 = vpop.f32.mrb[0].mxu0
      %v4250 = vadd.f32 0.0, %v4249
      %v4251 = vpop.f32.mrb[0].mxu0
      %4252 = vmatprep.mubr.f32.mxu0 0.0
      %4253 = vmatmul.mubr.f32.gmra.mrb[0].mxu0 %v4036
      %v4254 = vpop.f32.mrb[0].mxu0
      %v4255 = vadd.f32 0.0, %v4254
      %v4256 = vpop.f32.mrb[0].mxu0
      %4257 = vmatprep.mubr.f32.mxu0 0.0
      %4258 = vmatmul.mubr.f32.gmra.mrb[0].mxu0 %v4039
      %v4259 = vpop.f32.mrb[0].mxu0
      %v4260 = vadd.f32 0.0, %v4259
      %v4261 = vpop.f32.mrb[0].mxu0
      %4262 = vmatprep.mubr.f32.mxu0 0.0
      %4263 = vmatmul.mubr.f32.gmra.mrb[0].mxu0 %v4042
      %v4264 = vpop.f32.mrb[0].mxu0
      %v4265 = vadd.f32 0.0, %v4264
      %v4266 = vpop.f32.mrb[0].mxu0
      %4267 = vmatprep.mubr.f32.mxu0 0.0
      %4268 = vmatmul.mubr.f32.gmra.mrb[0].mxu0 %v4045
      %v4269 = vpop.f32.mrb[0].mxu0
      %v4270 = vadd.f32 0.0, %v4269
      %v4271 = vpop.f32.mrb[0].mxu0
      %4272 = vmatprep.mubr.f32.mxu0 0.0
      %4273 = vmatmul.mubr.f32.gmra.mrb[0].mxu0 %v4048
      %v4274 = vpop.f32.mrb[0].mxu0
      %v4275 = vadd.f32 0.0, %v4274
      %v4276 = vpop.f32.mrb[0].mxu0
      %4277 = vdwg.mxu0
      %v4278 = vadd.f32 %v3855, %v4120
      %v4279 = vadd.f32 %v3856, %v4125
      %v4280 = vadd.f32 %v3857, %v4130
      %v4281 = vadd.f32 %v3858, %v4135
      %v4282 = vadd.f32 %v3859, %v4140
      %v4283 = vadd.f32 %v3860, %v4145
      %v4284 = vadd.f32 %v3861, %v4150
      %v4285 = vadd.f32 %v3862, %v4155
      %v4286 = vadd.f32 %v3863, %v4160
      %v4287 = vadd.f32 %v3864, %v4165
      %v4288 = vadd.f32 %v3865, %v4170
      %v4289 = vadd.f32 %v3866, %v4175
      %v4290 = vadd.f32 %v3867, %v4180
      %v4291 = vadd.f32 %v3868, %v4185
      %v4292 = vadd.f32 %v3869, %v4190
      %v4293 = vadd.f32 %v3870, %v4195
      %v4294 = vadd.f32 %v3871, %v4200
      %v4295 = vadd.f32 %v3872, %v4205
      %v4296 = vadd.f32 %v3873, %v4210
      %v4297 = vadd.f32 %v3874, %v4215
      %v4298 = vadd.f32 %v3875, %v4220
      %v4299 = vadd.f32 %v3876, %v4225
      %v4300 = vadd.f32 %v3877, %v4230
      %v4301 = vadd.f32 %v3878, %v4235
      %v4302 = vadd.f32 %v3879, %v4240
      %v4303 = vadd.f32 %v3880, %v4245
      %v4304 = vadd.f32 %v3881, %v4250
      %v4305 = vadd.f32 %v3882, %v4255
      %v4306 = vadd.f32 %v3883, %v4260
      %v4307 = vadd.f32 %v3884, %v4265
      %v4308 = vadd.f32 %v3885, %v4270
      %v4309 = vadd.f32 %v3886, %v4275
      %v4310 = vld [vmem:[#allocation2 + $0x28] sm:$0xff]
      %v4311 = vld [vmem:[#allocation2 + $0x30] sm:$0xff]
      %v4312 = vld [vmem:[#allocation2 + $0x38] sm:$0xff]
      %v4313 = vld [vmem:[#allocation2 + $0x40] sm:$0xff]
      %v4314 = vld [vmem:[#allocation2 + $0x48] sm:$0xff]
      %v4315 = vld [vmem:[#allocation2 + $0x50] sm:$0xff]
      %v4316 = vld [vmem:[#allocation2 + $0x58] sm:$0xff]
      %v4317 = vld [vmem:[#allocation2 + $0x60] sm:$0xff]
      %v4318 = vld [vmem:[#allocation2 + $0x68] sm:$0xff]
      %v4319 = vld [vmem:[#allocation2 + $0x70] sm:$0xff]
      %v4320 = vld [vmem:[#allocation2 + $0x78] sm:$0xff]
      %v4321 = vld [vmem:[#allocation2 + $0x80] sm:$0xff]
      %v4322 = vld [vmem:[#allocation2 + $0x88] sm:$0xff]
      %v4323 = vld [vmem:[#allocation2 + $0x90] sm:$0xff]
      %v4324 = vld [vmem:[#allocation2 + $0x98] sm:$0xff]
      %v4325 = vld [vmem:[#allocation2 + $0xa0] sm:$0xff]
      %v4326 = vld [vmem:[#allocation2 + $0xa8] sm:$0xff]
      %v4327 = vld [vmem:[#allocation2 + $0xb0] sm:$0xff]
      %v4328 = vld [vmem:[#allocation2 + $0xb8] sm:$0xff]
      %v4329 = vld [vmem:[#allocation2 + $0xc0] sm:$0xff]
      %v4330 = vld [vmem:[#allocation2 + $0xc8] sm:$0xff]
      %v4331 = vld [vmem:[#allocation2 + $0xd0] sm:$0xff]
      %v4332 = vld [vmem:[#allocation2 + $0xd8] sm:$0xff]
      %v4333 = vld [vmem:[#allocation2 + $0xe0] sm:$0xff]
      %v4334 = vld [vmem:[#allocation2 + $0xe8] sm:$0xff]
      %v4335 = vld [vmem:[#allocation2 + $0xf0] sm:$0xff]
      %v4336 = vld [vmem:[#allocation2 + $0xf8] sm:$0xff]
      %v4337 = vld [vmem:[#allocation2 + $0x100] sm:$0xff]
      %v4338 = vld [vmem:[#allocation2 + $0x108] sm:$0xff]
      %v4339 = vld [vmem:[#allocation2 + $0x110] sm:$0xff]
      %v4340 = vld [vmem:[#allocation2 + $0x118] sm:$0xff]
      %v4341 = vld [vmem:[#allocation2 + $0x120] sm:$0xff]
      %s4342 = scalar_lea.vmem %s3, 112
      %v4343 = vld [vmem:[%s4342] sm:$0xff]
      %v4344 = vld [vmem:[%s4342 + $0x8] sm:$0xf]
      %v4346 = vsel %vm1406, %v4310, 0
      %v4349 = vsel %vm1406, %v4311, 0
      %v4352 = vsel %vm1406, %v4312, 0
      %v4355 = vsel %vm1406, %v4313, 0
      %v4358 = vsel %vm1406, %v4314, 0
      %v4361 = vsel %vm1406, %v4315, 0
      %v4364 = vsel %vm1406, %v4316, 0
      %v4367 = vsel %vm1406, %v4317, 0
      %v4370 = vsel %vm1406, %v4318, 0
      %v4373 = vsel %vm1406, %v4319, 0
      %v4376 = vsel %vm1406, %v4320, 0
      %v4379 = vsel %vm1406, %v4321, 0
      %v4382 = vsel %vm1406, %v4322, 0
      %v4385 = vsel %vm1406, %v4323, 0
      %v4388 = vsel %vm1406, %v4324, 0
      %v4391 = vsel %vm1406, %v4325, 0
      %v4394 = vsel %vm1406, %v4326, 0
      %v4397 = vsel %vm1406, %v4327, 0
      %v4400 = vsel %vm1406, %v4328, 0
      %v4403 = vsel %vm1406, %v4329, 0
      %v4406 = vsel %vm1406, %v4330, 0
      %v4409 = vsel %vm1406, %v4331, 0
      %v4412 = vsel %vm1406, %v4332, 0
      %v4415 = vsel %vm1406, %v4333, 0
      %v4418 = vsel %vm1406, %v4334, 0
      %v4421 = vsel %vm1406, %v4335, 0
      %v4424 = vsel %vm1406, %v4336, 0
      %v4427 = vsel %vm1406, %v4337, 0
      %v4430 = vsel %vm1406, %v4338, 0
      %v4433 = vsel %vm1406, %v4339, 0
      %v4436 = vsel %vm1406, %v4340, 0
      %v4439 = vsel %vm1406, %v4341, 0
      %v4442 = vsel %vm1674, %v4344, 0
      %4444 = vmatprep.subr.mxu0 0.0
      %4445 = vmatpush1.msra.mxu0 %v4343
      %4446 = vmatprep.subr.mxu0 0.0
      %4447 = vmatpush1.msra.mxu0 %v4442
      %4448 = vmatprep.subr.mxu0 0.0
      %4449 = vmatpush1.msra.mxu0 0.0
      %4450 = vmatprep.subr.mxu0 0.0
      %4451 = vmatpush1.msra.mxu0 0.0
      %4452 = vmatprep.subr.mxu0 0.0
      %4453 = vmatpush1.msra.mxu0 0.0
      %4454 = vmatprep.subr.mxu0 0.0
      %4455 = vmatpush1.msra.mxu0 0.0
      %4456 = vmatprep.subr.mxu0 0.0
      %4457 = vmatpush1.msra.mxu0 0.0
      %4458 = vmatprep.subr.mxu0 0.0
      %4459 = vmatpush1.msra.mxu0 0.0
      %4460 = vmatprep.subr.mxu0 0.0
      %4461 = vmatpush1.msra.mxu0 0.0
      %4462 = vmatprep.subr.mxu0 0.0
      %4463 = vmatpush1.msra.mxu0 0.0
      %4464 = vmatprep.subr.mxu0 0.0
      %4465 = vmatpush1.msra.mxu0 0.0
      %4466 = vmatprep.subr.mxu0 0.0
      %4467 = vmatpush1.msra.mxu0 0.0
      %4468 = vmatprep.subr.mxu0 0.0
      %4469 = vmatpush1.msra.mxu0 0.0
      %4470 = vmatprep.subr.mxu0 0.0
      %4471 = vmatpush1.msra.mxu0 0.0
      %4472 = vmatprep.subr.mxu0 0.0
      %4473 = vmatpush1.msra.mxu0 0.0
      %4474 = vmatprep.subr.mxu0 0.0
      %4475 = vmatpush1.msra.mxu0 0.0
      %4476 = vmatprep.subr.mxu0 0.0
      %4477 = vmatpush1.msra.mxu0 0.0
      %4478 = vmatprep.subr.mxu0 0.0
      %4479 = vmatpush1.msra.mxu0 0.0
      %4480 = vmatprep.subr.mxu0 0.0
      %4481 = vmatpush1.msra.mxu0 0.0
      %4482 = vmatprep.subr.mxu0 0.0
      %4483 = vmatpush1.msra.mxu0 0.0
      %4484 = vmatprep.subr.mxu0 0.0
      %4485 = vmatpush1.msra.mxu0 0.0
      %4486 = vmatprep.subr.mxu0 0.0
      %4487 = vmatpush1.msra.mxu0 0.0
      %4488 = vmatprep.subr.mxu0 0.0
      %4489 = vmatpush1.msra.mxu0 0.0
      %4490 = vmatprep.subr.mxu0 0.0
      %4491 = vmatpush1.msra.mxu0 0.0
      %4492 = vmatprep.subr.mxu0 0.0
      %4493 = vmatpush1.msra.mxu0 0.0
      %4494 = vmatprep.subr.mxu0 0.0
      %4495 = vmatpush1.msra.mxu0 0.0
      %4496 = vmatprep.subr.mxu0 0.0
      %4497 = vmatpush1.msra.mxu0 0.0
      %4498 = vmatprep.subr.mxu0 0.0
      %4499 = vmatpush1.msra.mxu0 0.0
      %4500 = vmatprep.subr.mxu0 0.0
      %4501 = vmatpush1.msra.mxu0 0.0
      %4502 = vmatprep.subr.mxu0 0.0
      %4503 = vmatpush1.msra.mxu0 0.0
      %4504 = vmatprep.subr.mxu0 0.0
      %4505 = vmatpush1.msra.mxu0 0.0
      %4506 = vmatprep.subr.mxu0 0.0
      %4507 = vmatpush1.msra.mxu0 0.0
      %4508 = vmatprep.mubr.f32.mxu0 0.0
      %4509 = vmatmul.mubr.f32.gmra.mrb[0].mxu0 %v4346
      %v4510 = vpop.f32.mrb[0].mxu0
      %v4511 = vadd.f32 0.0, %v4510
      %v4512 = vpop.f32.mrb[0].mxu0
      %4513 = vmatprep.mubr.f32.mxu0 0.0
      %4514 = vmatmul.mubr.f32.gmra.mrb[0].mxu0 %v4349
      %v4515 = vpop.f32.mrb[0].mxu0
      %v4516 = vadd.f32 0.0, %v4515
      %v4517 = vpop.f32.mrb[0].mxu0
      %4518 = vmatprep.mubr.f32.mxu0 0.0
      %4519 = vmatmul.mubr.f32.gmra.mrb[0].mxu0 %v4352
      %v4520 = vpop.f32.mrb[0].mxu0
      %v4521 = vadd.f32 0.0, %v4520
      %v4522 = vpop.f32.mrb[0].mxu0
      %4523 = vmatprep.mubr.f32.mxu0 0.0
      %4524 = vmatmul.mubr.f32.gmra.mrb[0].mxu0 %v4355
      %v4525 = vpop.f32.mrb[0].mxu0
      %v4526 = vadd.f32 0.0, %v4525
      %v4527 = vpop.f32.mrb[0].mxu0
      %4528 = vmatprep.mubr.f32.mxu0 0.0
      %4529 = vmatmul.mubr.f32.gmra.mrb[0].mxu0 %v4358
      %v4530 = vpop.f32.mrb[0].mxu0
      %v4531 = vadd.f32 0.0, %v4530
      %v4532 = vpop.f32.mrb[0].mxu0
      %4533 = vmatprep.mubr.f32.mxu0 0.0
      %4534 = vmatmul.mubr.f32.gmra.mrb[0].mxu0 %v4361
      %v4535 = vpop.f32.mrb[0].mxu0
      %v4536 = vadd.f32 0.0, %v4535
      %v4537 = vpop.f32.mrb[0].mxu0
      %4538 = vmatprep.mubr.f32.mxu0 0.0
      %4539 = vmatmul.mubr.f32.gmra.mrb[0].mxu0 %v4364
      %v4540 = vpop.f32.mrb[0].mxu0
      %v4541 = vadd.f32 0.0, %v4540
      %v4542 = vpop.f32.mrb[0].mxu0
      %4543 = vmatprep.mubr.f32.mxu0 0.0
      %4544 = vmatmul.mubr.f32.gmra.mrb[0].mxu0 %v4367
      %v4545 = vpop.f32.mrb[0].mxu0
      %v4546 = vadd.f32 0.0, %v4545
      %v4547 = vpop.f32.mrb[0].mxu0
      %4548 = vmatprep.mubr.f32.mxu0 0.0
      %4549 = vmatmul.mubr.f32.gmra.mrb[0].mxu0 %v4370
      %v4550 = vpop.f32.mrb[0].mxu0
      %v4551 = vadd.f32 0.0, %v4550
      %v4552 = vpop.f32.mrb[0].mxu0
      %4553 = vmatprep.mubr.f32.mxu0 0.0
      %4554 = vmatmul.mubr.f32.gmra.mrb[0].mxu0 %v4373
      %v4555 = vpop.f32.mrb[0].mxu0
      %v4556 = vadd.f32 0.0, %v4555
      %v4557 = vpop.f32.mrb[0].mxu0
      %4558 = vmatprep.mubr.f32.mxu0 0.0
      %4559 = vmatmul.mubr.f32.gmra.mrb[0].mxu0 %v4376
      %v4560 = vpop.f32.mrb[0].mxu0
      %v4561 = vadd.f32 0.0, %v4560
      %v4562 = vpop.f32.mrb[0].mxu0
      %4563 = vmatprep.mubr.f32.mxu0 0.0
      %4564 = vmatmul.mubr.f32.gmra.mrb[0].mxu0 %v4379
      %v4565 = vpop.f32.mrb[0].mxu0
      %v4566 = vadd.f32 0.0, %v4565
      %v4567 = vpop.f32.mrb[0].mxu0
      %4568 = vmatprep.mubr.f32.mxu0 0.0
      %4569 = vmatmul.mubr.f32.gmra.mrb[0].mxu0 %v4382
      %v4570 = vpop.f32.mrb[0].mxu0
      %v4571 = vadd.f32 0.0, %v4570
      %v4572 = vpop.f32.mrb[0].mxu0
      %4573 = vmatprep.mubr.f32.mxu0 0.0
      %4574 = vmatmul.mubr.f32.gmra.mrb[0].mxu0 %v4385
      %v4575 = vpop.f32.mrb[0].mxu0
      %v4576 = vadd.f32 0.0, %v4575
      %v4577 = vpop.f32.mrb[0].mxu0
      %4578 = vmatprep.mubr.f32.mxu0 0.0
      %4579 = vmatmul.mubr.f32.gmra.mrb[0].mxu0 %v4388
      %v4580 = vpop.f32.mrb[0].mxu0
      %v4581 = vadd.f32 0.0, %v4580
      %v4582 = vpop.f32.mrb[0].mxu0
      %4583 = vmatprep.mubr.f32.mxu0 0.0
      %4584 = vmatmul.mubr.f32.gmra.mrb[0].mxu0 %v4391
      %v4585 = vpop.f32.mrb[0].mxu0
      %v4586 = vadd.f32 0.0, %v4585
      %v4587 = vpop.f32.mrb[0].mxu0
      %4588 = vmatprep.mubr.f32.mxu0 0.0
      %4589 = vmatmul.mubr.f32.gmra.mrb[0].mxu0 %v4394
      %v4590 = vpop.f32.mrb[0].mxu0
      %v4591 = vadd.f32 0.0, %v4590
      %v4592 = vpop.f32.mrb[0].mxu0
      %4593 = vmatprep.mubr.f32.mxu0 0.0
      %4594 = vmatmul.mubr.f32.gmra.mrb[0].mxu0 %v4397
      %v4595 = vpop.f32.mrb[0].mxu0
      %v4596 = vadd.f32 0.0, %v4595
      %v4597 = vpop.f32.mrb[0].mxu0
      %4598 = vmatprep.mubr.f32.mxu0 0.0
      %4599 = vmatmul.mubr.f32.gmra.mrb[0].mxu0 %v4400
      %v4600 = vpop.f32.mrb[0].mxu0
      %v4601 = vadd.f32 0.0, %v4600
      %v4602 = vpop.f32.mrb[0].mxu0
      %4603 = vmatprep.mubr.f32.mxu0 0.0
      %4604 = vmatmul.mubr.f32.gmra.mrb[0].mxu0 %v4403
      %v4605 = vpop.f32.mrb[0].mxu0
      %v4606 = vadd.f32 0.0, %v4605
      %v4607 = vpop.f32.mrb[0].mxu0
      %4608 = vmatprep.mubr.f32.mxu0 0.0
      %4609 = vmatmul.mubr.f32.gmra.mrb[0].mxu0 %v4406
      %v4610 = vpop.f32.mrb[0].mxu0
      %v4611 = vadd.f32 0.0, %v4610
      %v4612 = vpop.f32.mrb[0].mxu0
      %4613 = vmatprep.mubr.f32.mxu0 0.0
      %4614 = vmatmul.mubr.f32.gmra.mrb[0].mxu0 %v4409
      %v4615 = vpop.f32.mrb[0].mxu0
      %v4616 = vadd.f32 0.0, %v4615
      %v4617 = vpop.f32.mrb[0].mxu0
      %4618 = vmatprep.mubr.f32.mxu0 0.0
      %4619 = vmatmul.mubr.f32.gmra.mrb[0].mxu0 %v4412
      %v4620 = vpop.f32.mrb[0].mxu0
      %v4621 = vadd.f32 0.0, %v4620
      %v4622 = vpop.f32.mrb[0].mxu0
      %4623 = vmatprep.mubr.f32.mxu0 0.0
      %4624 = vmatmul.mubr.f32.gmra.mrb[0].mxu0 %v4415
      %v4625 = vpop.f32.mrb[0].mxu0
      %v4626 = vadd.f32 0.0, %v4625
      %v4627 = vpop.f32.mrb[0].mxu0
      %4628 = vmatprep.mubr.f32.mxu0 0.0
      %4629 = vmatmul.mubr.f32.gmra.mrb[0].mxu0 %v4418
      %v4630 = vpop.f32.mrb[0].mxu0
      %v4631 = vadd.f32 0.0, %v4630
      %v4632 = vpop.f32.mrb[0].mxu0
      %4633 = vmatprep.mubr.f32.mxu0 0.0
      %4634 = vmatmul.mubr.f32.gmra.mrb[0].mxu0 %v4421
      %v4635 = vpop.f32.mrb[0].mxu0
      %v4636 = vadd.f32 0.0, %v4635
      %v4637 = vpop.f32.mrb[0].mxu0
      %4638 = vmatprep.mubr.f32.mxu0 0.0
      %4639 = vmatmul.mubr.f32.gmra.mrb[0].mxu0 %v4424
      %v4640 = vpop.f32.mrb[0].mxu0
      %v4641 = vadd.f32 0.0, %v4640
      %v4642 = vpop.f32.mrb[0].mxu0
      %4643 = vmatprep.mubr.f32.mxu0 0.0
      %4644 = vmatmul.mubr.f32.gmra.mrb[0].mxu0 %v4427
      %v4645 = vpop.f32.mrb[0].mxu0
      %v4646 = vadd.f32 0.0, %v4645
      %v4647 = vpop.f32.mrb[0].mxu0
      %4648 = vmatprep.mubr.f32.mxu0 0.0
      %4649 = vmatmul.mubr.f32.gmra.mrb[0].mxu0 %v4430
      %v4650 = vpop.f32.mrb[0].mxu0
      %v4651 = vadd.f32 0.0, %v4650
      %v4652 = vpop.f32.mrb[0].mxu0
      %4653 = vmatprep.mubr.f32.mxu0 0.0
      %4654 = vmatmul.mubr.f32.gmra.mrb[0].mxu0 %v4433
      %v4655 = vpop.f32.mrb[0].mxu0
      %v4656 = vadd.f32 0.0, %v4655
      %v4657 = vpop.f32.mrb[0].mxu0
      %4658 = vmatprep.mubr.f32.mxu0 0.0
      %4659 = vmatmul.mubr.f32.gmra.mrb[0].mxu0 %v4436
      %v4660 = vpop.f32.mrb[0].mxu0
      %v4661 = vadd.f32 0.0, %v4660
      %v4662 = vpop.f32.mrb[0].mxu0
      %4663 = vmatprep.mubr.f32.mxu0 0.0
      %4664 = vmatmul.mubr.f32.gmra.mrb[0].mxu0 %v4439
      %v4665 = vpop.f32.mrb[0].mxu0
      %v4666 = vadd.f32 0.0, %v4665
      %v4667 = vpop.f32.mrb[0].mxu0
      %4668 = vdwg.mxu0
      %v4669 = vadd.f32 %v4278, %v4511
      %v4670 = vadd.f32 %v4279, %v4516
      %v4671 = vadd.f32 %v4280, %v4521
      %v4672 = vadd.f32 %v4281, %v4526
      %v4673 = vadd.f32 %v4282, %v4531
      %v4674 = vadd.f32 %v4283, %v4536
      %v4675 = vadd.f32 %v4284, %v4541
      %v4676 = vadd.f32 %v4285, %v4546
      %v4677 = vadd.f32 %v4286, %v4551
      %v4678 = vadd.f32 %v4287, %v4556
      %v4679 = vadd.f32 %v4288, %v4561
      %v4680 = vadd.f32 %v4289, %v4566
      %v4681 = vadd.f32 %v4290, %v4571
      %v4682 = vadd.f32 %v4291, %v4576
      %v4683 = vadd.f32 %v4292, %v4581
      %v4684 = vadd.f32 %v4293, %v4586
      %v4685 = vadd.f32 %v4294, %v4591
      %v4686 = vadd.f32 %v4295, %v4596
      %v4687 = vadd.f32 %v4296, %v4601
      %v4688 = vadd.f32 %v4297, %v4606
      %v4689 = vadd.f32 %v4298, %v4611
      %v4690 = vadd.f32 %v4299, %v4616
      %v4691 = vadd.f32 %v4300, %v4621
      %v4692 = vadd.f32 %v4301, %v4626
      %v4693 = vadd.f32 %v4302, %v4631
      %v4694 = vadd.f32 %v4303, %v4636
      %v4695 = vadd.f32 %v4304, %v4641
      %v4696 = vadd.f32 %v4305, %v4646
      %v4697 = vadd.f32 %v4306, %v4651
      %v4698 = vadd.f32 %v4307, %v4656
      %v4699 = vadd.f32 %v4308, %v4661
      %v4700 = vadd.f32 %v4309, %v4666
      %v4701 = vld [vmem:[#allocation2 + $0x29] sm:$0xff]
      %v4702 = vld [vmem:[#allocation2 + $0x31] sm:$0xff]
      %v4703 = vld [vmem:[#allocation2 + $0x39] sm:$0xff]
      %v4704 = vld [vmem:[#allocation2 + $0x41] sm:$0xff]
      %v4705 = vld [vmem:[#allocation2 + $0x49] sm:$0xff]
      %v4706 = vld [vmem:[#allocation2 + $0x51] sm:$0xff]
      %v4707 = vld [vmem:[#allocation2 + $0x59] sm:$0xff]
      %v4708 = vld [vmem:[#allocation2 + $0x61] sm:$0xff]
      %v4709 = vld [vmem:[#allocation2 + $0x69] sm:$0xff]
      %v4710 = vld [vmem:[#allocation2 + $0x71] sm:$0xff]
      %v4711 = vld [vmem:[#allocation2 + $0x79] sm:$0xff]
      %v4712 = vld [vmem:[#allocation2 + $0x81] sm:$0xff]
      %v4713 = vld [vmem:[#allocation2 + $0x89] sm:$0xff]
      %v4714 = vld [vmem:[#allocation2 + $0x91] sm:$0xff]
      %v4715 = vld [vmem:[#allocation2 + $0x99] sm:$0xff]
      %v4716 = vld [vmem:[#allocation2 + $0xa1] sm:$0xff]
      %v4717 = vld [vmem:[#allocation2 + $0xa9] sm:$0xff]
      %v4718 = vld [vmem:[#allocation2 + $0xb1] sm:$0xff]
      %v4719 = vld [vmem:[#allocation2 + $0xb9] sm:$0xff]
      %v4720 = vld [vmem:[#allocation2 + $0xc1] sm:$0xff]
      %v4721 = vld [vmem:[#allocation2 + $0xc9] sm:$0xff]
      %v4722 = vld [vmem:[#allocation2 + $0xd1] sm:$0xff]
      %v4723 = vld [vmem:[#allocation2 + $0xd9] sm:$0xff]
      %v4724 = vld [vmem:[#allocation2 + $0xe1] sm:$0xff]
      %v4725 = vld [vmem:[#allocation2 + $0xe9] sm:$0xff]
      %v4726 = vld [vmem:[#allocation2 + $0xf1] sm:$0xff]
      %v4727 = vld [vmem:[#allocation2 + $0xf9] sm:$0xff]
      %v4728 = vld [vmem:[#allocation2 + $0x101] sm:$0xff]
      %v4729 = vld [vmem:[#allocation2 + $0x109] sm:$0xff]
      %v4730 = vld [vmem:[#allocation2 + $0x111] sm:$0xff]
      %v4731 = vld [vmem:[#allocation2 + $0x119] sm:$0xff]
      %v4732 = vld [vmem:[#allocation2 + $0x121] sm:$0xff]
      %v4733 = vmul.f32 %v4701, %v1374
      %v4734 = vmul.f32 %v4702, %v1375
      %v4735 = vmul.f32 %v4703, %v1376
      %v4736 = vmul.f32 %v4704, %v1377
      %v4737 = vmul.f32 %v4705, %v1378
      %v4738 = vmul.f32 %v4706, %v1379
      %v4739 = vmul.f32 %v4707, %v1380
      %v4740 = vmul.f32 %v4708, %v1381
      %v4741 = vmul.f32 %v4709, %v1382
      %v4742 = vmul.f32 %v4710, %v1383
      %v4743 = vmul.f32 %v4711, %v1384
      %v4744 = vmul.f32 %v4712, %v1385
      %v4745 = vmul.f32 %v4713, %v1386
      %v4746 = vmul.f32 %v4714, %v1387
      %v4747 = vmul.f32 %v4715, %v1388
      %v4748 = vmul.f32 %v4716, %v1389
      %v4749 = vmul.f32 %v4717, %v1390
      %v4750 = vmul.f32 %v4718, %v1391
      %v4751 = vmul.f32 %v4719, %v1392
      %v4752 = vmul.f32 %v4720, %v1393
      %v4753 = vmul.f32 %v4721, %v1394
      %v4754 = vmul.f32 %v4722, %v1395
      %v4755 = vmul.f32 %v4723, %v1396
      %v4756 = vmul.f32 %v4724, %v1397
      %v4757 = vmul.f32 %v4725, %v1398
      %v4758 = vmul.f32 %v4726, %v1399
      %v4759 = vmul.f32 %v4727, %v1400
      %v4760 = vmul.f32 %v4728, %v1401
      %v4761 = vmul.f32 %v4729, %v1402
      %v4762 = vmul.f32 %v4730, %v1403
      %v4763 = vmul.f32 %v4731, %v1404
      %v4764 = vmul.f32 %v4732, %v1405
      %s4765 = scalar_lea.vmem %s3, 128
      %v4766 = vld [vmem:[%s4765] sm:$0xff]
      %v4767 = vld [vmem:[%s4765 + $0x8] sm:$0xf]
      %v4769 = vsel %vm1406, %v4733, 0
      %v4772 = vsel %vm1406, %v4734, 0
      %v4775 = vsel %vm1406, %v4735, 0
      %v4778 = vsel %vm1406, %v4736, 0
      %v4781 = vsel %vm1406, %v4737, 0
      %v4784 = vsel %vm1406, %v4738, 0
      %v4787 = vsel %vm1406, %v4739, 0
      %v4790 = vsel %vm1406, %v4740, 0
      %v4793 = vsel %vm1406, %v4741, 0
      %v4796 = vsel %vm1406, %v4742, 0
      %v4799 = vsel %vm1406, %v4743, 0
      %v4802 = vsel %vm1406, %v4744, 0
      %v4805 = vsel %vm1406, %v4745, 0
      %v4808 = vsel %vm1406, %v4746, 0
      %v4811 = vsel %vm1406, %v4747, 0
      %v4814 = vsel %vm1406, %v4748, 0
      %v4817 = vsel %vm1406, %v4749, 0
      %v4820 = vsel %vm1406, %v4750, 0
      %v4823 = vsel %vm1406, %v4751, 0
      %v4826 = vsel %vm1406, %v4752, 0
      %v4829 = vsel %vm1406, %v4753, 0
      %v4832 = vsel %vm1406, %v4754, 0
      %v4835 = vsel %vm1406, %v4755, 0
      %v4838 = vsel %vm1406, %v4756, 0
      %v4841 = vsel %vm1406, %v4757, 0
      %v4844 = vsel %vm1406, %v4758, 0
      %v4847 = vsel %vm1406, %v4759, 0
      %v4850 = vsel %vm1406, %v4760, 0
      %v4853 = vsel %vm1406, %v4761, 0
      %v4856 = vsel %vm1406, %v4762, 0
      %v4859 = vsel %vm1406, %v4763, 0
      %v4862 = vsel %vm1406, %v4764, 0
      %v4865 = vsel %vm1674, %v4767, 0
      %4867 = vmatprep.subr.mxu0 0.0
      %4868 = vmatpush1.msra.mxu0 %v4766
      %4869 = vmatprep.subr.mxu0 0.0
      %4870 = vmatpush1.msra.mxu0 %v4865
      %4871 = vmatprep.subr.mxu0 0.0
      %4872 = vmatpush1.msra.mxu0 0.0
      %4873 = vmatprep.subr.mxu0 0.0
      %4874 = vmatpush1.msra.mxu0 0.0
      %4875 = vmatprep.subr.mxu0 0.0
      %4876 = vmatpush1.msra.mxu0 0.0
      %4877 = vmatprep.subr.mxu0 0.0
      %4878 = vmatpush1.msra.mxu0 0.0
      %4879 = vmatprep.subr.mxu0 0.0
      %4880 = vmatpush1.msra.mxu0 0.0
      %4881 = vmatprep.subr.mxu0 0.0
      %4882 = vmatpush1.msra.mxu0 0.0
      %4883 = vmatprep.subr.mxu0 0.0
      %4884 = vmatpush1.msra.mxu0 0.0
      %4885 = vmatprep.subr.mxu0 0.0
      %4886 = vmatpush1.msra.mxu0 0.0
      %4887 = vmatprep.subr.mxu0 0.0
      %4888 = vmatpush1.msra.mxu0 0.0
      %4889 = vmatprep.subr.mxu0 0.0
      %4890 = vmatpush1.msra.mxu0 0.0
      %4891 = vmatprep.subr.mxu0 0.0
      %4892 = vmatpush1.msra.mxu0 0.0
      %4893 = vmatprep.subr.mxu0 0.0
      %4894 = vmatpush1.msra.mxu0 0.0
      %4895 = vmatprep.subr.mxu0 0.0
      %4896 = vmatpush1.msra.mxu0 0.0
      %4897 = vmatprep.subr.mxu0 0.0
      %4898 = vmatpush1.msra.mxu0 0.0
      %4899 = vmatprep.subr.mxu0 0.0
      %4900 = vmatpush1.msra.mxu0 0.0
      %4901 = vmatprep.subr.mxu0 0.0
      %4902 = vmatpush1.msra.mxu0 0.0
      %4903 = vmatprep.subr.mxu0 0.0
      %4904 = vmatpush1.msra.mxu0 0.0
      %4905 = vmatprep.subr.mxu0 0.0
      %4906 = vmatpush1.msra.mxu0 0.0
      %4907 = vmatprep.subr.mxu0 0.0
      %4908 = vmatpush1.msra.mxu0 0.0
      %4909 = vmatprep.subr.mxu0 0.0
      %4910 = vmatpush1.msra.mxu0 0.0
      %4911 = vmatprep.subr.mxu0 0.0
      %4912 = vmatpush1.msra.mxu0 0.0
      %4913 = vmatprep.subr.mxu0 0.0
      %4914 = vmatpush1.msra.mxu0 0.0
      %4915 = vmatprep.subr.mxu0 0.0
      %4916 = vmatpush1.msra.mxu0 0.0
      %4917 = vmatprep.subr.mxu0 0.0
      %4918 = vmatpush1.msra.mxu0 0.0
      %4919 = vmatprep.subr.mxu0 0.0
      %4920 = vmatpush1.msra.mxu0 0.0
      %4921 = vmatprep.subr.mxu0 0.0
      %4922 = vmatpush1.msra.mxu0 0.0
      %4923 = vmatprep.subr.mxu0 0.0
      %4924 = vmatpush1.msra.mxu0 0.0
      %4925 = vmatprep.subr.mxu0 0.0
      %4926 = vmatpush1.msra.mxu0 0.0
      %4927 = vmatprep.subr.mxu0 0.0
      %4928 = vmatpush1.msra.mxu0 0.0
      %4929 = vmatprep.subr.mxu0 0.0
      %4930 = vmatpush1.msra.mxu0 0.0
      %4931 = vmatprep.mubr.f32.mxu0 0.0
      %4932 = vmatmul.mubr.f32.gmra.mrb[0].mxu0 %v4769
      %v4933 = vpop.f32.mrb[0].mxu0
      %v4934 = vadd.f32 0.0, %v4933
      %v4935 = vpop.f32.mrb[0].mxu0
      %4936 = vmatprep.mubr.f32.mxu0 0.0
      %4937 = vmatmul.mubr.f32.gmra.mrb[0].mxu0 %v4772
      %v4938 = vpop.f32.mrb[0].mxu0
      %v4939 = vadd.f32 0.0, %v4938
      %v4940 = vpop.f32.mrb[0].mxu0
      %4941 = vmatprep.mubr.f32.mxu0 0.0
      %4942 = vmatmul.mubr.f32.gmra.mrb[0].mxu0 %v4775
      %v4943 = vpop.f32.mrb[0].mxu0
      %v4944 = vadd.f32 0.0, %v4943
      %v4945 = vpop.f32.mrb[0].mxu0
      %4946 = vmatprep.mubr.f32.mxu0 0.0
      %4947 = vmatmul.mubr.f32.gmra.mrb[0].mxu0 %v4778
      %v4948 = vpop.f32.mrb[0].mxu0
      %v4949 = vadd.f32 0.0, %v4948
      %v4950 = vpop.f32.mrb[0].mxu0
      %4951 = vmatprep.mubr.f32.mxu0 0.0
      %4952 = vmatmul.mubr.f32.gmra.mrb[0].mxu0 %v4781
      %v4953 = vpop.f32.mrb[0].mxu0
      %v4954 = vadd.f32 0.0, %v4953
      %v4955 = vpop.f32.mrb[0].mxu0
      %4956 = vmatprep.mubr.f32.mxu0 0.0
      %4957 = vmatmul.mubr.f32.gmra.mrb[0].mxu0 %v4784
      %v4958 = vpop.f32.mrb[0].mxu0
      %v4959 = vadd.f32 0.0, %v4958
      %v4960 = vpop.f32.mrb[0].mxu0
      %4961 = vmatprep.mubr.f32.mxu0 0.0
      %4962 = vmatmul.mubr.f32.gmra.mrb[0].mxu0 %v4787
      %v4963 = vpop.f32.mrb[0].mxu0
      %v4964 = vadd.f32 0.0, %v4963
      %v4965 = vpop.f32.mrb[0].mxu0
      %4966 = vmatprep.mubr.f32.mxu0 0.0
      %4967 = vmatmul.mubr.f32.gmra.mrb[0].mxu0 %v4790
      %v4968 = vpop.f32.mrb[0].mxu0
      %v4969 = vadd.f32 0.0, %v4968
      %v4970 = vpop.f32.mrb[0].mxu0
      %4971 = vmatprep.mubr.f32.mxu0 0.0
      %4972 = vmatmul.mubr.f32.gmra.mrb[0].mxu0 %v4793
      %v4973 = vpop.f32.mrb[0].mxu0
      %v4974 = vadd.f32 0.0, %v4973
      %v4975 = vpop.f32.mrb[0].mxu0
      %4976 = vmatprep.mubr.f32.mxu0 0.0
      %4977 = vmatmul.mubr.f32.gmra.mrb[0].mxu0 %v4796
      %v4978 = vpop.f32.mrb[0].mxu0
      %v4979 = vadd.f32 0.0, %v4978
      %v4980 = vpop.f32.mrb[0].mxu0
      %4981 = vmatprep.mubr.f32.mxu0 0.0
      %4982 = vmatmul.mubr.f32.gmra.mrb[0].mxu0 %v4799
      %v4983 = vpop.f32.mrb[0].mxu0
      %v4984 = vadd.f32 0.0, %v4983
      %v4985 = vpop.f32.mrb[0].mxu0
      %4986 = vmatprep.mubr.f32.mxu0 0.0
      %4987 = vmatmul.mubr.f32.gmra.mrb[0].mxu0 %v4802
      %v4988 = vpop.f32.mrb[0].mxu0
      %v4989 = vadd.f32 0.0, %v4988
      %v4990 = vpop.f32.mrb[0].mxu0
      %4991 = vmatprep.mubr.f32.mxu0 0.0
      %4992 = vmatmul.mubr.f32.gmra.mrb[0].mxu0 %v4805
      %v4993 = vpop.f32.mrb[0].mxu0
      %v4994 = vadd.f32 0.0, %v4993
      %v4995 = vpop.f32.mrb[0].mxu0
      %4996 = vmatprep.mubr.f32.mxu0 0.0
      %4997 = vmatmul.mubr.f32.gmra.mrb[0].mxu0 %v4808
      %v4998 = vpop.f32.mrb[0].mxu0
      %v4999 = vadd.f32 0.0, %v4998
      %v5000 = vpop.f32.mrb[0].mxu0
      %5001 = vmatprep.mubr.f32.mxu0 0.0
      %5002 = vmatmul.mubr.f32.gmra.mrb[0].mxu0 %v4811
      %v5003 = vpop.f32.mrb[0].mxu0
      %v5004 = vadd.f32 0.0, %v5003
      %v5005 = vpop.f32.mrb[0].mxu0
      %5006 = vmatprep.mubr.f32.mxu0 0.0
      %5007 = vmatmul.mubr.f32.gmra.mrb[0].mxu0 %v4814
      %v5008 = vpop.f32.mrb[0].mxu0
      %v5009 = vadd.f32 0.0, %v5008
      %v5010 = vpop.f32.mrb[0].mxu0
      %5011 = vmatprep.mubr.f32.mxu0 0.0
      %5012 = vmatmul.mubr.f32.gmra.mrb[0].mxu0 %v4817
      %v5013 = vpop.f32.mrb[0].mxu0
      %v5014 = vadd.f32 0.0, %v5013
      %v5015 = vpop.f32.mrb[0].mxu0
      %5016 = vmatprep.mubr.f32.mxu0 0.0
      %5017 = vmatmul.mubr.f32.gmra.mrb[0].mxu0 %v4820
      %v5018 = vpop.f32.mrb[0].mxu0
      %v5019 = vadd.f32 0.0, %v5018
      %v5020 = vpop.f32.mrb[0].mxu0
      %5021 = vmatprep.mubr.f32.mxu0 0.0
      %5022 = vmatmul.mubr.f32.gmra.mrb[0].mxu0 %v4823
      %v5023 = vpop.f32.mrb[0].mxu0
      %v5024 = vadd.f32 0.0, %v5023
      %v5025 = vpop.f32.mrb[0].mxu0
      %5026 = vmatprep.mubr.f32.mxu0 0.0
      %5027 = vmatmul.mubr.f32.gmra.mrb[0].mxu0 %v4826
      %v5028 = vpop.f32.mrb[0].mxu0
      %v5029 = vadd.f32 0.0, %v5028
      %v5030 = vpop.f32.mrb[0].mxu0
      %5031 = vmatprep.mubr.f32.mxu0 0.0
      %5032 = vmatmul.mubr.f32.gmra.mrb[0].mxu0 %v4829
      %v5033 = vpop.f32.mrb[0].mxu0
      %v5034 = vadd.f32 0.0, %v5033
      %v5035 = vpop.f32.mrb[0].mxu0
      %5036 = vmatprep.mubr.f32.mxu0 0.0
      %5037 = vmatmul.mubr.f32.gmra.mrb[0].mxu0 %v4832
      %v5038 = vpop.f32.mrb[0].mxu0
      %v5039 = vadd.f32 0.0, %v5038
      %v5040 = vpop.f32.mrb[0].mxu0
      %5041 = vmatprep.mubr.f32.mxu0 0.0
      %5042 = vmatmul.mubr.f32.gmra.mrb[0].mxu0 %v4835
      %v5043 = vpop.f32.mrb[0].mxu0
      %v5044 = vadd.f32 0.0, %v5043
      %v5045 = vpop.f32.mrb[0].mxu0
      %5046 = vmatprep.mubr.f32.mxu0 0.0
      %5047 = vmatmul.mubr.f32.gmra.mrb[0].mxu0 %v4838
      %v5048 = vpop.f32.mrb[0].mxu0
      %v5049 = vadd.f32 0.0, %v5048
      %v5050 = vpop.f32.mrb[0].mxu0
      %5051 = vmatprep.mubr.f32.mxu0 0.0
      %5052 = vmatmul.mubr.f32.gmra.mrb[0].mxu0 %v4841
      %v5053 = vpop.f32.mrb[0].mxu0
      %v5054 = vadd.f32 0.0, %v5053
      %v5055 = vpop.f32.mrb[0].mxu0
      %5056 = vmatprep.mubr.f32.mxu0 0.0
      %5057 = vmatmul.mubr.f32.gmra.mrb[0].mxu0 %v4844
      %v5058 = vpop.f32.mrb[0].mxu0
      %v5059 = vadd.f32 0.0, %v5058
      %v5060 = vpop.f32.mrb[0].mxu0
      %5061 = vmatprep.mubr.f32.mxu0 0.0
      %5062 = vmatmul.mubr.f32.gmra.mrb[0].mxu0 %v4847
      %v5063 = vpop.f32.mrb[0].mxu0
      %v5064 = vadd.f32 0.0, %v5063
      %v5065 = vpop.f32.mrb[0].mxu0
      %5066 = vmatprep.mubr.f32.mxu0 0.0
      %5067 = vmatmul.mubr.f32.gmra.mrb[0].mxu0 %v4850
      %v5068 = vpop.f32.mrb[0].mxu0
      %v5069 = vadd.f32 0.0, %v5068
      %v5070 = vpop.f32.mrb[0].mxu0
      %5071 = vmatprep.mubr.f32.mxu0 0.0
      %5072 = vmatmul.mubr.f32.gmra.mrb[0].mxu0 %v4853
      %v5073 = vpop.f32.mrb[0].mxu0
      %v5074 = vadd.f32 0.0, %v5073
      %v5075 = vpop.f32.mrb[0].mxu0
      %5076 = vmatprep.mubr.f32.mxu0 0.0
      %5077 = vmatmul.mubr.f32.gmra.mrb[0].mxu0 %v4856
      %v5078 = vpop.f32.mrb[0].mxu0
      %v5079 = vadd.f32 0.0, %v5078
      %v5080 = vpop.f32.mrb[0].mxu0
      %5081 = vmatprep.mubr.f32.mxu0 0.0
      %5082 = vmatmul.mubr.f32.gmra.mrb[0].mxu0 %v4859
      %v5083 = vpop.f32.mrb[0].mxu0
      %v5084 = vadd.f32 0.0, %v5083
      %v5085 = vpop.f32.mrb[0].mxu0
      %5086 = vmatprep.mubr.f32.mxu0 0.0
      %5087 = vmatmul.mubr.f32.gmra.mrb[0].mxu0 %v4862
      %v5088 = vpop.f32.mrb[0].mxu0
      %v5089 = vadd.f32 0.0, %v5088
      %v5090 = vpop.f32.mrb[0].mxu0
      %5091 = vdwg.mxu0
      %v5092 = vadd.f32 %v4669, %v4934
      %v5093 = vadd.f32 %v4670, %v4939
      %v5094 = vadd.f32 %v4671, %v4944
      %v5095 = vadd.f32 %v4672, %v4949
      %v5096 = vadd.f32 %v4673, %v4954
      %v5097 = vadd.f32 %v4674, %v4959
      %v5098 = vadd.f32 %v4675, %v4964
      %v5099 = vadd.f32 %v4676, %v4969
      %v5100 = vadd.f32 %v4677, %v4974
      %v5101 = vadd.f32 %v4678, %v4979
      %v5102 = vadd.f32 %v4679, %v4984
      %v5103 = vadd.f32 %v4680, %v4989
      %v5104 = vadd.f32 %v4681, %v4994
      %v5105 = vadd.f32 %v4682, %v4999
      %v5106 = vadd.f32 %v4683, %v5004
      %v5107 = vadd.f32 %v4684, %v5009
      %v5108 = vadd.f32 %v4685, %v5014
      %v5109 = vadd.f32 %v4686, %v5019
      %v5110 = vadd.f32 %v4687, %v5024
      %v5111 = vadd.f32 %v4688, %v5029
      %v5112 = vadd.f32 %v4689, %v5034
      %v5113 = vadd.f32 %v4690, %v5039
      %v5114 = vadd.f32 %v4691, %v5044
      %v5115 = vadd.f32 %v4692, %v5049
      %v5116 = vadd.f32 %v4693, %v5054
      %v5117 = vadd.f32 %v4694, %v5059
      %v5118 = vadd.f32 %v4695, %v5064
      %v5119 = vadd.f32 %v4696, %v5069
      %v5120 = vadd.f32 %v4697, %v5074
      %v5121 = vadd.f32 %v4698, %v5079
      %v5122 = vadd.f32 %v4699, %v5084
      %v5123 = vadd.f32 %v4700, %v5089
      %v5124 = vld [vmem:[%s4] sm:$0x1]
      %v5126 = vlaneseq
      %v5127 = vshrl.u32 %v5126, 7
      %v5128 = vsub.s32 0, %v5127
      %v5129 = vrot.slane %v5124, %v5128
      %v5131 = vadd.f32 %v5092, %v5129
      %v5132 = vadd.f32 %v5093, %v5129
      %v5133 = vadd.f32 %v5094, %v5129
      %v5134 = vadd.f32 %v5095, %v5129
      %v5135 = vadd.f32 %v5096, %v5129
      %v5136 = vadd.f32 %v5097, %v5129
      %v5137 = vadd.f32 %v5098, %v5129
      %v5138 = vadd.f32 %v5099, %v5129
      %v5139 = vadd.f32 %v5100, %v5129
      %v5140 = vadd.f32 %v5101, %v5129
      %v5141 = vadd.f32 %v5102, %v5129
      %v5142 = vadd.f32 %v5103, %v5129
      %v5143 = vadd.f32 %v5104, %v5129
      %v5144 = vadd.f32 %v5105, %v5129
      %v5145 = vadd.f32 %v5106, %v5129
      %v5146 = vadd.f32 %v5107, %v5129
      %v5147 = vadd.f32 %v5108, %v5129
      %v5148 = vadd.f32 %v5109, %v5129
      %v5149 = vadd.f32 %v5110, %v5129
      %v5150 = vadd.f32 %v5111, %v5129
      %v5151 = vadd.f32 %v5112, %v5129
      %v5152 = vadd.f32 %v5113, %v5129
      %v5153 = vadd.f32 %v5114, %v5129
      %v5154 = vadd.f32 %v5115, %v5129
      %v5155 = vadd.f32 %v5116, %v5129
      %v5156 = vadd.f32 %v5117, %v5129
      %v5157 = vadd.f32 %v5118, %v5129
      %v5158 = vadd.f32 %v5119, %v5129
      %v5159 = vadd.f32 %v5120, %v5129
      %v5160 = vadd.f32 %v5121, %v5129
      %v5161 = vadd.f32 %v5122, %v5129
      %v5162 = vadd.f32 %v5123, %v5129
      %vm5163 = vcmp.gt.f32.partialorder %v5131, 0.0
      %vm5164 = vcmp.gt.f32.partialorder %v5132, 0.0
      %vm5165 = vcmp.gt.f32.partialorder %v5133, 0.0
      %vm5166 = vcmp.gt.f32.partialorder %v5134, 0.0
      %vm5167 = vcmp.gt.f32.partialorder %v5135, 0.0
      %vm5168 = vcmp.gt.f32.partialorder %v5136, 0.0
      %vm5169 = vcmp.gt.f32.partialorder %v5137, 0.0
      %vm5170 = vcmp.gt.f32.partialorder %v5138, 0.0
      %vm5171 = vcmp.gt.f32.partialorder %v5139, 0.0
      %vm5172 = vcmp.gt.f32.partialorder %v5140, 0.0
      %vm5173 = vcmp.gt.f32.partialorder %v5141, 0.0
      %vm5174 = vcmp.gt.f32.partialorder %v5142, 0.0
      %vm5175 = vcmp.gt.f32.partialorder %v5143, 0.0
      %vm5176 = vcmp.gt.f32.partialorder %v5144, 0.0
      %vm5177 = vcmp.gt.f32.partialorder %v5145, 0.0
      %vm5178 = vcmp.gt.f32.partialorder %v5146, 0.0
      %vm5179 = vcmp.gt.f32.partialorder %v5147, 0.0
      %vm5180 = vcmp.gt.f32.partialorder %v5148, 0.0
      %vm5181 = vcmp.gt.f32.partialorder %v5149, 0.0
      %vm5182 = vcmp.gt.f32.partialorder %v5150, 0.0
      %vm5183 = vcmp.gt.f32.partialorder %v5151, 0.0
      %vm5184 = vcmp.gt.f32.partialorder %v5152, 0.0
      %vm5185 = vcmp.gt.f32.partialorder %v5153, 0.0
      %vm5186 = vcmp.gt.f32.partialorder %v5154, 0.0
      %vm5187 = vcmp.gt.f32.partialorder %v5155, 0.0
      %vm5188 = vcmp.gt.f32.partialorder %v5156, 0.0
      %vm5189 = vcmp.gt.f32.partialorder %v5157, 0.0
      %vm5190 = vcmp.gt.f32.partialorder %v5158, 0.0
      %vm5191 = vcmp.gt.f32.partialorder %v5159, 0.0
      %vm5192 = vcmp.gt.f32.partialorder %v5160, 0.0
      %vm5193 = vcmp.gt.f32.partialorder %v5161, 0.0
      %vm5194 = vcmp.gt.f32.partialorder %v5162, 0.0
      %v5195 = vmul.f32 %v5131, 0.01
      %v5196 = vmul.f32 %v5132, 0.01
      %v5197 = vmul.f32 %v5133, 0.01
      %v5198 = vmul.f32 %v5134, 0.01
      %v5199 = vmul.f32 %v5135, 0.01
      %v5200 = vmul.f32 %v5136, 0.01
      %v5201 = vmul.f32 %v5137, 0.01
      %v5202 = vmul.f32 %v5138, 0.01
      %v5203 = vmul.f32 %v5139, 0.01
      %v5204 = vmul.f32 %v5140, 0.01
      %v5205 = vmul.f32 %v5141, 0.01
      %v5206 = vmul.f32 %v5142, 0.01
      %v5207 = vmul.f32 %v5143, 0.01
      %v5208 = vmul.f32 %v5144, 0.01
      %v5209 = vmul.f32 %v5145, 0.01
      %v5210 = vmul.f32 %v5146, 0.01
      %v5211 = vmul.f32 %v5147, 0.01
      %v5212 = vmul.f32 %v5148, 0.01
      %v5213 = vmul.f32 %v5149, 0.01
      %v5214 = vmul.f32 %v5150, 0.01
      %v5215 = vmul.f32 %v5151, 0.01
      %v5216 = vmul.f32 %v5152, 0.01
      %v5217 = vmul.f32 %v5153, 0.01
      %v5218 = vmul.f32 %v5154, 0.01
      %v5219 = vmul.f32 %v5155, 0.01
      %v5220 = vmul.f32 %v5156, 0.01
      %v5221 = vmul.f32 %v5157, 0.01
      %v5222 = vmul.f32 %v5158, 0.01
      %v5223 = vmul.f32 %v5159, 0.01
      %v5224 = vmul.f32 %v5160, 0.01
      %v5225 = vmul.f32 %v5161, 0.01
      %v5226 = vmul.f32 %v5162, 0.01
      %v5227 = vsel %vm5163, %v5131, %v5195
      %v5228 = vsel %vm5164, %v5132, %v5196
      %v5229 = vsel %vm5165, %v5133, %v5197
      %v5230 = vsel %vm5166, %v5134, %v5198
      %v5231 = vsel %vm5167, %v5135, %v5199
      %v5232 = vsel %vm5168, %v5136, %v5200
      %v5233 = vsel %vm5169, %v5137, %v5201
      %v5234 = vsel %vm5170, %v5138, %v5202
      %v5235 = vsel %vm5171, %v5139, %v5203
      %v5236 = vsel %vm5172, %v5140, %v5204
      %v5237 = vsel %vm5173, %v5141, %v5205
      %v5238 = vsel %vm5174, %v5142, %v5206
      %v5239 = vsel %vm5175, %v5143, %v5207
      %v5240 = vsel %vm5176, %v5144, %v5208
      %v5241 = vsel %vm5177, %v5145, %v5209
      %v5242 = vsel %vm5178, %v5146, %v5210
      %v5243 = vsel %vm5179, %v5147, %v5211
      %v5244 = vsel %vm5180, %v5148, %v5212
      %v5245 = vsel %vm5181, %v5149, %v5213
      %v5246 = vsel %vm5182, %v5150, %v5214
      %v5247 = vsel %vm5183, %v5151, %v5215
      %v5248 = vsel %vm5184, %v5152, %v5216
      %v5249 = vsel %vm5185, %v5153, %v5217
      %v5250 = vsel %vm5186, %v5154, %v5218
      %v5251 = vsel %vm5187, %v5155, %v5219
      %v5252 = vsel %vm5188, %v5156, %v5220
      %v5253 = vsel %vm5189, %v5157, %v5221
      %v5254 = vsel %vm5190, %v5158, %v5222
      %v5255 = vsel %vm5191, %v5159, %v5223
      %v5256 = vsel %vm5192, %v5160, %v5224
      %v5257 = vsel %vm5193, %v5161, %v5225
      %v5258 = vsel %vm5194, %v5162, %v5226
      %5259 = vst.msk [vmem:[#allocation2 + $0x18] sm:$0xff] %vm1406, %v5227
      %5260 = vst.msk [vmem:[#allocation2 + $0x20] sm:$0xff] %vm1406, %v5228
      %5261 = vst.msk [vmem:[#allocation2 + $0x28] sm:$0xff] %vm1406, %v5229
      %5262 = vst.msk [vmem:[#allocation2 + $0x30] sm:$0xff] %vm1406, %v5230
      %5263 = vst.msk [vmem:[#allocation2 + $0x38] sm:$0xff] %vm1406, %v5231
      %5264 = vst.msk [vmem:[#allocation2 + $0x40] sm:$0xff] %vm1406, %v5232
      %5265 = vst.msk [vmem:[#allocation2 + $0x48] sm:$0xff] %vm1406, %v5233
      %5266 = vst.msk [vmem:[#allocation2 + $0x50] sm:$0xff] %vm1406, %v5234
      %5267 = vst.msk [vmem:[#allocation2 + $0x58] sm:$0xff] %vm1406, %v5235
      %5268 = vst.msk [vmem:[#allocation2 + $0x60] sm:$0xff] %vm1406, %v5236
      %5269 = vst.msk [vmem:[#allocation2 + $0x68] sm:$0xff] %vm1406, %v5237
      %5270 = vst.msk [vmem:[#allocation2 + $0x70] sm:$0xff] %vm1406, %v5238
      %5271 = vst.msk [vmem:[#allocation2 + $0x78] sm:$0xff] %vm1406, %v5239
      %5272 = vst.msk [vmem:[#allocation2 + $0x80] sm:$0xff] %vm1406, %v5240
      %5273 = vst.msk [vmem:[#allocation2 + $0x88] sm:$0xff] %vm1406, %v5241
      %5274 = vst.msk [vmem:[#allocation2 + $0x90] sm:$0xff] %vm1406, %v5242
      %5275 = vst.msk [vmem:[#allocation2 + $0x98] sm:$0xff] %vm1406, %v5243
      %5276 = vst.msk [vmem:[#allocation2 + $0xa0] sm:$0xff] %vm1406, %v5244
      %5277 = vst.msk [vmem:[#allocation2 + $0xa8] sm:$0xff] %vm1406, %v5245
      %5278 = vst.msk [vmem:[#allocation2 + $0xb0] sm:$0xff] %vm1406, %v5246
      %5279 = vst.msk [vmem:[#allocation2 + $0xb8] sm:$0xff] %vm1406, %v5247
      %5280 = vst.msk [vmem:[#allocation2 + $0xc0] sm:$0xff] %vm1406, %v5248
      %5281 = vst.msk [vmem:[#allocation2 + $0xc8] sm:$0xff] %vm1406, %v5249
      %5282 = vst.msk [vmem:[#allocation2 + $0xd0] sm:$0xff] %vm1406, %v5250
      %5283 = vst.msk [vmem:[#allocation2 + $0xd8] sm:$0xff] %vm1406, %v5251
      %5284 = vst.msk [vmem:[#allocation2 + $0xe0] sm:$0xff] %vm1406, %v5252
      %5285 = vst.msk [vmem:[#allocation2 + $0xe8] sm:$0xff] %vm1406, %v5253
      %5286 = vst.msk [vmem:[#allocation2 + $0xf0] sm:$0xff] %vm1406, %v5254
      %5287 = vst.msk [vmem:[#allocation2 + $0xf8] sm:$0xff] %vm1406, %v5255
      %5288 = vst.msk [vmem:[#allocation2 + $0x100] sm:$0xff] %vm1406, %v5256
      %5289 = vst.msk [vmem:[#allocation2 + $0x108] sm:$0xff] %vm1406, %v5257
      %5290 = vst.msk [vmem:[#allocation2 + $0x110] sm:$0xff] %vm1406, %v5258
      %v5291 = vld [vmem:[#allocation2 + $0x7] sm:$0xff]
      %v5292 = vld [vmem:[#allocation2 + $0xf] sm:$0xff]
      %v5293 = vld [vmem:[#allocation2 + $0x17] sm:$0xff]
      %v5294 = vld [vmem:[#allocation2 + $0x1f] sm:$0xff]
      %v5295 = vld [vmem:[#allocation2 + $0x27] sm:$0xff]
      %v5296 = vld [vmem:[#allocation2 + $0x2f] sm:$0xff]
      %v5297 = vld [vmem:[#allocation2 + $0x37] sm:$0xff]
      %v5298 = vld [vmem:[#allocation2 + $0x3f] sm:$0xff]
      %v5299 = vld [vmem:[#allocation2 + $0x47] sm:$0xff]
      %v5300 = vld [vmem:[#allocation2 + $0x4f] sm:$0xff]
      %v5301 = vld [vmem:[#allocation2 + $0x57] sm:$0xff]
      %v5302 = vld [vmem:[#allocation2 + $0x5f] sm:$0xff]
      %v5303 = vld [vmem:[#allocation2 + $0x67] sm:$0xff]
      %v5304 = vld [vmem:[#allocation2 + $0x6f] sm:$0xff]
      %v5305 = vld [vmem:[#allocation2 + $0x77] sm:$0xff]
      %v5306 = vld [vmem:[#allocation2 + $0x7f] sm:$0xff]
      %v5307 = vld [vmem:[#allocation2 + $0x87] sm:$0xff]
      %v5308 = vld [vmem:[#allocation2 + $0x8f] sm:$0xff]
      %v5309 = vld [vmem:[#allocation2 + $0x97] sm:$0xff]
      %v5310 = vld [vmem:[#allocation2 + $0x9f] sm:$0xff]
      %v5311 = vld [vmem:[#allocation2 + $0xa7] sm:$0xff]
      %v5312 = vld [vmem:[#allocation2 + $0xaf] sm:$0xff]
      %v5313 = vld [vmem:[#allocation2 + $0xb7] sm:$0xff]
      %v5314 = vld [vmem:[#allocation2 + $0xbf] sm:$0xff]
      %v5315 = vld [vmem:[#allocation2 + $0xc7] sm:$0xff]
      %v5316 = vld [vmem:[#allocation2 + $0xcf] sm:$0xff]
      %v5317 = vld [vmem:[#allocation2 + $0xd7] sm:$0xff]
      %v5318 = vld [vmem:[#allocation2 + $0xdf] sm:$0xff]
      %v5319 = vld [vmem:[#allocation2 + $0xe7] sm:$0xff]
      %v5320 = vld [vmem:[#allocation2 + $0xef] sm:$0xff]
      %v5321 = vld [vmem:[#allocation2 + $0xf7] sm:$0xff]
      %v5322 = vld [vmem:[#allocation2 + $0xff] sm:$0xff]
      %v5323 = vmul.f32 %v5291, %v1278
      %v5324 = vmul.f32 %v5292, %v1279
      %v5325 = vmul.f32 %v5293, %v1280
      %v5326 = vmul.f32 %v5294, %v1281
      %v5327 = vmul.f32 %v5295, %v1282
      %v5328 = vmul.f32 %v5296, %v1283
      %v5329 = vmul.f32 %v5297, %v1284
      %v5330 = vmul.f32 %v5298, %v1285
      %v5331 = vmul.f32 %v5299, %v1286
      %v5332 = vmul.f32 %v5300, %v1287
      %v5333 = vmul.f32 %v5301, %v1288
      %v5334 = vmul.f32 %v5302, %v1289
      %v5335 = vmul.f32 %v5303, %v1290
      %v5336 = vmul.f32 %v5304, %v1291
      %v5337 = vmul.f32 %v5305, %v1292
      %v5338 = vmul.f32 %v5306, %v1293
      %v5339 = vmul.f32 %v5307, %v1294
      %v5340 = vmul.f32 %v5308, %v1295
      %v5341 = vmul.f32 %v5309, %v1296
      %v5342 = vmul.f32 %v5310, %v1297
      %v5343 = vmul.f32 %v5311, %v1298
      %v5344 = vmul.f32 %v5312, %v1299
      %v5345 = vmul.f32 %v5313, %v1300
      %v5346 = vmul.f32 %v5314, %v1301
      %v5347 = vmul.f32 %v5315, %v1302
      %v5348 = vmul.f32 %v5316, %v1303
      %v5349 = vmul.f32 %v5317, %v1304
      %v5350 = vmul.f32 %v5318, %v1305
      %v5351 = vmul.f32 %v5319, %v1306
      %v5352 = vmul.f32 %v5320, %v1307
      %v5353 = vmul.f32 %v5321, %v1308
      %v5354 = vmul.f32 %v5322, %v1309
      %v5355 = vld [vmem:[%s5] sm:$0xff]
      %v5356 = vld [vmem:[%s5 + $0x8] sm:$0xf]
      %v5357 = vld [vmem:[#allocation2 + $0x8] sm:$0xff]
      %v5358 = vld [vmem:[#allocation2 + $0x10] sm:$0xff]
      %v5359 = vld [vmem:[#allocation2 + $0x18] sm:$0xff]
      %v5360 = vld [vmem:[#allocation2 + $0x20] sm:$0xff]
      %v5361 = vld [vmem:[#allocation2 + $0x28] sm:$0xff]
      %v5362 = vld [vmem:[#allocation2 + $0x30] sm:$0xff]
      %v5363 = vld [vmem:[#allocation2 + $0x38] sm:$0xff]
      %v5364 = vld [vmem:[#allocation2 + $0x40] sm:$0xff]
      %v5365 = vld [vmem:[#allocation2 + $0x48] sm:$0xff]
      %v5366 = vld [vmem:[#allocation2 + $0x50] sm:$0xff]
      %v5367 = vld [vmem:[#allocation2 + $0x58] sm:$0xff]
      %v5368 = vld [vmem:[#allocation2 + $0x60] sm:$0xff]
      %v5369 = vld [vmem:[#allocation2 + $0x68] sm:$0xff]
      %v5370 = vld [vmem:[#allocation2 + $0x70] sm:$0xff]
      %v5371 = vld [vmem:[#allocation2 + $0x78] sm:$0xff]
      %v5372 = vld [vmem:[#allocation2 + $0x80] sm:$0xff]
      %v5373 = vld [vmem:[#allocation2 + $0x88] sm:$0xff]
      %v5374 = vld [vmem:[#allocation2 + $0x90] sm:$0xff]
      %v5375 = vld [vmem:[#allocation2 + $0x98] sm:$0xff]
      %v5376 = vld [vmem:[#allocation2 + $0xa0] sm:$0xff]
      %v5377 = vld [vmem:[#allocation2 + $0xa8] sm:$0xff]
      %v5378 = vld [vmem:[#allocation2 + $0xb0] sm:$0xff]
      %v5379 = vld [vmem:[#allocation2 + $0xb8] sm:$0xff]
      %v5380 = vld [vmem:[#allocation2 + $0xc0] sm:$0xff]
      %v5381 = vld [vmem:[#allocation2 + $0xc8] sm:$0xff]
      %v5382 = vld [vmem:[#allocation2 + $0xd0] sm:$0xff]
      %v5383 = vld [vmem:[#allocation2 + $0xd8] sm:$0xff]
      %v5384 = vld [vmem:[#allocation2 + $0xe0] sm:$0xff]
      %v5385 = vld [vmem:[#allocation2 + $0xe8] sm:$0xff]
      %v5386 = vld [vmem:[#allocation2 + $0xf0] sm:$0xff]
      %v5387 = vld [vmem:[#allocation2 + $0xf8] sm:$0xff]
      %v5388 = vld [vmem:[#allocation2 + $0x100] sm:$0xff]
      %s5389 = scalar_lea.vmem %s5, 16
      %v5390 = vld [vmem:[%s5389] sm:$0xff]
      %v5391 = vld [vmem:[%s5389 + $0x8] sm:$0xf]
      %v5393 = vsel %vm1406, %v5357, 0
      %v5396 = vsel %vm1406, %v5358, 0
      %v5399 = vsel %vm1406, %v5359, 0
      %v5402 = vsel %vm1406, %v5360, 0
      %v5405 = vsel %vm1406, %v5361, 0
      %v5408 = vsel %vm1406, %v5362, 0
      %v5411 = vsel %vm1406, %v5363, 0
      %v5414 = vsel %vm1406, %v5364, 0
      %v5417 = vsel %vm1406, %v5365, 0
      %v5420 = vsel %vm1406, %v5366, 0
      %v5423 = vsel %vm1406, %v5367, 0
      %v5426 = vsel %vm1406, %v5368, 0
      %v5429 = vsel %vm1406, %v5369, 0
      %v5432 = vsel %vm1406, %v5370, 0
      %v5435 = vsel %vm1406, %v5371, 0
      %v5438 = vsel %vm1406, %v5372, 0
      %v5441 = vsel %vm1406, %v5373, 0
      %v5444 = vsel %vm1406, %v5374, 0
      %v5447 = vsel %vm1406, %v5375, 0
      %v5450 = vsel %vm1406, %v5376, 0
      %v5453 = vsel %vm1406, %v5377, 0
      %v5456 = vsel %vm1406, %v5378, 0
      %v5459 = vsel %vm1406, %v5379, 0
      %v5462 = vsel %vm1406, %v5380, 0
      %v5465 = vsel %vm1406, %v5381, 0
      %v5468 = vsel %vm1406, %v5382, 0
      %v5471 = vsel %vm1406, %v5383, 0
      %v5474 = vsel %vm1406, %v5384, 0
      %v5477 = vsel %vm1406, %v5385, 0
      %v5480 = vsel %vm1406, %v5386, 0
      %v5483 = vsel %vm1406, %v5387, 0
      %v5486 = vsel %vm1406, %v5388, 0
      %v5489 = vsel %vm1674, %v5391, 0
      %5491 = vmatprep.subr.mxu0 0.0
      %5492 = vmatpush1.msra.mxu0 %v5390
      %5493 = vmatprep.subr.mxu0 0.0
      %5494 = vmatpush1.msra.mxu0 %v5489
      %5495 = vmatprep.subr.mxu0 0.0
      %5496 = vmatpush1.msra.mxu0 0.0
      %5497 = vmatprep.subr.mxu0 0.0
      %5498 = vmatpush1.msra.mxu0 0.0
      %5499 = vmatprep.subr.mxu0 0.0
      %5500 = vmatpush1.msra.mxu0 0.0
      %5501 = vmatprep.subr.mxu0 0.0
      %5502 = vmatpush1.msra.mxu0 0.0
      %5503 = vmatprep.subr.mxu0 0.0
      %5504 = vmatpush1.msra.mxu0 0.0
      %5505 = vmatprep.subr.mxu0 0.0
      %5506 = vmatpush1.msra.mxu0 0.0
      %5507 = vmatprep.subr.mxu0 0.0
      %5508 = vmatpush1.msra.mxu0 0.0
      %5509 = vmatprep.subr.mxu0 0.0
      %5510 = vmatpush1.msra.mxu0 0.0
      %5511 = vmatprep.subr.mxu0 0.0
      %5512 = vmatpush1.msra.mxu0 0.0
      %5513 = vmatprep.subr.mxu0 0.0
      %5514 = vmatpush1.msra.mxu0 0.0
      %5515 = vmatprep.subr.mxu0 0.0
      %5516 = vmatpush1.msra.mxu0 0.0
      %5517 = vmatprep.subr.mxu0 0.0
      %5518 = vmatpush1.msra.mxu0 0.0
      %5519 = vmatprep.subr.mxu0 0.0
      %5520 = vmatpush1.msra.mxu0 0.0
      %5521 = vmatprep.subr.mxu0 0.0
      %5522 = vmatpush1.msra.mxu0 0.0
      %5523 = vmatprep.subr.mxu0 0.0
      %5524 = vmatpush1.msra.mxu0 0.0
      %5525 = vmatprep.subr.mxu0 0.0
      %5526 = vmatpush1.msra.mxu0 0.0
      %5527 = vmatprep.subr.mxu0 0.0
      %5528 = vmatpush1.msra.mxu0 0.0
      %5529 = vmatprep.subr.mxu0 0.0
      %5530 = vmatpush1.msra.mxu0 0.0
      %5531 = vmatprep.subr.mxu0 0.0
      %5532 = vmatpush1.msra.mxu0 0.0
      %5533 = vmatprep.subr.mxu0 0.0
      %5534 = vmatpush1.msra.mxu0 0.0
      %5535 = vmatprep.subr.mxu0 0.0
      %5536 = vmatpush1.msra.mxu0 0.0
      %5537 = vmatprep.subr.mxu0 0.0
      %5538 = vmatpush1.msra.mxu0 0.0
      %5539 = vmatprep.subr.mxu0 0.0
      %5540 = vmatpush1.msra.mxu0 0.0
      %5541 = vmatprep.subr.mxu0 0.0
      %5542 = vmatpush1.msra.mxu0 0.0
      %5543 = vmatprep.subr.mxu0 0.0
      %5544 = vmatpush1.msra.mxu0 0.0
      %5545 = vmatprep.subr.mxu0 0.0
      %5546 = vmatpush1.msra.mxu0 0.0
      %5547 = vmatprep.subr.mxu0 0.0
      %5548 = vmatpush1.msra.mxu0 0.0
      %5549 = vmatprep.subr.mxu0 0.0
      %5550 = vmatpush1.msra.mxu0 0.0
      %5551 = vmatprep.subr.mxu0 0.0
      %5552 = vmatpush1.msra.mxu0 0.0
      %5553 = vmatprep.subr.mxu0 0.0
      %5554 = vmatpush1.msra.mxu0 0.0
      %5555 = vmatprep.mubr.f32.mxu0 0.0
      %5556 = vmatmul.mubr.f32.gmra.mrb[0].mxu0 %v5393
      %v5557 = vpop.f32.mrb[0].mxu0
      %v5558 = vadd.f32 0.0, %v5557
      %v5559 = vpop.f32.mrb[0].mxu0
      %5560 = vmatprep.mubr.f32.mxu0 0.0
      %5561 = vmatmul.mubr.f32.gmra.mrb[0].mxu0 %v5396
      %v5562 = vpop.f32.mrb[0].mxu0
      %v5563 = vadd.f32 0.0, %v5562
      %v5564 = vpop.f32.mrb[0].mxu0
      %5565 = vmatprep.mubr.f32.mxu0 0.0
      %5566 = vmatmul.mubr.f32.gmra.mrb[0].mxu0 %v5399
      %v5567 = vpop.f32.mrb[0].mxu0
      %v5568 = vadd.f32 0.0, %v5567
      %v5569 = vpop.f32.mrb[0].mxu0
      %5570 = vmatprep.mubr.f32.mxu0 0.0
      %5571 = vmatmul.mubr.f32.gmra.mrb[0].mxu0 %v5402
      %v5572 = vpop.f32.mrb[0].mxu0
      %v5573 = vadd.f32 0.0, %v5572
      %v5574 = vpop.f32.mrb[0].mxu0
      %5575 = vmatprep.mubr.f32.mxu0 0.0
      %5576 = vmatmul.mubr.f32.gmra.mrb[0].mxu0 %v5405
      %v5577 = vpop.f32.mrb[0].mxu0
      %v5578 = vadd.f32 0.0, %v5577
      %v5579 = vpop.f32.mrb[0].mxu0
      %5580 = vmatprep.mubr.f32.mxu0 0.0
      %5581 = vmatmul.mubr.f32.gmra.mrb[0].mxu0 %v5408
      %v5582 = vpop.f32.mrb[0].mxu0
      %v5583 = vadd.f32 0.0, %v5582
      %v5584 = vpop.f32.mrb[0].mxu0
      %5585 = vmatprep.mubr.f32.mxu0 0.0
      %5586 = vmatmul.mubr.f32.gmra.mrb[0].mxu0 %v5411
      %v5587 = vpop.f32.mrb[0].mxu0
      %v5588 = vadd.f32 0.0, %v5587
      %v5589 = vpop.f32.mrb[0].mxu0
      %5590 = vmatprep.mubr.f32.mxu0 0.0
      %5591 = vmatmul.mubr.f32.gmra.mrb[0].mxu0 %v5414
      %v5592 = vpop.f32.mrb[0].mxu0
      %v5593 = vadd.f32 0.0, %v5592
      %v5594 = vpop.f32.mrb[0].mxu0
      %5595 = vmatprep.mubr.f32.mxu0 0.0
      %5596 = vmatmul.mubr.f32.gmra.mrb[0].mxu0 %v5417
      %v5597 = vpop.f32.mrb[0].mxu0
      %v5598 = vadd.f32 0.0, %v5597
      %v5599 = vpop.f32.mrb[0].mxu0
      %5600 = vmatprep.mubr.f32.mxu0 0.0
      %5601 = vmatmul.mubr.f32.gmra.mrb[0].mxu0 %v5420
      %v5602 = vpop.f32.mrb[0].mxu0
      %v5603 = vadd.f32 0.0, %v5602
      %v5604 = vpop.f32.mrb[0].mxu0
      %5605 = vmatprep.mubr.f32.mxu0 0.0
      %5606 = vmatmul.mubr.f32.gmra.mrb[0].mxu0 %v5423
      %v5607 = vpop.f32.mrb[0].mxu0
      %v5608 = vadd.f32 0.0, %v5607
      %v5609 = vpop.f32.mrb[0].mxu0
      %5610 = vmatprep.mubr.f32.mxu0 0.0
      %5611 = vmatmul.mubr.f32.gmra.mrb[0].mxu0 %v5426
      %v5612 = vpop.f32.mrb[0].mxu0
      %v5613 = vadd.f32 0.0, %v5612
      %v5614 = vpop.f32.mrb[0].mxu0
      %5615 = vmatprep.mubr.f32.mxu0 0.0
      %5616 = vmatmul.mubr.f32.gmra.mrb[0].mxu0 %v5429
      %v5617 = vpop.f32.mrb[0].mxu0
      %v5618 = vadd.f32 0.0, %v5617
      %v5619 = vpop.f32.mrb[0].mxu0
      %5620 = vmatprep.mubr.f32.mxu0 0.0
      %5621 = vmatmul.mubr.f32.gmra.mrb[0].mxu0 %v5432
      %v5622 = vpop.f32.mrb[0].mxu0
      %v5623 = vadd.f32 0.0, %v5622
      %v5624 = vpop.f32.mrb[0].mxu0
      %5625 = vmatprep.mubr.f32.mxu0 0.0
      %5626 = vmatmul.mubr.f32.gmra.mrb[0].mxu0 %v5435
      %v5627 = vpop.f32.mrb[0].mxu0
      %v5628 = vadd.f32 0.0, %v5627
      %v5629 = vpop.f32.mrb[0].mxu0
      %5630 = vmatprep.mubr.f32.mxu0 0.0
      %5631 = vmatmul.mubr.f32.gmra.mrb[0].mxu0 %v5438
      %v5632 = vpop.f32.mrb[0].mxu0
      %v5633 = vadd.f32 0.0, %v5632
      %v5634 = vpop.f32.mrb[0].mxu0
      %5635 = vmatprep.mubr.f32.mxu0 0.0
      %5636 = vmatmul.mubr.f32.gmra.mrb[0].mxu0 %v5441
      %v5637 = vpop.f32.mrb[0].mxu0
      %v5638 = vadd.f32 0.0, %v5637
      %v5639 = vpop.f32.mrb[0].mxu0
      %5640 = vmatprep.mubr.f32.mxu0 0.0
      %5641 = vmatmul.mubr.f32.gmra.mrb[0].mxu0 %v5444
      %v5642 = vpop.f32.mrb[0].mxu0
      %v5643 = vadd.f32 0.0, %v5642
      %v5644 = vpop.f32.mrb[0].mxu0
      %5645 = vmatprep.mubr.f32.mxu0 0.0
      %5646 = vmatmul.mubr.f32.gmra.mrb[0].mxu0 %v5447
      %v5647 = vpop.f32.mrb[0].mxu0
      %v5648 = vadd.f32 0.0, %v5647
      %v5649 = vpop.f32.mrb[0].mxu0
      %5650 = vmatprep.mubr.f32.mxu0 0.0
      %5651 = vmatmul.mubr.f32.gmra.mrb[0].mxu0 %v5450
      %v5652 = vpop.f32.mrb[0].mxu0
      %v5653 = vadd.f32 0.0, %v5652
      %v5654 = vpop.f32.mrb[0].mxu0
      %5655 = vmatprep.mubr.f32.mxu0 0.0
      %5656 = vmatmul.mubr.f32.gmra.mrb[0].mxu0 %v5453
      %v5657 = vpop.f32.mrb[0].mxu0
      %v5658 = vadd.f32 0.0, %v5657
      %v5659 = vpop.f32.mrb[0].mxu0
      %5660 = vmatprep.mubr.f32.mxu0 0.0
      %5661 = vmatmul.mubr.f32.gmra.mrb[0].mxu0 %v5456
      %v5662 = vpop.f32.mrb[0].mxu0
      %v5663 = vadd.f32 0.0, %v5662
      %v5664 = vpop.f32.mrb[0].mxu0
      %5665 = vmatprep.mubr.f32.mxu0 0.0
      %5666 = vmatmul.mubr.f32.gmra.mrb[0].mxu0 %v5459
      %v5667 = vpop.f32.mrb[0].mxu0
      %v5668 = vadd.f32 0.0, %v5667
      %v5669 = vpop.f32.mrb[0].mxu0
      %5670 = vmatprep.mubr.f32.mxu0 0.0
      %5671 = vmatmul.mubr.f32.gmra.mrb[0].mxu0 %v5462
      %v5672 = vpop.f32.mrb[0].mxu0
      %v5673 = vadd.f32 0.0, %v5672
      %v5674 = vpop.f32.mrb[0].mxu0
      %5675 = vmatprep.mubr.f32.mxu0 0.0
      %5676 = vmatmul.mubr.f32.gmra.mrb[0].mxu0 %v5465
      %v5677 = vpop.f32.mrb[0].mxu0
      %v5678 = vadd.f32 0.0, %v5677
      %v5679 = vpop.f32.mrb[0].mxu0
      %5680 = vmatprep.mubr.f32.mxu0 0.0
      %5681 = vmatmul.mubr.f32.gmra.mrb[0].mxu0 %v5468
      %v5682 = vpop.f32.mrb[0].mxu0
      %v5683 = vadd.f32 0.0, %v5682
      %v5684 = vpop.f32.mrb[0].mxu0
      %5685 = vmatprep.mubr.f32.mxu0 0.0
      %5686 = vmatmul.mubr.f32.gmra.mrb[0].mxu0 %v5471
      %v5687 = vpop.f32.mrb[0].mxu0
      %v5688 = vadd.f32 0.0, %v5687
      %v5689 = vpop.f32.mrb[0].mxu0
      %5690 = vmatprep.mubr.f32.mxu0 0.0
      %5691 = vmatmul.mubr.f32.gmra.mrb[0].mxu0 %v5474
      %v5692 = vpop.f32.mrb[0].mxu0
      %v5693 = vadd.f32 0.0, %v5692
      %v5694 = vpop.f32.mrb[0].mxu0
      %5695 = vmatprep.mubr.f32.mxu0 0.0
      %5696 = vmatmul.mubr.f32.gmra.mrb[0].mxu0 %v5477
      %v5697 = vpop.f32.mrb[0].mxu0
      %v5698 = vadd.f32 0.0, %v5697
      %v5699 = vpop.f32.mrb[0].mxu0
      %5700 = vmatprep.mubr.f32.mxu0 0.0
      %5701 = vmatmul.mubr.f32.gmra.mrb[0].mxu0 %v5480
      %v5702 = vpop.f32.mrb[0].mxu0
      %v5703 = vadd.f32 0.0, %v5702
      %v5704 = vpop.f32.mrb[0].mxu0
      %5705 = vmatprep.mubr.f32.mxu0 0.0
      %5706 = vmatmul.mubr.f32.gmra.mrb[0].mxu0 %v5483
      %v5707 = vpop.f32.mrb[0].mxu0
      %v5708 = vadd.f32 0.0, %v5707
      %v5709 = vpop.f32.mrb[0].mxu0
      %5710 = vmatprep.mubr.f32.mxu0 0.0
      %5711 = vmatmul.mubr.f32.gmra.mrb[0].mxu0 %v5486
      %v5712 = vpop.f32.mrb[0].mxu0
      %v5713 = vadd.f32 0.0, %v5712
      %v5714 = vpop.f32.mrb[0].mxu0
      %5715 = vdwg.mxu0
      %v5717 = vsel %vm1406, %v5323, 0
      %v5720 = vsel %vm1406, %v5324, 0
      %v5723 = vsel %vm1406, %v5325, 0
      %v5726 = vsel %vm1406, %v5326, 0
      %v5729 = vsel %vm1406, %v5327, 0
      %v5732 = vsel %vm1406, %v5328, 0
      %v5735 = vsel %vm1406, %v5329, 0
      %v5738 = vsel %vm1406, %v5330, 0
      %v5741 = vsel %vm1406, %v5331, 0
      %v5744 = vsel %vm1406, %v5332, 0
      %v5747 = vsel %vm1406, %v5333, 0
      %v5750 = vsel %vm1406, %v5334, 0
      %v5753 = vsel %vm1406, %v5335, 0
      %v5756 = vsel %vm1406, %v5336, 0
      %v5759 = vsel %vm1406, %v5337, 0
      %v5762 = vsel %vm1406, %v5338, 0
      %v5765 = vsel %vm1406, %v5339, 0
      %v5768 = vsel %vm1406, %v5340, 0
      %v5771 = vsel %vm1406, %v5341, 0
      %v5774 = vsel %vm1406, %v5342, 0
      %v5777 = vsel %vm1406, %v5343, 0
      %v5780 = vsel %vm1406, %v5344, 0
      %v5783 = vsel %vm1406, %v5345, 0
      %v5786 = vsel %vm1406, %v5346, 0
      %v5789 = vsel %vm1406, %v5347, 0
      %v5792 = vsel %vm1406, %v5348, 0
      %v5795 = vsel %vm1406, %v5349, 0
      %v5798 = vsel %vm1406, %v5350, 0
      %v5801 = vsel %vm1406, %v5351, 0
      %v5804 = vsel %vm1406, %v5352, 0
      %v5807 = vsel %vm1406, %v5353, 0
      %v5810 = vsel %vm1406, %v5354, 0
      %v5813 = vsel %vm1674, %v5356, 0
      %5815 = vmatprep.subr.mxu0 0.0
      %5816 = vmatpush1.msra.mxu0 %v5355
      %5817 = vmatprep.subr.mxu0 0.0
      %5818 = vmatpush1.msra.mxu0 %v5813
      %5819 = vmatprep.subr.mxu0 0.0
      %5820 = vmatpush1.msra.mxu0 0.0
      %5821 = vmatprep.subr.mxu0 0.0
      %5822 = vmatpush1.msra.mxu0 0.0
      %5823 = vmatprep.subr.mxu0 0.0
      %5824 = vmatpush1.msra.mxu0 0.0
      %5825 = vmatprep.subr.mxu0 0.0
      %5826 = vmatpush1.msra.mxu0 0.0
      %5827 = vmatprep.subr.mxu0 0.0
      %5828 = vmatpush1.msra.mxu0 0.0
      %5829 = vmatprep.subr.mxu0 0.0
      %5830 = vmatpush1.msra.mxu0 0.0
      %5831 = vmatprep.subr.mxu0 0.0
      %5832 = vmatpush1.msra.mxu0 0.0
      %5833 = vmatprep.subr.mxu0 0.0
      %5834 = vmatpush1.msra.mxu0 0.0
      %5835 = vmatprep.subr.mxu0 0.0
      %5836 = vmatpush1.msra.mxu0 0.0
      %5837 = vmatprep.subr.mxu0 0.0
      %5838 = vmatpush1.msra.mxu0 0.0
      %5839 = vmatprep.subr.mxu0 0.0
      %5840 = vmatpush1.msra.mxu0 0.0
      %5841 = vmatprep.subr.mxu0 0.0
      %5842 = vmatpush1.msra.mxu0 0.0
      %5843 = vmatprep.subr.mxu0 0.0
      %5844 = vmatpush1.msra.mxu0 0.0
      %5845 = vmatprep.subr.mxu0 0.0
      %5846 = vmatpush1.msra.mxu0 0.0
      %5847 = vmatprep.subr.mxu0 0.0
      %5848 = vmatpush1.msra.mxu0 0.0
      %5849 = vmatprep.subr.mxu0 0.0
      %5850 = vmatpush1.msra.mxu0 0.0
      %5851 = vmatprep.subr.mxu0 0.0
      %5852 = vmatpush1.msra.mxu0 0.0
      %5853 = vmatprep.subr.mxu0 0.0
      %5854 = vmatpush1.msra.mxu0 0.0
      %5855 = vmatprep.subr.mxu0 0.0
      %5856 = vmatpush1.msra.mxu0 0.0
      %5857 = vmatprep.subr.mxu0 0.0
      %5858 = vmatpush1.msra.mxu0 0.0
      %5859 = vmatprep.subr.mxu0 0.0
      %5860 = vmatpush1.msra.mxu0 0.0
      %5861 = vmatprep.subr.mxu0 0.0
      %5862 = vmatpush1.msra.mxu0 0.0
      %5863 = vmatprep.subr.mxu0 0.0
      %5864 = vmatpush1.msra.mxu0 0.0
      %5865 = vmatprep.subr.mxu0 0.0
      %5866 = vmatpush1.msra.mxu0 0.0
      %5867 = vmatprep.subr.mxu0 0.0
      %5868 = vmatpush1.msra.mxu0 0.0
      %5869 = vmatprep.subr.mxu0 0.0
      %5870 = vmatpush1.msra.mxu0 0.0
      %5871 = vmatprep.subr.mxu0 0.0
      %5872 = vmatpush1.msra.mxu0 0.0
      %5873 = vmatprep.subr.mxu0 0.0
      %5874 = vmatpush1.msra.mxu0 0.0
      %5875 = vmatprep.subr.mxu0 0.0
      %5876 = vmatpush1.msra.mxu0 0.0
      %5877 = vmatprep.subr.mxu0 0.0
      %5878 = vmatpush1.msra.mxu0 0.0
      %5879 = vmatprep.mubr.f32.mxu0 0.0
      %5880 = vmatmul.mubr.f32.gmra.mrb[0].mxu0 %v5717
      %v5881 = vpop.f32.mrb[0].mxu0
      %v5882 = vadd.f32 %v5558, %v5881
      %v5883 = vpop.f32.mrb[0].mxu0
      %5884 = vmatprep.mubr.f32.mxu0 0.0
      %5885 = vmatmul.mubr.f32.gmra.mrb[0].mxu0 %v5720
      %v5886 = vpop.f32.mrb[0].mxu0
      %v5887 = vadd.f32 %v5563, %v5886
      %v5888 = vpop.f32.mrb[0].mxu0
      %5889 = vmatprep.mubr.f32.mxu0 0.0
      %5890 = vmatmul.mubr.f32.gmra.mrb[0].mxu0 %v5723
      %v5891 = vpop.f32.mrb[0].mxu0
      %v5892 = vadd.f32 %v5568, %v5891
      %v5893 = vpop.f32.mrb[0].mxu0
      %5894 = vmatprep.mubr.f32.mxu0 0.0
      %5895 = vmatmul.mubr.f32.gmra.mrb[0].mxu0 %v5726
      %v5896 = vpop.f32.mrb[0].mxu0
      %v5897 = vadd.f32 %v5573, %v5896
      %v5898 = vpop.f32.mrb[0].mxu0
      %5899 = vmatprep.mubr.f32.mxu0 0.0
      %5900 = vmatmul.mubr.f32.gmra.mrb[0].mxu0 %v5729
      %v5901 = vpop.f32.mrb[0].mxu0
      %v5902 = vadd.f32 %v5578, %v5901
      %v5903 = vpop.f32.mrb[0].mxu0
      %5904 = vmatprep.mubr.f32.mxu0 0.0
      %5905 = vmatmul.mubr.f32.gmra.mrb[0].mxu0 %v5732
      %v5906 = vpop.f32.mrb[0].mxu0
      %v5907 = vadd.f32 %v5583, %v5906
      %v5908 = vpop.f32.mrb[0].mxu0
      %5909 = vmatprep.mubr.f32.mxu0 0.0
      %5910 = vmatmul.mubr.f32.gmra.mrb[0].mxu0 %v5735
      %v5911 = vpop.f32.mrb[0].mxu0
      %v5912 = vadd.f32 %v5588, %v5911
      %v5913 = vpop.f32.mrb[0].mxu0
      %5914 = vmatprep.mubr.f32.mxu0 0.0
      %5915 = vmatmul.mubr.f32.gmra.mrb[0].mxu0 %v5738
      %v5916 = vpop.f32.mrb[0].mxu0
      %v5917 = vadd.f32 %v5593, %v5916
      %v5918 = vpop.f32.mrb[0].mxu0
      %5919 = vmatprep.mubr.f32.mxu0 0.0
      %5920 = vmatmul.mubr.f32.gmra.mrb[0].mxu0 %v5741
      %v5921 = vpop.f32.mrb[0].mxu0
      %v5922 = vadd.f32 %v5598, %v5921
      %v5923 = vpop.f32.mrb[0].mxu0
      %5924 = vmatprep.mubr.f32.mxu0 0.0
      %5925 = vmatmul.mubr.f32.gmra.mrb[0].mxu0 %v5744
      %v5926 = vpop.f32.mrb[0].mxu0
      %v5927 = vadd.f32 %v5603, %v5926
      %v5928 = vpop.f32.mrb[0].mxu0
      %5929 = vmatprep.mubr.f32.mxu0 0.0
      %5930 = vmatmul.mubr.f32.gmra.mrb[0].mxu0 %v5747
      %v5931 = vpop.f32.mrb[0].mxu0
      %v5932 = vadd.f32 %v5608, %v5931
      %v5933 = vpop.f32.mrb[0].mxu0
      %5934 = vmatprep.mubr.f32.mxu0 0.0
      %5935 = vmatmul.mubr.f32.gmra.mrb[0].mxu0 %v5750
      %v5936 = vpop.f32.mrb[0].mxu0
      %v5937 = vadd.f32 %v5613, %v5936
      %v5938 = vpop.f32.mrb[0].mxu0
      %5939 = vmatprep.mubr.f32.mxu0 0.0
      %5940 = vmatmul.mubr.f32.gmra.mrb[0].mxu0 %v5753
      %v5941 = vpop.f32.mrb[0].mxu0
      %v5942 = vadd.f32 %v5618, %v5941
      %v5943 = vpop.f32.mrb[0].mxu0
      %5944 = vmatprep.mubr.f32.mxu0 0.0
      %5945 = vmatmul.mubr.f32.gmra.mrb[0].mxu0 %v5756
      %v5946 = vpop.f32.mrb[0].mxu0
      %v5947 = vadd.f32 %v5623, %v5946
      %v5948 = vpop.f32.mrb[0].mxu0
      %5949 = vmatprep.mubr.f32.mxu0 0.0
      %5950 = vmatmul.mubr.f32.gmra.mrb[0].mxu0 %v5759
      %v5951 = vpop.f32.mrb[0].mxu0
      %v5952 = vadd.f32 %v5628, %v5951
      %v5953 = vpop.f32.mrb[0].mxu0
      %5954 = vmatprep.mubr.f32.mxu0 0.0
      %5955 = vmatmul.mubr.f32.gmra.mrb[0].mxu0 %v5762
      %v5956 = vpop.f32.mrb[0].mxu0
      %v5957 = vadd.f32 %v5633, %v5956
      %v5958 = vpop.f32.mrb[0].mxu0
      %5959 = vmatprep.mubr.f32.mxu0 0.0
      %5960 = vmatmul.mubr.f32.gmra.mrb[0].mxu0 %v5765
      %v5961 = vpop.f32.mrb[0].mxu0
      %v5962 = vadd.f32 %v5638, %v5961
      %v5963 = vpop.f32.mrb[0].mxu0
      %5964 = vmatprep.mubr.f32.mxu0 0.0
      %5965 = vmatmul.mubr.f32.gmra.mrb[0].mxu0 %v5768
      %v5966 = vpop.f32.mrb[0].mxu0
      %v5967 = vadd.f32 %v5643, %v5966
      %v5968 = vpop.f32.mrb[0].mxu0
      %5969 = vmatprep.mubr.f32.mxu0 0.0
      %5970 = vmatmul.mubr.f32.gmra.mrb[0].mxu0 %v5771
      %v5971 = vpop.f32.mrb[0].mxu0
      %v5972 = vadd.f32 %v5648, %v5971
      %v5973 = vpop.f32.mrb[0].mxu0
      %5974 = vmatprep.mubr.f32.mxu0 0.0
      %5975 = vmatmul.mubr.f32.gmra.mrb[0].mxu0 %v5774
      %v5976 = vpop.f32.mrb[0].mxu0
      %v5977 = vadd.f32 %v5653, %v5976
      %v5978 = vpop.f32.mrb[0].mxu0
      %5979 = vmatprep.mubr.f32.mxu0 0.0
      %5980 = vmatmul.mubr.f32.gmra.mrb[0].mxu0 %v5777
      %v5981 = vpop.f32.mrb[0].mxu0
      %v5982 = vadd.f32 %v5658, %v5981
      %v5983 = vpop.f32.mrb[0].mxu0
      %5984 = vmatprep.mubr.f32.mxu0 0.0
      %5985 = vmatmul.mubr.f32.gmra.mrb[0].mxu0 %v5780
      %v5986 = vpop.f32.mrb[0].mxu0
      %v5987 = vadd.f32 %v5663, %v5986
      %v5988 = vpop.f32.mrb[0].mxu0
      %5989 = vmatprep.mubr.f32.mxu0 0.0
      %5990 = vmatmul.mubr.f32.gmra.mrb[0].mxu0 %v5783
      %v5991 = vpop.f32.mrb[0].mxu0
      %v5992 = vadd.f32 %v5668, %v5991
      %v5993 = vpop.f32.mrb[0].mxu0
      %5994 = vmatprep.mubr.f32.mxu0 0.0
      %5995 = vmatmul.mubr.f32.gmra.mrb[0].mxu0 %v5786
      %v5996 = vpop.f32.mrb[0].mxu0
      %v5997 = vadd.f32 %v5673, %v5996
      %v5998 = vpop.f32.mrb[0].mxu0
      %5999 = vmatprep.mubr.f32.mxu0 0.0
      %6000 = vmatmul.mubr.f32.gmra.mrb[0].mxu0 %v5789
      %v6001 = vpop.f32.mrb[0].mxu0
      %v6002 = vadd.f32 %v5678, %v6001
      %v6003 = vpop.f32.mrb[0].mxu0
      %6004 = vmatprep.mubr.f32.mxu0 0.0
      %6005 = vmatmul.mubr.f32.gmra.mrb[0].mxu0 %v5792
      %v6006 = vpop.f32.mrb[0].mxu0
      %v6007 = vadd.f32 %v5683, %v6006
      %v6008 = vpop.f32.mrb[0].mxu0
      %6009 = vmatprep.mubr.f32.mxu0 0.0
      %6010 = vmatmul.mubr.f32.gmra.mrb[0].mxu0 %v5795
      %v6011 = vpop.f32.mrb[0].mxu0
      %v6012 = vadd.f32 %v5688, %v6011
      %v6013 = vpop.f32.mrb[0].mxu0
      %6014 = vmatprep.mubr.f32.mxu0 0.0
      %6015 = vmatmul.mubr.f32.gmra.mrb[0].mxu0 %v5798
      %v6016 = vpop.f32.mrb[0].mxu0
      %v6017 = vadd.f32 %v5693, %v6016
      %v6018 = vpop.f32.mrb[0].mxu0
      %6019 = vmatprep.mubr.f32.mxu0 0.0
      %6020 = vmatmul.mubr.f32.gmra.mrb[0].mxu0 %v5801
      %v6021 = vpop.f32.mrb[0].mxu0
      %v6022 = vadd.f32 %v5698, %v6021
      %v6023 = vpop.f32.mrb[0].mxu0
      %6024 = vmatprep.mubr.f32.mxu0 0.0
      %6025 = vmatmul.mubr.f32.gmra.mrb[0].mxu0 %v5804
      %v6026 = vpop.f32.mrb[0].mxu0
      %v6027 = vadd.f32 %v5703, %v6026
      %v6028 = vpop.f32.mrb[0].mxu0
      %6029 = vmatprep.mubr.f32.mxu0 0.0
      %6030 = vmatmul.mubr.f32.gmra.mrb[0].mxu0 %v5807
      %v6031 = vpop.f32.mrb[0].mxu0
      %v6032 = vadd.f32 %v5708, %v6031
      %v6033 = vpop.f32.mrb[0].mxu0
      %6034 = vmatprep.mubr.f32.mxu0 0.0
      %6035 = vmatmul.mubr.f32.gmra.mrb[0].mxu0 %v5810
      %v6036 = vpop.f32.mrb[0].mxu0
      %v6037 = vadd.f32 %v5713, %v6036
      %v6038 = vpop.f32.mrb[0].mxu0
      %6039 = vdwg.mxu0
      %v6040 = vld [vmem:[#allocation2 + $0x9] sm:$0xff]
      %v6041 = vld [vmem:[#allocation2 + $0x11] sm:$0xff]
      %v6042 = vld [vmem:[#allocation2 + $0x19] sm:$0xff]
      %v6043 = vld [vmem:[#allocation2 + $0x21] sm:$0xff]
      %v6044 = vld [vmem:[#allocation2 + $0x29] sm:$0xff]
      %v6045 = vld [vmem:[#allocation2 + $0x31] sm:$0xff]
      %v6046 = vld [vmem:[#allocation2 + $0x39] sm:$0xff]
      %v6047 = vld [vmem:[#allocation2 + $0x41] sm:$0xff]
      %v6048 = vld [vmem:[#allocation2 + $0x49] sm:$0xff]
      %v6049 = vld [vmem:[#allocation2 + $0x51] sm:$0xff]
      %v6050 = vld [vmem:[#allocation2 + $0x59] sm:$0xff]
      %v6051 = vld [vmem:[#allocation2 + $0x61] sm:$0xff]
      %v6052 = vld [vmem:[#allocation2 + $0x69] sm:$0xff]
      %v6053 = vld [vmem:[#allocation2 + $0x71] sm:$0xff]
      %v6054 = vld [vmem:[#allocation2 + $0x79] sm:$0xff]
      %v6055 = vld [vmem:[#allocation2 + $0x81] sm:$0xff]
      %v6056 = vld [vmem:[#allocation2 + $0x89] sm:$0xff]
      %v6057 = vld [vmem:[#allocation2 + $0x91] sm:$0xff]
      %v6058 = vld [vmem:[#allocation2 + $0x99] sm:$0xff]
      %v6059 = vld [vmem:[#allocation2 + $0xa1] sm:$0xff]
      %v6060 = vld [vmem:[#allocation2 + $0xa9] sm:$0xff]
      %v6061 = vld [vmem:[#allocation2 + $0xb1] sm:$0xff]
      %v6062 = vld [vmem:[#allocation2 + $0xb9] sm:$0xff]
      %v6063 = vld [vmem:[#allocation2 + $0xc1] sm:$0xff]
      %v6064 = vld [vmem:[#allocation2 + $0xc9] sm:$0xff]
      %v6065 = vld [vmem:[#allocation2 + $0xd1] sm:$0xff]
      %v6066 = vld [vmem:[#allocation2 + $0xd9] sm:$0xff]
      %v6067 = vld [vmem:[#allocation2 + $0xe1] sm:$0xff]
      %v6068 = vld [vmem:[#allocation2 + $0xe9] sm:$0xff]
      %v6069 = vld [vmem:[#allocation2 + $0xf1] sm:$0xff]
      %v6070 = vld [vmem:[#allocation2 + $0xf9] sm:$0xff]
      %v6071 = vld [vmem:[#allocation2 + $0x101] sm:$0xff]
      %v6072 = vmul.f32 %v6040, %v1374
      %v6073 = vmul.f32 %v6041, %v1375
      %v6074 = vmul.f32 %v6042, %v1376
      %v6075 = vmul.f32 %v6043, %v1377
      %v6076 = vmul.f32 %v6044, %v1378
      %v6077 = vmul.f32 %v6045, %v1379
      %v6078 = vmul.f32 %v6046, %v1380
      %v6079 = vmul.f32 %v6047, %v1381
      %v6080 = vmul.f32 %v6048, %v1382
      %v6081 = vmul.f32 %v6049, %v1383
      %v6082 = vmul.f32 %v6050, %v1384
      %v6083 = vmul.f32 %v6051, %v1385
      %v6084 = vmul.f32 %v6052, %v1386
      %v6085 = vmul.f32 %v6053, %v1387
      %v6086 = vmul.f32 %v6054, %v1388
      %v6087 = vmul.f32 %v6055, %v1389
      %v6088 = vmul.f32 %v6056, %v1390
      %v6089 = vmul.f32 %v6057, %v1391
      %v6090 = vmul.f32 %v6058, %v1392
      %v6091 = vmul.f32 %v6059, %v1393
      %v6092 = vmul.f32 %v6060, %v1394
      %v6093 = vmul.f32 %v6061, %v1395
      %v6094 = vmul.f32 %v6062, %v1396
      %v6095 = vmul.f32 %v6063, %v1397
      %v6096 = vmul.f32 %v6064, %v1398
      %v6097 = vmul.f32 %v6065, %v1399
      %v6098 = vmul.f32 %v6066, %v1400
      %v6099 = vmul.f32 %v6067, %v1401
      %v6100 = vmul.f32 %v6068, %v1402
      %v6101 = vmul.f32 %v6069, %v1403
      %v6102 = vmul.f32 %v6070, %v1404
      %v6103 = vmul.f32 %v6071, %v1405
      %s6104 = scalar_lea.vmem %s5, 32
      %v6105 = vld [vmem:[%s6104] sm:$0xff]
      %v6106 = vld [vmem:[%s6104 + $0x8] sm:$0xf]
      %v6108 = vsel %vm1406, %v6072, 0
      %v6111 = vsel %vm1406, %v6073, 0
      %v6114 = vsel %vm1406, %v6074, 0
      %v6117 = vsel %vm1406, %v6075, 0
      %v6120 = vsel %vm1406, %v6076, 0
      %v6123 = vsel %vm1406, %v6077, 0
      %v6126 = vsel %vm1406, %v6078, 0
      %v6129 = vsel %vm1406, %v6079, 0
      %v6132 = vsel %vm1406, %v6080, 0
      %v6135 = vsel %vm1406, %v6081, 0
      %v6138 = vsel %vm1406, %v6082, 0
      %v6141 = vsel %vm1406, %v6083, 0
      %v6144 = vsel %vm1406, %v6084, 0
      %v6147 = vsel %vm1406, %v6085, 0
      %v6150 = vsel %vm1406, %v6086, 0
      %v6153 = vsel %vm1406, %v6087, 0
      %v6156 = vsel %vm1406, %v6088, 0
      %v6159 = vsel %vm1406, %v6089, 0
      %v6162 = vsel %vm1406, %v6090, 0
      %v6165 = vsel %vm1406, %v6091, 0
      %v6168 = vsel %vm1406, %v6092, 0
      %v6171 = vsel %vm1406, %v6093, 0
      %v6174 = vsel %vm1406, %v6094, 0
      %v6177 = vsel %vm1406, %v6095, 0
      %v6180 = vsel %vm1406, %v6096, 0
      %v6183 = vsel %vm1406, %v6097, 0
      %v6186 = vsel %vm1406, %v6098, 0
      %v6189 = vsel %vm1406, %v6099, 0
      %v6192 = vsel %vm1406, %v6100, 0
      %v6195 = vsel %vm1406, %v6101, 0
      %v6198 = vsel %vm1406, %v6102, 0
      %v6201 = vsel %vm1406, %v6103, 0
      %v6204 = vsel %vm1674, %v6106, 0
      %6206 = vmatprep.subr.mxu0 0.0
      %6207 = vmatpush1.msra.mxu0 %v6105
      %6208 = vmatprep.subr.mxu0 0.0
      %6209 = vmatpush1.msra.mxu0 %v6204
      %6210 = vmatprep.subr.mxu0 0.0
      %6211 = vmatpush1.msra.mxu0 0.0
      %6212 = vmatprep.subr.mxu0 0.0
      %6213 = vmatpush1.msra.mxu0 0.0
      %6214 = vmatprep.subr.mxu0 0.0
      %6215 = vmatpush1.msra.mxu0 0.0
      %6216 = vmatprep.subr.mxu0 0.0
      %6217 = vmatpush1.msra.mxu0 0.0
      %6218 = vmatprep.subr.mxu0 0.0
      %6219 = vmatpush1.msra.mxu0 0.0
      %6220 = vmatprep.subr.mxu0 0.0
      %6221 = vmatpush1.msra.mxu0 0.0
      %6222 = vmatprep.subr.mxu0 0.0
      %6223 = vmatpush1.msra.mxu0 0.0
      %6224 = vmatprep.subr.mxu0 0.0
      %6225 = vmatpush1.msra.mxu0 0.0
      %6226 = vmatprep.subr.mxu0 0.0
      %6227 = vmatpush1.msra.mxu0 0.0
      %6228 = vmatprep.subr.mxu0 0.0
      %6229 = vmatpush1.msra.mxu0 0.0
      %6230 = vmatprep.subr.mxu0 0.0
      %6231 = vmatpush1.msra.mxu0 0.0
      %6232 = vmatprep.subr.mxu0 0.0
      %6233 = vmatpush1.msra.mxu0 0.0
      %6234 = vmatprep.subr.mxu0 0.0
      %6235 = vmatpush1.msra.mxu0 0.0
      %6236 = vmatprep.subr.mxu0 0.0
      %6237 = vmatpush1.msra.mxu0 0.0
      %6238 = vmatprep.subr.mxu0 0.0
      %6239 = vmatpush1.msra.mxu0 0.0
      %6240 = vmatprep.subr.mxu0 0.0
      %6241 = vmatpush1.msra.mxu0 0.0
      %6242 = vmatprep.subr.mxu0 0.0
      %6243 = vmatpush1.msra.mxu0 0.0
      %6244 = vmatprep.subr.mxu0 0.0
      %6245 = vmatpush1.msra.mxu0 0.0
      %6246 = vmatprep.subr.mxu0 0.0
      %6247 = vmatpush1.msra.mxu0 0.0
      %6248 = vmatprep.subr.mxu0 0.0
      %6249 = vmatpush1.msra.mxu0 0.0
      %6250 = vmatprep.subr.mxu0 0.0
      %6251 = vmatpush1.msra.mxu0 0.0
      %6252 = vmatprep.subr.mxu0 0.0
      %6253 = vmatpush1.msra.mxu0 0.0
      %6254 = vmatprep.subr.mxu0 0.0
      %6255 = vmatpush1.msra.mxu0 0.0
      %6256 = vmatprep.subr.mxu0 0.0
      %6257 = vmatpush1.msra.mxu0 0.0
      %6258 = vmatprep.subr.mxu0 0.0
      %6259 = vmatpush1.msra.mxu0 0.0
      %6260 = vmatprep.subr.mxu0 0.0
      %6261 = vmatpush1.msra.mxu0 0.0
      %6262 = vmatprep.subr.mxu0 0.0
      %6263 = vmatpush1.msra.mxu0 0.0
      %6264 = vmatprep.subr.mxu0 0.0
      %6265 = vmatpush1.msra.mxu0 0.0
      %6266 = vmatprep.subr.mxu0 0.0
      %6267 = vmatpush1.msra.mxu0 0.0
      %6268 = vmatprep.subr.mxu0 0.0
      %6269 = vmatpush1.msra.mxu0 0.0
      %6270 = vmatprep.mubr.f32.mxu0 0.0
      %6271 = vmatmul.mubr.f32.gmra.mrb[0].mxu0 %v6108
      %v6272 = vpop.f32.mrb[0].mxu0
      %v6273 = vadd.f32 0.0, %v6272
      %v6274 = vpop.f32.mrb[0].mxu0
      %6275 = vmatprep.mubr.f32.mxu0 0.0
      %6276 = vmatmul.mubr.f32.gmra.mrb[0].mxu0 %v6111
      %v6277 = vpop.f32.mrb[0].mxu0
      %v6278 = vadd.f32 0.0, %v6277
      %v6279 = vpop.f32.mrb[0].mxu0
      %6280 = vmatprep.mubr.f32.mxu0 0.0
      %6281 = vmatmul.mubr.f32.gmra.mrb[0].mxu0 %v6114
      %v6282 = vpop.f32.mrb[0].mxu0
      %v6283 = vadd.f32 0.0, %v6282
      %v6284 = vpop.f32.mrb[0].mxu0
      %6285 = vmatprep.mubr.f32.mxu0 0.0
      %6286 = vmatmul.mubr.f32.gmra.mrb[0].mxu0 %v6117
      %v6287 = vpop.f32.mrb[0].mxu0
      %v6288 = vadd.f32 0.0, %v6287
      %v6289 = vpop.f32.mrb[0].mxu0
      %6290 = vmatprep.mubr.f32.mxu0 0.0
      %6291 = vmatmul.mubr.f32.gmra.mrb[0].mxu0 %v6120
      %v6292 = vpop.f32.mrb[0].mxu0
      %v6293 = vadd.f32 0.0, %v6292
      %v6294 = vpop.f32.mrb[0].mxu0
      %6295 = vmatprep.mubr.f32.mxu0 0.0
      %6296 = vmatmul.mubr.f32.gmra.mrb[0].mxu0 %v6123
      %v6297 = vpop.f32.mrb[0].mxu0
      %v6298 = vadd.f32 0.0, %v6297
      %v6299 = vpop.f32.mrb[0].mxu0
      %6300 = vmatprep.mubr.f32.mxu0 0.0
      %6301 = vmatmul.mubr.f32.gmra.mrb[0].mxu0 %v6126
      %v6302 = vpop.f32.mrb[0].mxu0
      %v6303 = vadd.f32 0.0, %v6302
      %v6304 = vpop.f32.mrb[0].mxu0
      %6305 = vmatprep.mubr.f32.mxu0 0.0
      %6306 = vmatmul.mubr.f32.gmra.mrb[0].mxu0 %v6129
      %v6307 = vpop.f32.mrb[0].mxu0
      %v6308 = vadd.f32 0.0, %v6307
      %v6309 = vpop.f32.mrb[0].mxu0
      %6310 = vmatprep.mubr.f32.mxu0 0.0
      %6311 = vmatmul.mubr.f32.gmra.mrb[0].mxu0 %v6132
      %v6312 = vpop.f32.mrb[0].mxu0
      %v6313 = vadd.f32 0.0, %v6312
      %v6314 = vpop.f32.mrb[0].mxu0
      %6315 = vmatprep.mubr.f32.mxu0 0.0
      %6316 = vmatmul.mubr.f32.gmra.mrb[0].mxu0 %v6135
      %v6317 = vpop.f32.mrb[0].mxu0
      %v6318 = vadd.f32 0.0, %v6317
      %v6319 = vpop.f32.mrb[0].mxu0
      %6320 = vmatprep.mubr.f32.mxu0 0.0
      %6321 = vmatmul.mubr.f32.gmra.mrb[0].mxu0 %v6138
      %v6322 = vpop.f32.mrb[0].mxu0
      %v6323 = vadd.f32 0.0, %v6322
      %v6324 = vpop.f32.mrb[0].mxu0
      %6325 = vmatprep.mubr.f32.mxu0 0.0
      %6326 = vmatmul.mubr.f32.gmra.mrb[0].mxu0 %v6141
      %v6327 = vpop.f32.mrb[0].mxu0
      %v6328 = vadd.f32 0.0, %v6327
      %v6329 = vpop.f32.mrb[0].mxu0
      %6330 = vmatprep.mubr.f32.mxu0 0.0
      %6331 = vmatmul.mubr.f32.gmra.mrb[0].mxu0 %v6144
      %v6332 = vpop.f32.mrb[0].mxu0
      %v6333 = vadd.f32 0.0, %v6332
      %v6334 = vpop.f32.mrb[0].mxu0
      %6335 = vmatprep.mubr.f32.mxu0 0.0
      %6336 = vmatmul.mubr.f32.gmra.mrb[0].mxu0 %v6147
      %v6337 = vpop.f32.mrb[0].mxu0
      %v6338 = vadd.f32 0.0, %v6337
      %v6339 = vpop.f32.mrb[0].mxu0
      %6340 = vmatprep.mubr.f32.mxu0 0.0
      %6341 = vmatmul.mubr.f32.gmra.mrb[0].mxu0 %v6150
      %v6342 = vpop.f32.mrb[0].mxu0
      %v6343 = vadd.f32 0.0, %v6342
      %v6344 = vpop.f32.mrb[0].mxu0
      %6345 = vmatprep.mubr.f32.mxu0 0.0
      %6346 = vmatmul.mubr.f32.gmra.mrb[0].mxu0 %v6153
      %v6347 = vpop.f32.mrb[0].mxu0
      %v6348 = vadd.f32 0.0, %v6347
      %v6349 = vpop.f32.mrb[0].mxu0
      %6350 = vmatprep.mubr.f32.mxu0 0.0
      %6351 = vmatmul.mubr.f32.gmra.mrb[0].mxu0 %v6156
      %v6352 = vpop.f32.mrb[0].mxu0
      %v6353 = vadd.f32 0.0, %v6352
      %v6354 = vpop.f32.mrb[0].mxu0
      %6355 = vmatprep.mubr.f32.mxu0 0.0
      %6356 = vmatmul.mubr.f32.gmra.mrb[0].mxu0 %v6159
      %v6357 = vpop.f32.mrb[0].mxu0
      %v6358 = vadd.f32 0.0, %v6357
      %v6359 = vpop.f32.mrb[0].mxu0
      %6360 = vmatprep.mubr.f32.mxu0 0.0
      %6361 = vmatmul.mubr.f32.gmra.mrb[0].mxu0 %v6162
      %v6362 = vpop.f32.mrb[0].mxu0
      %v6363 = vadd.f32 0.0, %v6362
      %v6364 = vpop.f32.mrb[0].mxu0
      %6365 = vmatprep.mubr.f32.mxu0 0.0
      %6366 = vmatmul.mubr.f32.gmra.mrb[0].mxu0 %v6165
      %v6367 = vpop.f32.mrb[0].mxu0
      %v6368 = vadd.f32 0.0, %v6367
      %v6369 = vpop.f32.mrb[0].mxu0
      %6370 = vmatprep.mubr.f32.mxu0 0.0
      %6371 = vmatmul.mubr.f32.gmra.mrb[0].mxu0 %v6168
      %v6372 = vpop.f32.mrb[0].mxu0
      %v6373 = vadd.f32 0.0, %v6372
      %v6374 = vpop.f32.mrb[0].mxu0
      %6375 = vmatprep.mubr.f32.mxu0 0.0
      %6376 = vmatmul.mubr.f32.gmra.mrb[0].mxu0 %v6171
      %v6377 = vpop.f32.mrb[0].mxu0
      %v6378 = vadd.f32 0.0, %v6377
      %v6379 = vpop.f32.mrb[0].mxu0
      %6380 = vmatprep.mubr.f32.mxu0 0.0
      %6381 = vmatmul.mubr.f32.gmra.mrb[0].mxu0 %v6174
      %v6382 = vpop.f32.mrb[0].mxu0
      %v6383 = vadd.f32 0.0, %v6382
      %v6384 = vpop.f32.mrb[0].mxu0
      %6385 = vmatprep.mubr.f32.mxu0 0.0
      %6386 = vmatmul.mubr.f32.gmra.mrb[0].mxu0 %v6177
      %v6387 = vpop.f32.mrb[0].mxu0
      %v6388 = vadd.f32 0.0, %v6387
      %v6389 = vpop.f32.mrb[0].mxu0
      %6390 = vmatprep.mubr.f32.mxu0 0.0
      %6391 = vmatmul.mubr.f32.gmra.mrb[0].mxu0 %v6180
      %v6392 = vpop.f32.mrb[0].mxu0
      %v6393 = vadd.f32 0.0, %v6392
      %v6394 = vpop.f32.mrb[0].mxu0
      %6395 = vmatprep.mubr.f32.mxu0 0.0
      %6396 = vmatmul.mubr.f32.gmra.mrb[0].mxu0 %v6183
      %v6397 = vpop.f32.mrb[0].mxu0
      %v6398 = vadd.f32 0.0, %v6397
      %v6399 = vpop.f32.mrb[0].mxu0
      %6400 = vmatprep.mubr.f32.mxu0 0.0
      %6401 = vmatmul.mubr.f32.gmra.mrb[0].mxu0 %v6186
      %v6402 = vpop.f32.mrb[0].mxu0
      %v6403 = vadd.f32 0.0, %v6402
      %v6404 = vpop.f32.mrb[0].mxu0
      %6405 = vmatprep.mubr.f32.mxu0 0.0
      %6406 = vmatmul.mubr.f32.gmra.mrb[0].mxu0 %v6189
      %v6407 = vpop.f32.mrb[0].mxu0
      %v6408 = vadd.f32 0.0, %v6407
      %v6409 = vpop.f32.mrb[0].mxu0
      %6410 = vmatprep.mubr.f32.mxu0 0.0
      %6411 = vmatmul.mubr.f32.gmra.mrb[0].mxu0 %v6192
      %v6412 = vpop.f32.mrb[0].mxu0
      %v6413 = vadd.f32 0.0, %v6412
      %v6414 = vpop.f32.mrb[0].mxu0
      %6415 = vmatprep.mubr.f32.mxu0 0.0
      %6416 = vmatmul.mubr.f32.gmra.mrb[0].mxu0 %v6195
      %v6417 = vpop.f32.mrb[0].mxu0
      %v6418 = vadd.f32 0.0, %v6417
      %v6419 = vpop.f32.mrb[0].mxu0
      %6420 = vmatprep.mubr.f32.mxu0 0.0
      %6421 = vmatmul.mubr.f32.gmra.mrb[0].mxu0 %v6198
      %v6422 = vpop.f32.mrb[0].mxu0
      %v6423 = vadd.f32 0.0, %v6422
      %v6424 = vpop.f32.mrb[0].mxu0
      %6425 = vmatprep.mubr.f32.mxu0 0.0
      %6426 = vmatmul.mubr.f32.gmra.mrb[0].mxu0 %v6201
      %v6427 = vpop.f32.mrb[0].mxu0
      %v6428 = vadd.f32 0.0, %v6427
      %v6429 = vpop.f32.mrb[0].mxu0
      %6430 = vdwg.mxu0
      %v6431 = vadd.f32 %v5882, %v6273
      %v6432 = vadd.f32 %v5887, %v6278
      %v6433 = vadd.f32 %v5892, %v6283
      %v6434 = vadd.f32 %v5897, %v6288
      %v6435 = vadd.f32 %v5902, %v6293
      %v6436 = vadd.f32 %v5907, %v6298
      %v6437 = vadd.f32 %v5912, %v6303
      %v6438 = vadd.f32 %v5917, %v6308
      %v6439 = vadd.f32 %v5922, %v6313
      %v6440 = vadd.f32 %v5927, %v6318
      %v6441 = vadd.f32 %v5932, %v6323
      %v6442 = vadd.f32 %v5937, %v6328
      %v6443 = vadd.f32 %v5942, %v6333
      %v6444 = vadd.f32 %v5947, %v6338
      %v6445 = vadd.f32 %v5952, %v6343
      %v6446 = vadd.f32 %v5957, %v6348
      %v6447 = vadd.f32 %v5962, %v6353
      %v6448 = vadd.f32 %v5967, %v6358
      %v6449 = vadd.f32 %v5972, %v6363
      %v6450 = vadd.f32 %v5977, %v6368
      %v6451 = vadd.f32 %v5982, %v6373
      %v6452 = vadd.f32 %v5987, %v6378
      %v6453 = vadd.f32 %v5992, %v6383
      %v6454 = vadd.f32 %v5997, %v6388
      %v6455 = vadd.f32 %v6002, %v6393
      %v6456 = vadd.f32 %v6007, %v6398
      %v6457 = vadd.f32 %v6012, %v6403
      %v6458 = vadd.f32 %v6017, %v6408
      %v6459 = vadd.f32 %v6022, %v6413
      %v6460 = vadd.f32 %v6027, %v6418
      %v6461 = vadd.f32 %v6032, %v6423
      %v6462 = vadd.f32 %v6037, %v6428
      %v6463 = vld [vmem:[#allocation2 + $0x17] sm:$0xff]
      %v6464 = vld [vmem:[#allocation2 + $0x1f] sm:$0xff]
      %v6465 = vld [vmem:[#allocation2 + $0x27] sm:$0xff]
      %v6466 = vld [vmem:[#allocation2 + $0x2f] sm:$0xff]
      %v6467 = vld [vmem:[#allocation2 + $0x37] sm:$0xff]
      %v6468 = vld [vmem:[#allocation2 + $0x3f] sm:$0xff]
      %v6469 = vld [vmem:[#allocation2 + $0x47] sm:$0xff]
      %v6470 = vld [vmem:[#allocation2 + $0x4f] sm:$0xff]
      %v6471 = vld [vmem:[#allocation2 + $0x57] sm:$0xff]
      %v6472 = vld [vmem:[#allocation2 + $0x5f] sm:$0xff]
      %v6473 = vld [vmem:[#allocation2 + $0x67] sm:$0xff]
      %v6474 = vld [vmem:[#allocation2 + $0x6f] sm:$0xff]
      %v6475 = vld [vmem:[#allocation2 + $0x77] sm:$0xff]
      %v6476 = vld [vmem:[#allocation2 + $0x7f] sm:$0xff]
      %v6477 = vld [vmem:[#allocation2 + $0x87] sm:$0xff]
      %v6478 = vld [vmem:[#allocation2 + $0x8f] sm:$0xff]
      %v6479 = vld [vmem:[#allocation2 + $0x97] sm:$0xff]
      %v6480 = vld [vmem:[#allocation2 + $0x9f] sm:$0xff]
      %v6481 = vld [vmem:[#allocation2 + $0xa7] sm:$0xff]
      %v6482 = vld [vmem:[#allocation2 + $0xaf] sm:$0xff]
      %v6483 = vld [vmem:[#allocation2 + $0xb7] sm:$0xff]
      %v6484 = vld [vmem:[#allocation2 + $0xbf] sm:$0xff]
      %v6485 = vld [vmem:[#allocation2 + $0xc7] sm:$0xff]
      %v6486 = vld [vmem:[#allocation2 + $0xcf] sm:$0xff]
      %v6487 = vld [vmem:[#allocation2 + $0xd7] sm:$0xff]
      %v6488 = vld [vmem:[#allocation2 + $0xdf] sm:$0xff]
      %v6489 = vld [vmem:[#allocation2 + $0xe7] sm:$0xff]
      %v6490 = vld [vmem:[#allocation2 + $0xef] sm:$0xff]
      %v6491 = vld [vmem:[#allocation2 + $0xf7] sm:$0xff]
      %v6492 = vld [vmem:[#allocation2 + $0xff] sm:$0xff]
      %v6493 = vld [vmem:[#allocation2 + $0x107] sm:$0xff]
      %v6494 = vld [vmem:[#allocation2 + $0x10f] sm:$0xff]
      %v6495 = vmul.f32 %v6463, %v1278
      %v6496 = vmul.f32 %v6464, %v1279
      %v6497 = vmul.f32 %v6465, %v1280
      %v6498 = vmul.f32 %v6466, %v1281
      %v6499 = vmul.f32 %v6467, %v1282
      %v6500 = vmul.f32 %v6468, %v1283
      %v6501 = vmul.f32 %v6469, %v1284
      %v6502 = vmul.f32 %v6470, %v1285
      %v6503 = vmul.f32 %v6471, %v1286
      %v6504 = vmul.f32 %v6472, %v1287
      %v6505 = vmul.f32 %v6473, %v1288
      %v6506 = vmul.f32 %v6474, %v1289
      %v6507 = vmul.f32 %v6475, %v1290
      %v6508 = vmul.f32 %v6476, %v1291
      %v6509 = vmul.f32 %v6477, %v1292
      %v6510 = vmul.f32 %v6478, %v1293
      %v6511 = vmul.f32 %v6479, %v1294
      %v6512 = vmul.f32 %v6480, %v1295
      %v6513 = vmul.f32 %v6481, %v1296
      %v6514 = vmul.f32 %v6482, %v1297
      %v6515 = vmul.f32 %v6483, %v1298
      %v6516 = vmul.f32 %v6484, %v1299
      %v6517 = vmul.f32 %v6485, %v1300
      %v6518 = vmul.f32 %v6486, %v1301
      %v6519 = vmul.f32 %v6487, %v1302
      %v6520 = vmul.f32 %v6488, %v1303
      %v6521 = vmul.f32 %v6489, %v1304
      %v6522 = vmul.f32 %v6490, %v1305
      %v6523 = vmul.f32 %v6491, %v1306
      %v6524 = vmul.f32 %v6492, %v1307
      %v6525 = vmul.f32 %v6493, %v1308
      %v6526 = vmul.f32 %v6494, %v1309
      %s6527 = scalar_lea.vmem %s5, 48
      %v6528 = vld [vmem:[%s6527] sm:$0xff]
      %v6529 = vld [vmem:[%s6527 + $0x8] sm:$0xf]
      %v6531 = vsel %vm1406, %v6495, 0
      %v6534 = vsel %vm1406, %v6496, 0
      %v6537 = vsel %vm1406, %v6497, 0
      %v6540 = vsel %vm1406, %v6498, 0
      %v6543 = vsel %vm1406, %v6499, 0
      %v6546 = vsel %vm1406, %v6500, 0
      %v6549 = vsel %vm1406, %v6501, 0
      %v6552 = vsel %vm1406, %v6502, 0
      %v6555 = vsel %vm1406, %v6503, 0
      %v6558 = vsel %vm1406, %v6504, 0
      %v6561 = vsel %vm1406, %v6505, 0
      %v6564 = vsel %vm1406, %v6506, 0
      %v6567 = vsel %vm1406, %v6507, 0
      %v6570 = vsel %vm1406, %v6508, 0
      %v6573 = vsel %vm1406, %v6509, 0
      %v6576 = vsel %vm1406, %v6510, 0
      %v6579 = vsel %vm1406, %v6511, 0
      %v6582 = vsel %vm1406, %v6512, 0
      %v6585 = vsel %vm1406, %v6513, 0
      %v6588 = vsel %vm1406, %v6514, 0
      %v6591 = vsel %vm1406, %v6515, 0
      %v6594 = vsel %vm1406, %v6516, 0
      %v6597 = vsel %vm1406, %v6517, 0
      %v6600 = vsel %vm1406, %v6518, 0
      %v6603 = vsel %vm1406, %v6519, 0
      %v6606 = vsel %vm1406, %v6520, 0
      %v6609 = vsel %vm1406, %v6521, 0
      %v6612 = vsel %vm1406, %v6522, 0
      %v6615 = vsel %vm1406, %v6523, 0
      %v6618 = vsel %vm1406, %v6524, 0
      %v6621 = vsel %vm1406, %v6525, 0
      %v6624 = vsel %vm1406, %v6526, 0
      %v6627 = vsel %vm1674, %v6529, 0
      %6629 = vmatprep.subr.mxu0 0.0
      %6630 = vmatpush1.msra.mxu0 %v6528
      %6631 = vmatprep.subr.mxu0 0.0
      %6632 = vmatpush1.msra.mxu0 %v6627
      %6633 = vmatprep.subr.mxu0 0.0
      %6634 = vmatpush1.msra.mxu0 0.0
      %6635 = vmatprep.subr.mxu0 0.0
      %6636 = vmatpush1.msra.mxu0 0.0
      %6637 = vmatprep.subr.mxu0 0.0
      %6638 = vmatpush1.msra.mxu0 0.0
      %6639 = vmatprep.subr.mxu0 0.0
      %6640 = vmatpush1.msra.mxu0 0.0
      %6641 = vmatprep.subr.mxu0 0.0
      %6642 = vmatpush1.msra.mxu0 0.0
      %6643 = vmatprep.subr.mxu0 0.0
      %6644 = vmatpush1.msra.mxu0 0.0
      %6645 = vmatprep.subr.mxu0 0.0
      %6646 = vmatpush1.msra.mxu0 0.0
      %6647 = vmatprep.subr.mxu0 0.0
      %6648 = vmatpush1.msra.mxu0 0.0
      %6649 = vmatprep.subr.mxu0 0.0
      %6650 = vmatpush1.msra.mxu0 0.0
      %6651 = vmatprep.subr.mxu0 0.0
      %6652 = vmatpush1.msra.mxu0 0.0
      %6653 = vmatprep.subr.mxu0 0.0
      %6654 = vmatpush1.msra.mxu0 0.0
      %6655 = vmatprep.subr.mxu0 0.0
      %6656 = vmatpush1.msra.mxu0 0.0
      %6657 = vmatprep.subr.mxu0 0.0
      %6658 = vmatpush1.msra.mxu0 0.0
      %6659 = vmatprep.subr.mxu0 0.0
      %6660 = vmatpush1.msra.mxu0 0.0
      %6661 = vmatprep.subr.mxu0 0.0
      %6662 = vmatpush1.msra.mxu0 0.0
      %6663 = vmatprep.subr.mxu0 0.0
      %6664 = vmatpush1.msra.mxu0 0.0
      %6665 = vmatprep.subr.mxu0 0.0
      %6666 = vmatpush1.msra.mxu0 0.0
      %6667 = vmatprep.subr.mxu0 0.0
      %6668 = vmatpush1.msra.mxu0 0.0
      %6669 = vmatprep.subr.mxu0 0.0
      %6670 = vmatpush1.msra.mxu0 0.0
      %6671 = vmatprep.subr.mxu0 0.0
      %6672 = vmatpush1.msra.mxu0 0.0
      %6673 = vmatprep.subr.mxu0 0.0
      %6674 = vmatpush1.msra.mxu0 0.0
      %6675 = vmatprep.subr.mxu0 0.0
      %6676 = vmatpush1.msra.mxu0 0.0
      %6677 = vmatprep.subr.mxu0 0.0
      %6678 = vmatpush1.msra.mxu0 0.0
      %6679 = vmatprep.subr.mxu0 0.0
      %6680 = vmatpush1.msra.mxu0 0.0
      %6681 = vmatprep.subr.mxu0 0.0
      %6682 = vmatpush1.msra.mxu0 0.0
      %6683 = vmatprep.subr.mxu0 0.0
      %6684 = vmatpush1.msra.mxu0 0.0
      %6685 = vmatprep.subr.mxu0 0.0
      %6686 = vmatpush1.msra.mxu0 0.0
      %6687 = vmatprep.subr.mxu0 0.0
      %6688 = vmatpush1.msra.mxu0 0.0
      %6689 = vmatprep.subr.mxu0 0.0
      %6690 = vmatpush1.msra.mxu0 0.0
      %6691 = vmatprep.subr.mxu0 0.0
      %6692 = vmatpush1.msra.mxu0 0.0
      %6693 = vmatprep.mubr.f32.mxu0 0.0
      %6694 = vmatmul.mubr.f32.gmra.mrb[0].mxu0 %v6531
      %v6695 = vpop.f32.mrb[0].mxu0
      %v6696 = vadd.f32 0.0, %v6695
      %v6697 = vpop.f32.mrb[0].mxu0
      %6698 = vmatprep.mubr.f32.mxu0 0.0
      %6699 = vmatmul.mubr.f32.gmra.mrb[0].mxu0 %v6534
      %v6700 = vpop.f32.mrb[0].mxu0
      %v6701 = vadd.f32 0.0, %v6700
      %v6702 = vpop.f32.mrb[0].mxu0
      %6703 = vmatprep.mubr.f32.mxu0 0.0
      %6704 = vmatmul.mubr.f32.gmra.mrb[0].mxu0 %v6537
      %v6705 = vpop.f32.mrb[0].mxu0
      %v6706 = vadd.f32 0.0, %v6705
      %v6707 = vpop.f32.mrb[0].mxu0
      %6708 = vmatprep.mubr.f32.mxu0 0.0
      %6709 = vmatmul.mubr.f32.gmra.mrb[0].mxu0 %v6540
      %v6710 = vpop.f32.mrb[0].mxu0
      %v6711 = vadd.f32 0.0, %v6710
      %v6712 = vpop.f32.mrb[0].mxu0
      %6713 = vmatprep.mubr.f32.mxu0 0.0
      %6714 = vmatmul.mubr.f32.gmra.mrb[0].mxu0 %v6543
      %v6715 = vpop.f32.mrb[0].mxu0
      %v6716 = vadd.f32 0.0, %v6715
      %v6717 = vpop.f32.mrb[0].mxu0
      %6718 = vmatprep.mubr.f32.mxu0 0.0
      %6719 = vmatmul.mubr.f32.gmra.mrb[0].mxu0 %v6546
      %v6720 = vpop.f32.mrb[0].mxu0
      %v6721 = vadd.f32 0.0, %v6720
      %v6722 = vpop.f32.mrb[0].mxu0
      %6723 = vmatprep.mubr.f32.mxu0 0.0
      %6724 = vmatmul.mubr.f32.gmra.mrb[0].mxu0 %v6549
      %v6725 = vpop.f32.mrb[0].mxu0
      %v6726 = vadd.f32 0.0, %v6725
      %v6727 = vpop.f32.mrb[0].mxu0
      %6728 = vmatprep.mubr.f32.mxu0 0.0
      %6729 = vmatmul.mubr.f32.gmra.mrb[0].mxu0 %v6552
      %v6730 = vpop.f32.mrb[0].mxu0
      %v6731 = vadd.f32 0.0, %v6730
      %v6732 = vpop.f32.mrb[0].mxu0
      %6733 = vmatprep.mubr.f32.mxu0 0.0
      %6734 = vmatmul.mubr.f32.gmra.mrb[0].mxu0 %v6555
      %v6735 = vpop.f32.mrb[0].mxu0
      %v6736 = vadd.f32 0.0, %v6735
      %v6737 = vpop.f32.mrb[0].mxu0
      %6738 = vmatprep.mubr.f32.mxu0 0.0
      %6739 = vmatmul.mubr.f32.gmra.mrb[0].mxu0 %v6558
      %v6740 = vpop.f32.mrb[0].mxu0
      %v6741 = vadd.f32 0.0, %v6740
      %v6742 = vpop.f32.mrb[0].mxu0
      %6743 = vmatprep.mubr.f32.mxu0 0.0
      %6744 = vmatmul.mubr.f32.gmra.mrb[0].mxu0 %v6561
      %v6745 = vpop.f32.mrb[0].mxu0
      %v6746 = vadd.f32 0.0, %v6745
      %v6747 = vpop.f32.mrb[0].mxu0
      %6748 = vmatprep.mubr.f32.mxu0 0.0
      %6749 = vmatmul.mubr.f32.gmra.mrb[0].mxu0 %v6564
      %v6750 = vpop.f32.mrb[0].mxu0
      %v6751 = vadd.f32 0.0, %v6750
      %v6752 = vpop.f32.mrb[0].mxu0
      %6753 = vmatprep.mubr.f32.mxu0 0.0
      %6754 = vmatmul.mubr.f32.gmra.mrb[0].mxu0 %v6567
      %v6755 = vpop.f32.mrb[0].mxu0
      %v6756 = vadd.f32 0.0, %v6755
      %v6757 = vpop.f32.mrb[0].mxu0
      %6758 = vmatprep.mubr.f32.mxu0 0.0
      %6759 = vmatmul.mubr.f32.gmra.mrb[0].mxu0 %v6570
      %v6760 = vpop.f32.mrb[0].mxu0
      %v6761 = vadd.f32 0.0, %v6760
      %v6762 = vpop.f32.mrb[0].mxu0
      %6763 = vmatprep.mubr.f32.mxu0 0.0
      %6764 = vmatmul.mubr.f32.gmra.mrb[0].mxu0 %v6573
      %v6765 = vpop.f32.mrb[0].mxu0
      %v6766 = vadd.f32 0.0, %v6765
      %v6767 = vpop.f32.mrb[0].mxu0
      %6768 = vmatprep.mubr.f32.mxu0 0.0
      %6769 = vmatmul.mubr.f32.gmra.mrb[0].mxu0 %v6576
      %v6770 = vpop.f32.mrb[0].mxu0
      %v6771 = vadd.f32 0.0, %v6770
      %v6772 = vpop.f32.mrb[0].mxu0
      %6773 = vmatprep.mubr.f32.mxu0 0.0
      %6774 = vmatmul.mubr.f32.gmra.mrb[0].mxu0 %v6579
      %v6775 = vpop.f32.mrb[0].mxu0
      %v6776 = vadd.f32 0.0, %v6775
      %v6777 = vpop.f32.mrb[0].mxu0
      %6778 = vmatprep.mubr.f32.mxu0 0.0
      %6779 = vmatmul.mubr.f32.gmra.mrb[0].mxu0 %v6582
      %v6780 = vpop.f32.mrb[0].mxu0
      %v6781 = vadd.f32 0.0, %v6780
      %v6782 = vpop.f32.mrb[0].mxu0
      %6783 = vmatprep.mubr.f32.mxu0 0.0
      %6784 = vmatmul.mubr.f32.gmra.mrb[0].mxu0 %v6585
      %v6785 = vpop.f32.mrb[0].mxu0
      %v6786 = vadd.f32 0.0, %v6785
      %v6787 = vpop.f32.mrb[0].mxu0
      %6788 = vmatprep.mubr.f32.mxu0 0.0
      %6789 = vmatmul.mubr.f32.gmra.mrb[0].mxu0 %v6588
      %v6790 = vpop.f32.mrb[0].mxu0
      %v6791 = vadd.f32 0.0, %v6790
      %v6792 = vpop.f32.mrb[0].mxu0
      %6793 = vmatprep.mubr.f32.mxu0 0.0
      %6794 = vmatmul.mubr.f32.gmra.mrb[0].mxu0 %v6591
      %v6795 = vpop.f32.mrb[0].mxu0
      %v6796 = vadd.f32 0.0, %v6795
      %v6797 = vpop.f32.mrb[0].mxu0
      %6798 = vmatprep.mubr.f32.mxu0 0.0
      %6799 = vmatmul.mubr.f32.gmra.mrb[0].mxu0 %v6594
      %v6800 = vpop.f32.mrb[0].mxu0
      %v6801 = vadd.f32 0.0, %v6800
      %v6802 = vpop.f32.mrb[0].mxu0
      %6803 = vmatprep.mubr.f32.mxu0 0.0
      %6804 = vmatmul.mubr.f32.gmra.mrb[0].mxu0 %v6597
      %v6805 = vpop.f32.mrb[0].mxu0
      %v6806 = vadd.f32 0.0, %v6805
      %v6807 = vpop.f32.mrb[0].mxu0
      %6808 = vmatprep.mubr.f32.mxu0 0.0
      %6809 = vmatmul.mubr.f32.gmra.mrb[0].mxu0 %v6600
      %v6810 = vpop.f32.mrb[0].mxu0
      %v6811 = vadd.f32 0.0, %v6810
      %v6812 = vpop.f32.mrb[0].mxu0
      %6813 = vmatprep.mubr.f32.mxu0 0.0
      %6814 = vmatmul.mubr.f32.gmra.mrb[0].mxu0 %v6603
      %v6815 = vpop.f32.mrb[0].mxu0
      %v6816 = vadd.f32 0.0, %v6815
      %v6817 = vpop.f32.mrb[0].mxu0
      %6818 = vmatprep.mubr.f32.mxu0 0.0
      %6819 = vmatmul.mubr.f32.gmra.mrb[0].mxu0 %v6606
      %v6820 = vpop.f32.mrb[0].mxu0
      %v6821 = vadd.f32 0.0, %v6820
      %v6822 = vpop.f32.mrb[0].mxu0
      %6823 = vmatprep.mubr.f32.mxu0 0.0
      %6824 = vmatmul.mubr.f32.gmra.mrb[0].mxu0 %v6609
      %v6825 = vpop.f32.mrb[0].mxu0
      %v6826 = vadd.f32 0.0, %v6825
      %v6827 = vpop.f32.mrb[0].mxu0
      %6828 = vmatprep.mubr.f32.mxu0 0.0
      %6829 = vmatmul.mubr.f32.gmra.mrb[0].mxu0 %v6612
      %v6830 = vpop.f32.mrb[0].mxu0
      %v6831 = vadd.f32 0.0, %v6830
      %v6832 = vpop.f32.mrb[0].mxu0
      %6833 = vmatprep.mubr.f32.mxu0 0.0
      %6834 = vmatmul.mubr.f32.gmra.mrb[0].mxu0 %v6615
      %v6835 = vpop.f32.mrb[0].mxu0
      %v6836 = vadd.f32 0.0, %v6835
      %v6837 = vpop.f32.mrb[0].mxu0
      %6838 = vmatprep.mubr.f32.mxu0 0.0
      %6839 = vmatmul.mubr.f32.gmra.mrb[0].mxu0 %v6618
      %v6840 = vpop.f32.mrb[0].mxu0
      %v6841 = vadd.f32 0.0, %v6840
      %v6842 = vpop.f32.mrb[0].mxu0
      %6843 = vmatprep.mubr.f32.mxu0 0.0
      %6844 = vmatmul.mubr.f32.gmra.mrb[0].mxu0 %v6621
      %v6845 = vpop.f32.mrb[0].mxu0
      %v6846 = vadd.f32 0.0, %v6845
      %v6847 = vpop.f32.mrb[0].mxu0
      %6848 = vmatprep.mubr.f32.mxu0 0.0
      %6849 = vmatmul.mubr.f32.gmra.mrb[0].mxu0 %v6624
      %v6850 = vpop.f32.mrb[0].mxu0
      %v6851 = vadd.f32 0.0, %v6850
      %v6852 = vpop.f32.mrb[0].mxu0
      %6853 = vdwg.mxu0
      %v6854 = vadd.f32 %v6431, %v6696
      %v6855 = vadd.f32 %v6432, %v6701
      %v6856 = vadd.f32 %v6433, %v6706
      %v6857 = vadd.f32 %v6434, %v6711
      %v6858 = vadd.f32 %v6435, %v6716
      %v6859 = vadd.f32 %v6436, %v6721
      %v6860 = vadd.f32 %v6437, %v6726
      %v6861 = vadd.f32 %v6438, %v6731
      %v6862 = vadd.f32 %v6439, %v6736
      %v6863 = vadd.f32 %v6440, %v6741
      %v6864 = vadd.f32 %v6441, %v6746
      %v6865 = vadd.f32 %v6442, %v6751
      %v6866 = vadd.f32 %v6443, %v6756
      %v6867 = vadd.f32 %v6444, %v6761
      %v6868 = vadd.f32 %v6445, %v6766
      %v6869 = vadd.f32 %v6446, %v6771
      %v6870 = vadd.f32 %v6447, %v6776
      %v6871 = vadd.f32 %v6448, %v6781
      %v6872 = vadd.f32 %v6449, %v6786
      %v6873 = vadd.f32 %v6450, %v6791
      %v6874 = vadd.f32 %v6451, %v6796
      %v6875 = vadd.f32 %v6452, %v6801
      %v6876 = vadd.f32 %v6453, %v6806
      %v6877 = vadd.f32 %v6454, %v6811
      %v6878 = vadd.f32 %v6455, %v6816
      %v6879 = vadd.f32 %v6456, %v6821
      %v6880 = vadd.f32 %v6457, %v6826
      %v6881 = vadd.f32 %v6458, %v6831
      %v6882 = vadd.f32 %v6459, %v6836
      %v6883 = vadd.f32 %v6460, %v6841
      %v6884 = vadd.f32 %v6461, %v6846
      %v6885 = vadd.f32 %v6462, %v6851
      %v6886 = vld [vmem:[#allocation2 + $0x18] sm:$0xff]
      %v6887 = vld [vmem:[#allocation2 + $0x20] sm:$0xff]
      %v6888 = vld [vmem:[#allocation2 + $0x28] sm:$0xff]
      %v6889 = vld [vmem:[#allocation2 + $0x30] sm:$0xff]
      %v6890 = vld [vmem:[#allocation2 + $0x38] sm:$0xff]
      %v6891 = vld [vmem:[#allocation2 + $0x40] sm:$0xff]
      %v6892 = vld [vmem:[#allocation2 + $0x48] sm:$0xff]
      %v6893 = vld [vmem:[#allocation2 + $0x50] sm:$0xff]
      %v6894 = vld [vmem:[#allocation2 + $0x58] sm:$0xff]
      %v6895 = vld [vmem:[#allocation2 + $0x60] sm:$0xff]
      %v6896 = vld [vmem:[#allocation2 + $0x68] sm:$0xff]
      %v6897 = vld [vmem:[#allocation2 + $0x70] sm:$0xff]
      %v6898 = vld [vmem:[#allocation2 + $0x78] sm:$0xff]
      %v6899 = vld [vmem:[#allocation2 + $0x80] sm:$0xff]
      %v6900 = vld [vmem:[#allocation2 + $0x88] sm:$0xff]
      %v6901 = vld [vmem:[#allocation2 + $0x90] sm:$0xff]
      %v6902 = vld [vmem:[#allocation2 + $0x98] sm:$0xff]
      %v6903 = vld [vmem:[#allocation2 + $0xa0] sm:$0xff]
      %v6904 = vld [vmem:[#allocation2 + $0xa8] sm:$0xff]
      %v6905 = vld [vmem:[#allocation2 + $0xb0] sm:$0xff]
      %v6906 = vld [vmem:[#allocation2 + $0xb8] sm:$0xff]
      %v6907 = vld [vmem:[#allocation2 + $0xc0] sm:$0xff]
      %v6908 = vld [vmem:[#allocation2 + $0xc8] sm:$0xff]
      %v6909 = vld [vmem:[#allocation2 + $0xd0] sm:$0xff]
      %v6910 = vld [vmem:[#allocation2 + $0xd8] sm:$0xff]
      %v6911 = vld [vmem:[#allocation2 + $0xe0] sm:$0xff]
      %v6912 = vld [vmem:[#allocation2 + $0xe8] sm:$0xff]
      %v6913 = vld [vmem:[#allocation2 + $0xf0] sm:$0xff]
      %v6914 = vld [vmem:[#allocation2 + $0xf8] sm:$0xff]
      %v6915 = vld [vmem:[#allocation2 + $0x100] sm:$0xff]
      %v6916 = vld [vmem:[#allocation2 + $0x108] sm:$0xff]
      %v6917 = vld [vmem:[#allocation2 + $0x110] sm:$0xff]
      %s6918 = scalar_lea.vmem %s5, 64
      %v6919 = vld [vmem:[%s6918] sm:$0xff]
      %v6920 = vld [vmem:[%s6918 + $0x8] sm:$0xf]
      %v6922 = vsel %vm1406, %v6886, 0
      %v6925 = vsel %vm1406, %v6887, 0
      %v6928 = vsel %vm1406, %v6888, 0
      %v6931 = vsel %vm1406, %v6889, 0
      %v6934 = vsel %vm1406, %v6890, 0
      %v6937 = vsel %vm1406, %v6891, 0
      %v6940 = vsel %vm1406, %v6892, 0
      %v6943 = vsel %vm1406, %v6893, 0
      %v6946 = vsel %vm1406, %v6894, 0
      %v6949 = vsel %vm1406, %v6895, 0
      %v6952 = vsel %vm1406, %v6896, 0
      %v6955 = vsel %vm1406, %v6897, 0
      %v6958 = vsel %vm1406, %v6898, 0
      %v6961 = vsel %vm1406, %v6899, 0
      %v6964 = vsel %vm1406, %v6900, 0
      %v6967 = vsel %vm1406, %v6901, 0
      %v6970 = vsel %vm1406, %v6902, 0
      %v6973 = vsel %vm1406, %v6903, 0
      %v6976 = vsel %vm1406, %v6904, 0
      %v6979 = vsel %vm1406, %v6905, 0
      %v6982 = vsel %vm1406, %v6906, 0
      %v6985 = vsel %vm1406, %v6907, 0
      %v6988 = vsel %vm1406, %v6908, 0
      %v6991 = vsel %vm1406, %v6909, 0
      %v6994 = vsel %vm1406, %v6910, 0
      %v6997 = vsel %vm1406, %v6911, 0
      %v7000 = vsel %vm1406, %v6912, 0
      %v7003 = vsel %vm1406, %v6913, 0
      %v7006 = vsel %vm1406, %v6914, 0
      %v7009 = vsel %vm1406, %v6915, 0
      %v7012 = vsel %vm1406, %v6916, 0
      %v7015 = vsel %vm1406, %v6917, 0
      %v7018 = vsel %vm1674, %v6920, 0
      %7020 = vmatprep.subr.mxu0 0.0
      %7021 = vmatpush1.msra.mxu0 %v6919
      %7022 = vmatprep.subr.mxu0 0.0
      %7023 = vmatpush1.msra.mxu0 %v7018
      %7024 = vmatprep.subr.mxu0 0.0
      %7025 = vmatpush1.msra.mxu0 0.0
      %7026 = vmatprep.subr.mxu0 0.0
      %7027 = vmatpush1.msra.mxu0 0.0
      %7028 = vmatprep.subr.mxu0 0.0
      %7029 = vmatpush1.msra.mxu0 0.0
      %7030 = vmatprep.subr.mxu0 0.0
      %7031 = vmatpush1.msra.mxu0 0.0
      %7032 = vmatprep.subr.mxu0 0.0
      %7033 = vmatpush1.msra.mxu0 0.0
      %7034 = vmatprep.subr.mxu0 0.0
      %7035 = vmatpush1.msra.mxu0 0.0
      %7036 = vmatprep.subr.mxu0 0.0
      %7037 = vmatpush1.msra.mxu0 0.0
      %7038 = vmatprep.subr.mxu0 0.0
      %7039 = vmatpush1.msra.mxu0 0.0
      %7040 = vmatprep.subr.mxu0 0.0
      %7041 = vmatpush1.msra.mxu0 0.0
      %7042 = vmatprep.subr.mxu0 0.0
      %7043 = vmatpush1.msra.mxu0 0.0
      %7044 = vmatprep.subr.mxu0 0.0
      %7045 = vmatpush1.msra.mxu0 0.0
      %7046 = vmatprep.subr.mxu0 0.0
      %7047 = vmatpush1.msra.mxu0 0.0
      %7048 = vmatprep.subr.mxu0 0.0
      %7049 = vmatpush1.msra.mxu0 0.0
      %7050 = vmatprep.subr.mxu0 0.0
      %7051 = vmatpush1.msra.mxu0 0.0
      %7052 = vmatprep.subr.mxu0 0.0
      %7053 = vmatpush1.msra.mxu0 0.0
      %7054 = vmatprep.subr.mxu0 0.0
      %7055 = vmatpush1.msra.mxu0 0.0
      %7056 = vmatprep.subr.mxu0 0.0
      %7057 = vmatpush1.msra.mxu0 0.0
      %7058 = vmatprep.subr.mxu0 0.0
      %7059 = vmatpush1.msra.mxu0 0.0
      %7060 = vmatprep.subr.mxu0 0.0
      %7061 = vmatpush1.msra.mxu0 0.0
      %7062 = vmatprep.subr.mxu0 0.0
      %7063 = vmatpush1.msra.mxu0 0.0
      %7064 = vmatprep.subr.mxu0 0.0
      %7065 = vmatpush1.msra.mxu0 0.0
      %7066 = vmatprep.subr.mxu0 0.0
      %7067 = vmatpush1.msra.mxu0 0.0
      %7068 = vmatprep.subr.mxu0 0.0
      %7069 = vmatpush1.msra.mxu0 0.0
      %7070 = vmatprep.subr.mxu0 0.0
      %7071 = vmatpush1.msra.mxu0 0.0
      %7072 = vmatprep.subr.mxu0 0.0
      %7073 = vmatpush1.msra.mxu0 0.0
      %7074 = vmatprep.subr.mxu0 0.0
      %7075 = vmatpush1.msra.mxu0 0.0
      %7076 = vmatprep.subr.mxu0 0.0
      %7077 = vmatpush1.msra.mxu0 0.0
      %7078 = vmatprep.subr.mxu0 0.0
      %7079 = vmatpush1.msra.mxu0 0.0
      %7080 = vmatprep.subr.mxu0 0.0
      %7081 = vmatpush1.msra.mxu0 0.0
      %7082 = vmatprep.subr.mxu0 0.0
      %7083 = vmatpush1.msra.mxu0 0.0
      %7084 = vmatprep.mubr.f32.mxu0 0.0
      %7085 = vmatmul.mubr.f32.gmra.mrb[0].mxu0 %v6922
      %v7086 = vpop.f32.mrb[0].mxu0
      %v7087 = vadd.f32 0.0, %v7086
      %v7088 = vpop.f32.mrb[0].mxu0
      %7089 = vmatprep.mubr.f32.mxu0 0.0
      %7090 = vmatmul.mubr.f32.gmra.mrb[0].mxu0 %v6925
      %v7091 = vpop.f32.mrb[0].mxu0
      %v7092 = vadd.f32 0.0, %v7091
      %v7093 = vpop.f32.mrb[0].mxu0
      %7094 = vmatprep.mubr.f32.mxu0 0.0
      %7095 = vmatmul.mubr.f32.gmra.mrb[0].mxu0 %v6928
      %v7096 = vpop.f32.mrb[0].mxu0
      %v7097 = vadd.f32 0.0, %v7096
      %v7098 = vpop.f32.mrb[0].mxu0
      %7099 = vmatprep.mubr.f32.mxu0 0.0
      %7100 = vmatmul.mubr.f32.gmra.mrb[0].mxu0 %v6931
      %v7101 = vpop.f32.mrb[0].mxu0
      %v7102 = vadd.f32 0.0, %v7101
      %v7103 = vpop.f32.mrb[0].mxu0
      %7104 = vmatprep.mubr.f32.mxu0 0.0
      %7105 = vmatmul.mubr.f32.gmra.mrb[0].mxu0 %v6934
      %v7106 = vpop.f32.mrb[0].mxu0
      %v7107 = vadd.f32 0.0, %v7106
      %v7108 = vpop.f32.mrb[0].mxu0
      %7109 = vmatprep.mubr.f32.mxu0 0.0
      %7110 = vmatmul.mubr.f32.gmra.mrb[0].mxu0 %v6937
      %v7111 = vpop.f32.mrb[0].mxu0
      %v7112 = vadd.f32 0.0, %v7111
      %v7113 = vpop.f32.mrb[0].mxu0
      %7114 = vmatprep.mubr.f32.mxu0 0.0
      %7115 = vmatmul.mubr.f32.gmra.mrb[0].mxu0 %v6940
      %v7116 = vpop.f32.mrb[0].mxu0
      %v7117 = vadd.f32 0.0, %v7116
      %v7118 = vpop.f32.mrb[0].mxu0
      %7119 = vmatprep.mubr.f32.mxu0 0.0
      %7120 = vmatmul.mubr.f32.gmra.mrb[0].mxu0 %v6943
      %v7121 = vpop.f32.mrb[0].mxu0
      %v7122 = vadd.f32 0.0, %v7121
      %v7123 = vpop.f32.mrb[0].mxu0
      %7124 = vmatprep.mubr.f32.mxu0 0.0
      %7125 = vmatmul.mubr.f32.gmra.mrb[0].mxu0 %v6946
      %v7126 = vpop.f32.mrb[0].mxu0
      %v7127 = vadd.f32 0.0, %v7126
      %v7128 = vpop.f32.mrb[0].mxu0
      %7129 = vmatprep.mubr.f32.mxu0 0.0
      %7130 = vmatmul.mubr.f32.gmra.mrb[0].mxu0 %v6949
      %v7131 = vpop.f32.mrb[0].mxu0
      %v7132 = vadd.f32 0.0, %v7131
      %v7133 = vpop.f32.mrb[0].mxu0
      %7134 = vmatprep.mubr.f32.mxu0 0.0
      %7135 = vmatmul.mubr.f32.gmra.mrb[0].mxu0 %v6952
      %v7136 = vpop.f32.mrb[0].mxu0
      %v7137 = vadd.f32 0.0, %v7136
      %v7138 = vpop.f32.mrb[0].mxu0
      %7139 = vmatprep.mubr.f32.mxu0 0.0
      %7140 = vmatmul.mubr.f32.gmra.mrb[0].mxu0 %v6955
      %v7141 = vpop.f32.mrb[0].mxu0
      %v7142 = vadd.f32 0.0, %v7141
      %v7143 = vpop.f32.mrb[0].mxu0
      %7144 = vmatprep.mubr.f32.mxu0 0.0
      %7145 = vmatmul.mubr.f32.gmra.mrb[0].mxu0 %v6958
      %v7146 = vpop.f32.mrb[0].mxu0
      %v7147 = vadd.f32 0.0, %v7146
      %v7148 = vpop.f32.mrb[0].mxu0
      %7149 = vmatprep.mubr.f32.mxu0 0.0
      %7150 = vmatmul.mubr.f32.gmra.mrb[0].mxu0 %v6961
      %v7151 = vpop.f32.mrb[0].mxu0
      %v7152 = vadd.f32 0.0, %v7151
      %v7153 = vpop.f32.mrb[0].mxu0
      %7154 = vmatprep.mubr.f32.mxu0 0.0
      %7155 = vmatmul.mubr.f32.gmra.mrb[0].mxu0 %v6964
      %v7156 = vpop.f32.mrb[0].mxu0
      %v7157 = vadd.f32 0.0, %v7156
      %v7158 = vpop.f32.mrb[0].mxu0
      %7159 = vmatprep.mubr.f32.mxu0 0.0
      %7160 = vmatmul.mubr.f32.gmra.mrb[0].mxu0 %v6967
      %v7161 = vpop.f32.mrb[0].mxu0
      %v7162 = vadd.f32 0.0, %v7161
      %v7163 = vpop.f32.mrb[0].mxu0
      %7164 = vmatprep.mubr.f32.mxu0 0.0
      %7165 = vmatmul.mubr.f32.gmra.mrb[0].mxu0 %v6970
      %v7166 = vpop.f32.mrb[0].mxu0
      %v7167 = vadd.f32 0.0, %v7166
      %v7168 = vpop.f32.mrb[0].mxu0
      %7169 = vmatprep.mubr.f32.mxu0 0.0
      %7170 = vmatmul.mubr.f32.gmra.mrb[0].mxu0 %v6973
      %v7171 = vpop.f32.mrb[0].mxu0
      %v7172 = vadd.f32 0.0, %v7171
      %v7173 = vpop.f32.mrb[0].mxu0
      %7174 = vmatprep.mubr.f32.mxu0 0.0
      %7175 = vmatmul.mubr.f32.gmra.mrb[0].mxu0 %v6976
      %v7176 = vpop.f32.mrb[0].mxu0
      %v7177 = vadd.f32 0.0, %v7176
      %v7178 = vpop.f32.mrb[0].mxu0
      %7179 = vmatprep.mubr.f32.mxu0 0.0
      %7180 = vmatmul.mubr.f32.gmra.mrb[0].mxu0 %v6979
      %v7181 = vpop.f32.mrb[0].mxu0
      %v7182 = vadd.f32 0.0, %v7181
      %v7183 = vpop.f32.mrb[0].mxu0
      %7184 = vmatprep.mubr.f32.mxu0 0.0
      %7185 = vmatmul.mubr.f32.gmra.mrb[0].mxu0 %v6982
      %v7186 = vpop.f32.mrb[0].mxu0
      %v7187 = vadd.f32 0.0, %v7186
      %v7188 = vpop.f32.mrb[0].mxu0
      %7189 = vmatprep.mubr.f32.mxu0 0.0
      %7190 = vmatmul.mubr.f32.gmra.mrb[0].mxu0 %v6985
      %v7191 = vpop.f32.mrb[0].mxu0
      %v7192 = vadd.f32 0.0, %v7191
      %v7193 = vpop.f32.mrb[0].mxu0
      %7194 = vmatprep.mubr.f32.mxu0 0.0
      %7195 = vmatmul.mubr.f32.gmra.mrb[0].mxu0 %v6988
      %v7196 = vpop.f32.mrb[0].mxu0
      %v7197 = vadd.f32 0.0, %v7196
      %v7198 = vpop.f32.mrb[0].mxu0
      %7199 = vmatprep.mubr.f32.mxu0 0.0
      %7200 = vmatmul.mubr.f32.gmra.mrb[0].mxu0 %v6991
      %v7201 = vpop.f32.mrb[0].mxu0
      %v7202 = vadd.f32 0.0, %v7201
      %v7203 = vpop.f32.mrb[0].mxu0
      %7204 = vmatprep.mubr.f32.mxu0 0.0
      %7205 = vmatmul.mubr.f32.gmra.mrb[0].mxu0 %v6994
      %v7206 = vpop.f32.mrb[0].mxu0
      %v7207 = vadd.f32 0.0, %v7206
      %v7208 = vpop.f32.mrb[0].mxu0
      %7209 = vmatprep.mubr.f32.mxu0 0.0
      %7210 = vmatmul.mubr.f32.gmra.mrb[0].mxu0 %v6997
      %v7211 = vpop.f32.mrb[0].mxu0
      %v7212 = vadd.f32 0.0, %v7211
      %v7213 = vpop.f32.mrb[0].mxu0
      %7214 = vmatprep.mubr.f32.mxu0 0.0
      %7215 = vmatmul.mubr.f32.gmra.mrb[0].mxu0 %v7000
      %v7216 = vpop.f32.mrb[0].mxu0
      %v7217 = vadd.f32 0.0, %v7216
      %v7218 = vpop.f32.mrb[0].mxu0
      %7219 = vmatprep.mubr.f32.mxu0 0.0
      %7220 = vmatmul.mubr.f32.gmra.mrb[0].mxu0 %v7003
      %v7221 = vpop.f32.mrb[0].mxu0
      %v7222 = vadd.f32 0.0, %v7221
      %v7223 = vpop.f32.mrb[0].mxu0
      %7224 = vmatprep.mubr.f32.mxu0 0.0
      %7225 = vmatmul.mubr.f32.gmra.mrb[0].mxu0 %v7006
      %v7226 = vpop.f32.mrb[0].mxu0
      %v7227 = vadd.f32 0.0, %v7226
      %v7228 = vpop.f32.mrb[0].mxu0
      %7229 = vmatprep.mubr.f32.mxu0 0.0
      %7230 = vmatmul.mubr.f32.gmra.mrb[0].mxu0 %v7009
      %v7231 = vpop.f32.mrb[0].mxu0
      %v7232 = vadd.f32 0.0, %v7231
      %v7233 = vpop.f32.mrb[0].mxu0
      %7234 = vmatprep.mubr.f32.mxu0 0.0
      %7235 = vmatmul.mubr.f32.gmra.mrb[0].mxu0 %v7012
      %v7236 = vpop.f32.mrb[0].mxu0
      %v7237 = vadd.f32 0.0, %v7236
      %v7238 = vpop.f32.mrb[0].mxu0
      %7239 = vmatprep.mubr.f32.mxu0 0.0
      %7240 = vmatmul.mubr.f32.gmra.mrb[0].mxu0 %v7015
      %v7241 = vpop.f32.mrb[0].mxu0
      %v7242 = vadd.f32 0.0, %v7241
      %v7243 = vpop.f32.mrb[0].mxu0
      %7244 = vdwg.mxu0
      %v7245 = vadd.f32 %v6854, %v7087
      %v7246 = vadd.f32 %v6855, %v7092
      %v7247 = vadd.f32 %v6856, %v7097
      %v7248 = vadd.f32 %v6857, %v7102
      %v7249 = vadd.f32 %v6858, %v7107
      %v7250 = vadd.f32 %v6859, %v7112
      %v7251 = vadd.f32 %v6860, %v7117
      %v7252 = vadd.f32 %v6861, %v7122
      %v7253 = vadd.f32 %v6862, %v7127
      %v7254 = vadd.f32 %v6863, %v7132
      %v7255 = vadd.f32 %v6864, %v7137
      %v7256 = vadd.f32 %v6865, %v7142
      %v7257 = vadd.f32 %v6866, %v7147
      %v7258 = vadd.f32 %v6867, %v7152
      %v7259 = vadd.f32 %v6868, %v7157
      %v7260 = vadd.f32 %v6869, %v7162
      %v7261 = vadd.f32 %v6870, %v7167
      %v7262 = vadd.f32 %v6871, %v7172
      %v7263 = vadd.f32 %v6872, %v7177
      %v7264 = vadd.f32 %v6873, %v7182
      %v7265 = vadd.f32 %v6874, %v7187
      %v7266 = vadd.f32 %v6875, %v7192
      %v7267 = vadd.f32 %v6876, %v7197
      %v7268 = vadd.f32 %v6877, %v7202
      %v7269 = vadd.f32 %v6878, %v7207
      %v7270 = vadd.f32 %v6879, %v7212
      %v7271 = vadd.f32 %v6880, %v7217
      %v7272 = vadd.f32 %v6881, %v7222
      %v7273 = vadd.f32 %v6882, %v7227
      %v7274 = vadd.f32 %v6883, %v7232
      %v7275 = vadd.f32 %v6884, %v7237
      %v7276 = vadd.f32 %v6885, %v7242
      %v7277 = vld [vmem:[#allocation2 + $0x19] sm:$0xff]
      %v7278 = vld [vmem:[#allocation2 + $0x21] sm:$0xff]
      %v7279 = vld [vmem:[#allocation2 + $0x29] sm:$0xff]
      %v7280 = vld [vmem:[#allocation2 + $0x31] sm:$0xff]
      %v7281 = vld [vmem:[#allocation2 + $0x39] sm:$0xff]
      %v7282 = vld [vmem:[#allocation2 + $0x41] sm:$0xff]
      %v7283 = vld [vmem:[#allocation2 + $0x49] sm:$0xff]
      %v7284 = vld [vmem:[#allocation2 + $0x51] sm:$0xff]
      %v7285 = vld [vmem:[#allocation2 + $0x59] sm:$0xff]
      %v7286 = vld [vmem:[#allocation2 + $0x61] sm:$0xff]
      %v7287 = vld [vmem:[#allocation2 + $0x69] sm:$0xff]
      %v7288 = vld [vmem:[#allocation2 + $0x71] sm:$0xff]
      %v7289 = vld [vmem:[#allocation2 + $0x79] sm:$0xff]
      %v7290 = vld [vmem:[#allocation2 + $0x81] sm:$0xff]
      %v7291 = vld [vmem:[#allocation2 + $0x89] sm:$0xff]
      %v7292 = vld [vmem:[#allocation2 + $0x91] sm:$0xff]
      %v7293 = vld [vmem:[#allocation2 + $0x99] sm:$0xff]
      %v7294 = vld [vmem:[#allocation2 + $0xa1] sm:$0xff]
      %v7295 = vld [vmem:[#allocation2 + $0xa9] sm:$0xff]
      %v7296 = vld [vmem:[#allocation2 + $0xb1] sm:$0xff]
      %v7297 = vld [vmem:[#allocation2 + $0xb9] sm:$0xff]
      %v7298 = vld [vmem:[#allocation2 + $0xc1] sm:$0xff]
      %v7299 = vld [vmem:[#allocation2 + $0xc9] sm:$0xff]
      %v7300 = vld [vmem:[#allocation2 + $0xd1] sm:$0xff]
      %v7301 = vld [vmem:[#allocation2 + $0xd9] sm:$0xff]
      %v7302 = vld [vmem:[#allocation2 + $0xe1] sm:$0xff]
      %v7303 = vld [vmem:[#allocation2 + $0xe9] sm:$0xff]
      %v7304 = vld [vmem:[#allocation2 + $0xf1] sm:$0xff]
      %v7305 = vld [vmem:[#allocation2 + $0xf9] sm:$0xff]
      %v7306 = vld [vmem:[#allocation2 + $0x101] sm:$0xff]
      %v7307 = vld [vmem:[#allocation2 + $0x109] sm:$0xff]
      %v7308 = vld [vmem:[#allocation2 + $0x111] sm:$0xff]
      %v7309 = vmul.f32 %v7277, %v1374
      %v7310 = vmul.f32 %v7278, %v1375
      %v7311 = vmul.f32 %v7279, %v1376
      %v7312 = vmul.f32 %v7280, %v1377
      %v7313 = vmul.f32 %v7281, %v1378
      %v7314 = vmul.f32 %v7282, %v1379
      %v7315 = vmul.f32 %v7283, %v1380
      %v7316 = vmul.f32 %v7284, %v1381
      %v7317 = vmul.f32 %v7285, %v1382
      %v7318 = vmul.f32 %v7286, %v1383
      %v7319 = vmul.f32 %v7287, %v1384
      %v7320 = vmul.f32 %v7288, %v1385
      %v7321 = vmul.f32 %v7289, %v1386
      %v7322 = vmul.f32 %v7290, %v1387
      %v7323 = vmul.f32 %v7291, %v1388
      %v7324 = vmul.f32 %v7292, %v1389
      %v7325 = vmul.f32 %v7293, %v1390
      %v7326 = vmul.f32 %v7294, %v1391
      %v7327 = vmul.f32 %v7295, %v1392
      %v7328 = vmul.f32 %v7296, %v1393
      %v7329 = vmul.f32 %v7297, %v1394
      %v7330 = vmul.f32 %v7298, %v1395
      %v7331 = vmul.f32 %v7299, %v1396
      %v7332 = vmul.f32 %v7300, %v1397
      %v7333 = vmul.f32 %v7301, %v1398
      %v7334 = vmul.f32 %v7302, %v1399
      %v7335 = vmul.f32 %v7303, %v1400
      %v7336 = vmul.f32 %v7304, %v1401
      %v7337 = vmul.f32 %v7305, %v1402
      %v7338 = vmul.f32 %v7306, %v1403
      %v7339 = vmul.f32 %v7307, %v1404
      %v7340 = vmul.f32 %v7308, %v1405
      %s7341 = scalar_lea.vmem %s5, 80
      %v7342 = vld [vmem:[%s7341] sm:$0xff]
      %v7343 = vld [vmem:[%s7341 + $0x8] sm:$0xf]
      %v7345 = vsel %vm1406, %v7309, 0
      %v7348 = vsel %vm1406, %v7310, 0
      %v7351 = vsel %vm1406, %v7311, 0
      %v7354 = vsel %vm1406, %v7312, 0
      %v7357 = vsel %vm1406, %v7313, 0
      %v7360 = vsel %vm1406, %v7314, 0
      %v7363 = vsel %vm1406, %v7315, 0
      %v7366 = vsel %vm1406, %v7316, 0
      %v7369 = vsel %vm1406, %v7317, 0
      %v7372 = vsel %vm1406, %v7318, 0
      %v7375 = vsel %vm1406, %v7319, 0
      %v7378 = vsel %vm1406, %v7320, 0
      %v7381 = vsel %vm1406, %v7321, 0
      %v7384 = vsel %vm1406, %v7322, 0
      %v7387 = vsel %vm1406, %v7323, 0
      %v7390 = vsel %vm1406, %v7324, 0
      %v7393 = vsel %vm1406, %v7325, 0
      %v7396 = vsel %vm1406, %v7326, 0
      %v7399 = vsel %vm1406, %v7327, 0
      %v7402 = vsel %vm1406, %v7328, 0
      %v7405 = vsel %vm1406, %v7329, 0
      %v7408 = vsel %vm1406, %v7330, 0
      %v7411 = vsel %vm1406, %v7331, 0
      %v7414 = vsel %vm1406, %v7332, 0
      %v7417 = vsel %vm1406, %v7333, 0
      %v7420 = vsel %vm1406, %v7334, 0
      %v7423 = vsel %vm1406, %v7335, 0
      %v7426 = vsel %vm1406, %v7336, 0
      %v7429 = vsel %vm1406, %v7337, 0
      %v7432 = vsel %vm1406, %v7338, 0
      %v7435 = vsel %vm1406, %v7339, 0
      %v7438 = vsel %vm1406, %v7340, 0
      %v7441 = vsel %vm1674, %v7343, 0
      %7443 = vmatprep.subr.mxu0 0.0
      %7444 = vmatpush1.msra.mxu0 %v7342
      %7445 = vmatprep.subr.mxu0 0.0
      %7446 = vmatpush1.msra.mxu0 %v7441
      %7447 = vmatprep.subr.mxu0 0.0
      %7448 = vmatpush1.msra.mxu0 0.0
      %7449 = vmatprep.subr.mxu0 0.0
      %7450 = vmatpush1.msra.mxu0 0.0
      %7451 = vmatprep.subr.mxu0 0.0
      %7452 = vmatpush1.msra.mxu0 0.0
      %7453 = vmatprep.subr.mxu0 0.0
      %7454 = vmatpush1.msra.mxu0 0.0
      %7455 = vmatprep.subr.mxu0 0.0
      %7456 = vmatpush1.msra.mxu0 0.0
      %7457 = vmatprep.subr.mxu0 0.0
      %7458 = vmatpush1.msra.mxu0 0.0
      %7459 = vmatprep.subr.mxu0 0.0
      %7460 = vmatpush1.msra.mxu0 0.0
      %7461 = vmatprep.subr.mxu0 0.0
      %7462 = vmatpush1.msra.mxu0 0.0
      %7463 = vmatprep.subr.mxu0 0.0
      %7464 = vmatpush1.msra.mxu0 0.0
      %7465 = vmatprep.subr.mxu0 0.0
      %7466 = vmatpush1.msra.mxu0 0.0
      %7467 = vmatprep.subr.mxu0 0.0
      %7468 = vmatpush1.msra.mxu0 0.0
      %7469 = vmatprep.subr.mxu0 0.0
      %7470 = vmatpush1.msra.mxu0 0.0
      %7471 = vmatprep.subr.mxu0 0.0
      %7472 = vmatpush1.msra.mxu0 0.0
      %7473 = vmatprep.subr.mxu0 0.0
      %7474 = vmatpush1.msra.mxu0 0.0
      %7475 = vmatprep.subr.mxu0 0.0
      %7476 = vmatpush1.msra.mxu0 0.0
      %7477 = vmatprep.subr.mxu0 0.0
      %7478 = vmatpush1.msra.mxu0 0.0
      %7479 = vmatprep.subr.mxu0 0.0
      %7480 = vmatpush1.msra.mxu0 0.0
      %7481 = vmatprep.subr.mxu0 0.0
      %7482 = vmatpush1.msra.mxu0 0.0
      %7483 = vmatprep.subr.mxu0 0.0
      %7484 = vmatpush1.msra.mxu0 0.0
      %7485 = vmatprep.subr.mxu0 0.0
      %7486 = vmatpush1.msra.mxu0 0.0
      %7487 = vmatprep.subr.mxu0 0.0
      %7488 = vmatpush1.msra.mxu0 0.0
      %7489 = vmatprep.subr.mxu0 0.0
      %7490 = vmatpush1.msra.mxu0 0.0
      %7491 = vmatprep.subr.mxu0 0.0
      %7492 = vmatpush1.msra.mxu0 0.0
      %7493 = vmatprep.subr.mxu0 0.0
      %7494 = vmatpush1.msra.mxu0 0.0
      %7495 = vmatprep.subr.mxu0 0.0
      %7496 = vmatpush1.msra.mxu0 0.0
      %7497 = vmatprep.subr.mxu0 0.0
      %7498 = vmatpush1.msra.mxu0 0.0
      %7499 = vmatprep.subr.mxu0 0.0
      %7500 = vmatpush1.msra.mxu0 0.0
      %7501 = vmatprep.subr.mxu0 0.0
      %7502 = vmatpush1.msra.mxu0 0.0
      %7503 = vmatprep.subr.mxu0 0.0
      %7504 = vmatpush1.msra.mxu0 0.0
      %7505 = vmatprep.subr.mxu0 0.0
      %7506 = vmatpush1.msra.mxu0 0.0
      %7507 = vmatprep.mubr.f32.mxu0 0.0
      %7508 = vmatmul.mubr.f32.gmra.mrb[0].mxu0 %v7345
      %v7509 = vpop.f32.mrb[0].mxu0
      %v7510 = vadd.f32 0.0, %v7509
      %v7511 = vpop.f32.mrb[0].mxu0
      %7512 = vmatprep.mubr.f32.mxu0 0.0
      %7513 = vmatmul.mubr.f32.gmra.mrb[0].mxu0 %v7348
      %v7514 = vpop.f32.mrb[0].mxu0
      %v7515 = vadd.f32 0.0, %v7514
      %v7516 = vpop.f32.mrb[0].mxu0
      %7517 = vmatprep.mubr.f32.mxu0 0.0
      %7518 = vmatmul.mubr.f32.gmra.mrb[0].mxu0 %v7351
      %v7519 = vpop.f32.mrb[0].mxu0
      %v7520 = vadd.f32 0.0, %v7519
      %v7521 = vpop.f32.mrb[0].mxu0
      %7522 = vmatprep.mubr.f32.mxu0 0.0
      %7523 = vmatmul.mubr.f32.gmra.mrb[0].mxu0 %v7354
      %v7524 = vpop.f32.mrb[0].mxu0
      %v7525 = vadd.f32 0.0, %v7524
      %v7526 = vpop.f32.mrb[0].mxu0
      %7527 = vmatprep.mubr.f32.mxu0 0.0
      %7528 = vmatmul.mubr.f32.gmra.mrb[0].mxu0 %v7357
      %v7529 = vpop.f32.mrb[0].mxu0
      %v7530 = vadd.f32 0.0, %v7529
      %v7531 = vpop.f32.mrb[0].mxu0
      %7532 = vmatprep.mubr.f32.mxu0 0.0
      %7533 = vmatmul.mubr.f32.gmra.mrb[0].mxu0 %v7360
      %v7534 = vpop.f32.mrb[0].mxu0
      %v7535 = vadd.f32 0.0, %v7534
      %v7536 = vpop.f32.mrb[0].mxu0
      %7537 = vmatprep.mubr.f32.mxu0 0.0
      %7538 = vmatmul.mubr.f32.gmra.mrb[0].mxu0 %v7363
      %v7539 = vpop.f32.mrb[0].mxu0
      %v7540 = vadd.f32 0.0, %v7539
      %v7541 = vpop.f32.mrb[0].mxu0
      %7542 = vmatprep.mubr.f32.mxu0 0.0
      %7543 = vmatmul.mubr.f32.gmra.mrb[0].mxu0 %v7366
      %v7544 = vpop.f32.mrb[0].mxu0
      %v7545 = vadd.f32 0.0, %v7544
      %v7546 = vpop.f32.mrb[0].mxu0
      %7547 = vmatprep.mubr.f32.mxu0 0.0
      %7548 = vmatmul.mubr.f32.gmra.mrb[0].mxu0 %v7369
      %v7549 = vpop.f32.mrb[0].mxu0
      %v7550 = vadd.f32 0.0, %v7549
      %v7551 = vpop.f32.mrb[0].mxu0
      %7552 = vmatprep.mubr.f32.mxu0 0.0
      %7553 = vmatmul.mubr.f32.gmra.mrb[0].mxu0 %v7372
      %v7554 = vpop.f32.mrb[0].mxu0
      %v7555 = vadd.f32 0.0, %v7554
      %v7556 = vpop.f32.mrb[0].mxu0
      %7557 = vmatprep.mubr.f32.mxu0 0.0
      %7558 = vmatmul.mubr.f32.gmra.mrb[0].mxu0 %v7375
      %v7559 = vpop.f32.mrb[0].mxu0
      %v7560 = vadd.f32 0.0, %v7559
      %v7561 = vpop.f32.mrb[0].mxu0
      %7562 = vmatprep.mubr.f32.mxu0 0.0
      %7563 = vmatmul.mubr.f32.gmra.mrb[0].mxu0 %v7378
      %v7564 = vpop.f32.mrb[0].mxu0
      %v7565 = vadd.f32 0.0, %v7564
      %v7566 = vpop.f32.mrb[0].mxu0
      %7567 = vmatprep.mubr.f32.mxu0 0.0
      %7568 = vmatmul.mubr.f32.gmra.mrb[0].mxu0 %v7381
      %v7569 = vpop.f32.mrb[0].mxu0
      %v7570 = vadd.f32 0.0, %v7569
      %v7571 = vpop.f32.mrb[0].mxu0
      %7572 = vmatprep.mubr.f32.mxu0 0.0
      %7573 = vmatmul.mubr.f32.gmra.mrb[0].mxu0 %v7384
      %v7574 = vpop.f32.mrb[0].mxu0
      %v7575 = vadd.f32 0.0, %v7574
      %v7576 = vpop.f32.mrb[0].mxu0
      %7577 = vmatprep.mubr.f32.mxu0 0.0
      %7578 = vmatmul.mubr.f32.gmra.mrb[0].mxu0 %v7387
      %v7579 = vpop.f32.mrb[0].mxu0
      %v7580 = vadd.f32 0.0, %v7579
      %v7581 = vpop.f32.mrb[0].mxu0
      %7582 = vmatprep.mubr.f32.mxu0 0.0
      %7583 = vmatmul.mubr.f32.gmra.mrb[0].mxu0 %v7390
      %v7584 = vpop.f32.mrb[0].mxu0
      %v7585 = vadd.f32 0.0, %v7584
      %v7586 = vpop.f32.mrb[0].mxu0
      %7587 = vmatprep.mubr.f32.mxu0 0.0
      %7588 = vmatmul.mubr.f32.gmra.mrb[0].mxu0 %v7393
      %v7589 = vpop.f32.mrb[0].mxu0
      %v7590 = vadd.f32 0.0, %v7589
      %v7591 = vpop.f32.mrb[0].mxu0
      %7592 = vmatprep.mubr.f32.mxu0 0.0
      %7593 = vmatmul.mubr.f32.gmra.mrb[0].mxu0 %v7396
      %v7594 = vpop.f32.mrb[0].mxu0
      %v7595 = vadd.f32 0.0, %v7594
      %v7596 = vpop.f32.mrb[0].mxu0
      %7597 = vmatprep.mubr.f32.mxu0 0.0
      %7598 = vmatmul.mubr.f32.gmra.mrb[0].mxu0 %v7399
      %v7599 = vpop.f32.mrb[0].mxu0
      %v7600 = vadd.f32 0.0, %v7599
      %v7601 = vpop.f32.mrb[0].mxu0
      %7602 = vmatprep.mubr.f32.mxu0 0.0
      %7603 = vmatmul.mubr.f32.gmra.mrb[0].mxu0 %v7402
      %v7604 = vpop.f32.mrb[0].mxu0
      %v7605 = vadd.f32 0.0, %v7604
      %v7606 = vpop.f32.mrb[0].mxu0
      %7607 = vmatprep.mubr.f32.mxu0 0.0
      %7608 = vmatmul.mubr.f32.gmra.mrb[0].mxu0 %v7405
      %v7609 = vpop.f32.mrb[0].mxu0
      %v7610 = vadd.f32 0.0, %v7609
      %v7611 = vpop.f32.mrb[0].mxu0
      %7612 = vmatprep.mubr.f32.mxu0 0.0
      %7613 = vmatmul.mubr.f32.gmra.mrb[0].mxu0 %v7408
      %v7614 = vpop.f32.mrb[0].mxu0
      %v7615 = vadd.f32 0.0, %v7614
      %v7616 = vpop.f32.mrb[0].mxu0
      %7617 = vmatprep.mubr.f32.mxu0 0.0
      %7618 = vmatmul.mubr.f32.gmra.mrb[0].mxu0 %v7411
      %v7619 = vpop.f32.mrb[0].mxu0
      %v7620 = vadd.f32 0.0, %v7619
      %v7621 = vpop.f32.mrb[0].mxu0
      %7622 = vmatprep.mubr.f32.mxu0 0.0
      %7623 = vmatmul.mubr.f32.gmra.mrb[0].mxu0 %v7414
      %v7624 = vpop.f32.mrb[0].mxu0
      %v7625 = vadd.f32 0.0, %v7624
      %v7626 = vpop.f32.mrb[0].mxu0
      %7627 = vmatprep.mubr.f32.mxu0 0.0
      %7628 = vmatmul.mubr.f32.gmra.mrb[0].mxu0 %v7417
      %v7629 = vpop.f32.mrb[0].mxu0
      %v7630 = vadd.f32 0.0, %v7629
      %v7631 = vpop.f32.mrb[0].mxu0
      %7632 = vmatprep.mubr.f32.mxu0 0.0
      %7633 = vmatmul.mubr.f32.gmra.mrb[0].mxu0 %v7420
      %v7634 = vpop.f32.mrb[0].mxu0
      %v7635 = vadd.f32 0.0, %v7634
      %v7636 = vpop.f32.mrb[0].mxu0
      %7637 = vmatprep.mubr.f32.mxu0 0.0
      %7638 = vmatmul.mubr.f32.gmra.mrb[0].mxu0 %v7423
      %v7639 = vpop.f32.mrb[0].mxu0
      %v7640 = vadd.f32 0.0, %v7639
      %v7641 = vpop.f32.mrb[0].mxu0
      %7642 = vmatprep.mubr.f32.mxu0 0.0
      %7643 = vmatmul.mubr.f32.gmra.mrb[0].mxu0 %v7426
      %v7644 = vpop.f32.mrb[0].mxu0
      %v7645 = vadd.f32 0.0, %v7644
      %v7646 = vpop.f32.mrb[0].mxu0
      %7647 = vmatprep.mubr.f32.mxu0 0.0
      %7648 = vmatmul.mubr.f32.gmra.mrb[0].mxu0 %v7429
      %v7649 = vpop.f32.mrb[0].mxu0
      %v7650 = vadd.f32 0.0, %v7649
      %v7651 = vpop.f32.mrb[0].mxu0
      %7652 = vmatprep.mubr.f32.mxu0 0.0
      %7653 = vmatmul.mubr.f32.gmra.mrb[0].mxu0 %v7432
      %v7654 = vpop.f32.mrb[0].mxu0
      %v7655 = vadd.f32 0.0, %v7654
      %v7656 = vpop.f32.mrb[0].mxu0
      %7657 = vmatprep.mubr.f32.mxu0 0.0
      %7658 = vmatmul.mubr.f32.gmra.mrb[0].mxu0 %v7435
      %v7659 = vpop.f32.mrb[0].mxu0
      %v7660 = vadd.f32 0.0, %v7659
      %v7661 = vpop.f32.mrb[0].mxu0
      %7662 = vmatprep.mubr.f32.mxu0 0.0
      %7663 = vmatmul.mubr.f32.gmra.mrb[0].mxu0 %v7438
      %v7664 = vpop.f32.mrb[0].mxu0
      %v7665 = vadd.f32 0.0, %v7664
      %v7666 = vpop.f32.mrb[0].mxu0
      %7667 = vdwg.mxu0
      %v7668 = vadd.f32 %v7245, %v7510
      %v7669 = vadd.f32 %v7246, %v7515
      %v7670 = vadd.f32 %v7247, %v7520
      %v7671 = vadd.f32 %v7248, %v7525
      %v7672 = vadd.f32 %v7249, %v7530
      %v7673 = vadd.f32 %v7250, %v7535
      %v7674 = vadd.f32 %v7251, %v7540
      %v7675 = vadd.f32 %v7252, %v7545
      %v7676 = vadd.f32 %v7253, %v7550
      %v7677 = vadd.f32 %v7254, %v7555
      %v7678 = vadd.f32 %v7255, %v7560
      %v7679 = vadd.f32 %v7256, %v7565
      %v7680 = vadd.f32 %v7257, %v7570
      %v7681 = vadd.f32 %v7258, %v7575
      %v7682 = vadd.f32 %v7259, %v7580
      %v7683 = vadd.f32 %v7260, %v7585
      %v7684 = vadd.f32 %v7261, %v7590
      %v7685 = vadd.f32 %v7262, %v7595
      %v7686 = vadd.f32 %v7263, %v7600
      %v7687 = vadd.f32 %v7264, %v7605
      %v7688 = vadd.f32 %v7265, %v7610
      %v7689 = vadd.f32 %v7266, %v7615
      %v7690 = vadd.f32 %v7267, %v7620
      %v7691 = vadd.f32 %v7268, %v7625
      %v7692 = vadd.f32 %v7269, %v7630
      %v7693 = vadd.f32 %v7270, %v7635
      %v7694 = vadd.f32 %v7271, %v7640
      %v7695 = vadd.f32 %v7272, %v7645
      %v7696 = vadd.f32 %v7273, %v7650
      %v7697 = vadd.f32 %v7274, %v7655
      %v7698 = vadd.f32 %v7275, %v7660
      %v7699 = vadd.f32 %v7276, %v7665
      %v7700 = vld [vmem:[#allocation2 + $0x27] sm:$0xff]
      %v7701 = vld [vmem:[#allocation2 + $0x2f] sm:$0xff]
      %v7702 = vld [vmem:[#allocation2 + $0x37] sm:$0xff]
      %v7703 = vld [vmem:[#allocation2 + $0x3f] sm:$0xff]
      %v7704 = vld [vmem:[#allocation2 + $0x47] sm:$0xff]
      %v7705 = vld [vmem:[#allocation2 + $0x4f] sm:$0xff]
      %v7706 = vld [vmem:[#allocation2 + $0x57] sm:$0xff]
      %v7707 = vld [vmem:[#allocation2 + $0x5f] sm:$0xff]
      %v7708 = vld [vmem:[#allocation2 + $0x67] sm:$0xff]
      %v7709 = vld [vmem:[#allocation2 + $0x6f] sm:$0xff]
      %v7710 = vld [vmem:[#allocation2 + $0x77] sm:$0xff]
      %v7711 = vld [vmem:[#allocation2 + $0x7f] sm:$0xff]
      %v7712 = vld [vmem:[#allocation2 + $0x87] sm:$0xff]
      %v7713 = vld [vmem:[#allocation2 + $0x8f] sm:$0xff]
      %v7714 = vld [vmem:[#allocation2 + $0x97] sm:$0xff]
      %v7715 = vld [vmem:[#allocation2 + $0x9f] sm:$0xff]
      %v7716 = vld [vmem:[#allocation2 + $0xa7] sm:$0xff]
      %v7717 = vld [vmem:[#allocation2 + $0xaf] sm:$0xff]
      %v7718 = vld [vmem:[#allocation2 + $0xb7] sm:$0xff]
      %v7719 = vld [vmem:[#allocation2 + $0xbf] sm:$0xff]
      %v7720 = vld [vmem:[#allocation2 + $0xc7] sm:$0xff]
      %v7721 = vld [vmem:[#allocation2 + $0xcf] sm:$0xff]
      %v7722 = vld [vmem:[#allocation2 + $0xd7] sm:$0xff]
      %v7723 = vld [vmem:[#allocation2 + $0xdf] sm:$0xff]
      %v7724 = vld [vmem:[#allocation2 + $0xe7] sm:$0xff]
      %v7725 = vld [vmem:[#allocation2 + $0xef] sm:$0xff]
      %v7726 = vld [vmem:[#allocation2 + $0xf7] sm:$0xff]
      %v7727 = vld [vmem:[#allocation2 + $0xff] sm:$0xff]
      %v7728 = vld [vmem:[#allocation2 + $0x107] sm:$0xff]
      %v7729 = vld [vmem:[#allocation2 + $0x10f] sm:$0xff]
      %v7730 = vld [vmem:[#allocation2 + $0x117] sm:$0xff]
      %v7731 = vld [vmem:[#allocation2 + $0x11f] sm:$0xff]
      %v7732 = vmul.f32 %v7700, %v1278
      %v7733 = vmul.f32 %v7701, %v1279
      %v7734 = vmul.f32 %v7702, %v1280
      %v7735 = vmul.f32 %v7703, %v1281
      %v7736 = vmul.f32 %v7704, %v1282
      %v7737 = vmul.f32 %v7705, %v1283
      %v7738 = vmul.f32 %v7706, %v1284
      %v7739 = vmul.f32 %v7707, %v1285
      %v7740 = vmul.f32 %v7708, %v1286
      %v7741 = vmul.f32 %v7709, %v1287
      %v7742 = vmul.f32 %v7710, %v1288
      %v7743 = vmul.f32 %v7711, %v1289
      %v7744 = vmul.f32 %v7712, %v1290
      %v7745 = vmul.f32 %v7713, %v1291
      %v7746 = vmul.f32 %v7714, %v1292
      %v7747 = vmul.f32 %v7715, %v1293
      %v7748 = vmul.f32 %v7716, %v1294
      %v7749 = vmul.f32 %v7717, %v1295
      %v7750 = vmul.f32 %v7718, %v1296
      %v7751 = vmul.f32 %v7719, %v1297
      %v7752 = vmul.f32 %v7720, %v1298
      %v7753 = vmul.f32 %v7721, %v1299
      %v7754 = vmul.f32 %v7722, %v1300
      %v7755 = vmul.f32 %v7723, %v1301
      %v7756 = vmul.f32 %v7724, %v1302
      %v7757 = vmul.f32 %v7725, %v1303
      %v7758 = vmul.f32 %v7726, %v1304
      %v7759 = vmul.f32 %v7727, %v1305
      %v7760 = vmul.f32 %v7728, %v1306
      %v7761 = vmul.f32 %v7729, %v1307
      %v7762 = vmul.f32 %v7730, %v1308
      %v7763 = vmul.f32 %v7731, %v1309
      %s7764 = scalar_lea.vmem %s5, 96
      %v7765 = vld [vmem:[%s7764] sm:$0xff]
      %v7766 = vld [vmem:[%s7764 + $0x8] sm:$0xf]
      %v7768 = vsel %vm1406, %v7732, 0
      %v7771 = vsel %vm1406, %v7733, 0
      %v7774 = vsel %vm1406, %v7734, 0
      %v7777 = vsel %vm1406, %v7735, 0
      %v7780 = vsel %vm1406, %v7736, 0
      %v7783 = vsel %vm1406, %v7737, 0
      %v7786 = vsel %vm1406, %v7738, 0
      %v7789 = vsel %vm1406, %v7739, 0
      %v7792 = vsel %vm1406, %v7740, 0
      %v7795 = vsel %vm1406, %v7741, 0
      %v7798 = vsel %vm1406, %v7742, 0
      %v7801 = vsel %vm1406, %v7743, 0
      %v7804 = vsel %vm1406, %v7744, 0
      %v7807 = vsel %vm1406, %v7745, 0
      %v7810 = vsel %vm1406, %v7746, 0
      %v7813 = vsel %vm1406, %v7747, 0
      %v7816 = vsel %vm1406, %v7748, 0
      %v7819 = vsel %vm1406, %v7749, 0
      %v7822 = vsel %vm1406, %v7750, 0
      %v7825 = vsel %vm1406, %v7751, 0
      %v7828 = vsel %vm1406, %v7752, 0
      %v7831 = vsel %vm1406, %v7753, 0
      %v7834 = vsel %vm1406, %v7754, 0
      %v7837 = vsel %vm1406, %v7755, 0
      %v7840 = vsel %vm1406, %v7756, 0
      %v7843 = vsel %vm1406, %v7757, 0
      %v7846 = vsel %vm1406, %v7758, 0
      %v7849 = vsel %vm1406, %v7759, 0
      %v7852 = vsel %vm1406, %v7760, 0
      %v7855 = vsel %vm1406, %v7761, 0
      %v7858 = vsel %vm1406, %v7762, 0
      %v7861 = vsel %vm1406, %v7763, 0
      %v7864 = vsel %vm1674, %v7766, 0
      %7866 = vmatprep.subr.mxu0 0.0
      %7867 = vmatpush1.msra.mxu0 %v7765
      %7868 = vmatprep.subr.mxu0 0.0
      %7869 = vmatpush1.msra.mxu0 %v7864
      %7870 = vmatprep.subr.mxu0 0.0
      %7871 = vmatpush1.msra.mxu0 0.0
      %7872 = vmatprep.subr.mxu0 0.0
      %7873 = vmatpush1.msra.mxu0 0.0
      %7874 = vmatprep.subr.mxu0 0.0
      %7875 = vmatpush1.msra.mxu0 0.0
      %7876 = vmatprep.subr.mxu0 0.0
      %7877 = vmatpush1.msra.mxu0 0.0
      %7878 = vmatprep.subr.mxu0 0.0
      %7879 = vmatpush1.msra.mxu0 0.0
      %7880 = vmatprep.subr.mxu0 0.0
      %7881 = vmatpush1.msra.mxu0 0.0
      %7882 = vmatprep.subr.mxu0 0.0
      %7883 = vmatpush1.msra.mxu0 0.0
      %7884 = vmatprep.subr.mxu0 0.0
      %7885 = vmatpush1.msra.mxu0 0.0
      %7886 = vmatprep.subr.mxu0 0.0
      %7887 = vmatpush1.msra.mxu0 0.0
      %7888 = vmatprep.subr.mxu0 0.0
      %7889 = vmatpush1.msra.mxu0 0.0
      %7890 = vmatprep.subr.mxu0 0.0
      %7891 = vmatpush1.msra.mxu0 0.0
      %7892 = vmatprep.subr.mxu0 0.0
      %7893 = vmatpush1.msra.mxu0 0.0
      %7894 = vmatprep.subr.mxu0 0.0
      %7895 = vmatpush1.msra.mxu0 0.0
      %7896 = vmatprep.subr.mxu0 0.0
      %7897 = vmatpush1.msra.mxu0 0.0
      %7898 = vmatprep.subr.mxu0 0.0
      %7899 = vmatpush1.msra.mxu0 0.0
      %7900 = vmatprep.subr.mxu0 0.0
      %7901 = vmatpush1.msra.mxu0 0.0
      %7902 = vmatprep.subr.mxu0 0.0
      %7903 = vmatpush1.msra.mxu0 0.0
      %7904 = vmatprep.subr.mxu0 0.0
      %7905 = vmatpush1.msra.mxu0 0.0
      %7906 = vmatprep.subr.mxu0 0.0
      %7907 = vmatpush1.msra.mxu0 0.0
      %7908 = vmatprep.subr.mxu0 0.0
      %7909 = vmatpush1.msra.mxu0 0.0
      %7910 = vmatprep.subr.mxu0 0.0
      %7911 = vmatpush1.msra.mxu0 0.0
      %7912 = vmatprep.subr.mxu0 0.0
      %7913 = vmatpush1.msra.mxu0 0.0
      %7914 = vmatprep.subr.mxu0 0.0
      %7915 = vmatpush1.msra.mxu0 0.0
      %7916 = vmatprep.subr.mxu0 0.0
      %7917 = vmatpush1.msra.mxu0 0.0
      %7918 = vmatprep.subr.mxu0 0.0
      %7919 = vmatpush1.msra.mxu0 0.0
      %7920 = vmatprep.subr.mxu0 0.0
      %7921 = vmatpush1.msra.mxu0 0.0
      %7922 = vmatprep.subr.mxu0 0.0
      %7923 = vmatpush1.msra.mxu0 0.0
      %7924 = vmatprep.subr.mxu0 0.0
      %7925 = vmatpush1.msra.mxu0 0.0
      %7926 = vmatprep.subr.mxu0 0.0
      %7927 = vmatpush1.msra.mxu0 0.0
      %7928 = vmatprep.subr.mxu0 0.0
      %7929 = vmatpush1.msra.mxu0 0.0
      %7930 = vmatprep.mubr.f32.mxu0 0.0
      %7931 = vmatmul.mubr.f32.gmra.mrb[0].mxu0 %v7768
      %v7932 = vpop.f32.mrb[0].mxu0
      %v7933 = vadd.f32 0.0, %v7932
      %v7934 = vpop.f32.mrb[0].mxu0
      %7935 = vmatprep.mubr.f32.mxu0 0.0
      %7936 = vmatmul.mubr.f32.gmra.mrb[0].mxu0 %v7771
      %v7937 = vpop.f32.mrb[0].mxu0
      %v7938 = vadd.f32 0.0, %v7937
      %v7939 = vpop.f32.mrb[0].mxu0
      %7940 = vmatprep.mubr.f32.mxu0 0.0
      %7941 = vmatmul.mubr.f32.gmra.mrb[0].mxu0 %v7774
      %v7942 = vpop.f32.mrb[0].mxu0
      %v7943 = vadd.f32 0.0, %v7942
      %v7944 = vpop.f32.mrb[0].mxu0
      %7945 = vmatprep.mubr.f32.mxu0 0.0
      %7946 = vmatmul.mubr.f32.gmra.mrb[0].mxu0 %v7777
      %v7947 = vpop.f32.mrb[0].mxu0
      %v7948 = vadd.f32 0.0, %v7947
      %v7949 = vpop.f32.mrb[0].mxu0
      %7950 = vmatprep.mubr.f32.mxu0 0.0
      %7951 = vmatmul.mubr.f32.gmra.mrb[0].mxu0 %v7780
      %v7952 = vpop.f32.mrb[0].mxu0
      %v7953 = vadd.f32 0.0, %v7952
      %v7954 = vpop.f32.mrb[0].mxu0
      %7955 = vmatprep.mubr.f32.mxu0 0.0
      %7956 = vmatmul.mubr.f32.gmra.mrb[0].mxu0 %v7783
      %v7957 = vpop.f32.mrb[0].mxu0
      %v7958 = vadd.f32 0.0, %v7957
      %v7959 = vpop.f32.mrb[0].mxu0
      %7960 = vmatprep.mubr.f32.mxu0 0.0
      %7961 = vmatmul.mubr.f32.gmra.mrb[0].mxu0 %v7786
      %v7962 = vpop.f32.mrb[0].mxu0
      %v7963 = vadd.f32 0.0, %v7962
      %v7964 = vpop.f32.mrb[0].mxu0
      %7965 = vmatprep.mubr.f32.mxu0 0.0
      %7966 = vmatmul.mubr.f32.gmra.mrb[0].mxu0 %v7789
      %v7967 = vpop.f32.mrb[0].mxu0
      %v7968 = vadd.f32 0.0, %v7967
      %v7969 = vpop.f32.mrb[0].mxu0
      %7970 = vmatprep.mubr.f32.mxu0 0.0
      %7971 = vmatmul.mubr.f32.gmra.mrb[0].mxu0 %v7792
      %v7972 = vpop.f32.mrb[0].mxu0
      %v7973 = vadd.f32 0.0, %v7972
      %v7974 = vpop.f32.mrb[0].mxu0
      %7975 = vmatprep.mubr.f32.mxu0 0.0
      %7976 = vmatmul.mubr.f32.gmra.mrb[0].mxu0 %v7795
      %v7977 = vpop.f32.mrb[0].mxu0
      %v7978 = vadd.f32 0.0, %v7977
      %v7979 = vpop.f32.mrb[0].mxu0
      %7980 = vmatprep.mubr.f32.mxu0 0.0
      %7981 = vmatmul.mubr.f32.gmra.mrb[0].mxu0 %v7798
      %v7982 = vpop.f32.mrb[0].mxu0
      %v7983 = vadd.f32 0.0, %v7982
      %v7984 = vpop.f32.mrb[0].mxu0
      %7985 = vmatprep.mubr.f32.mxu0 0.0
      %7986 = vmatmul.mubr.f32.gmra.mrb[0].mxu0 %v7801
      %v7987 = vpop.f32.mrb[0].mxu0
      %v7988 = vadd.f32 0.0, %v7987
      %v7989 = vpop.f32.mrb[0].mxu0
      %7990 = vmatprep.mubr.f32.mxu0 0.0
      %7991 = vmatmul.mubr.f32.gmra.mrb[0].mxu0 %v7804
      %v7992 = vpop.f32.mrb[0].mxu0
      %v7993 = vadd.f32 0.0, %v7992
      %v7994 = vpop.f32.mrb[0].mxu0
      %7995 = vmatprep.mubr.f32.mxu0 0.0
      %7996 = vmatmul.mubr.f32.gmra.mrb[0].mxu0 %v7807
      %v7997 = vpop.f32.mrb[0].mxu0
      %v7998 = vadd.f32 0.0, %v7997
      %v7999 = vpop.f32.mrb[0].mxu0
      %8000 = vmatprep.mubr.f32.mxu0 0.0
      %8001 = vmatmul.mubr.f32.gmra.mrb[0].mxu0 %v7810
      %v8002 = vpop.f32.mrb[0].mxu0
      %v8003 = vadd.f32 0.0, %v8002
      %v8004 = vpop.f32.mrb[0].mxu0
      %8005 = vmatprep.mubr.f32.mxu0 0.0
      %8006 = vmatmul.mubr.f32.gmra.mrb[0].mxu0 %v7813
      %v8007 = vpop.f32.mrb[0].mxu0
      %v8008 = vadd.f32 0.0, %v8007
      %v8009 = vpop.f32.mrb[0].mxu0
      %8010 = vmatprep.mubr.f32.mxu0 0.0
      %8011 = vmatmul.mubr.f32.gmra.mrb[0].mxu0 %v7816
      %v8012 = vpop.f32.mrb[0].mxu0
      %v8013 = vadd.f32 0.0, %v8012
      %v8014 = vpop.f32.mrb[0].mxu0
      %8015 = vmatprep.mubr.f32.mxu0 0.0
      %8016 = vmatmul.mubr.f32.gmra.mrb[0].mxu0 %v7819
      %v8017 = vpop.f32.mrb[0].mxu0
      %v8018 = vadd.f32 0.0, %v8017
      %v8019 = vpop.f32.mrb[0].mxu0
      %8020 = vmatprep.mubr.f32.mxu0 0.0
      %8021 = vmatmul.mubr.f32.gmra.mrb[0].mxu0 %v7822
      %v8022 = vpop.f32.mrb[0].mxu0
      %v8023 = vadd.f32 0.0, %v8022
      %v8024 = vpop.f32.mrb[0].mxu0
      %8025 = vmatprep.mubr.f32.mxu0 0.0
      %8026 = vmatmul.mubr.f32.gmra.mrb[0].mxu0 %v7825
      %v8027 = vpop.f32.mrb[0].mxu0
      %v8028 = vadd.f32 0.0, %v8027
      %v8029 = vpop.f32.mrb[0].mxu0
      %8030 = vmatprep.mubr.f32.mxu0 0.0
      %8031 = vmatmul.mubr.f32.gmra.mrb[0].mxu0 %v7828
      %v8032 = vpop.f32.mrb[0].mxu0
      %v8033 = vadd.f32 0.0, %v8032
      %v8034 = vpop.f32.mrb[0].mxu0
      %8035 = vmatprep.mubr.f32.mxu0 0.0
      %8036 = vmatmul.mubr.f32.gmra.mrb[0].mxu0 %v7831
      %v8037 = vpop.f32.mrb[0].mxu0
      %v8038 = vadd.f32 0.0, %v8037
      %v8039 = vpop.f32.mrb[0].mxu0
      %8040 = vmatprep.mubr.f32.mxu0 0.0
      %8041 = vmatmul.mubr.f32.gmra.mrb[0].mxu0 %v7834
      %v8042 = vpop.f32.mrb[0].mxu0
      %v8043 = vadd.f32 0.0, %v8042
      %v8044 = vpop.f32.mrb[0].mxu0
      %8045 = vmatprep.mubr.f32.mxu0 0.0
      %8046 = vmatmul.mubr.f32.gmra.mrb[0].mxu0 %v7837
      %v8047 = vpop.f32.mrb[0].mxu0
      %v8048 = vadd.f32 0.0, %v8047
      %v8049 = vpop.f32.mrb[0].mxu0
      %8050 = vmatprep.mubr.f32.mxu0 0.0
      %8051 = vmatmul.mubr.f32.gmra.mrb[0].mxu0 %v7840
      %v8052 = vpop.f32.mrb[0].mxu0
      %v8053 = vadd.f32 0.0, %v8052
      %v8054 = vpop.f32.mrb[0].mxu0
      %8055 = vmatprep.mubr.f32.mxu0 0.0
      %8056 = vmatmul.mubr.f32.gmra.mrb[0].mxu0 %v7843
      %v8057 = vpop.f32.mrb[0].mxu0
      %v8058 = vadd.f32 0.0, %v8057
      %v8059 = vpop.f32.mrb[0].mxu0
      %8060 = vmatprep.mubr.f32.mxu0 0.0
      %8061 = vmatmul.mubr.f32.gmra.mrb[0].mxu0 %v7846
      %v8062 = vpop.f32.mrb[0].mxu0
      %v8063 = vadd.f32 0.0, %v8062
      %v8064 = vpop.f32.mrb[0].mxu0
      %8065 = vmatprep.mubr.f32.mxu0 0.0
      %8066 = vmatmul.mubr.f32.gmra.mrb[0].mxu0 %v7849
      %v8067 = vpop.f32.mrb[0].mxu0
      %v8068 = vadd.f32 0.0, %v8067
      %v8069 = vpop.f32.mrb[0].mxu0
      %8070 = vmatprep.mubr.f32.mxu0 0.0
      %8071 = vmatmul.mubr.f32.gmra.mrb[0].mxu0 %v7852
      %v8072 = vpop.f32.mrb[0].mxu0
      %v8073 = vadd.f32 0.0, %v8072
      %v8074 = vpop.f32.mrb[0].mxu0
      %8075 = vmatprep.mubr.f32.mxu0 0.0
      %8076 = vmatmul.mubr.f32.gmra.mrb[0].mxu0 %v7855
      %v8077 = vpop.f32.mrb[0].mxu0
      %v8078 = vadd.f32 0.0, %v8077
      %v8079 = vpop.f32.mrb[0].mxu0
      %8080 = vmatprep.mubr.f32.mxu0 0.0
      %8081 = vmatmul.mubr.f32.gmra.mrb[0].mxu0 %v7858
      %v8082 = vpop.f32.mrb[0].mxu0
      %v8083 = vadd.f32 0.0, %v8082
      %v8084 = vpop.f32.mrb[0].mxu0
      %8085 = vmatprep.mubr.f32.mxu0 0.0
      %8086 = vmatmul.mubr.f32.gmra.mrb[0].mxu0 %v7861
      %v8087 = vpop.f32.mrb[0].mxu0
      %v8088 = vadd.f32 0.0, %v8087
      %v8089 = vpop.f32.mrb[0].mxu0
      %8090 = vdwg.mxu0
      %v8091 = vadd.f32 %v7668, %v7933
      %v8092 = vadd.f32 %v7669, %v7938
      %v8093 = vadd.f32 %v7670, %v7943
      %v8094 = vadd.f32 %v7671, %v7948
      %v8095 = vadd.f32 %v7672, %v7953
      %v8096 = vadd.f32 %v7673, %v7958
      %v8097 = vadd.f32 %v7674, %v7963
      %v8098 = vadd.f32 %v7675, %v7968
      %v8099 = vadd.f32 %v7676, %v7973
      %v8100 = vadd.f32 %v7677, %v7978
      %v8101 = vadd.f32 %v7678, %v7983
      %v8102 = vadd.f32 %v7679, %v7988
      %v8103 = vadd.f32 %v7680, %v7993
      %v8104 = vadd.f32 %v7681, %v7998
      %v8105 = vadd.f32 %v7682, %v8003
      %v8106 = vadd.f32 %v7683, %v8008
      %v8107 = vadd.f32 %v7684, %v8013
      %v8108 = vadd.f32 %v7685, %v8018
      %v8109 = vadd.f32 %v7686, %v8023
      %v8110 = vadd.f32 %v7687, %v8028
      %v8111 = vadd.f32 %v7688, %v8033
      %v8112 = vadd.f32 %v7689, %v8038
      %v8113 = vadd.f32 %v7690, %v8043
      %v8114 = vadd.f32 %v7691, %v8048
      %v8115 = vadd.f32 %v7692, %v8053
      %v8116 = vadd.f32 %v7693, %v8058
      %v8117 = vadd.f32 %v7694, %v8063
      %v8118 = vadd.f32 %v7695, %v8068
      %v8119 = vadd.f32 %v7696, %v8073
      %v8120 = vadd.f32 %v7697, %v8078
      %v8121 = vadd.f32 %v7698, %v8083
      %v8122 = vadd.f32 %v7699, %v8088
      %v8123 = vld [vmem:[#allocation2 + $0x28] sm:$0xff]
      %v8124 = vld [vmem:[#allocation2 + $0x30] sm:$0xff]
      %v8125 = vld [vmem:[#allocation2 + $0x38] sm:$0xff]
      %v8126 = vld [vmem:[#allocation2 + $0x40] sm:$0xff]
      %v8127 = vld [vmem:[#allocation2 + $0x48] sm:$0xff]
      %v8128 = vld [vmem:[#allocation2 + $0x50] sm:$0xff]
      %v8129 = vld [vmem:[#allocation2 + $0x58] sm:$0xff]
      %v8130 = vld [vmem:[#allocation2 + $0x60] sm:$0xff]
      %v8131 = vld [vmem:[#allocation2 + $0x68] sm:$0xff]
      %v8132 = vld [vmem:[#allocation2 + $0x70] sm:$0xff]
      %v8133 = vld [vmem:[#allocation2 + $0x78] sm:$0xff]
      %v8134 = vld [vmem:[#allocation2 + $0x80] sm:$0xff]
      %v8135 = vld [vmem:[#allocation2 + $0x88] sm:$0xff]
      %v8136 = vld [vmem:[#allocation2 + $0x90] sm:$0xff]
      %v8137 = vld [vmem:[#allocation2 + $0x98] sm:$0xff]
      %v8138 = vld [vmem:[#allocation2 + $0xa0] sm:$0xff]
      %v8139 = vld [vmem:[#allocation2 + $0xa8] sm:$0xff]
      %v8140 = vld [vmem:[#allocation2 + $0xb0] sm:$0xff]
      %v8141 = vld [vmem:[#allocation2 + $0xb8] sm:$0xff]
      %v8142 = vld [vmem:[#allocation2 + $0xc0] sm:$0xff]
      %v8143 = vld [vmem:[#allocation2 + $0xc8] sm:$0xff]
      %v8144 = vld [vmem:[#allocation2 + $0xd0] sm:$0xff]
      %v8145 = vld [vmem:[#allocation2 + $0xd8] sm:$0xff]
      %v8146 = vld [vmem:[#allocation2 + $0xe0] sm:$0xff]
      %v8147 = vld [vmem:[#allocation2 + $0xe8] sm:$0xff]
      %v8148 = vld [vmem:[#allocation2 + $0xf0] sm:$0xff]
      %v8149 = vld [vmem:[#allocation2 + $0xf8] sm:$0xff]
      %v8150 = vld [vmem:[#allocation2 + $0x100] sm:$0xff]
      %v8151 = vld [vmem:[#allocation2 + $0x108] sm:$0xff]
      %v8152 = vld [vmem:[#allocation2 + $0x110] sm:$0xff]
      %v8153 = vld [vmem:[#allocation2 + $0x118] sm:$0xff]
      %v8154 = vld [vmem:[#allocation2 + $0x120] sm:$0xff]
      %s8155 = scalar_lea.vmem %s5, 112
      %v8156 = vld [vmem:[%s8155] sm:$0xff]
      %v8157 = vld [vmem:[%s8155 + $0x8] sm:$0xf]
      %v8159 = vsel %vm1406, %v8123, 0
      %v8162 = vsel %vm1406, %v8124, 0
      %v8165 = vsel %vm1406, %v8125, 0
      %v8168 = vsel %vm1406, %v8126, 0
      %v8171 = vsel %vm1406, %v8127, 0
      %v8174 = vsel %vm1406, %v8128, 0
      %v8177 = vsel %vm1406, %v8129, 0
      %v8180 = vsel %vm1406, %v8130, 0
      %v8183 = vsel %vm1406, %v8131, 0
      %v8186 = vsel %vm1406, %v8132, 0
      %v8189 = vsel %vm1406, %v8133, 0
      %v8192 = vsel %vm1406, %v8134, 0
      %v8195 = vsel %vm1406, %v8135, 0
      %v8198 = vsel %vm1406, %v8136, 0
      %v8201 = vsel %vm1406, %v8137, 0
      %v8204 = vsel %vm1406, %v8138, 0
      %v8207 = vsel %vm1406, %v8139, 0
      %v8210 = vsel %vm1406, %v8140, 0
      %v8213 = vsel %vm1406, %v8141, 0
      %v8216 = vsel %vm1406, %v8142, 0
      %v8219 = vsel %vm1406, %v8143, 0
      %v8222 = vsel %vm1406, %v8144, 0
      %v8225 = vsel %vm1406, %v8145, 0
      %v8228 = vsel %vm1406, %v8146, 0
      %v8231 = vsel %vm1406, %v8147, 0
      %v8234 = vsel %vm1406, %v8148, 0
      %v8237 = vsel %vm1406, %v8149, 0
      %v8240 = vsel %vm1406, %v8150, 0
      %v8243 = vsel %vm1406, %v8151, 0
      %v8246 = vsel %vm1406, %v8152, 0
      %v8249 = vsel %vm1406, %v8153, 0
      %v8252 = vsel %vm1406, %v8154, 0
      %v8255 = vsel %vm1674, %v8157, 0
      %8257 = vmatprep.subr.mxu0 0.0
      %8258 = vmatpush1.msra.mxu0 %v8156
      %8259 = vmatprep.subr.mxu0 0.0
      %8260 = vmatpush1.msra.mxu0 %v8255
      %8261 = vmatprep.subr.mxu0 0.0
      %8262 = vmatpush1.msra.mxu0 0.0
      %8263 = vmatprep.subr.mxu0 0.0
      %8264 = vmatpush1.msra.mxu0 0.0
      %8265 = vmatprep.subr.mxu0 0.0
      %8266 = vmatpush1.msra.mxu0 0.0
      %8267 = vmatprep.subr.mxu0 0.0
      %8268 = vmatpush1.msra.mxu0 0.0
      %8269 = vmatprep.subr.mxu0 0.0
      %8270 = vmatpush1.msra.mxu0 0.0
      %8271 = vmatprep.subr.mxu0 0.0
      %8272 = vmatpush1.msra.mxu0 0.0
      %8273 = vmatprep.subr.mxu0 0.0
      %8274 = vmatpush1.msra.mxu0 0.0
      %8275 = vmatprep.subr.mxu0 0.0
      %8276 = vmatpush1.msra.mxu0 0.0
      %8277 = vmatprep.subr.mxu0 0.0
      %8278 = vmatpush1.msra.mxu0 0.0
      %8279 = vmatprep.subr.mxu0 0.0
      %8280 = vmatpush1.msra.mxu0 0.0
      %8281 = vmatprep.subr.mxu0 0.0
      %8282 = vmatpush1.msra.mxu0 0.0
      %8283 = vmatprep.subr.mxu0 0.0
      %8284 = vmatpush1.msra.mxu0 0.0
      %8285 = vmatprep.subr.mxu0 0.0
      %8286 = vmatpush1.msra.mxu0 0.0
      %8287 = vmatprep.subr.mxu0 0.0
      %8288 = vmatpush1.msra.mxu0 0.0
      %8289 = vmatprep.subr.mxu0 0.0
      %8290 = vmatpush1.msra.mxu0 0.0
      %8291 = vmatprep.subr.mxu0 0.0
      %8292 = vmatpush1.msra.mxu0 0.0
      %8293 = vmatprep.subr.mxu0 0.0
      %8294 = vmatpush1.msra.mxu0 0.0
      %8295 = vmatprep.subr.mxu0 0.0
      %8296 = vmatpush1.msra.mxu0 0.0
      %8297 = vmatprep.subr.mxu0 0.0
      %8298 = vmatpush1.msra.mxu0 0.0
      %8299 = vmatprep.subr.mxu0 0.0
      %8300 = vmatpush1.msra.mxu0 0.0
      %8301 = vmatprep.subr.mxu0 0.0
      %8302 = vmatpush1.msra.mxu0 0.0
      %8303 = vmatprep.subr.mxu0 0.0
      %8304 = vmatpush1.msra.mxu0 0.0
      %8305 = vmatprep.subr.mxu0 0.0
      %8306 = vmatpush1.msra.mxu0 0.0
      %8307 = vmatprep.subr.mxu0 0.0
      %8308 = vmatpush1.msra.mxu0 0.0
      %8309 = vmatprep.subr.mxu0 0.0
      %8310 = vmatpush1.msra.mxu0 0.0
      %8311 = vmatprep.subr.mxu0 0.0
      %8312 = vmatpush1.msra.mxu0 0.0
      %8313 = vmatprep.subr.mxu0 0.0
      %8314 = vmatpush1.msra.mxu0 0.0
      %8315 = vmatprep.subr.mxu0 0.0
      %8316 = vmatpush1.msra.mxu0 0.0
      %8317 = vmatprep.subr.mxu0 0.0
      %8318 = vmatpush1.msra.mxu0 0.0
      %8319 = vmatprep.subr.mxu0 0.0
      %8320 = vmatpush1.msra.mxu0 0.0
      %8321 = vmatprep.mubr.f32.mxu0 0.0
      %8322 = vmatmul.mubr.f32.gmra.mrb[0].mxu0 %v8159
      %v8323 = vpop.f32.mrb[0].mxu0
      %v8324 = vadd.f32 0.0, %v8323
      %v8325 = vpop.f32.mrb[0].mxu0
      %8326 = vmatprep.mubr.f32.mxu0 0.0
      %8327 = vmatmul.mubr.f32.gmra.mrb[0].mxu0 %v8162
      %v8328 = vpop.f32.mrb[0].mxu0
      %v8329 = vadd.f32 0.0, %v8328
      %v8330 = vpop.f32.mrb[0].mxu0
      %8331 = vmatprep.mubr.f32.mxu0 0.0
      %8332 = vmatmul.mubr.f32.gmra.mrb[0].mxu0 %v8165
      %v8333 = vpop.f32.mrb[0].mxu0
      %v8334 = vadd.f32 0.0, %v8333
      %v8335 = vpop.f32.mrb[0].mxu0
      %8336 = vmatprep.mubr.f32.mxu0 0.0
      %8337 = vmatmul.mubr.f32.gmra.mrb[0].mxu0 %v8168
      %v8338 = vpop.f32.mrb[0].mxu0
      %v8339 = vadd.f32 0.0, %v8338
      %v8340 = vpop.f32.mrb[0].mxu0
      %8341 = vmatprep.mubr.f32.mxu0 0.0
      %8342 = vmatmul.mubr.f32.gmra.mrb[0].mxu0 %v8171
      %v8343 = vpop.f32.mrb[0].mxu0
      %v8344 = vadd.f32 0.0, %v8343
      %v8345 = vpop.f32.mrb[0].mxu0
      %8346 = vmatprep.mubr.f32.mxu0 0.0
      %8347 = vmatmul.mubr.f32.gmra.mrb[0].mxu0 %v8174
      %v8348 = vpop.f32.mrb[0].mxu0
      %v8349 = vadd.f32 0.0, %v8348
      %v8350 = vpop.f32.mrb[0].mxu0
      %8351 = vmatprep.mubr.f32.mxu0 0.0
      %8352 = vmatmul.mubr.f32.gmra.mrb[0].mxu0 %v8177
      %v8353 = vpop.f32.mrb[0].mxu0
      %v8354 = vadd.f32 0.0, %v8353
      %v8355 = vpop.f32.mrb[0].mxu0
      %8356 = vmatprep.mubr.f32.mxu0 0.0
      %8357 = vmatmul.mubr.f32.gmra.mrb[0].mxu0 %v8180
      %v8358 = vpop.f32.mrb[0].mxu0
      %v8359 = vadd.f32 0.0, %v8358
      %v8360 = vpop.f32.mrb[0].mxu0
      %8361 = vmatprep.mubr.f32.mxu0 0.0
      %8362 = vmatmul.mubr.f32.gmra.mrb[0].mxu0 %v8183
      %v8363 = vpop.f32.mrb[0].mxu0
      %v8364 = vadd.f32 0.0, %v8363
      %v8365 = vpop.f32.mrb[0].mxu0
      %8366 = vmatprep.mubr.f32.mxu0 0.0
      %8367 = vmatmul.mubr.f32.gmra.mrb[0].mxu0 %v8186
      %v8368 = vpop.f32.mrb[0].mxu0
      %v8369 = vadd.f32 0.0, %v8368
      %v8370 = vpop.f32.mrb[0].mxu0
      %8371 = vmatprep.mubr.f32.mxu0 0.0
      %8372 = vmatmul.mubr.f32.gmra.mrb[0].mxu0 %v8189
      %v8373 = vpop.f32.mrb[0].mxu0
      %v8374 = vadd.f32 0.0, %v8373
      %v8375 = vpop.f32.mrb[0].mxu0
      %8376 = vmatprep.mubr.f32.mxu0 0.0
      %8377 = vmatmul.mubr.f32.gmra.mrb[0].mxu0 %v8192
      %v8378 = vpop.f32.mrb[0].mxu0
      %v8379 = vadd.f32 0.0, %v8378
      %v8380 = vpop.f32.mrb[0].mxu0
      %8381 = vmatprep.mubr.f32.mxu0 0.0
      %8382 = vmatmul.mubr.f32.gmra.mrb[0].mxu0 %v8195
      %v8383 = vpop.f32.mrb[0].mxu0
      %v8384 = vadd.f32 0.0, %v8383
      %v8385 = vpop.f32.mrb[0].mxu0
      %8386 = vmatprep.mubr.f32.mxu0 0.0
      %8387 = vmatmul.mubr.f32.gmra.mrb[0].mxu0 %v8198
      %v8388 = vpop.f32.mrb[0].mxu0
      %v8389 = vadd.f32 0.0, %v8388
      %v8390 = vpop.f32.mrb[0].mxu0
      %8391 = vmatprep.mubr.f32.mxu0 0.0
      %8392 = vmatmul.mubr.f32.gmra.mrb[0].mxu0 %v8201
      %v8393 = vpop.f32.mrb[0].mxu0
      %v8394 = vadd.f32 0.0, %v8393
      %v8395 = vpop.f32.mrb[0].mxu0
      %8396 = vmatprep.mubr.f32.mxu0 0.0
      %8397 = vmatmul.mubr.f32.gmra.mrb[0].mxu0 %v8204
      %v8398 = vpop.f32.mrb[0].mxu0
      %v8399 = vadd.f32 0.0, %v8398
      %v8400 = vpop.f32.mrb[0].mxu0
      %8401 = vmatprep.mubr.f32.mxu0 0.0
      %8402 = vmatmul.mubr.f32.gmra.mrb[0].mxu0 %v8207
      %v8403 = vpop.f32.mrb[0].mxu0
      %v8404 = vadd.f32 0.0, %v8403
      %v8405 = vpop.f32.mrb[0].mxu0
      %8406 = vmatprep.mubr.f32.mxu0 0.0
      %8407 = vmatmul.mubr.f32.gmra.mrb[0].mxu0 %v8210
      %v8408 = vpop.f32.mrb[0].mxu0
      %v8409 = vadd.f32 0.0, %v8408
      %v8410 = vpop.f32.mrb[0].mxu0
      %8411 = vmatprep.mubr.f32.mxu0 0.0
      %8412 = vmatmul.mubr.f32.gmra.mrb[0].mxu0 %v8213
      %v8413 = vpop.f32.mrb[0].mxu0
      %v8414 = vadd.f32 0.0, %v8413
      %v8415 = vpop.f32.mrb[0].mxu0
      %8416 = vmatprep.mubr.f32.mxu0 0.0
      %8417 = vmatmul.mubr.f32.gmra.mrb[0].mxu0 %v8216
      %v8418 = vpop.f32.mrb[0].mxu0
      %v8419 = vadd.f32 0.0, %v8418
      %v8420 = vpop.f32.mrb[0].mxu0
      %8421 = vmatprep.mubr.f32.mxu0 0.0
      %8422 = vmatmul.mubr.f32.gmra.mrb[0].mxu0 %v8219
      %v8423 = vpop.f32.mrb[0].mxu0
      %v8424 = vadd.f32 0.0, %v8423
      %v8425 = vpop.f32.mrb[0].mxu0
      %8426 = vmatprep.mubr.f32.mxu0 0.0
      %8427 = vmatmul.mubr.f32.gmra.mrb[0].mxu0 %v8222
      %v8428 = vpop.f32.mrb[0].mxu0
      %v8429 = vadd.f32 0.0, %v8428
      %v8430 = vpop.f32.mrb[0].mxu0
      %8431 = vmatprep.mubr.f32.mxu0 0.0
      %8432 = vmatmul.mubr.f32.gmra.mrb[0].mxu0 %v8225
      %v8433 = vpop.f32.mrb[0].mxu0
      %v8434 = vadd.f32 0.0, %v8433
      %v8435 = vpop.f32.mrb[0].mxu0
      %8436 = vmatprep.mubr.f32.mxu0 0.0
      %8437 = vmatmul.mubr.f32.gmra.mrb[0].mxu0 %v8228
      %v8438 = vpop.f32.mrb[0].mxu0
      %v8439 = vadd.f32 0.0, %v8438
      %v8440 = vpop.f32.mrb[0].mxu0
      %8441 = vmatprep.mubr.f32.mxu0 0.0
      %8442 = vmatmul.mubr.f32.gmra.mrb[0].mxu0 %v8231
      %v8443 = vpop.f32.mrb[0].mxu0
      %v8444 = vadd.f32 0.0, %v8443
      %v8445 = vpop.f32.mrb[0].mxu0
      %8446 = vmatprep.mubr.f32.mxu0 0.0
      %8447 = vmatmul.mubr.f32.gmra.mrb[0].mxu0 %v8234
      %v8448 = vpop.f32.mrb[0].mxu0
      %v8449 = vadd.f32 0.0, %v8448
      %v8450 = vpop.f32.mrb[0].mxu0
      %8451 = vmatprep.mubr.f32.mxu0 0.0
      %8452 = vmatmul.mubr.f32.gmra.mrb[0].mxu0 %v8237
      %v8453 = vpop.f32.mrb[0].mxu0
      %v8454 = vadd.f32 0.0, %v8453
      %v8455 = vpop.f32.mrb[0].mxu0
      %8456 = vmatprep.mubr.f32.mxu0 0.0
      %8457 = vmatmul.mubr.f32.gmra.mrb[0].mxu0 %v8240
      %v8458 = vpop.f32.mrb[0].mxu0
      %v8459 = vadd.f32 0.0, %v8458
      %v8460 = vpop.f32.mrb[0].mxu0
      %8461 = vmatprep.mubr.f32.mxu0 0.0
      %8462 = vmatmul.mubr.f32.gmra.mrb[0].mxu0 %v8243
      %v8463 = vpop.f32.mrb[0].mxu0
      %v8464 = vadd.f32 0.0, %v8463
      %v8465 = vpop.f32.mrb[0].mxu0
      %8466 = vmatprep.mubr.f32.mxu0 0.0
      %8467 = vmatmul.mubr.f32.gmra.mrb[0].mxu0 %v8246
      %v8468 = vpop.f32.mrb[0].mxu0
      %v8469 = vadd.f32 0.0, %v8468
      %v8470 = vpop.f32.mrb[0].mxu0
      %8471 = vmatprep.mubr.f32.mxu0 0.0
      %8472 = vmatmul.mubr.f32.gmra.mrb[0].mxu0 %v8249
      %v8473 = vpop.f32.mrb[0].mxu0
      %v8474 = vadd.f32 0.0, %v8473
      %v8475 = vpop.f32.mrb[0].mxu0
      %8476 = vmatprep.mubr.f32.mxu0 0.0
      %8477 = vmatmul.mubr.f32.gmra.mrb[0].mxu0 %v8252
      %v8478 = vpop.f32.mrb[0].mxu0
      %v8479 = vadd.f32 0.0, %v8478
      %v8480 = vpop.f32.mrb[0].mxu0
      %8481 = vdwg.mxu0
      %v8482 = vadd.f32 %v8091, %v8324
      %v8483 = vadd.f32 %v8092, %v8329
      %v8484 = vadd.f32 %v8093, %v8334
      %v8485 = vadd.f32 %v8094, %v8339
      %v8486 = vadd.f32 %v8095, %v8344
      %v8487 = vadd.f32 %v8096, %v8349
      %v8488 = vadd.f32 %v8097, %v8354
      %v8489 = vadd.f32 %v8098, %v8359
      %v8490 = vadd.f32 %v8099, %v8364
      %v8491 = vadd.f32 %v8100, %v8369
      %v8492 = vadd.f32 %v8101, %v8374
      %v8493 = vadd.f32 %v8102, %v8379
      %v8494 = vadd.f32 %v8103, %v8384
      %v8495 = vadd.f32 %v8104, %v8389
      %v8496 = vadd.f32 %v8105, %v8394
      %v8497 = vadd.f32 %v8106, %v8399
      %v8498 = vadd.f32 %v8107, %v8404
      %v8499 = vadd.f32 %v8108, %v8409
      %v8500 = vadd.f32 %v8109, %v8414
      %v8501 = vadd.f32 %v8110, %v8419
      %v8502 = vadd.f32 %v8111, %v8424
      %v8503 = vadd.f32 %v8112, %v8429
      %v8504 = vadd.f32 %v8113, %v8434
      %v8505 = vadd.f32 %v8114, %v8439
      %v8506 = vadd.f32 %v8115, %v8444
      %v8507 = vadd.f32 %v8116, %v8449
      %v8508 = vadd.f32 %v8117, %v8454
      %v8509 = vadd.f32 %v8118, %v8459
      %v8510 = vadd.f32 %v8119, %v8464
      %v8511 = vadd.f32 %v8120, %v8469
      %v8512 = vadd.f32 %v8121, %v8474
      %v8513 = vadd.f32 %v8122, %v8479
      %v8514 = vld [vmem:[#allocation2 + $0x29] sm:$0xff]
      %v8515 = vld [vmem:[#allocation2 + $0x31] sm:$0xff]
      %v8516 = vld [vmem:[#allocation2 + $0x39] sm:$0xff]
      %v8517 = vld [vmem:[#allocation2 + $0x41] sm:$0xff]
      %v8518 = vld [vmem:[#allocation2 + $0x49] sm:$0xff]
      %v8519 = vld [vmem:[#allocation2 + $0x51] sm:$0xff]
      %v8520 = vld [vmem:[#allocation2 + $0x59] sm:$0xff]
      %v8521 = vld [vmem:[#allocation2 + $0x61] sm:$0xff]
      %v8522 = vld [vmem:[#allocation2 + $0x69] sm:$0xff]
      %v8523 = vld [vmem:[#allocation2 + $0x71] sm:$0xff]
      %v8524 = vld [vmem:[#allocation2 + $0x79] sm:$0xff]
      %v8525 = vld [vmem:[#allocation2 + $0x81] sm:$0xff]
      %v8526 = vld [vmem:[#allocation2 + $0x89] sm:$0xff]
      %v8527 = vld [vmem:[#allocation2 + $0x91] sm:$0xff]
      %v8528 = vld [vmem:[#allocation2 + $0x99] sm:$0xff]
      %v8529 = vld [vmem:[#allocation2 + $0xa1] sm:$0xff]
      %v8530 = vld [vmem:[#allocation2 + $0xa9] sm:$0xff]
      %v8531 = vld [vmem:[#allocation2 + $0xb1] sm:$0xff]
      %v8532 = vld [vmem:[#allocation2 + $0xb9] sm:$0xff]
      %v8533 = vld [vmem:[#allocation2 + $0xc1] sm:$0xff]
      %v8534 = vld [vmem:[#allocation2 + $0xc9] sm:$0xff]
      %v8535 = vld [vmem:[#allocation2 + $0xd1] sm:$0xff]
      %v8536 = vld [vmem:[#allocation2 + $0xd9] sm:$0xff]
      %v8537 = vld [vmem:[#allocation2 + $0xe1] sm:$0xff]
      %v8538 = vld [vmem:[#allocation2 + $0xe9] sm:$0xff]
      %v8539 = vld [vmem:[#allocation2 + $0xf1] sm:$0xff]
      %v8540 = vld [vmem:[#allocation2 + $0xf9] sm:$0xff]
      %v8541 = vld [vmem:[#allocation2 + $0x101] sm:$0xff]
      %v8542 = vld [vmem:[#allocation2 + $0x109] sm:$0xff]
      %v8543 = vld [vmem:[#allocation2 + $0x111] sm:$0xff]
      %v8544 = vld [vmem:[#allocation2 + $0x119] sm:$0xff]
      %v8545 = vld [vmem:[#allocation2 + $0x121] sm:$0xff]
      %v8546 = vmul.f32 %v8514, %v1374
      %v8547 = vmul.f32 %v8515, %v1375
      %v8548 = vmul.f32 %v8516, %v1376
      %v8549 = vmul.f32 %v8517, %v1377
      %v8550 = vmul.f32 %v8518, %v1378
      %v8551 = vmul.f32 %v8519, %v1379
      %v8552 = vmul.f32 %v8520, %v1380
      %v8553 = vmul.f32 %v8521, %v1381
      %v8554 = vmul.f32 %v8522, %v1382
      %v8555 = vmul.f32 %v8523, %v1383
      %v8556 = vmul.f32 %v8524, %v1384
      %v8557 = vmul.f32 %v8525, %v1385
      %v8558 = vmul.f32 %v8526, %v1386
      %v8559 = vmul.f32 %v8527, %v1387
      %v8560 = vmul.f32 %v8528, %v1388
      %v8561 = vmul.f32 %v8529, %v1389
      %v8562 = vmul.f32 %v8530, %v1390
      %v8563 = vmul.f32 %v8531, %v1391
      %v8564 = vmul.f32 %v8532, %v1392
      %v8565 = vmul.f32 %v8533, %v1393
      %v8566 = vmul.f32 %v8534, %v1394
      %v8567 = vmul.f32 %v8535, %v1395
      %v8568 = vmul.f32 %v8536, %v1396
      %v8569 = vmul.f32 %v8537, %v1397
      %v8570 = vmul.f32 %v8538, %v1398
      %v8571 = vmul.f32 %v8539, %v1399
      %v8572 = vmul.f32 %v8540, %v1400
      %v8573 = vmul.f32 %v8541, %v1401
      %v8574 = vmul.f32 %v8542, %v1402
      %v8575 = vmul.f32 %v8543, %v1403
      %v8576 = vmul.f32 %v8544, %v1404
      %v8577 = vmul.f32 %v8545, %v1405
      %s8578 = scalar_lea.vmem %s5, 128
      %v8579 = vld [vmem:[%s8578] sm:$0xff]
      %v8580 = vld [vmem:[%s8578 + $0x8] sm:$0xf]
      %v8582 = vsel %vm1406, %v8546, 0
      %v8585 = vsel %vm1406, %v8547, 0
      %v8588 = vsel %vm1406, %v8548, 0
      %v8591 = vsel %vm1406, %v8549, 0
      %v8594 = vsel %vm1406, %v8550, 0
      %v8597 = vsel %vm1406, %v8551, 0
      %v8600 = vsel %vm1406, %v8552, 0
      %v8603 = vsel %vm1406, %v8553, 0
      %v8606 = vsel %vm1406, %v8554, 0
      %v8609 = vsel %vm1406, %v8555, 0
      %v8612 = vsel %vm1406, %v8556, 0
      %v8615 = vsel %vm1406, %v8557, 0
      %v8618 = vsel %vm1406, %v8558, 0
      %v8621 = vsel %vm1406, %v8559, 0
      %v8624 = vsel %vm1406, %v8560, 0
      %v8627 = vsel %vm1406, %v8561, 0
      %v8630 = vsel %vm1406, %v8562, 0
      %v8633 = vsel %vm1406, %v8563, 0
      %v8636 = vsel %vm1406, %v8564, 0
      %v8639 = vsel %vm1406, %v8565, 0
      %v8642 = vsel %vm1406, %v8566, 0
      %v8645 = vsel %vm1406, %v8567, 0
      %v8648 = vsel %vm1406, %v8568, 0
      %v8651 = vsel %vm1406, %v8569, 0
      %v8654 = vsel %vm1406, %v8570, 0
      %v8657 = vsel %vm1406, %v8571, 0
      %v8660 = vsel %vm1406, %v8572, 0
      %v8663 = vsel %vm1406, %v8573, 0
      %v8666 = vsel %vm1406, %v8574, 0
      %v8669 = vsel %vm1406, %v8575, 0
      %v8672 = vsel %vm1406, %v8576, 0
      %v8675 = vsel %vm1406, %v8577, 0
      %v8678 = vsel %vm1674, %v8580, 0
      %8680 = vmatprep.subr.mxu0 0.0
      %8681 = vmatpush1.msra.mxu0 %v8579
      %8682 = vmatprep.subr.mxu0 0.0
      %8683 = vmatpush1.msra.mxu0 %v8678
      %8684 = vmatprep.subr.mxu0 0.0
      %8685 = vmatpush1.msra.mxu0 0.0
      %8686 = vmatprep.subr.mxu0 0.0
      %8687 = vmatpush1.msra.mxu0 0.0
      %8688 = vmatprep.subr.mxu0 0.0
      %8689 = vmatpush1.msra.mxu0 0.0
      %8690 = vmatprep.subr.mxu0 0.0
      %8691 = vmatpush1.msra.mxu0 0.0
      %8692 = vmatprep.subr.mxu0 0.0
      %8693 = vmatpush1.msra.mxu0 0.0
      %8694 = vmatprep.subr.mxu0 0.0
      %8695 = vmatpush1.msra.mxu0 0.0
      %8696 = vmatprep.subr.mxu0 0.0
      %8697 = vmatpush1.msra.mxu0 0.0
      %8698 = vmatprep.subr.mxu0 0.0
      %8699 = vmatpush1.msra.mxu0 0.0
      %8700 = vmatprep.subr.mxu0 0.0
      %8701 = vmatpush1.msra.mxu0 0.0
      %8702 = vmatprep.subr.mxu0 0.0
      %8703 = vmatpush1.msra.mxu0 0.0
      %8704 = vmatprep.subr.mxu0 0.0
      %8705 = vmatpush1.msra.mxu0 0.0
      %8706 = vmatprep.subr.mxu0 0.0
      %8707 = vmatpush1.msra.mxu0 0.0
      %8708 = vmatprep.subr.mxu0 0.0
      %8709 = vmatpush1.msra.mxu0 0.0
      %8710 = vmatprep.subr.mxu0 0.0
      %8711 = vmatpush1.msra.mxu0 0.0
      %8712 = vmatprep.subr.mxu0 0.0
      %8713 = vmatpush1.msra.mxu0 0.0
      %8714 = vmatprep.subr.mxu0 0.0
      %8715 = vmatpush1.msra.mxu0 0.0
      %8716 = vmatprep.subr.mxu0 0.0
      %8717 = vmatpush1.msra.mxu0 0.0
      %8718 = vmatprep.subr.mxu0 0.0
      %8719 = vmatpush1.msra.mxu0 0.0
      %8720 = vmatprep.subr.mxu0 0.0
      %8721 = vmatpush1.msra.mxu0 0.0
      %8722 = vmatprep.subr.mxu0 0.0
      %8723 = vmatpush1.msra.mxu0 0.0
      %8724 = vmatprep.subr.mxu0 0.0
      %8725 = vmatpush1.msra.mxu0 0.0
      %8726 = vmatprep.subr.mxu0 0.0
      %8727 = vmatpush1.msra.mxu0 0.0
      %8728 = vmatprep.subr.mxu0 0.0
      %8729 = vmatpush1.msra.mxu0 0.0
      %8730 = vmatprep.subr.mxu0 0.0
      %8731 = vmatpush1.msra.mxu0 0.0
      %8732 = vmatprep.subr.mxu0 0.0
      %8733 = vmatpush1.msra.mxu0 0.0
      %8734 = vmatprep.subr.mxu0 0.0
      %8735 = vmatpush1.msra.mxu0 0.0
      %8736 = vmatprep.subr.mxu0 0.0
      %8737 = vmatpush1.msra.mxu0 0.0
      %8738 = vmatprep.subr.mxu0 0.0
      %8739 = vmatpush1.msra.mxu0 0.0
      %8740 = vmatprep.subr.mxu0 0.0
      %8741 = vmatpush1.msra.mxu0 0.0
      %8742 = vmatprep.subr.mxu0 0.0
      %8743 = vmatpush1.msra.mxu0 0.0
      %8744 = vmatprep.mubr.f32.mxu0 0.0
      %8745 = vmatmul.mubr.f32.gmra.mrb[0].mxu0 %v8582
      %v8746 = vpop.f32.mrb[0].mxu0
      %v8747 = vadd.f32 0.0, %v8746
      %v8748 = vpop.f32.mrb[0].mxu0
      %8749 = vmatprep.mubr.f32.mxu0 0.0
      %8750 = vmatmul.mubr.f32.gmra.mrb[0].mxu0 %v8585
      %v8751 = vpop.f32.mrb[0].mxu0
      %v8752 = vadd.f32 0.0, %v8751
      %v8753 = vpop.f32.mrb[0].mxu0
      %8754 = vmatprep.mubr.f32.mxu0 0.0
      %8755 = vmatmul.mubr.f32.gmra.mrb[0].mxu0 %v8588
      %v8756 = vpop.f32.mrb[0].mxu0
      %v8757 = vadd.f32 0.0, %v8756
      %v8758 = vpop.f32.mrb[0].mxu0
      %8759 = vmatprep.mubr.f32.mxu0 0.0
      %8760 = vmatmul.mubr.f32.gmra.mrb[0].mxu0 %v8591
      %v8761 = vpop.f32.mrb[0].mxu0
      %v8762 = vadd.f32 0.0, %v8761
      %v8763 = vpop.f32.mrb[0].mxu0
      %8764 = vmatprep.mubr.f32.mxu0 0.0
      %8765 = vmatmul.mubr.f32.gmra.mrb[0].mxu0 %v8594
      %v8766 = vpop.f32.mrb[0].mxu0
      %v8767 = vadd.f32 0.0, %v8766
      %v8768 = vpop.f32.mrb[0].mxu0
      %8769 = vmatprep.mubr.f32.mxu0 0.0
      %8770 = vmatmul.mubr.f32.gmra.mrb[0].mxu0 %v8597
      %v8771 = vpop.f32.mrb[0].mxu0
      %v8772 = vadd.f32 0.0, %v8771
      %v8773 = vpop.f32.mrb[0].mxu0
      %8774 = vmatprep.mubr.f32.mxu0 0.0
      %8775 = vmatmul.mubr.f32.gmra.mrb[0].mxu0 %v8600
      %v8776 = vpop.f32.mrb[0].mxu0
      %v8777 = vadd.f32 0.0, %v8776
      %v8778 = vpop.f32.mrb[0].mxu0
      %8779 = vmatprep.mubr.f32.mxu0 0.0
      %8780 = vmatmul.mubr.f32.gmra.mrb[0].mxu0 %v8603
      %v8781 = vpop.f32.mrb[0].mxu0
      %v8782 = vadd.f32 0.0, %v8781
      %v8783 = vpop.f32.mrb[0].mxu0
      %8784 = vmatprep.mubr.f32.mxu0 0.0
      %8785 = vmatmul.mubr.f32.gmra.mrb[0].mxu0 %v8606
      %v8786 = vpop.f32.mrb[0].mxu0
      %v8787 = vadd.f32 0.0, %v8786
      %v8788 = vpop.f32.mrb[0].mxu0
      %8789 = vmatprep.mubr.f32.mxu0 0.0
      %8790 = vmatmul.mubr.f32.gmra.mrb[0].mxu0 %v8609
      %v8791 = vpop.f32.mrb[0].mxu0
      %v8792 = vadd.f32 0.0, %v8791
      %v8793 = vpop.f32.mrb[0].mxu0
      %8794 = vmatprep.mubr.f32.mxu0 0.0
      %8795 = vmatmul.mubr.f32.gmra.mrb[0].mxu0 %v8612
      %v8796 = vpop.f32.mrb[0].mxu0
      %v8797 = vadd.f32 0.0, %v8796
      %v8798 = vpop.f32.mrb[0].mxu0
      %8799 = vmatprep.mubr.f32.mxu0 0.0
      %8800 = vmatmul.mubr.f32.gmra.mrb[0].mxu0 %v8615
      %v8801 = vpop.f32.mrb[0].mxu0
      %v8802 = vadd.f32 0.0, %v8801
      %v8803 = vpop.f32.mrb[0].mxu0
      %8804 = vmatprep.mubr.f32.mxu0 0.0
      %8805 = vmatmul.mubr.f32.gmra.mrb[0].mxu0 %v8618
      %v8806 = vpop.f32.mrb[0].mxu0
      %v8807 = vadd.f32 0.0, %v8806
      %v8808 = vpop.f32.mrb[0].mxu0
      %8809 = vmatprep.mubr.f32.mxu0 0.0
      %8810 = vmatmul.mubr.f32.gmra.mrb[0].mxu0 %v8621
      %v8811 = vpop.f32.mrb[0].mxu0
      %v8812 = vadd.f32 0.0, %v8811
      %v8813 = vpop.f32.mrb[0].mxu0
      %8814 = vmatprep.mubr.f32.mxu0 0.0
      %8815 = vmatmul.mubr.f32.gmra.mrb[0].mxu0 %v8624
      %v8816 = vpop.f32.mrb[0].mxu0
      %v8817 = vadd.f32 0.0, %v8816
      %v8818 = vpop.f32.mrb[0].mxu0
      %8819 = vmatprep.mubr.f32.mxu0 0.0
      %8820 = vmatmul.mubr.f32.gmra.mrb[0].mxu0 %v8627
      %v8821 = vpop.f32.mrb[0].mxu0
      %v8822 = vadd.f32 0.0, %v8821
      %v8823 = vpop.f32.mrb[0].mxu0
      %8824 = vmatprep.mubr.f32.mxu0 0.0
      %8825 = vmatmul.mubr.f32.gmra.mrb[0].mxu0 %v8630
      %v8826 = vpop.f32.mrb[0].mxu0
      %v8827 = vadd.f32 0.0, %v8826
      %v8828 = vpop.f32.mrb[0].mxu0
      %8829 = vmatprep.mubr.f32.mxu0 0.0
      %8830 = vmatmul.mubr.f32.gmra.mrb[0].mxu0 %v8633
      %v8831 = vpop.f32.mrb[0].mxu0
      %v8832 = vadd.f32 0.0, %v8831
      %v8833 = vpop.f32.mrb[0].mxu0
      %8834 = vmatprep.mubr.f32.mxu0 0.0
      %8835 = vmatmul.mubr.f32.gmra.mrb[0].mxu0 %v8636
      %v8836 = vpop.f32.mrb[0].mxu0
      %v8837 = vadd.f32 0.0, %v8836
      %v8838 = vpop.f32.mrb[0].mxu0
      %8839 = vmatprep.mubr.f32.mxu0 0.0
      %8840 = vmatmul.mubr.f32.gmra.mrb[0].mxu0 %v8639
      %v8841 = vpop.f32.mrb[0].mxu0
      %v8842 = vadd.f32 0.0, %v8841
      %v8843 = vpop.f32.mrb[0].mxu0
      %8844 = vmatprep.mubr.f32.mxu0 0.0
      %8845 = vmatmul.mubr.f32.gmra.mrb[0].mxu0 %v8642
      %v8846 = vpop.f32.mrb[0].mxu0
      %v8847 = vadd.f32 0.0, %v8846
      %v8848 = vpop.f32.mrb[0].mxu0
      %8849 = vmatprep.mubr.f32.mxu0 0.0
      %8850 = vmatmul.mubr.f32.gmra.mrb[0].mxu0 %v8645
      %v8851 = vpop.f32.mrb[0].mxu0
      %v8852 = vadd.f32 0.0, %v8851
      %v8853 = vpop.f32.mrb[0].mxu0
      %8854 = vmatprep.mubr.f32.mxu0 0.0
      %8855 = vmatmul.mubr.f32.gmra.mrb[0].mxu0 %v8648
      %v8856 = vpop.f32.mrb[0].mxu0
      %v8857 = vadd.f32 0.0, %v8856
      %v8858 = vpop.f32.mrb[0].mxu0
      %8859 = vmatprep.mubr.f32.mxu0 0.0
      %8860 = vmatmul.mubr.f32.gmra.mrb[0].mxu0 %v8651
      %v8861 = vpop.f32.mrb[0].mxu0
      %v8862 = vadd.f32 0.0, %v8861
      %v8863 = vpop.f32.mrb[0].mxu0
      %8864 = vmatprep.mubr.f32.mxu0 0.0
      %8865 = vmatmul.mubr.f32.gmra.mrb[0].mxu0 %v8654
      %v8866 = vpop.f32.mrb[0].mxu0
      %v8867 = vadd.f32 0.0, %v8866
      %v8868 = vpop.f32.mrb[0].mxu0
      %8869 = vmatprep.mubr.f32.mxu0 0.0
      %8870 = vmatmul.mubr.f32.gmra.mrb[0].mxu0 %v8657
      %v8871 = vpop.f32.mrb[0].mxu0
      %v8872 = vadd.f32 0.0, %v8871
      %v8873 = vpop.f32.mrb[0].mxu0
      %8874 = vmatprep.mubr.f32.mxu0 0.0
      %8875 = vmatmul.mubr.f32.gmra.mrb[0].mxu0 %v8660
      %v8876 = vpop.f32.mrb[0].mxu0
      %v8877 = vadd.f32 0.0, %v8876
      %v8878 = vpop.f32.mrb[0].mxu0
      %8879 = vmatprep.mubr.f32.mxu0 0.0
      %8880 = vmatmul.mubr.f32.gmra.mrb[0].mxu0 %v8663
      %v8881 = vpop.f32.mrb[0].mxu0
      %v8882 = vadd.f32 0.0, %v8881
      %v8883 = vpop.f32.mrb[0].mxu0
      %8884 = vmatprep.mubr.f32.mxu0 0.0
      %8885 = vmatmul.mubr.f32.gmra.mrb[0].mxu0 %v8666
      %v8886 = vpop.f32.mrb[0].mxu0
      %v8887 = vadd.f32 0.0, %v8886
      %v8888 = vpop.f32.mrb[0].mxu0
      %8889 = vmatprep.mubr.f32.mxu0 0.0
      %8890 = vmatmul.mubr.f32.gmra.mrb[0].mxu0 %v8669
      %v8891 = vpop.f32.mrb[0].mxu0
      %v8892 = vadd.f32 0.0, %v8891
      %v8893 = vpop.f32.mrb[0].mxu0
      %8894 = vmatprep.mubr.f32.mxu0 0.0
      %8895 = vmatmul.mubr.f32.gmra.mrb[0].mxu0 %v8672
      %v8896 = vpop.f32.mrb[0].mxu0
      %v8897 = vadd.f32 0.0, %v8896
      %v8898 = vpop.f32.mrb[0].mxu0
      %8899 = vmatprep.mubr.f32.mxu0 0.0
      %8900 = vmatmul.mubr.f32.gmra.mrb[0].mxu0 %v8675
      %v8901 = vpop.f32.mrb[0].mxu0
      %v8902 = vadd.f32 0.0, %v8901
      %v8903 = vpop.f32.mrb[0].mxu0
      %8904 = vdwg.mxu0
      %v8905 = vadd.f32 %v8482, %v8747
      %v8906 = vadd.f32 %v8483, %v8752
      %v8907 = vadd.f32 %v8484, %v8757
      %v8908 = vadd.f32 %v8485, %v8762
      %v8909 = vadd.f32 %v8486, %v8767
      %v8910 = vadd.f32 %v8487, %v8772
      %v8911 = vadd.f32 %v8488, %v8777
      %v8912 = vadd.f32 %v8489, %v8782
      %v8913 = vadd.f32 %v8490, %v8787
      %v8914 = vadd.f32 %v8491, %v8792
      %v8915 = vadd.f32 %v8492, %v8797
      %v8916 = vadd.f32 %v8493, %v8802
      %v8917 = vadd.f32 %v8494, %v8807
      %v8918 = vadd.f32 %v8495, %v8812
      %v8919 = vadd.f32 %v8496, %v8817
      %v8920 = vadd.f32 %v8497, %v8822
      %v8921 = vadd.f32 %v8498, %v8827
      %v8922 = vadd.f32 %v8499, %v8832
      %v8923 = vadd.f32 %v8500, %v8837
      %v8924 = vadd.f32 %v8501, %v8842
      %v8925 = vadd.f32 %v8502, %v8847
      %v8926 = vadd.f32 %v8503, %v8852
      %v8927 = vadd.f32 %v8504, %v8857
      %v8928 = vadd.f32 %v8505, %v8862
      %v8929 = vadd.f32 %v8506, %v8867
      %v8930 = vadd.f32 %v8507, %v8872
      %v8931 = vadd.f32 %v8508, %v8877
      %v8932 = vadd.f32 %v8509, %v8882
      %v8933 = vadd.f32 %v8510, %v8887
      %v8934 = vadd.f32 %v8511, %v8892
      %v8935 = vadd.f32 %v8512, %v8897
      %v8936 = vadd.f32 %v8513, %v8902
      %v8937 = vld [vmem:[%s6] sm:$0x1]
      %v8939 = vlaneseq
      %v8940 = vshrl.u32 %v8939, 7
      %v8941 = vsub.s32 0, %v8940
      %v8942 = vrot.slane %v8937, %v8941
      %v8944 = vadd.f32 %v8905, %v8942
      %v8945 = vadd.f32 %v8906, %v8942
      %v8946 = vadd.f32 %v8907, %v8942
      %v8947 = vadd.f32 %v8908, %v8942
      %v8948 = vadd.f32 %v8909, %v8942
      %v8949 = vadd.f32 %v8910, %v8942
      %v8950 = vadd.f32 %v8911, %v8942
      %v8951 = vadd.f32 %v8912, %v8942
      %v8952 = vadd.f32 %v8913, %v8942
      %v8953 = vadd.f32 %v8914, %v8942
      %v8954 = vadd.f32 %v8915, %v8942
      %v8955 = vadd.f32 %v8916, %v8942
      %v8956 = vadd.f32 %v8917, %v8942
      %v8957 = vadd.f32 %v8918, %v8942
      %v8958 = vadd.f32 %v8919, %v8942
      %v8959 = vadd.f32 %v8920, %v8942
      %v8960 = vadd.f32 %v8921, %v8942
      %v8961 = vadd.f32 %v8922, %v8942
      %v8962 = vadd.f32 %v8923, %v8942
      %v8963 = vadd.f32 %v8924, %v8942
      %v8964 = vadd.f32 %v8925, %v8942
      %v8965 = vadd.f32 %v8926, %v8942
      %v8966 = vadd.f32 %v8927, %v8942
      %v8967 = vadd.f32 %v8928, %v8942
      %v8968 = vadd.f32 %v8929, %v8942
      %v8969 = vadd.f32 %v8930, %v8942
      %v8970 = vadd.f32 %v8931, %v8942
      %v8971 = vadd.f32 %v8932, %v8942
      %v8972 = vadd.f32 %v8933, %v8942
      %v8973 = vadd.f32 %v8934, %v8942
      %v8974 = vadd.f32 %v8935, %v8942
      %v8975 = vadd.f32 %v8936, %v8942
      %vm8976 = vcmp.gt.f32.partialorder %v8944, 0.0
      %vm8977 = vcmp.gt.f32.partialorder %v8945, 0.0
      %vm8978 = vcmp.gt.f32.partialorder %v8946, 0.0
      %vm8979 = vcmp.gt.f32.partialorder %v8947, 0.0
      %vm8980 = vcmp.gt.f32.partialorder %v8948, 0.0
      %vm8981 = vcmp.gt.f32.partialorder %v8949, 0.0
      %vm8982 = vcmp.gt.f32.partialorder %v8950, 0.0
      %vm8983 = vcmp.gt.f32.partialorder %v8951, 0.0
      %vm8984 = vcmp.gt.f32.partialorder %v8952, 0.0
      %vm8985 = vcmp.gt.f32.partialorder %v8953, 0.0
      %vm8986 = vcmp.gt.f32.partialorder %v8954, 0.0
      %vm8987 = vcmp.gt.f32.partialorder %v8955, 0.0
      %vm8988 = vcmp.gt.f32.partialorder %v8956, 0.0
      %vm8989 = vcmp.gt.f32.partialorder %v8957, 0.0
      %vm8990 = vcmp.gt.f32.partialorder %v8958, 0.0
      %vm8991 = vcmp.gt.f32.partialorder %v8959, 0.0
      %vm8992 = vcmp.gt.f32.partialorder %v8960, 0.0
      %vm8993 = vcmp.gt.f32.partialorder %v8961, 0.0
      %vm8994 = vcmp.gt.f32.partialorder %v8962, 0.0
      %vm8995 = vcmp.gt.f32.partialorder %v8963, 0.0
      %vm8996 = vcmp.gt.f32.partialorder %v8964, 0.0
      %vm8997 = vcmp.gt.f32.partialorder %v8965, 0.0
      %vm8998 = vcmp.gt.f32.partialorder %v8966, 0.0
      %vm8999 = vcmp.gt.f32.partialorder %v8967, 0.0
      %vm9000 = vcmp.gt.f32.partialorder %v8968, 0.0
      %vm9001 = vcmp.gt.f32.partialorder %v8969, 0.0
      %vm9002 = vcmp.gt.f32.partialorder %v8970, 0.0
      %vm9003 = vcmp.gt.f32.partialorder %v8971, 0.0
      %vm9004 = vcmp.gt.f32.partialorder %v8972, 0.0
      %vm9005 = vcmp.gt.f32.partialorder %v8973, 0.0
      %vm9006 = vcmp.gt.f32.partialorder %v8974, 0.0
      %vm9007 = vcmp.gt.f32.partialorder %v8975, 0.0
      %v9008 = vmul.f32 %v8944, 0.01
      %v9009 = vmul.f32 %v8945, 0.01
      %v9010 = vmul.f32 %v8946, 0.01
      %v9011 = vmul.f32 %v8947, 0.01
      %v9012 = vmul.f32 %v8948, 0.01
      %v9013 = vmul.f32 %v8949, 0.01
      %v9014 = vmul.f32 %v8950, 0.01
      %v9015 = vmul.f32 %v8951, 0.01
      %v9016 = vmul.f32 %v8952, 0.01
      %v9017 = vmul.f32 %v8953, 0.01
      %v9018 = vmul.f32 %v8954, 0.01
      %v9019 = vmul.f32 %v8955, 0.01
      %v9020 = vmul.f32 %v8956, 0.01
      %v9021 = vmul.f32 %v8957, 0.01
      %v9022 = vmul.f32 %v8958, 0.01
      %v9023 = vmul.f32 %v8959, 0.01
      %v9024 = vmul.f32 %v8960, 0.01
      %v9025 = vmul.f32 %v8961, 0.01
      %v9026 = vmul.f32 %v8962, 0.01
      %v9027 = vmul.f32 %v8963, 0.01
      %v9028 = vmul.f32 %v8964, 0.01
      %v9029 = vmul.f32 %v8965, 0.01
      %v9030 = vmul.f32 %v8966, 0.01
      %v9031 = vmul.f32 %v8967, 0.01
      %v9032 = vmul.f32 %v8968, 0.01
      %v9033 = vmul.f32 %v8969, 0.01
      %v9034 = vmul.f32 %v8970, 0.01
      %v9035 = vmul.f32 %v8971, 0.01
      %v9036 = vmul.f32 %v8972, 0.01
      %v9037 = vmul.f32 %v8973, 0.01
      %v9038 = vmul.f32 %v8974, 0.01
      %v9039 = vmul.f32 %v8975, 0.01
      %v9040 = vsel %vm8976, %v8944, %v9008
      %v9041 = vsel %vm8977, %v8945, %v9009
      %v9042 = vsel %vm8978, %v8946, %v9010
      %v9043 = vsel %vm8979, %v8947, %v9011
      %v9044 = vsel %vm8980, %v8948, %v9012
      %v9045 = vsel %vm8981, %v8949, %v9013
      %v9046 = vsel %vm8982, %v8950, %v9014
      %v9047 = vsel %vm8983, %v8951, %v9015
      %v9048 = vsel %vm8984, %v8952, %v9016
      %v9049 = vsel %vm8985, %v8953, %v9017
      %v9050 = vsel %vm8986, %v8954, %v9018
      %v9051 = vsel %vm8987, %v8955, %v9019
      %v9052 = vsel %vm8988, %v8956, %v9020
      %v9053 = vsel %vm8989, %v8957, %v9021
      %v9054 = vsel %vm8990, %v8958, %v9022
      %v9055 = vsel %vm8991, %v8959, %v9023
      %v9056 = vsel %vm8992, %v8960, %v9024
      %v9057 = vsel %vm8993, %v8961, %v9025
      %v9058 = vsel %vm8994, %v8962, %v9026
      %v9059 = vsel %vm8995, %v8963, %v9027
      %v9060 = vsel %vm8996, %v8964, %v9028
      %v9061 = vsel %vm8997, %v8965, %v9029
      %v9062 = vsel %vm8998, %v8966, %v9030
      %v9063 = vsel %vm8999, %v8967, %v9031
      %v9064 = vsel %vm9000, %v8968, %v9032
      %v9065 = vsel %vm9001, %v8969, %v9033
      %v9066 = vsel %vm9002, %v8970, %v9034
      %v9067 = vsel %vm9003, %v8971, %v9035
      %v9068 = vsel %vm9004, %v8972, %v9036
      %v9069 = vsel %vm9005, %v8973, %v9037
      %v9070 = vsel %vm9006, %v8974, %v9038
      %v9071 = vsel %vm9007, %v8975, %v9039
      %9072 = vst.msk [vmem:[#allocation2 + $0x18] sm:$0xff] %vm1406, %v9040
      %9073 = vst.msk [vmem:[#allocation2 + $0x20] sm:$0xff] %vm1406, %v9041
      %9074 = vst.msk [vmem:[#allocation2 + $0x28] sm:$0xff] %vm1406, %v9042
      %9075 = vst.msk [vmem:[#allocation2 + $0x30] sm:$0xff] %vm1406, %v9043
      %9076 = vst.msk [vmem:[#allocation2 + $0x38] sm:$0xff] %vm1406, %v9044
      %9077 = vst.msk [vmem:[#allocation2 + $0x40] sm:$0xff] %vm1406, %v9045
      %9078 = vst.msk [vmem:[#allocation2 + $0x48] sm:$0xff] %vm1406, %v9046
      %9079 = vst.msk [vmem:[#allocation2 + $0x50] sm:$0xff] %vm1406, %v9047
      %9080 = vst.msk [vmem:[#allocation2 + $0x58] sm:$0xff] %vm1406, %v9048
      %9081 = vst.msk [vmem:[#allocation2 + $0x60] sm:$0xff] %vm1406, %v9049
      %9082 = vst.msk [vmem:[#allocation2 + $0x68] sm:$0xff] %vm1406, %v9050
      %9083 = vst.msk [vmem:[#allocation2 + $0x70] sm:$0xff] %vm1406, %v9051
      %9084 = vst.msk [vmem:[#allocation2 + $0x78] sm:$0xff] %vm1406, %v9052
      %9085 = vst.msk [vmem:[#allocation2 + $0x80] sm:$0xff] %vm1406, %v9053
      %9086 = vst.msk [vmem:[#allocation2 + $0x88] sm:$0xff] %vm1406, %v9054
      %9087 = vst.msk [vmem:[#allocation2 + $0x90] sm:$0xff] %vm1406, %v9055
      %9088 = vst.msk [vmem:[#allocation2 + $0x98] sm:$0xff] %vm1406, %v9056
      %9089 = vst.msk [vmem:[#allocation2 + $0xa0] sm:$0xff] %vm1406, %v9057
      %9090 = vst.msk [vmem:[#allocation2 + $0xa8] sm:$0xff] %vm1406, %v9058
      %9091 = vst.msk [vmem:[#allocation2 + $0xb0] sm:$0xff] %vm1406, %v9059
      %9092 = vst.msk [vmem:[#allocation2 + $0xb8] sm:$0xff] %vm1406, %v9060
      %9093 = vst.msk [vmem:[#allocation2 + $0xc0] sm:$0xff] %vm1406, %v9061
      %9094 = vst.msk [vmem:[#allocation2 + $0xc8] sm:$0xff] %vm1406, %v9062
      %9095 = vst.msk [vmem:[#allocation2 + $0xd0] sm:$0xff] %vm1406, %v9063
      %9096 = vst.msk [vmem:[#allocation2 + $0xd8] sm:$0xff] %vm1406, %v9064
      %9097 = vst.msk [vmem:[#allocation2 + $0xe0] sm:$0xff] %vm1406, %v9065
      %9098 = vst.msk [vmem:[#allocation2 + $0xe8] sm:$0xff] %vm1406, %v9066
      %9099 = vst.msk [vmem:[#allocation2 + $0xf0] sm:$0xff] %vm1406, %v9067
      %9100 = vst.msk [vmem:[#allocation2 + $0xf8] sm:$0xff] %vm1406, %v9068
      %9101 = vst.msk [vmem:[#allocation2 + $0x100] sm:$0xff] %vm1406, %v9069
      %9102 = vst.msk [vmem:[#allocation2 + $0x108] sm:$0xff] %vm1406, %v9070
      %9103 = vst.msk [vmem:[#allocation2 + $0x110] sm:$0xff] %vm1406, %v9071
      %v9104 = vld [vmem:[#allocation2 + $0x7] sm:$0xff]
      %v9105 = vld [vmem:[#allocation2 + $0xf] sm:$0xff]
      %v9106 = vld [vmem:[#allocation2 + $0x17] sm:$0xff]
      %v9107 = vld [vmem:[#allocation2 + $0x1f] sm:$0xff]
      %v9108 = vld [vmem:[#allocation2 + $0x27] sm:$0xff]
      %v9109 = vld [vmem:[#allocation2 + $0x2f] sm:$0xff]
      %v9110 = vld [vmem:[#allocation2 + $0x37] sm:$0xff]
      %v9111 = vld [vmem:[#allocation2 + $0x3f] sm:$0xff]
      %v9112 = vld [vmem:[#allocation2 + $0x47] sm:$0xff]
      %v9113 = vld [vmem:[#allocation2 + $0x4f] sm:$0xff]
      %v9114 = vld [vmem:[#allocation2 + $0x57] sm:$0xff]
      %v9115 = vld [vmem:[#allocation2 + $0x5f] sm:$0xff]
      %v9116 = vld [vmem:[#allocation2 + $0x67] sm:$0xff]
      %v9117 = vld [vmem:[#allocation2 + $0x6f] sm:$0xff]
      %v9118 = vld [vmem:[#allocation2 + $0x77] sm:$0xff]
      %v9119 = vld [vmem:[#allocation2 + $0x7f] sm:$0xff]
      %v9120 = vld [vmem:[#allocation2 + $0x87] sm:$0xff]
      %v9121 = vld [vmem:[#allocation2 + $0x8f] sm:$0xff]
      %v9122 = vld [vmem:[#allocation2 + $0x97] sm:$0xff]
      %v9123 = vld [vmem:[#allocation2 + $0x9f] sm:$0xff]
      %v9124 = vld [vmem:[#allocation2 + $0xa7] sm:$0xff]
      %v9125 = vld [vmem:[#allocation2 + $0xaf] sm:$0xff]
      %v9126 = vld [vmem:[#allocation2 + $0xb7] sm:$0xff]
      %v9127 = vld [vmem:[#allocation2 + $0xbf] sm:$0xff]
      %v9128 = vld [vmem:[#allocation2 + $0xc7] sm:$0xff]
      %v9129 = vld [vmem:[#allocation2 + $0xcf] sm:$0xff]
      %v9130 = vld [vmem:[#allocation2 + $0xd7] sm:$0xff]
      %v9131 = vld [vmem:[#allocation2 + $0xdf] sm:$0xff]
      %v9132 = vld [vmem:[#allocation2 + $0xe7] sm:$0xff]
      %v9133 = vld [vmem:[#allocation2 + $0xef] sm:$0xff]
      %v9134 = vld [vmem:[#allocation2 + $0xf7] sm:$0xff]
      %v9135 = vld [vmem:[#allocation2 + $0xff] sm:$0xff]
      %v9136 = vmul.f32 %v9104, %v1278
      %v9137 = vmul.f32 %v9105, %v1279
      %v9138 = vmul.f32 %v9106, %v1280
      %v9139 = vmul.f32 %v9107, %v1281
      %v9140 = vmul.f32 %v9108, %v1282
      %v9141 = vmul.f32 %v9109, %v1283
      %v9142 = vmul.f32 %v9110, %v1284
      %v9143 = vmul.f32 %v9111, %v1285
      %v9144 = vmul.f32 %v9112, %v1286
      %v9145 = vmul.f32 %v9113, %v1287
      %v9146 = vmul.f32 %v9114, %v1288
      %v9147 = vmul.f32 %v9115, %v1289
      %v9148 = vmul.f32 %v9116, %v1290
      %v9149 = vmul.f32 %v9117, %v1291
      %v9150 = vmul.f32 %v9118, %v1292
      %v9151 = vmul.f32 %v9119, %v1293
      %v9152 = vmul.f32 %v9120, %v1294
      %v9153 = vmul.f32 %v9121, %v1295
      %v9154 = vmul.f32 %v9122, %v1296
      %v9155 = vmul.f32 %v9123, %v1297
      %v9156 = vmul.f32 %v9124, %v1298
      %v9157 = vmul.f32 %v9125, %v1299
      %v9158 = vmul.f32 %v9126, %v1300
      %v9159 = vmul.f32 %v9127, %v1301
      %v9160 = vmul.f32 %v9128, %v1302
      %v9161 = vmul.f32 %v9129, %v1303
      %v9162 = vmul.f32 %v9130, %v1304
      %v9163 = vmul.f32 %v9131, %v1305
      %v9164 = vmul.f32 %v9132, %v1306
      %v9165 = vmul.f32 %v9133, %v1307
      %v9166 = vmul.f32 %v9134, %v1308
      %v9167 = vmul.f32 %v9135, %v1309
      %v9168 = vld [vmem:[%s7] sm:$0x1]
      %v9170 = vlaneseq
      %v9171 = vshrl.u32 %v9170, 7
      %v9172 = vsub.s32 0, %v9171
      %v9173 = vrot.slane %v9168, %v9172
      %v9175 = vmul.f32 %v9136, %v9173
      %v9176 = vmul.f32 %v9137, %v9173
      %v9177 = vmul.f32 %v9138, %v9173
      %v9178 = vmul.f32 %v9139, %v9173
      %v9179 = vmul.f32 %v9140, %v9173
      %v9180 = vmul.f32 %v9141, %v9173
      %v9181 = vmul.f32 %v9142, %v9173
      %v9182 = vmul.f32 %v9143, %v9173
      %v9183 = vmul.f32 %v9144, %v9173
      %v9184 = vmul.f32 %v9145, %v9173
      %v9185 = vmul.f32 %v9146, %v9173
      %v9186 = vmul.f32 %v9147, %v9173
      %v9187 = vmul.f32 %v9148, %v9173
      %v9188 = vmul.f32 %v9149, %v9173
      %v9189 = vmul.f32 %v9150, %v9173
      %v9190 = vmul.f32 %v9151, %v9173
      %v9191 = vmul.f32 %v9152, %v9173
      %v9192 = vmul.f32 %v9153, %v9173
      %v9193 = vmul.f32 %v9154, %v9173
      %v9194 = vmul.f32 %v9155, %v9173
      %v9195 = vmul.f32 %v9156, %v9173
      %v9196 = vmul.f32 %v9157, %v9173
      %v9197 = vmul.f32 %v9158, %v9173
      %v9198 = vmul.f32 %v9159, %v9173
      %v9199 = vmul.f32 %v9160, %v9173
      %v9200 = vmul.f32 %v9161, %v9173
      %v9201 = vmul.f32 %v9162, %v9173
      %v9202 = vmul.f32 %v9163, %v9173
      %v9203 = vmul.f32 %v9164, %v9173
      %v9204 = vmul.f32 %v9165, %v9173
      %v9205 = vmul.f32 %v9166, %v9173
      %v9206 = vmul.f32 %v9167, %v9173
      %v9207 = vld [vmem:[#allocation2 + $0x8] sm:$0xff]
      %v9208 = vld [vmem:[#allocation2 + $0x10] sm:$0xff]
      %v9209 = vld [vmem:[#allocation2 + $0x18] sm:$0xff]
      %v9210 = vld [vmem:[#allocation2 + $0x20] sm:$0xff]
      %v9211 = vld [vmem:[#allocation2 + $0x28] sm:$0xff]
      %v9212 = vld [vmem:[#allocation2 + $0x30] sm:$0xff]
      %v9213 = vld [vmem:[#allocation2 + $0x38] sm:$0xff]
      %v9214 = vld [vmem:[#allocation2 + $0x40] sm:$0xff]
      %v9215 = vld [vmem:[#allocation2 + $0x48] sm:$0xff]
      %v9216 = vld [vmem:[#allocation2 + $0x50] sm:$0xff]
      %v9217 = vld [vmem:[#allocation2 + $0x58] sm:$0xff]
      %v9218 = vld [vmem:[#allocation2 + $0x60] sm:$0xff]
      %v9219 = vld [vmem:[#allocation2 + $0x68] sm:$0xff]
      %v9220 = vld [vmem:[#allocation2 + $0x70] sm:$0xff]
      %v9221 = vld [vmem:[#allocation2 + $0x78] sm:$0xff]
      %v9222 = vld [vmem:[#allocation2 + $0x80] sm:$0xff]
      %v9223 = vld [vmem:[#allocation2 + $0x88] sm:$0xff]
      %v9224 = vld [vmem:[#allocation2 + $0x90] sm:$0xff]
      %v9225 = vld [vmem:[#allocation2 + $0x98] sm:$0xff]
      %v9226 = vld [vmem:[#allocation2 + $0xa0] sm:$0xff]
      %v9227 = vld [vmem:[#allocation2 + $0xa8] sm:$0xff]
      %v9228 = vld [vmem:[#allocation2 + $0xb0] sm:$0xff]
      %v9229 = vld [vmem:[#allocation2 + $0xb8] sm:$0xff]
      %v9230 = vld [vmem:[#allocation2 + $0xc0] sm:$0xff]
      %v9231 = vld [vmem:[#allocation2 + $0xc8] sm:$0xff]
      %v9232 = vld [vmem:[#allocation2 + $0xd0] sm:$0xff]
      %v9233 = vld [vmem:[#allocation2 + $0xd8] sm:$0xff]
      %v9234 = vld [vmem:[#allocation2 + $0xe0] sm:$0xff]
      %v9235 = vld [vmem:[#allocation2 + $0xe8] sm:$0xff]
      %v9236 = vld [vmem:[#allocation2 + $0xf0] sm:$0xff]
      %v9237 = vld [vmem:[#allocation2 + $0xf8] sm:$0xff]
      %v9238 = vld [vmem:[#allocation2 + $0x100] sm:$0xff]
      %s9239 = scalar_lea.vmem %s7, 1
      %v9240 = vld [vmem:[%s9239] sm:$0x1]
      %v9242 = vlaneseq
      %v9243 = vshrl.u32 %v9242, 7
      %v9244 = vsub.s32 0, %v9243
      %v9245 = vrot.slane %v9240, %v9244
      %v9247 = vmul.f32 %v9207, %v9245
      %v9248 = vmul.f32 %v9208, %v9245
      %v9249 = vmul.f32 %v9209, %v9245
      %v9250 = vmul.f32 %v9210, %v9245
      %v9251 = vmul.f32 %v9211, %v9245
      %v9252 = vmul.f32 %v9212, %v9245
      %v9253 = vmul.f32 %v9213, %v9245
      %v9254 = vmul.f32 %v9214, %v9245
      %v9255 = vmul.f32 %v9215, %v9245
      %v9256 = vmul.f32 %v9216, %v9245
      %v9257 = vmul.f32 %v9217, %v9245
      %v9258 = vmul.f32 %v9218, %v9245
      %v9259 = vmul.f32 %v9219, %v9245
      %v9260 = vmul.f32 %v9220, %v9245
      %v9261 = vmul.f32 %v9221, %v9245
      %v9262 = vmul.f32 %v9222, %v9245
      %v9263 = vmul.f32 %v9223, %v9245
      %v9264 = vmul.f32 %v9224, %v9245
      %v9265 = vmul.f32 %v9225, %v9245
      %v9266 = vmul.f32 %v9226, %v9245
      %v9267 = vmul.f32 %v9227, %v9245
      %v9268 = vmul.f32 %v9228, %v9245
      %v9269 = vmul.f32 %v9229, %v9245
      %v9270 = vmul.f32 %v9230, %v9245
      %v9271 = vmul.f32 %v9231, %v9245
      %v9272 = vmul.f32 %v9232, %v9245
      %v9273 = vmul.f32 %v9233, %v9245
      %v9274 = vmul.f32 %v9234, %v9245
      %v9275 = vmul.f32 %v9235, %v9245
      %v9276 = vmul.f32 %v9236, %v9245
      %v9277 = vmul.f32 %v9237, %v9245
      %v9278 = vmul.f32 %v9238, %v9245
      %v9279 = vadd.f32 %v9175, %v9247
      %v9280 = vadd.f32 %v9176, %v9248
      %v9281 = vadd.f32 %v9177, %v9249
      %v9282 = vadd.f32 %v9178, %v9250
      %v9283 = vadd.f32 %v9179, %v9251
      %v9284 = vadd.f32 %v9180, %v9252
      %v9285 = vadd.f32 %v9181, %v9253
      %v9286 = vadd.f32 %v9182, %v9254
      %v9287 = vadd.f32 %v9183, %v9255
      %v9288 = vadd.f32 %v9184, %v9256
      %v9289 = vadd.f32 %v9185, %v9257
      %v9290 = vadd.f32 %v9186, %v9258
      %v9291 = vadd.f32 %v9187, %v9259
      %v9292 = vadd.f32 %v9188, %v9260
      %v9293 = vadd.f32 %v9189, %v9261
      %v9294 = vadd.f32 %v9190, %v9262
      %v9295 = vadd.f32 %v9191, %v9263
      %v9296 = vadd.f32 %v9192, %v9264
      %v9297 = vadd.f32 %v9193, %v9265
      %v9298 = vadd.f32 %v9194, %v9266
      %v9299 = vadd.f32 %v9195, %v9267
      %v9300 = vadd.f32 %v9196, %v9268
      %v9301 = vadd.f32 %v9197, %v9269
      %v9302 = vadd.f32 %v9198, %v9270
      %v9303 = vadd.f32 %v9199, %v9271
      %v9304 = vadd.f32 %v9200, %v9272
      %v9305 = vadd.f32 %v9201, %v9273
      %v9306 = vadd.f32 %v9202, %v9274
      %v9307 = vadd.f32 %v9203, %v9275
      %v9308 = vadd.f32 %v9204, %v9276
      %v9309 = vadd.f32 %v9205, %v9277
      %v9310 = vadd.f32 %v9206, %v9278
      %v9311 = vld [vmem:[#allocation2 + $0x9] sm:$0xff]
      %v9312 = vld [vmem:[#allocation2 + $0x11] sm:$0xff]
      %v9313 = vld [vmem:[#allocation2 + $0x19] sm:$0xff]
      %v9314 = vld [vmem:[#allocation2 + $0x21] sm:$0xff]
      %v9315 = vld [vmem:[#allocation2 + $0x29] sm:$0xff]
      %v9316 = vld [vmem:[#allocation2 + $0x31] sm:$0xff]
      %v9317 = vld [vmem:[#allocation2 + $0x39] sm:$0xff]
      %v9318 = vld [vmem:[#allocation2 + $0x41] sm:$0xff]
      %v9319 = vld [vmem:[#allocation2 + $0x49] sm:$0xff]
      %v9320 = vld [vmem:[#allocation2 + $0x51] sm:$0xff]
      %v9321 = vld [vmem:[#allocation2 + $0x59] sm:$0xff]
      %v9322 = vld [vmem:[#allocation2 + $0x61] sm:$0xff]
      %v9323 = vld [vmem:[#allocation2 + $0x69] sm:$0xff]
      %v9324 = vld [vmem:[#allocation2 + $0x71] sm:$0xff]
      %v9325 = vld [vmem:[#allocation2 + $0x79] sm:$0xff]
      %v9326 = vld [vmem:[#allocation2 + $0x81] sm:$0xff]
      %v9327 = vld [vmem:[#allocation2 + $0x89] sm:$0xff]
      %v9328 = vld [vmem:[#allocation2 + $0x91] sm:$0xff]
      %v9329 = vld [vmem:[#allocation2 + $0x99] sm:$0xff]
      %v9330 = vld [vmem:[#allocation2 + $0xa1] sm:$0xff]
      %v9331 = vld [vmem:[#allocation2 + $0xa9] sm:$0xff]
      %v9332 = vld [vmem:[#allocation2 + $0xb1] sm:$0xff]
      %v9333 = vld [vmem:[#allocation2 + $0xb9] sm:$0xff]
      %v9334 = vld [vmem:[#allocation2 + $0xc1] sm:$0xff]
      %v9335 = vld [vmem:[#allocation2 + $0xc9] sm:$0xff]
      %v9336 = vld [vmem:[#allocation2 + $0xd1] sm:$0xff]
      %v9337 = vld [vmem:[#allocation2 + $0xd9] sm:$0xff]
      %v9338 = vld [vmem:[#allocation2 + $0xe1] sm:$0xff]
      %v9339 = vld [vmem:[#allocation2 + $0xe9] sm:$0xff]
      %v9340 = vld [vmem:[#allocation2 + $0xf1] sm:$0xff]
      %v9341 = vld [vmem:[#allocation2 + $0xf9] sm:$0xff]
      %v9342 = vld [vmem:[#allocation2 + $0x101] sm:$0xff]
      %v9343 = vmul.f32 %v9311, %v1374
      %v9344 = vmul.f32 %v9312, %v1375
      %v9345 = vmul.f32 %v9313, %v1376
      %v9346 = vmul.f32 %v9314, %v1377
      %v9347 = vmul.f32 %v9315, %v1378
      %v9348 = vmul.f32 %v9316, %v1379
      %v9349 = vmul.f32 %v9317, %v1380
      %v9350 = vmul.f32 %v9318, %v1381
      %v9351 = vmul.f32 %v9319, %v1382
      %v9352 = vmul.f32 %v9320, %v1383
      %v9353 = vmul.f32 %v9321, %v1384
      %v9354 = vmul.f32 %v9322, %v1385
      %v9355 = vmul.f32 %v9323, %v1386
      %v9356 = vmul.f32 %v9324, %v1387
      %v9357 = vmul.f32 %v9325, %v1388
      %v9358 = vmul.f32 %v9326, %v1389
      %v9359 = vmul.f32 %v9327, %v1390
      %v9360 = vmul.f32 %v9328, %v1391
      %v9361 = vmul.f32 %v9329, %v1392
      %v9362 = vmul.f32 %v9330, %v1393
      %v9363 = vmul.f32 %v9331, %v1394
      %v9364 = vmul.f32 %v9332, %v1395
      %v9365 = vmul.f32 %v9333, %v1396
      %v9366 = vmul.f32 %v9334, %v1397
      %v9367 = vmul.f32 %v9335, %v1398
      %v9368 = vmul.f32 %v9336, %v1399
      %v9369 = vmul.f32 %v9337, %v1400
      %v9370 = vmul.f32 %v9338, %v1401
      %v9371 = vmul.f32 %v9339, %v1402
      %v9372 = vmul.f32 %v9340, %v1403
      %v9373 = vmul.f32 %v9341, %v1404
      %v9374 = vmul.f32 %v9342, %v1405
      %s9375 = scalar_lea.vmem %s7, 2
      %v9376 = vld [vmem:[%s9375] sm:$0x1]
      %v9378 = vlaneseq
      %v9379 = vshrl.u32 %v9378, 7
      %v9380 = vsub.s32 0, %v9379
      %v9381 = vrot.slane %v9376, %v9380
      %v9383 = vmul.f32 %v9343, %v9381
      %v9384 = vmul.f32 %v9344, %v9381
      %v9385 = vmul.f32 %v9345, %v9381
      %v9386 = vmul.f32 %v9346, %v9381
      %v9387 = vmul.f32 %v9347, %v9381
      %v9388 = vmul.f32 %v9348, %v9381
      %v9389 = vmul.f32 %v9349, %v9381
      %v9390 = vmul.f32 %v9350, %v9381
      %v9391 = vmul.f32 %v9351, %v9381
      %v9392 = vmul.f32 %v9352, %v9381
      %v9393 = vmul.f32 %v9353, %v9381
      %v9394 = vmul.f32 %v9354, %v9381
      %v9395 = vmul.f32 %v9355, %v9381
      %v9396 = vmul.f32 %v9356, %v9381
      %v9397 = vmul.f32 %v9357, %v9381
      %v9398 = vmul.f32 %v9358, %v9381
      %v9399 = vmul.f32 %v9359, %v9381
      %v9400 = vmul.f32 %v9360, %v9381
      %v9401 = vmul.f32 %v9361, %v9381
      %v9402 = vmul.f32 %v9362, %v9381
      %v9403 = vmul.f32 %v9363, %v9381
      %v9404 = vmul.f32 %v9364, %v9381
      %v9405 = vmul.f32 %v9365, %v9381
      %v9406 = vmul.f32 %v9366, %v9381
      %v9407 = vmul.f32 %v9367, %v9381
      %v9408 = vmul.f32 %v9368, %v9381
      %v9409 = vmul.f32 %v9369, %v9381
      %v9410 = vmul.f32 %v9370, %v9381
      %v9411 = vmul.f32 %v9371, %v9381
      %v9412 = vmul.f32 %v9372, %v9381
      %v9413 = vmul.f32 %v9373, %v9381
      %v9414 = vmul.f32 %v9374, %v9381
      %v9415 = vadd.f32 %v9279, %v9383
      %v9416 = vadd.f32 %v9280, %v9384
      %v9417 = vadd.f32 %v9281, %v9385
      %v9418 = vadd.f32 %v9282, %v9386
      %v9419 = vadd.f32 %v9283, %v9387
      %v9420 = vadd.f32 %v9284, %v9388
      %v9421 = vadd.f32 %v9285, %v9389
      %v9422 = vadd.f32 %v9286, %v9390
      %v9423 = vadd.f32 %v9287, %v9391
      %v9424 = vadd.f32 %v9288, %v9392
      %v9425 = vadd.f32 %v9289, %v9393
      %v9426 = vadd.f32 %v9290, %v9394
      %v9427 = vadd.f32 %v9291, %v9395
      %v9428 = vadd.f32 %v9292, %v9396
      %v9429 = vadd.f32 %v9293, %v9397
      %v9430 = vadd.f32 %v9294, %v9398
      %v9431 = vadd.f32 %v9295, %v9399
      %v9432 = vadd.f32 %v9296, %v9400
      %v9433 = vadd.f32 %v9297, %v9401
      %v9434 = vadd.f32 %v9298, %v9402
      %v9435 = vadd.f32 %v9299, %v9403
      %v9436 = vadd.f32 %v9300, %v9404
      %v9437 = vadd.f32 %v9301, %v9405
      %v9438 = vadd.f32 %v9302, %v9406
      %v9439 = vadd.f32 %v9303, %v9407
      %v9440 = vadd.f32 %v9304, %v9408
      %v9441 = vadd.f32 %v9305, %v9409
      %v9442 = vadd.f32 %v9306, %v9410
      %v9443 = vadd.f32 %v9307, %v9411
      %v9444 = vadd.f32 %v9308, %v9412
      %v9445 = vadd.f32 %v9309, %v9413
      %v9446 = vadd.f32 %v9310, %v9414
      %v9447 = vld [vmem:[#allocation2 + $0x107] sm:$0xff]
      %v9448 = vld [vmem:[#allocation2 + $0x10f] sm:$0xff]
      %v9449 = vmul.f32 %v9106, %v1278
      %v9450 = vmul.f32 %v9107, %v1279
      %v9451 = vmul.f32 %v9108, %v1280
      %v9452 = vmul.f32 %v9109, %v1281
      %v9453 = vmul.f32 %v9110, %v1282
      %v9454 = vmul.f32 %v9111, %v1283
      %v9455 = vmul.f32 %v9112, %v1284
      %v9456 = vmul.f32 %v9113, %v1285
      %v9457 = vmul.f32 %v9114, %v1286
      %v9458 = vmul.f32 %v9115, %v1287
      %v9459 = vmul.f32 %v9116, %v1288
      %v9460 = vmul.f32 %v9117, %v1289
      %v9461 = vmul.f32 %v9118, %v1290
      %v9462 = vmul.f32 %v9119, %v1291
      %v9463 = vmul.f32 %v9120, %v1292
      %v9464 = vmul.f32 %v9121, %v1293
      %v9465 = vmul.f32 %v9122, %v1294
      %v9466 = vmul.f32 %v9123, %v1295
      %v9467 = vmul.f32 %v9124, %v1296
      %v9468 = vmul.f32 %v9125, %v1297
      %v9469 = vmul.f32 %v9126, %v1298
      %v9470 = vmul.f32 %v9127, %v1299
      %v9471 = vmul.f32 %v9128, %v1300
      %v9472 = vmul.f32 %v9129, %v1301
      %v9473 = vmul.f32 %v9130, %v1302
      %v9474 = vmul.f32 %v9131, %v1303
      %v9475 = vmul.f32 %v9132, %v1304
      %v9476 = vmul.f32 %v9133, %v1305
      %v9477 = vmul.f32 %v9134, %v1306
      %v9478 = vmul.f32 %v9135, %v1307
      %v9479 = vmul.f32 %v9447, %v1308
      %v9480 = vmul.f32 %v9448, %v1309
      %s9481 = scalar_lea.vmem %s7, 3
      %v9482 = vld [vmem:[%s9481] sm:$0x1]
      %v9484 = vlaneseq
      %v9485 = vshrl.u32 %v9484, 7
      %v9486 = vsub.s32 0, %v9485
      %v9487 = vrot.slane %v9482, %v9486
      %v9489 = vmul.f32 %v9449, %v9487
      %v9490 = vmul.f32 %v9450, %v9487
      %v9491 = vmul.f32 %v9451, %v9487
      %v9492 = vmul.f32 %v9452, %v9487
      %v9493 = vmul.f32 %v9453, %v9487
      %v9494 = vmul.f32 %v9454, %v9487
      %v9495 = vmul.f32 %v9455, %v9487
      %v9496 = vmul.f32 %v9456, %v9487
      %v9497 = vmul.f32 %v9457, %v9487
      %v9498 = vmul.f32 %v9458, %v9487
      %v9499 = vmul.f32 %v9459, %v9487
      %v9500 = vmul.f32 %v9460, %v9487
      %v9501 = vmul.f32 %v9461, %v9487
      %v9502 = vmul.f32 %v9462, %v9487
      %v9503 = vmul.f32 %v9463, %v9487
      %v9504 = vmul.f32 %v9464, %v9487
      %v9505 = vmul.f32 %v9465, %v9487
      %v9506 = vmul.f32 %v9466, %v9487
      %v9507 = vmul.f32 %v9467, %v9487
      %v9508 = vmul.f32 %v9468, %v9487
      %v9509 = vmul.f32 %v9469, %v9487
      %v9510 = vmul.f32 %v9470, %v9487
      %v9511 = vmul.f32 %v9471, %v9487
      %v9512 = vmul.f32 %v9472, %v9487
      %v9513 = vmul.f32 %v9473, %v9487
      %v9514 = vmul.f32 %v9474, %v9487
      %v9515 = vmul.f32 %v9475, %v9487
      %v9516 = vmul.f32 %v9476, %v9487
      %v9517 = vmul.f32 %v9477, %v9487
      %v9518 = vmul.f32 %v9478, %v9487
      %v9519 = vmul.f32 %v9479, %v9487
      %v9520 = vmul.f32 %v9480, %v9487
      %v9521 = vadd.f32 %v9415, %v9489
      %v9522 = vadd.f32 %v9416, %v9490
      %v9523 = vadd.f32 %v9417, %v9491
      %v9524 = vadd.f32 %v9418, %v9492
      %v9525 = vadd.f32 %v9419, %v9493
      %v9526 = vadd.f32 %v9420, %v9494
      %v9527 = vadd.f32 %v9421, %v9495
      %v9528 = vadd.f32 %v9422, %v9496
      %v9529 = vadd.f32 %v9423, %v9497
      %v9530 = vadd.f32 %v9424, %v9498
      %v9531 = vadd.f32 %v9425, %v9499
      %v9532 = vadd.f32 %v9426, %v9500
      %v9533 = vadd.f32 %v9427, %v9501
      %v9534 = vadd.f32 %v9428, %v9502
      %v9535 = vadd.f32 %v9429, %v9503
      %v9536 = vadd.f32 %v9430, %v9504
      %v9537 = vadd.f32 %v9431, %v9505
      %v9538 = vadd.f32 %v9432, %v9506
      %v9539 = vadd.f32 %v9433, %v9507
      %v9540 = vadd.f32 %v9434, %v9508
      %v9541 = vadd.f32 %v9435, %v9509
      %v9542 = vadd.f32 %v9436, %v9510
      %v9543 = vadd.f32 %v9437, %v9511
      %v9544 = vadd.f32 %v9438, %v9512
      %v9545 = vadd.f32 %v9439, %v9513
      %v9546 = vadd.f32 %v9440, %v9514
      %v9547 = vadd.f32 %v9441, %v9515
      %v9548 = vadd.f32 %v9442, %v9516
      %v9549 = vadd.f32 %v9443, %v9517
      %v9550 = vadd.f32 %v9444, %v9518
      %v9551 = vadd.f32 %v9445, %v9519
      %v9552 = vadd.f32 %v9446, %v9520
      %v9553 = vld [vmem:[#allocation2 + $0x108] sm:$0xff]
      %v9554 = vld [vmem:[#allocation2 + $0x110] sm:$0xff]
      %s9555 = scalar_lea.vmem %s7, 4
      %v9556 = vld [vmem:[%s9555] sm:$0x1]
      %v9558 = vlaneseq
      %v9559 = vshrl.u32 %v9558, 7
      %v9560 = vsub.s32 0, %v9559
      %v9561 = vrot.slane %v9556, %v9560
      %v9563 = vmul.f32 %v9209, %v9561
      %v9564 = vmul.f32 %v9210, %v9561
      %v9565 = vmul.f32 %v9211, %v9561
      %v9566 = vmul.f32 %v9212, %v9561
      %v9567 = vmul.f32 %v9213, %v9561
      %v9568 = vmul.f32 %v9214, %v9561
      %v9569 = vmul.f32 %v9215, %v9561
      %v9570 = vmul.f32 %v9216, %v9561
      %v9571 = vmul.f32 %v9217, %v9561
      %v9572 = vmul.f32 %v9218, %v9561
      %v9573 = vmul.f32 %v9219, %v9561
      %v9574 = vmul.f32 %v9220, %v9561
      %v9575 = vmul.f32 %v9221, %v9561
      %v9576 = vmul.f32 %v9222, %v9561
      %v9577 = vmul.f32 %v9223, %v9561
      %v9578 = vmul.f32 %v9224, %v9561
      %v9579 = vmul.f32 %v9225, %v9561
      %v9580 = vmul.f32 %v9226, %v9561
      %v9581 = vmul.f32 %v9227, %v9561
      %v9582 = vmul.f32 %v9228, %v9561
      %v9583 = vmul.f32 %v9229, %v9561
      %v9584 = vmul.f32 %v9230, %v9561
      %v9585 = vmul.f32 %v9231, %v9561
      %v9586 = vmul.f32 %v9232, %v9561
      %v9587 = vmul.f32 %v9233, %v9561
      %v9588 = vmul.f32 %v9234, %v9561
      %v9589 = vmul.f32 %v9235, %v9561
      %v9590 = vmul.f32 %v9236, %v9561
      %v9591 = vmul.f32 %v9237, %v9561
      %v9592 = vmul.f32 %v9238, %v9561
      %v9593 = vmul.f32 %v9553, %v9561
      %v9594 = vmul.f32 %v9554, %v9561
      %v9595 = vadd.f32 %v9521, %v9563
      %v9596 = vadd.f32 %v9522, %v9564
      %v9597 = vadd.f32 %v9523, %v9565
      %v9598 = vadd.f32 %v9524, %v9566
      %v9599 = vadd.f32 %v9525, %v9567
      %v9600 = vadd.f32 %v9526, %v9568
      %v9601 = vadd.f32 %v9527, %v9569
      %v9602 = vadd.f32 %v9528, %v9570
      %v9603 = vadd.f32 %v9529, %v9571
      %v9604 = vadd.f32 %v9530, %v9572
      %v9605 = vadd.f32 %v9531, %v9573
      %v9606 = vadd.f32 %v9532, %v9574
      %v9607 = vadd.f32 %v9533, %v9575
      %v9608 = vadd.f32 %v9534, %v9576
      %v9609 = vadd.f32 %v9535, %v9577
      %v9610 = vadd.f32 %v9536, %v9578
      %v9611 = vadd.f32 %v9537, %v9579
      %v9612 = vadd.f32 %v9538, %v9580
      %v9613 = vadd.f32 %v9539, %v9581
      %v9614 = vadd.f32 %v9540, %v9582
      %v9615 = vadd.f32 %v9541, %v9583
      %v9616 = vadd.f32 %v9542, %v9584
      %v9617 = vadd.f32 %v9543, %v9585
      %v9618 = vadd.f32 %v9544, %v9586
      %v9619 = vadd.f32 %v9545, %v9587
      %v9620 = vadd.f32 %v9546, %v9588
      %v9621 = vadd.f32 %v9547, %v9589
      %v9622 = vadd.f32 %v9548, %v9590
      %v9623 = vadd.f32 %v9549, %v9591
      %v9624 = vadd.f32 %v9550, %v9592
      %v9625 = vadd.f32 %v9551, %v9593
      %v9626 = vadd.f32 %v9552, %v9594
      %v9627 = vld [vmem:[#allocation2 + $0x109] sm:$0xff]
      %v9628 = vld [vmem:[#allocation2 + $0x111] sm:$0xff]
      %v9629 = vmul.f32 %v9313, %v1374
      %v9630 = vmul.f32 %v9314, %v1375
      %v9631 = vmul.f32 %v9315, %v1376
      %v9632 = vmul.f32 %v9316, %v1377
      %v9633 = vmul.f32 %v9317, %v1378
      %v9634 = vmul.f32 %v9318, %v1379
      %v9635 = vmul.f32 %v9319, %v1380
      %v9636 = vmul.f32 %v9320, %v1381
      %v9637 = vmul.f32 %v9321, %v1382
      %v9638 = vmul.f32 %v9322, %v1383
      %v9639 = vmul.f32 %v9323, %v1384
      %v9640 = vmul.f32 %v9324, %v1385
      %v9641 = vmul.f32 %v9325, %v1386
      %v9642 = vmul.f32 %v9326, %v1387
      %v9643 = vmul.f32 %v9327, %v1388
      %v9644 = vmul.f32 %v9328, %v1389
      %v9645 = vmul.f32 %v9329, %v1390
      %v9646 = vmul.f32 %v9330, %v1391
      %v9647 = vmul.f32 %v9331, %v1392
      %v9648 = vmul.f32 %v9332, %v1393
      %v9649 = vmul.f32 %v9333, %v1394
      %v9650 = vmul.f32 %v9334, %v1395
      %v9651 = vmul.f32 %v9335, %v1396
      %v9652 = vmul.f32 %v9336, %v1397
      %v9653 = vmul.f32 %v9337, %v1398
      %v9654 = vmul.f32 %v9338, %v1399
      %v9655 = vmul.f32 %v9339, %v1400
      %v9656 = vmul.f32 %v9340, %v1401
      %v9657 = vmul.f32 %v9341, %v1402
      %v9658 = vmul.f32 %v9342, %v1403
      %v9659 = vmul.f32 %v9627, %v1404
      %v9660 = vmul.f32 %v9628, %v1405
      %s9661 = scalar_lea.vmem %s7, 5
      %v9662 = vld [vmem:[%s9661] sm:$0x1]
      %v9664 = vlaneseq
      %v9665 = vshrl.u32 %v9664, 7
      %v9666 = vsub.s32 0, %v9665
      %v9667 = vrot.slane %v9662, %v9666
      %v9669 = vmul.f32 %v9629, %v9667
      %v9670 = vmul.f32 %v9630, %v9667
      %v9671 = vmul.f32 %v9631, %v9667
      %v9672 = vmul.f32 %v9632, %v9667
      %v9673 = vmul.f32 %v9633, %v9667
      %v9674 = vmul.f32 %v9634, %v9667
      %v9675 = vmul.f32 %v9635, %v9667
      %v9676 = vmul.f32 %v9636, %v9667
      %v9677 = vmul.f32 %v9637, %v9667
      %v9678 = vmul.f32 %v9638, %v9667
      %v9679 = vmul.f32 %v9639, %v9667
      %v9680 = vmul.f32 %v9640, %v9667
      %v9681 = vmul.f32 %v9641, %v9667
      %v9682 = vmul.f32 %v9642, %v9667
      %v9683 = vmul.f32 %v9643, %v9667
      %v9684 = vmul.f32 %v9644, %v9667
      %v9685 = vmul.f32 %v9645, %v9667
      %v9686 = vmul.f32 %v9646, %v9667
      %v9687 = vmul.f32 %v9647, %v9667
      %v9688 = vmul.f32 %v9648, %v9667
      %v9689 = vmul.f32 %v9649, %v9667
      %v9690 = vmul.f32 %v9650, %v9667
      %v9691 = vmul.f32 %v9651, %v9667
      %v9692 = vmul.f32 %v9652, %v9667
      %v9693 = vmul.f32 %v9653, %v9667
      %v9694 = vmul.f32 %v9654, %v9667
      %v9695 = vmul.f32 %v9655, %v9667
      %v9696 = vmul.f32 %v9656, %v9667
      %v9697 = vmul.f32 %v9657, %v9667
      %v9698 = vmul.f32 %v9658, %v9667
      %v9699 = vmul.f32 %v9659, %v9667
      %v9700 = vmul.f32 %v9660, %v9667
      %v9701 = vadd.f32 %v9595, %v9669
      %v9702 = vadd.f32 %v9596, %v9670
      %v9703 = vadd.f32 %v9597, %v9671
      %v9704 = vadd.f32 %v9598, %v9672
      %v9705 = vadd.f32 %v9599, %v9673
      %v9706 = vadd.f32 %v9600, %v9674
      %v9707 = vadd.f32 %v9601, %v9675
      %v9708 = vadd.f32 %v9602, %v9676
      %v9709 = vadd.f32 %v9603, %v9677
      %v9710 = vadd.f32 %v9604, %v9678
      %v9711 = vadd.f32 %v9605, %v9679
      %v9712 = vadd.f32 %v9606, %v9680
      %v9713 = vadd.f32 %v9607, %v9681
      %v9714 = vadd.f32 %v9608, %v9682
      %v9715 = vadd.f32 %v9609, %v9683
      %v9716 = vadd.f32 %v9610, %v9684
      %v9717 = vadd.f32 %v9611, %v9685
      %v9718 = vadd.f32 %v9612, %v9686
      %v9719 = vadd.f32 %v9613, %v9687
      %v9720 = vadd.f32 %v9614, %v9688
      %v9721 = vadd.f32 %v9615, %v9689
      %v9722 = vadd.f32 %v9616, %v9690
      %v9723 = vadd.f32 %v9617, %v9691
      %v9724 = vadd.f32 %v9618, %v9692
      %v9725 = vadd.f32 %v9619, %v9693
      %v9726 = vadd.f32 %v9620, %v9694
      %v9727 = vadd.f32 %v9621, %v9695
      %v9728 = vadd.f32 %v9622, %v9696
      %v9729 = vadd.f32 %v9623, %v9697
      %v9730 = vadd.f32 %v9624, %v9698
      %v9731 = vadd.f32 %v9625, %v9699
      %v9732 = vadd.f32 %v9626, %v9700
      %v9733 = vld [vmem:[#allocation2 + $0x117] sm:$0xff]
      %v9734 = vld [vmem:[#allocation2 + $0x11f] sm:$0xff]
      %v9735 = vmul.f32 %v9108, %v1278
      %v9736 = vmul.f32 %v9109, %v1279
      %v9737 = vmul.f32 %v9110, %v1280
      %v9738 = vmul.f32 %v9111, %v1281
      %v9739 = vmul.f32 %v9112, %v1282
      %v9740 = vmul.f32 %v9113, %v1283
      %v9741 = vmul.f32 %v9114, %v1284
      %v9742 = vmul.f32 %v9115, %v1285
      %v9743 = vmul.f32 %v9116, %v1286
      %v9744 = vmul.f32 %v9117, %v1287
      %v9745 = vmul.f32 %v9118, %v1288
      %v9746 = vmul.f32 %v9119, %v1289
      %v9747 = vmul.f32 %v9120, %v1290
      %v9748 = vmul.f32 %v9121, %v1291
      %v9749 = vmul.f32 %v9122, %v1292
      %v9750 = vmul.f32 %v9123, %v1293
      %v9751 = vmul.f32 %v9124, %v1294
      %v9752 = vmul.f32 %v9125, %v1295
      %v9753 = vmul.f32 %v9126, %v1296
      %v9754 = vmul.f32 %v9127, %v1297
      %v9755 = vmul.f32 %v9128, %v1298
      %v9756 = vmul.f32 %v9129, %v1299
      %v9757 = vmul.f32 %v9130, %v1300
      %v9758 = vmul.f32 %v9131, %v1301
      %v9759 = vmul.f32 %v9132, %v1302
      %v9760 = vmul.f32 %v9133, %v1303
      %v9761 = vmul.f32 %v9134, %v1304
      %v9762 = vmul.f32 %v9135, %v1305
      %v9763 = vmul.f32 %v9447, %v1306
      %v9764 = vmul.f32 %v9448, %v1307
      %v9765 = vmul.f32 %v9733, %v1308
      %v9766 = vmul.f32 %v9734, %v1309
      %s9767 = scalar_lea.vmem %s7, 6
      %v9768 = vld [vmem:[%s9767] sm:$0x1]
      %v9770 = vlaneseq
      %v9771 = vshrl.u32 %v9770, 7
      %v9772 = vsub.s32 0, %v9771
      %v9773 = vrot.slane %v9768, %v9772
      %v9775 = vmul.f32 %v9735, %v9773
      %v9776 = vmul.f32 %v9736, %v9773
      %v9777 = vmul.f32 %v9737, %v9773
      %v9778 = vmul.f32 %v9738, %v9773
      %v9779 = vmul.f32 %v9739, %v9773
      %v9780 = vmul.f32 %v9740, %v9773
      %v9781 = vmul.f32 %v9741, %v9773
      %v9782 = vmul.f32 %v9742, %v9773
      %v9783 = vmul.f32 %v9743, %v9773
      %v9784 = vmul.f32 %v9744, %v9773
      %v9785 = vmul.f32 %v9745, %v9773
      %v9786 = vmul.f32 %v9746, %v9773
      %v9787 = vmul.f32 %v9747, %v9773
      %v9788 = vmul.f32 %v9748, %v9773
      %v9789 = vmul.f32 %v9749, %v9773
      %v9790 = vmul.f32 %v9750, %v9773
      %v9791 = vmul.f32 %v9751, %v9773
      %v9792 = vmul.f32 %v9752, %v9773
      %v9793 = vmul.f32 %v9753, %v9773
      %v9794 = vmul.f32 %v9754, %v9773
      %v9795 = vmul.f32 %v9755, %v9773
      %v9796 = vmul.f32 %v9756, %v9773
      %v9797 = vmul.f32 %v9757, %v9773
      %v9798 = vmul.f32 %v9758, %v9773
      %v9799 = vmul.f32 %v9759, %v9773
      %v9800 = vmul.f32 %v9760, %v9773
      %v9801 = vmul.f32 %v9761, %v9773
      %v9802 = vmul.f32 %v9762, %v9773
      %v9803 = vmul.f32 %v9763, %v9773
      %v9804 = vmul.f32 %v9764, %v9773
      %v9805 = vmul.f32 %v9765, %v9773
      %v9806 = vmul.f32 %v9766, %v9773
      %v9807 = vadd.f32 %v9701, %v9775
      %v9808 = vadd.f32 %v9702, %v9776
      %v9809 = vadd.f32 %v9703, %v9777
      %v9810 = vadd.f32 %v9704, %v9778
      %v9811 = vadd.f32 %v9705, %v9779
      %v9812 = vadd.f32 %v9706, %v9780
      %v9813 = vadd.f32 %v9707, %v9781
      %v9814 = vadd.f32 %v9708, %v9782
      %v9815 = vadd.f32 %v9709, %v9783
      %v9816 = vadd.f32 %v9710, %v9784
      %v9817 = vadd.f32 %v9711, %v9785
      %v9818 = vadd.f32 %v9712, %v9786
      %v9819 = vadd.f32 %v9713, %v9787
      %v9820 = vadd.f32 %v9714, %v9788
      %v9821 = vadd.f32 %v9715, %v9789
      %v9822 = vadd.f32 %v9716, %v9790
      %v9823 = vadd.f32 %v9717, %v9791
      %v9824 = vadd.f32 %v9718, %v9792
      %v9825 = vadd.f32 %v9719, %v9793
      %v9826 = vadd.f32 %v9720, %v9794
      %v9827 = vadd.f32 %v9721, %v9795
      %v9828 = vadd.f32 %v9722, %v9796
      %v9829 = vadd.f32 %v9723, %v9797
      %v9830 = vadd.f32 %v9724, %v9798
      %v9831 = vadd.f32 %v9725, %v9799
      %v9832 = vadd.f32 %v9726, %v9800
      %v9833 = vadd.f32 %v9727, %v9801
      %v9834 = vadd.f32 %v9728, %v9802
      %v9835 = vadd.f32 %v9729, %v9803
      %v9836 = vadd.f32 %v9730, %v9804
      %v9837 = vadd.f32 %v9731, %v9805
      %v9838 = vadd.f32 %v9732, %v9806
      %v9839 = vld [vmem:[#allocation2 + $0x118] sm:$0xff]
      %v9840 = vld [vmem:[#allocation2 + $0x120] sm:$0xff]
      %s9841 = scalar_lea.vmem %s7, 7
      %v9842 = vld [vmem:[%s9841] sm:$0x1]
      %v9844 = vlaneseq
      %v9845 = vshrl.u32 %v9844, 7
      %v9846 = vsub.s32 0, %v9845
      %v9847 = vrot.slane %v9842, %v9846
      %v9849 = vmul.f32 %v9211, %v9847
      %v9850 = vmul.f32 %v9212, %v9847
      %v9851 = vmul.f32 %v9213, %v9847
      %v9852 = vmul.f32 %v9214, %v9847
      %v9853 = vmul.f32 %v9215, %v9847
      %v9854 = vmul.f32 %v9216, %v9847
      %v9855 = vmul.f32 %v9217, %v9847
      %v9856 = vmul.f32 %v9218, %v9847
      %v9857 = vmul.f32 %v9219, %v9847
      %v9858 = vmul.f32 %v9220, %v9847
      %v9859 = vmul.f32 %v9221, %v9847
      %v9860 = vmul.f32 %v9222, %v9847
      %v9861 = vmul.f32 %v9223, %v9847
      %v9862 = vmul.f32 %v9224, %v9847
      %v9863 = vmul.f32 %v9225, %v9847
      %v9864 = vmul.f32 %v9226, %v9847
      %v9865 = vmul.f32 %v9227, %v9847
      %v9866 = vmul.f32 %v9228, %v9847
      %v9867 = vmul.f32 %v9229, %v9847
      %v9868 = vmul.f32 %v9230, %v9847
      %v9869 = vmul.f32 %v9231, %v9847
      %v9870 = vmul.f32 %v9232, %v9847
      %v9871 = vmul.f32 %v9233, %v9847
      %v9872 = vmul.f32 %v9234, %v9847
      %v9873 = vmul.f32 %v9235, %v9847
      %v9874 = vmul.f32 %v9236, %v9847
      %v9875 = vmul.f32 %v9237, %v9847
      %v9876 = vmul.f32 %v9238, %v9847
      %v9877 = vmul.f32 %v9553, %v9847
      %v9878 = vmul.f32 %v9554, %v9847
      %v9879 = vmul.f32 %v9839, %v9847
      %v9880 = vmul.f32 %v9840, %v9847
      %v9881 = vadd.f32 %v9807, %v9849
      %v9882 = vadd.f32 %v9808, %v9850
      %v9883 = vadd.f32 %v9809, %v9851
      %v9884 = vadd.f32 %v9810, %v9852
      %v9885 = vadd.f32 %v9811, %v9853
      %v9886 = vadd.f32 %v9812, %v9854
      %v9887 = vadd.f32 %v9813, %v9855
      %v9888 = vadd.f32 %v9814, %v9856
      %v9889 = vadd.f32 %v9815, %v9857
      %v9890 = vadd.f32 %v9816, %v9858
      %v9891 = vadd.f32 %v9817, %v9859
      %v9892 = vadd.f32 %v9818, %v9860
      %v9893 = vadd.f32 %v9819, %v9861
      %v9894 = vadd.f32 %v9820, %v9862
      %v9895 = vadd.f32 %v9821, %v9863
      %v9896 = vadd.f32 %v9822, %v9864
      %v9897 = vadd.f32 %v9823, %v9865
      %v9898 = vadd.f32 %v9824, %v9866
      %v9899 = vadd.f32 %v9825, %v9867
      %v9900 = vadd.f32 %v9826, %v9868
      %v9901 = vadd.f32 %v9827, %v9869
      %v9902 = vadd.f32 %v9828, %v9870
      %v9903 = vadd.f32 %v9829, %v9871
      %v9904 = vadd.f32 %v9830, %v9872
      %v9905 = vadd.f32 %v9831, %v9873
      %v9906 = vadd.f32 %v9832, %v9874
      %v9907 = vadd.f32 %v9833, %v9875
      %v9908 = vadd.f32 %v9834, %v9876
      %v9909 = vadd.f32 %v9835, %v9877
      %v9910 = vadd.f32 %v9836, %v9878
      %v9911 = vadd.f32 %v9837, %v9879
      %v9912 = vadd.f32 %v9838, %v9880
      %v9913 = vld [vmem:[#allocation2 + $0x119] sm:$0xff]
      %v9914 = vld [vmem:[#allocation2 + $0x121] sm:$0xff]
      %v9915 = vmul.f32 %v9315, %v1374
      %v9916 = vmul.f32 %v9316, %v1375
      %v9917 = vmul.f32 %v9317, %v1376
      %v9918 = vmul.f32 %v9318, %v1377
      %v9919 = vmul.f32 %v9319, %v1378
      %v9920 = vmul.f32 %v9320, %v1379
      %v9921 = vmul.f32 %v9321, %v1380
      %v9922 = vmul.f32 %v9322, %v1381
      %v9923 = vmul.f32 %v9323, %v1382
      %v9924 = vmul.f32 %v9324, %v1383
      %v9925 = vmul.f32 %v9325, %v1384
      %v9926 = vmul.f32 %v9326, %v1385
      %v9927 = vmul.f32 %v9327, %v1386
      %v9928 = vmul.f32 %v9328, %v1387
      %v9929 = vmul.f32 %v9329, %v1388
      %v9930 = vmul.f32 %v9330, %v1389
      %v9931 = vmul.f32 %v9331, %v1390
      %v9932 = vmul.f32 %v9332, %v1391
      %v9933 = vmul.f32 %v9333, %v1392
      %v9934 = vmul.f32 %v9334, %v1393
      %v9935 = vmul.f32 %v9335, %v1394
      %v9936 = vmul.f32 %v9336, %v1395
      %v9937 = vmul.f32 %v9337, %v1396
      %v9938 = vmul.f32 %v9338, %v1397
      %v9939 = vmul.f32 %v9339, %v1398
      %v9940 = vmul.f32 %v9340, %v1399
      %v9941 = vmul.f32 %v9341, %v1400
      %v9942 = vmul.f32 %v9342, %v1401
      %v9943 = vmul.f32 %v9627, %v1402
      %v9944 = vmul.f32 %v9628, %v1403
      %v9945 = vmul.f32 %v9913, %v1404
      %v9946 = vmul.f32 %v9914, %v1405
      %s9947 = scalar_lea.vmem %s7, 8
      %v9948 = vld [vmem:[%s9947] sm:$0x1]
      %v9950 = vlaneseq
      %v9951 = vshrl.u32 %v9950, 7
      %v9952 = vsub.s32 0, %v9951
      %v9953 = vrot.slane %v9948, %v9952
      %v9955 = vmul.f32 %v9915, %v9953
      %v9956 = vmul.f32 %v9916, %v9953
      %v9957 = vmul.f32 %v9917, %v9953
      %v9958 = vmul.f32 %v9918, %v9953
      %v9959 = vmul.f32 %v9919, %v9953
      %v9960 = vmul.f32 %v9920, %v9953
      %v9961 = vmul.f32 %v9921, %v9953
      %v9962 = vmul.f32 %v9922, %v9953
      %v9963 = vmul.f32 %v9923, %v9953
      %v9964 = vmul.f32 %v9924, %v9953
      %v9965 = vmul.f32 %v9925, %v9953
      %v9966 = vmul.f32 %v9926, %v9953
      %v9967 = vmul.f32 %v9927, %v9953
      %v9968 = vmul.f32 %v9928, %v9953
      %v9969 = vmul.f32 %v9929, %v9953
      %v9970 = vmul.f32 %v9930, %v9953
      %v9971 = vmul.f32 %v9931, %v9953
      %v9972 = vmul.f32 %v9932, %v9953
      %v9973 = vmul.f32 %v9933, %v9953
      %v9974 = vmul.f32 %v9934, %v9953
      %v9975 = vmul.f32 %v9935, %v9953
      %v9976 = vmul.f32 %v9936, %v9953
      %v9977 = vmul.f32 %v9937, %v9953
      %v9978 = vmul.f32 %v9938, %v9953
      %v9979 = vmul.f32 %v9939, %v9953
      %v9980 = vmul.f32 %v9940, %v9953
      %v9981 = vmul.f32 %v9941, %v9953
      %v9982 = vmul.f32 %v9942, %v9953
      %v9983 = vmul.f32 %v9943, %v9953
      %v9984 = vmul.f32 %v9944, %v9953
      %v9985 = vmul.f32 %v9945, %v9953
      %v9986 = vmul.f32 %v9946, %v9953
      %v9987 = vadd.f32 %v9881, %v9955
      %v9988 = vadd.f32 %v9882, %v9956
      %v9989 = vadd.f32 %v9883, %v9957
      %v9990 = vadd.f32 %v9884, %v9958
      %v9991 = vadd.f32 %v9885, %v9959
      %v9992 = vadd.f32 %v9886, %v9960
      %v9993 = vadd.f32 %v9887, %v9961
      %v9994 = vadd.f32 %v9888, %v9962
      %v9995 = vadd.f32 %v9889, %v9963
      %v9996 = vadd.f32 %v9890, %v9964
      %v9997 = vadd.f32 %v9891, %v9965
      %v9998 = vadd.f32 %v9892, %v9966
      %v9999 = vadd.f32 %v9893, %v9967
      %v10000 = vadd.f32 %v9894, %v9968
      %v10001 = vadd.f32 %v9895, %v9969
      %v10002 = vadd.f32 %v9896, %v9970
      %v10003 = vadd.f32 %v9897, %v9971
      %v10004 = vadd.f32 %v9898, %v9972
      %v10005 = vadd.f32 %v9899, %v9973
      %v10006 = vadd.f32 %v9900, %v9974
      %v10007 = vadd.f32 %v9901, %v9975
      %v10008 = vadd.f32 %v9902, %v9976
      %v10009 = vadd.f32 %v9903, %v9977
      %v10010 = vadd.f32 %v9904, %v9978
      %v10011 = vadd.f32 %v9905, %v9979
      %v10012 = vadd.f32 %v9906, %v9980
      %v10013 = vadd.f32 %v9907, %v9981
      %v10014 = vadd.f32 %v9908, %v9982
      %v10015 = vadd.f32 %v9909, %v9983
      %v10016 = vadd.f32 %v9910, %v9984
      %v10017 = vadd.f32 %v9911, %v9985
      %v10018 = vadd.f32 %v9912, %v9986
      %v10019 = vsel %vm1406, %v9987, 0.0
      %10020 = vadd.xlane.f32.xlu0 %v10019
      %v10021 = vpop.xlane.xlu0 %10020
      %v10022 = vsel %vm1406, %v9988, 0.0
      %10023 = vadd.xlane.f32.xlu0 %v10022
      %v10024 = vpop.xlane.xlu0 %10023
      %v10025 = vsel %vm1406, %v9989, 0.0
      %10026 = vadd.xlane.f32.xlu0 %v10025
      %v10027 = vpop.xlane.xlu0 %10026
      %v10028 = vsel %vm1406, %v9990, 0.0
      %10029 = vadd.xlane.f32.xlu0 %v10028
      %v10030 = vpop.xlane.xlu0 %10029
      %v10031 = vsel %vm1406, %v9991, 0.0
      %10032 = vadd.xlane.f32.xlu0 %v10031
      %v10033 = vpop.xlane.xlu0 %10032
      %v10034 = vsel %vm1406, %v9992, 0.0
      %10035 = vadd.xlane.f32.xlu0 %v10034
      %v10036 = vpop.xlane.xlu0 %10035
      %v10037 = vsel %vm1406, %v9993, 0.0
      %10038 = vadd.xlane.f32.xlu0 %v10037
      %v10039 = vpop.xlane.xlu0 %10038
      %v10040 = vsel %vm1406, %v9994, 0.0
      %10041 = vadd.xlane.f32.xlu0 %v10040
      %v10042 = vpop.xlane.xlu0 %10041
      %v10043 = vsel %vm1406, %v9995, 0.0
      %10044 = vadd.xlane.f32.xlu0 %v10043
      %v10045 = vpop.xlane.xlu0 %10044
      %v10046 = vsel %vm1406, %v9996, 0.0
      %10047 = vadd.xlane.f32.xlu0 %v10046
      %v10048 = vpop.xlane.xlu0 %10047
      %v10049 = vsel %vm1406, %v9997, 0.0
      %10050 = vadd.xlane.f32.xlu0 %v10049
      %v10051 = vpop.xlane.xlu0 %10050
      %v10052 = vsel %vm1406, %v9998, 0.0
      %10053 = vadd.xlane.f32.xlu0 %v10052
      %v10054 = vpop.xlane.xlu0 %10053
      %v10055 = vsel %vm1406, %v9999, 0.0
      %10056 = vadd.xlane.f32.xlu0 %v10055
      %v10057 = vpop.xlane.xlu0 %10056
      %v10058 = vsel %vm1406, %v10000, 0.0
      %10059 = vadd.xlane.f32.xlu0 %v10058
      %v10060 = vpop.xlane.xlu0 %10059
      %v10061 = vsel %vm1406, %v10001, 0.0
      %10062 = vadd.xlane.f32.xlu0 %v10061
      %v10063 = vpop.xlane.xlu0 %10062
      %v10064 = vsel %vm1406, %v10002, 0.0
      %10065 = vadd.xlane.f32.xlu0 %v10064
      %v10066 = vpop.xlane.xlu0 %10065
      %v10067 = vsel %vm1406, %v10003, 0.0
      %10068 = vadd.xlane.f32.xlu0 %v10067
      %v10069 = vpop.xlane.xlu0 %10068
      %v10070 = vsel %vm1406, %v10004, 0.0
      %10071 = vadd.xlane.f32.xlu0 %v10070
      %v10072 = vpop.xlane.xlu0 %10071
      %v10073 = vsel %vm1406, %v10005, 0.0
      %10074 = vadd.xlane.f32.xlu0 %v10073
      %v10075 = vpop.xlane.xlu0 %10074
      %v10076 = vsel %vm1406, %v10006, 0.0
      %10077 = vadd.xlane.f32.xlu0 %v10076
      %v10078 = vpop.xlane.xlu0 %10077
      %v10079 = vsel %vm1406, %v10007, 0.0
      %10080 = vadd.xlane.f32.xlu0 %v10079
      %v10081 = vpop.xlane.xlu0 %10080
      %v10082 = vsel %vm1406, %v10008, 0.0
      %10083 = vadd.xlane.f32.xlu0 %v10082
      %v10084 = vpop.xlane.xlu0 %10083
      %v10085 = vsel %vm1406, %v10009, 0.0
      %10086 = vadd.xlane.f32.xlu0 %v10085
      %v10087 = vpop.xlane.xlu0 %10086
      %v10088 = vsel %vm1406, %v10010, 0.0
      %10089 = vadd.xlane.f32.xlu0 %v10088
      %v10090 = vpop.xlane.xlu0 %10089
      %v10091 = vsel %vm1406, %v10011, 0.0
      %10092 = vadd.xlane.f32.xlu0 %v10091
      %v10093 = vpop.xlane.xlu0 %10092
      %v10094 = vsel %vm1406, %v10012, 0.0
      %10095 = vadd.xlane.f32.xlu0 %v10094
      %v10096 = vpop.xlane.xlu0 %10095
      %v10097 = vsel %vm1406, %v10013, 0.0
      %10098 = vadd.xlane.f32.xlu0 %v10097
      %v10099 = vpop.xlane.xlu0 %10098
      %v10100 = vsel %vm1406, %v10014, 0.0
      %10101 = vadd.xlane.f32.xlu0 %v10100
      %v10102 = vpop.xlane.xlu0 %10101
      %v10103 = vsel %vm1406, %v10015, 0.0
      %10104 = vadd.xlane.f32.xlu0 %v10103
      %v10105 = vpop.xlane.xlu0 %10104
      %v10106 = vsel %vm1406, %v10016, 0.0
      %10107 = vadd.xlane.f32.xlu0 %v10106
      %v10108 = vpop.xlane.xlu0 %10107
      %v10109 = vsel %vm1406, %v10017, 0.0
      %10110 = vadd.xlane.f32.xlu0 %v10109
      %v10111 = vpop.xlane.xlu0 %10110
      %v10112 = vsel %vm1406, %v10018, 0.0
      %10113 = vadd.xlane.f32.xlu0 %v10112
      %v10114 = vpop.xlane.xlu0 %10113
      %v10115 = vld [vmem:[#allocation3] sm:$0x1]
      %v10117 = vlaneseq
      %v10118 = vshrl.u32 %v10117, 7
      %v10119 = vsub.s32 0, %v10118
      %v10120 = vrot.slane %v10115, %v10119
      %v10122 = vadd.f32 %v10021, %v10120
      %v10123 = vadd.f32 %v10024, %v10120
      %v10124 = vadd.f32 %v10027, %v10120
      %v10125 = vadd.f32 %v10030, %v10120
      %v10126 = vadd.f32 %v10033, %v10120
      %v10127 = vadd.f32 %v10036, %v10120
      %v10128 = vadd.f32 %v10039, %v10120
      %v10129 = vadd.f32 %v10042, %v10120
      %v10130 = vadd.f32 %v10045, %v10120
      %v10131 = vadd.f32 %v10048, %v10120
      %v10132 = vadd.f32 %v10051, %v10120
      %v10133 = vadd.f32 %v10054, %v10120
      %v10134 = vadd.f32 %v10057, %v10120
      %v10135 = vadd.f32 %v10060, %v10120
      %v10136 = vadd.f32 %v10063, %v10120
      %v10137 = vadd.f32 %v10066, %v10120
      %v10138 = vadd.f32 %v10069, %v10120
      %v10139 = vadd.f32 %v10072, %v10120
      %v10140 = vadd.f32 %v10075, %v10120
      %v10141 = vadd.f32 %v10078, %v10120
      %v10142 = vadd.f32 %v10081, %v10120
      %v10143 = vadd.f32 %v10084, %v10120
      %v10144 = vadd.f32 %v10087, %v10120
      %v10145 = vadd.f32 %v10090, %v10120
      %v10146 = vadd.f32 %v10093, %v10120
      %v10147 = vadd.f32 %v10096, %v10120
      %v10148 = vadd.f32 %v10099, %v10120
      %v10149 = vadd.f32 %v10102, %v10120
      %v10150 = vadd.f32 %v10105, %v10120
      %v10151 = vadd.f32 %v10108, %v10120
      %v10152 = vadd.f32 %v10111, %v10120
      %v10153 = vadd.f32 %v10114, %v10120
      %v10154 = vmax.f32 %v10122, 0.0
      %v10155 = vmax.f32 %v10123, 0.0
      %v10156 = vmax.f32 %v10124, 0.0
      %v10157 = vmax.f32 %v10125, 0.0
      %v10158 = vmax.f32 %v10126, 0.0
      %v10159 = vmax.f32 %v10127, 0.0
      %v10160 = vmax.f32 %v10128, 0.0
      %v10161 = vmax.f32 %v10129, 0.0
      %v10162 = vmax.f32 %v10130, 0.0
      %v10163 = vmax.f32 %v10131, 0.0
      %v10164 = vmax.f32 %v10132, 0.0
      %v10165 = vmax.f32 %v10133, 0.0
      %v10166 = vmax.f32 %v10134, 0.0
      %v10167 = vmax.f32 %v10135, 0.0
      %v10168 = vmax.f32 %v10136, 0.0
      %v10169 = vmax.f32 %v10137, 0.0
      %v10170 = vmax.f32 %v10138, 0.0
      %v10171 = vmax.f32 %v10139, 0.0
      %v10172 = vmax.f32 %v10140, 0.0
      %v10173 = vmax.f32 %v10141, 0.0
      %v10174 = vmax.f32 %v10142, 0.0
      %v10175 = vmax.f32 %v10143, 0.0
      %v10176 = vmax.f32 %v10144, 0.0
      %v10177 = vmax.f32 %v10145, 0.0
      %v10178 = vmax.f32 %v10146, 0.0
      %v10179 = vmax.f32 %v10147, 0.0
      %v10180 = vmax.f32 %v10148, 0.0
      %v10181 = vmax.f32 %v10149, 0.0
      %v10182 = vmax.f32 %v10150, 0.0
      %v10183 = vmax.f32 %v10151, 0.0
      %v10184 = vmax.f32 %v10152, 0.0
      %v10185 = vmax.f32 %v10153, 0.0
      %vm10186 = vcmask 7168
      %10187 = vst.msk [vmem:[%s334] sm:$0xff] %vm10186, %v10154
      %10188 = vst.msk [vmem:[%s334 + $0x8] sm:$0xff] %vm10186, %v10155
      %10189 = vst.msk [vmem:[%s334 + $0x10] sm:$0xff] %vm10186, %v10156
      %10190 = vst.msk [vmem:[%s334 + $0x18] sm:$0xff] %vm10186, %v10157
      %10191 = vst.msk [vmem:[%s334 + $0x20] sm:$0xff] %vm10186, %v10158
      %10192 = vst.msk [vmem:[%s334 + $0x28] sm:$0xff] %vm10186, %v10159
      %10193 = vst.msk [vmem:[%s334 + $0x30] sm:$0xff] %vm10186, %v10160
      %10194 = vst.msk [vmem:[%s334 + $0x38] sm:$0xff] %vm10186, %v10161
      %10195 = vst.msk [vmem:[%s334 + $0x40] sm:$0xff] %vm10186, %v10162
      %10196 = vst.msk [vmem:[%s334 + $0x48] sm:$0xff] %vm10186, %v10163
      %10197 = vst.msk [vmem:[%s334 + $0x50] sm:$0xff] %vm10186, %v10164
      %10198 = vst.msk [vmem:[%s334 + $0x58] sm:$0xff] %vm10186, %v10165
      %10199 = vst.msk [vmem:[%s334 + $0x60] sm:$0xff] %vm10186, %v10166
      %10200 = vst.msk [vmem:[%s334 + $0x68] sm:$0xff] %vm10186, %v10167
      %10201 = vst.msk [vmem:[%s334 + $0x70] sm:$0xff] %vm10186, %v10168
      %10202 = vst.msk [vmem:[%s334 + $0x78] sm:$0xff] %vm10186, %v10169
      %10203 = vst.msk [vmem:[%s334 + $0x80] sm:$0xff] %vm10186, %v10170
      %10204 = vst.msk [vmem:[%s334 + $0x88] sm:$0xff] %vm10186, %v10171
      %10205 = vst.msk [vmem:[%s334 + $0x90] sm:$0xff] %vm10186, %v10172
      %10206 = vst.msk [vmem:[%s334 + $0x98] sm:$0xff] %vm10186, %v10173
      %10207 = vst.msk [vmem:[%s334 + $0xa0] sm:$0xff] %vm10186, %v10174
      %10208 = vst.msk [vmem:[%s334 + $0xa8] sm:$0xff] %vm10186, %v10175
      %10209 = vst.msk [vmem:[%s334 + $0xb0] sm:$0xff] %vm10186, %v10176
      %10210 = vst.msk [vmem:[%s334 + $0xb8] sm:$0xff] %vm10186, %v10177
      %10211 = vst.msk [vmem:[%s334 + $0xc0] sm:$0xff] %vm10186, %v10178
      %10212 = vst.msk [vmem:[%s334 + $0xc8] sm:$0xff] %vm10186, %v10179
      %10213 = vst.msk [vmem:[%s334 + $0xd0] sm:$0xff] %vm10186, %v10180
      %10214 = vst.msk [vmem:[%s334 + $0xd8] sm:$0xff] %vm10186, %v10181
      %10215 = vst.msk [vmem:[%s334 + $0xe0] sm:$0xff] %vm10186, %v10182
      %10216 = vst.msk [vmem:[%s334 + $0xe8] sm:$0xff] %vm10186, %v10183
      %10217 = vst.msk [vmem:[%s334 + $0xf0] sm:$0xff] %vm10186, %v10184
      %10218 = vst.msk [vmem:[%s334 + $0xf8] sm:$0xff] %vm10186, %v10185
      %p10219 = scmp.lt.s32.totalorder %s22, 1
      %s10220 = scalar_select %p10219, %s22, 1
      %s10221 = smul.addr %s10220, 32
      %s10222 = smul.addr %s10221, 8
      %s10223 = scalar_lea.vmem %s9, %s10222
      // Predicated region
      $region57: #{cnn_forward.1} parent=55 // pred_check
        %p10224 = pneg %p234
      $region58: #{cnn_forward.1} parent=55 // pred_check_branch
        %10226 = sbr.rel (%p10224) target = $region60
      $region59: #{cnn_forward.1} parent=55 // pred_region
        _
      $region60: #{cnn_forward.1} parent=55 // pred_fallthru
        _
    $region56: #{cnn_forward.1} parent=5 // pred_fallthru
      _
    %p10227 = scmp.le.s32.totalorder 2, %s17
    // Predicated region
    $region61: #{cnn_forward.1} parent=5 // pred_check
      %p10228 = pneg %p10227
    $region62: #{cnn_forward.1} parent=5 // pred_check_branch
      %10230 = sbr.rel (%p10228) target = $region64
    $region63: #{cnn_forward.1} parent=5 // pred_region
      %s10231 = ssub.s32 %s17, 2
      // Predicated region
      $region65: #{cnn_forward.1} parent=63 // pred_check
        %p10232 = pneg %p240
      $region66: #{cnn_forward.1} parent=63 // pred_check_branch
        %10234 = sbr.rel (%p10232) target = $region68
      $region67: #{cnn_forward.1} parent=63 // pred_region
        %p10235 = scmp.lt.s32.totalorder %s23, 1
        %s10236 = scalar_select %p10235, %s23, 1
        %s10237 = smul.addr %s10236, 32
        %s10238 = smul.addr %s10237, 8
        %s10239 = scalar_lea.vmem %s9, %s10238
      $region68: #{cnn_forward.1} parent=63 // pred_fallthru
        _
    $region64: #{cnn_forward.1} parent=5 // pred_fallthru
      _
  $region6: #{cnn_forward.1} parent=0 // loop_footer
    %s21 = sadd.s32 1, %s17
  $region7: #{cnn_forward.1} parent=0 // loop_footer_branch
    %16 = sbr.rel target = $region3
  $region8: #{cnn_forward.1} parent=0 // loop_exit
    _

</llo_original>
